<compile_context>
chip_gen: v5e
topology: v5e:2x2
jax: 0.10.0
libtpu: 0.0.40
codegen_flags: <defaults>
</compile_context>

<pallas_src>
import jax
import jax.numpy as jnp
from jax.experimental import pallas as pl
from jax.experimental.pallas import tpu as pltpu

# Geometry fixed by the module (fc1 = Linear(64*3*3, 128) forces 12x12 input).
H = W = 12
HP = H + 2            # 14  conv1 zero-padded grid
P1 = H // 2           # 6   pool1 grid
HP2 = P1 + 2          # 8   conv2 zero-padded grid
P2 = P1 // 2          # 3   pool2 grid
G = 16                # guard rows (>= max conv row shift, which is 15)


def _vmem():
    return pl.BlockSpec(memory_space=pltpu.MemorySpace.VMEM)


# ---------------------------------------------------------------------------
# One-time parameter packing (hoisted out of the jitted path).
# Everything lands in ONE (rows, 128) f32 buffer -> a single HBM->VMEM DMA.
# ---------------------------------------------------------------------------
def prepare_params(p):
    c1w, c1b = p["conv1_w"], p["conv1_b"]          # (32, Cin, 3, 3), (32,)
    c2w, c2b = p["conv2_w"], p["conv2_b"]          # (64, 32, 3, 3), (64,)
    f1w, f1b = p["fc1_w"], p["fc1_b"]              # (128, 576), (128,)
    f2w, f2b = p["fc2_w"], p["fc2_b"]              # (A, 128), (A,)
    C1, Cin = int(c1w.shape[0]), int(c1w.shape[1])
    C2 = int(c2w.shape[0])
    F1 = int(f1w.shape[0])
    A = int(f2w.shape[0])

    # Conv taps packed along the contraction dim: row = (kh*3 + kw)*Cin + cin.
    w1p = jnp.transpose(c1w, (2, 3, 1, 0)).reshape(9 * Cin, C1)     # (36, 32)
    w2p = jnp.transpose(c2w, (2, 3, 1, 0)).reshape(9 * C1, C2)      # (288, 64)
    # fc1 columns regrouped from torch (c, ph, pw) order to (ph*3+pw)*C2 + c.
    fw1p = f1w.T.reshape(C2, 9, F1).transpose(1, 0, 2).reshape(9 * C2, F1)
    fw2p = f2w.T                                                    # (128, A)

    pieces = [("w1", w1p), ("b1", c1b.reshape(1, C1)),
              ("w2", w2p), ("b2", c2b.reshape(1, C2)),
              ("fw1", fw1p), ("fb1", f1b.reshape(1, F1)),
              ("fw2", fw2p), ("fb2", f2b.reshape(1, A))]
    off, layout = 0, {}
    for name, arr in pieces:
        layout[name] = (off, int(arr.shape[0]), int(arr.shape[1]))
        off += -(-int(arr.shape[0]) // 8) * 8        # keep row offsets 8-aligned
    wbuf = jnp.zeros((off, 128), jnp.float32)
    for name, arr in pieces:
        r0, nr, nc = layout[name]
        wbuf = wbuf.at[r0:r0 + nr, 0:nc].set(arr.astype(jnp.float32))

    meta = {"layout": layout, "Cin": Cin, "C1": C1, "C2": C2, "F1": F1, "A": A}
    return wbuf, meta


# ---------------------------------------------------------------------------
# The single fused Pallas kernel.
# Activations are 2-D everywhere: rows = flattened zero-padded (b, h, w)
# (sublanes), cols = channels (lanes).  Each conv is one im2col + one matmul.
# ---------------------------------------------------------------------------
def dqn_forward(wbuf, x_nhwc, meta):
    B, Hx, Wx, Cin = x_nhwc.shape
    assert (Hx, Wx) == (H, W) and Cin == meta["Cin"] and B <= 8
    C1, C2, F1, A = meta["C1"], meta["C2"], meta["F1"], meta["A"]
    lay = meta["layout"]
    NP1 = B * HP * HP          # conv1 padded rows (392 @ B=2)
    NP2 = B * HP2 * HP2        # conv2 padded rows (128 @ B=2)

    def wsl(ref, name):        # static slice of the packed weight buffer
        r0, nr, nc = lay[name]
        return ref[r0:r0 + nr, 0:nc]

    def kernel(x_ref, w_ref, o_ref,
               s_x, s_im1, s_y1, s_p1, s_c2, s_im2, s_y2, s_p2, s_fcl):
        f32 = jnp.float32

        # -- stage conv1 input into the zero-padded (B,14,14,Cin) row layout --
        s_x[...] = jnp.zeros(s_x.shape, f32)
        for b in range(B):
            for hh in range(H):
                dst = G + b * HP * HP + (hh + 1) * HP + 1
                src = (b * H + hh) * W
                s_x[dst:dst + W, :] = x_ref[src:src + W, :]

        # -- conv1: im2col (taps packed along lanes) + ONE matmul + ReLU ------
        for t in range(9):
            sh = (t // 3 - 1) * HP + (t % 3 - 1)
            s_im1[:, t * Cin:(t + 1) * Cin] = s_x[G + sh:G + sh + NP1, :]
        y1 = jnp.dot(s_im1[...], wsl(w_ref, "w1"), preferred_element_type=f32)
        s_y1[0:NP1, :] = jnp.maximum(y1 + wsl(w_ref, "b1"), 0.0)

        # -- maxpool1 (2x2, stride 2): max of 4 shifted windows ---------------
        s_p1[...] = jnp.maximum(
            jnp.maximum(s_y1[0:NP1, :], s_y1[1:NP1 + 1, :]),
            jnp.maximum(s_y1[HP:HP + NP1, :], s_y1[HP + 1:HP + 1 + NP1, :]))

        # -- compact the 6x6 pooled grid into a zero-padded (B,8,8,C1) layout -
        s_c2[...] = jnp.zeros(s_c2.shape, f32)
        for b in range(B):
            for ho in range(P1):
                for wo in range(P1):
                    src = b * HP * HP + (2 * ho + 1) * HP + (2 * wo + 1)
                    dst = G + b * HP2 * HP2 + (ho + 1) * HP2 + (wo + 1)
                    s_c2[dst:dst + 1, :] = s_p1[src:src + 1, :]

        # -- conv2: im2col + ONE (128,288)x(288,64) matmul + ReLU -------------
        for t in range(9):
            sh = (t // 3 - 1) * HP2 + (t % 3 - 1)
            s_im2[:, t * C1:(t + 1) * C1] = s_c2[G + sh:G + sh + NP2, :]
        y2 = jnp.dot(s_im2[...], wsl(w_ref, "w2"), preferred_element_type=f32)
        s_y2[0:NP2, :] = jnp.maximum(y2 + wsl(w_ref, "b2"), 0.0)

        # -- maxpool2 ----------------------------------------------------------
        s_p2[...] = jnp.maximum(
            jnp.maximum(s_y2[0:NP2, :], s_y2[1:NP2 + 1, :]),
            jnp.maximum(s_y2[HP2:HP2 + NP2, :], s_y2[HP2 + 1:HP2 + 1 + NP2, :]))

        # -- gather the 3x3xC2 features of each image into one fc1 LHS row ----
        s_fcl[...] = jnp.zeros(s_fcl.shape, f32)
        for b in range(B):
            for t in range(9):
                po, qo = t // 3, t % 3
                r = b * HP2 * HP2 + (2 * po + 1) * HP2 + (2 * qo + 1)
                s_fcl[b:b + 1, t * C2:(t + 1) * C2] = s_p2[r:r + 1, :]

        # -- fc1 (+ReLU) and fc2: two matmuls, one output store ----------------
        z = jnp.maximum(
            jnp.dot(s_fcl[...], wsl(w_ref, "fw1"), preferred_element_type=f32)
            + wsl(w_ref, "fb1"), 0.0)
        out = (jnp.dot(z, wsl(w_ref, "fw2"), preferred_element_type=f32)
               + wsl(w_ref, "fb2"))
        o_ref[...] = out[0:B, :]

    flops = 2 * (NP1 * 9 * Cin * C1 + NP2 * 9 * C1 * C2
                 + 8 * 9 * C2 * F1 + 8 * F1 * A)
    bytes_accessed = 4 * (int(wbuf.size) + B * H * W * Cin + B * A)
    return pl.pallas_call(
        kernel,
        out_shape=jax.ShapeDtypeStruct((B, A), jnp.float32),
        in_specs=[_vmem(), _vmem()],
        out_specs=_vmem(),
        scratch_shapes=[
            pltpu.VMEM((2 * G + NP1, Cin), jnp.float32),   # s_x    (424, 4)
            pltpu.VMEM((NP1, 9 * Cin), jnp.float32),       # s_im1  (392, 36)
            pltpu.VMEM((NP1 + G, C1), jnp.float32),        # s_y1   (408, 32)
            pltpu.VMEM((NP1, C1), jnp.float32),            # s_p1   (392, 32)
            pltpu.VMEM((2 * G + NP2, C1), jnp.float32),    # s_c2   (160, 32)
            pltpu.VMEM((NP2, 9 * C1), jnp.float32),        # s_im2  (128, 288)
            pltpu.VMEM((NP2 + G, C2), jnp.float32),        # s_y2   (144, 64)
            pltpu.VMEM((NP2, C2), jnp.float32),            # s_p2   (128, 64)
            pltpu.VMEM((8, 9 * C2), jnp.float32),          # s_fcl  (8, 576)
        ],
        cost_estimate=pl.CostEstimate(flops=flops, transcendentals=0,
                                      bytes_accessed=bytes_accessed),
    )(x_nhwc.reshape(B * H * W, Cin), wbuf)


# ---------------------------------------------------------------------------
# Deterministic synthetic parameters (shapes from DQN.__init__)
# ---------------------------------------------------------------------------
def init_params(key, input_channels=4, n_actions=5):
    ks = jax.random.split(key, 8)

    def nrm(k, shape, scale=0.05):
        return scale * jax.random.normal(k, shape, dtype=jnp.float32)

    return {
        "conv1_w": nrm(ks[0], (32, input_channels, 3, 3)),
        "conv1_b": nrm(ks[1], (32,)),
        "conv2_w": nrm(ks[2], (64, 32, 3, 3)),
        "conv2_b": nrm(ks[3], (64,)),
        "fc1_w":   nrm(ks[4], (128, 64 * 3 * 3)),
        "fc1_b":   nrm(ks[5], (128,)),
        "fc2_w":   nrm(ks[6], (n_actions, 128)),
        "fc2_b":   nrm(ks[7], (n_actions,)),
    }


# Pure-JAX reference (mirrors the PyTorch forward), used only for verification.
def dqn_reference(params, x_nhwc):
    x = jnp.transpose(x_nhwc, (0, 3, 1, 2))  # NHWC -> NCHW (torch permute)

    def conv(x, w, b):
        y = jax.lax.conv_general_dilated(
            x, w, (1, 1), ((1, 1), (1, 1)),
            dimension_numbers=("NCHW", "OIHW", "NCHW"))
        return y + b[None, :, None, None]

    def pool(x):
        return jax.lax.reduce_window(x, -jnp.inf, jax.lax.max,
                                     (1, 1, 2, 2), (1, 1, 2, 2), "VALID")

    x = pool(jax.nn.relu(conv(x, params["conv1_w"], params["conv1_b"])))
    x = pool(jax.nn.relu(conv(x, params["conv2_w"], params["conv2_b"])))
    x = x.reshape(x.shape[0], -1)
    x = jax.nn.relu(x @ params["fc1_w"].T + params["fc1_b"])
    return x @ params["fc2_w"].T + params["fc2_b"]


if __name__ == "__main__":
    key = jax.random.PRNGKey(0)
    pk, xk = jax.random.split(key)
    params = init_params(pk, input_channels=4, n_actions=5)
    wbuf, meta = prepare_params(params)      # one-time weight packing, no jit

    # Input: (batch, H, W, C) = (2, 12, 12, 4), as the torch forward() expects.
    x = jax.random.normal(xk, (2, H, W, 4), dtype=jnp.float32)

    fwd = jax.jit(lambda wb, xx: dqn_forward(wb, xx, meta))  # meta is static
    out = jax.block_until_ready(fwd(wbuf, x))

    assert out.shape == (2, 5) and out.dtype == jnp.float32
    ref = dqn_reference(params, x)
    assert jnp.allclose(out, ref, atol=1e-4, rtol=1e-4), (out, ref)
    print("KERNEL_OK")
</pallas_src>

<mosaic_0001>
module attributes {stable_mosaic.version = 11 : i64} {
  func.func @kernel(%arg0: memref<288x4xf32, #tpu.memory_space<vmem>>, %arg1: memref<1064x128xf32, #tpu.memory_space<vmem>>, %arg2: memref<2x5xf32, #tpu.memory_space<vmem>>, %arg3: memref<424x4xf32, #tpu.memory_space<vmem>>, %arg4: memref<392x36xf32, #tpu.memory_space<vmem>>, %arg5: memref<408x32xf32, #tpu.memory_space<vmem>>, %arg6: memref<392x32xf32, #tpu.memory_space<vmem>>, %arg7: memref<160x32xf32, #tpu.memory_space<vmem>>, %arg8: memref<128x288xf32, #tpu.memory_space<vmem>>, %arg9: memref<144x64xf32, #tpu.memory_space<vmem>>, %arg10: memref<128x64xf32, #tpu.memory_space<vmem>>, %arg11: memref<8x576xf32, #tpu.memory_space<vmem>>) attributes {dimension_semantics = [], scalar_prefetch = 0 : i64, scratch_operands = 9 : i64, tpu.core_type = #tpu.core_type<tc>} {
    %cst = arith.constant 0.000000e+00 : f32
    %0 = vector.broadcast %cst : f32 to vector<424x4xf32>
    %c0 = arith.constant 0 : index
    %c0_0 = arith.constant 0 : index
    %1 = vector.load %arg3[%c0, %c0_0] : memref<424x4xf32, #tpu.memory_space<vmem>>, vector<424x4xf32>
    tpu.vector_store %arg3[%c0, %c0_0], %0 {strides = array<i32>} : memref<424x4xf32, #tpu.memory_space<vmem>>, vector<424x4xf32>,
    %c0_1 = arith.constant 0 : index
    %c0_2 = arith.constant 0 : index
    %2 = vector.load %arg0[%c0_1, %c0_2] : memref<288x4xf32, #tpu.memory_space<vmem>>, vector<12x4xf32>
    %c31 = arith.constant 31 : index
    %c0_3 = arith.constant 0 : index
    %3 = vector.load %arg3[%c31, %c0_3] : memref<424x4xf32, #tpu.memory_space<vmem>>, vector<12x4xf32>
    tpu.vector_store %arg3[%c31, %c0_3], %2 {strides = array<i32>} : memref<424x4xf32, #tpu.memory_space<vmem>>, vector<12x4xf32>,
    %c12 = arith.constant 12 : index
    %c0_4 = arith.constant 0 : index
    %4 = vector.load %arg0[%c12, %c0_4] : memref<288x4xf32, #tpu.memory_space<vmem>>, vector<12x4xf32>
    %c45 = arith.constant 45 : index
    %c0_5 = arith.constant 0 : index
    %5 = vector.load %arg3[%c45, %c0_5] : memref<424x4xf32, #tpu.memory_space<vmem>>, vector<12x4xf32>
    tpu.vector_store %arg3[%c45, %c0_5], %4 {strides = array<i32>} : memref<424x4xf32, #tpu.memory_space<vmem>>, vector<12x4xf32>,
    %c24 = arith.constant 24 : index
    %c0_6 = arith.constant 0 : index
    %6 = vector.load %arg0[%c24, %c0_6] : memref<288x4xf32, #tpu.memory_space<vmem>>, vector<12x4xf32>
    %c59 = arith.constant 59 : index
    %c0_7 = arith.constant 0 : index
    %7 = vector.load %arg3[%c59, %c0_7] : memref<424x4xf32, #tpu.memory_space<vmem>>, vector<12x4xf32>
    tpu.vector_store %arg3[%c59, %c0_7], %6 {strides = array<i32>} : memref<424x4xf32, #tpu.memory_space<vmem>>, vector<12x4xf32>,
    %c36 = arith.constant 36 : index
    %c0_8 = arith.constant 0 : index
    %8 = vector.load %arg0[%c36, %c0_8] : memref<288x4xf32, #tpu.memory_space<vmem>>, vector<12x4xf32>
    %c73 = arith.constant 73 : index
    %c0_9 = arith.constant 0 : index
    %9 = vector.load %arg3[%c73, %c0_9] : memref<424x4xf32, #tpu.memory_space<vmem>>, vector<12x4xf32>
    tpu.vector_store %arg3[%c73, %c0_9], %8 {strides = array<i32>} : memref<424x4xf32, #tpu.memory_space<vmem>>, vector<12x4xf32>,
    %c48 = arith.constant 48 : index
    %c0_10 = arith.constant 0 : index
    %10 = vector.load %arg0[%c48, %c0_10] : memref<288x4xf32, #tpu.memory_space<vmem>>, vector<12x4xf32>
    %c87 = arith.constant 87 : index
    %c0_11 = arith.constant 0 : index
    %11 = vector.load %arg3[%c87, %c0_11] : memref<424x4xf32, #tpu.memory_space<vmem>>, vector<12x4xf32>
    tpu.vector_store %arg3[%c87, %c0_11], %10 {strides = array<i32>} : memref<424x4xf32, #tpu.memory_space<vmem>>, vector<12x4xf32>,
    %c60 = arith.constant 60 : index
    %c0_12 = arith.constant 0 : index
    %12 = vector.load %arg0[%c60, %c0_12] : memref<288x4xf32, #tpu.memory_space<vmem>>, vector<12x4xf32>
    %c101 = arith.constant 101 : index
    %c0_13 = arith.constant 0 : index
    %13 = vector.load %arg3[%c101, %c0_13] : memref<424x4xf32, #tpu.memory_space<vmem>>, vector<12x4xf32>
    tpu.vector_store %arg3[%c101, %c0_13], %12 {strides = array<i32>} : memref<424x4xf32, #tpu.memory_space<vmem>>, vector<12x4xf32>,
    %c72 = arith.constant 72 : index
    %c0_14 = arith.constant 0 : index
    %14 = vector.load %arg0[%c72, %c0_14] : memref<288x4xf32, #tpu.memory_space<vmem>>, vector<12x4xf32>
    %c115 = arith.constant 115 : index
    %c0_15 = arith.constant 0 : index
    %15 = vector.load %arg3[%c115, %c0_15] : memref<424x4xf32, #tpu.memory_space<vmem>>, vector<12x4xf32>
    tpu.vector_store %arg3[%c115, %c0_15], %14 {strides = array<i32>} : memref<424x4xf32, #tpu.memory_space<vmem>>, vector<12x4xf32>,
    %c84 = arith.constant 84 : index
    %c0_16 = arith.constant 0 : index
    %16 = vector.load %arg0[%c84, %c0_16] : memref<288x4xf32, #tpu.memory_space<vmem>>, vector<12x4xf32>
    %c129 = arith.constant 129 : index
    %c0_17 = arith.constant 0 : index
    %17 = vector.load %arg3[%c129, %c0_17] : memref<424x4xf32, #tpu.memory_space<vmem>>, vector<12x4xf32>
    tpu.vector_store %arg3[%c129, %c0_17], %16 {strides = array<i32>} : memref<424x4xf32, #tpu.memory_space<vmem>>, vector<12x4xf32>,
    %c96 = arith.constant 96 : index
    %c0_18 = arith.constant 0 : index
    %18 = vector.load %arg0[%c96, %c0_18] : memref<288x4xf32, #tpu.memory_space<vmem>>, vector<12x4xf32>
    %c143 = arith.constant 143 : index
    %c0_19 = arith.constant 0 : index
    %19 = vector.load %arg3[%c143, %c0_19] : memref<424x4xf32, #tpu.memory_space<vmem>>, vector<12x4xf32>
    tpu.vector_store %arg3[%c143, %c0_19], %18 {strides = array<i32>} : memref<424x4xf32, #tpu.memory_space<vmem>>, vector<12x4xf32>,
    %c108 = arith.constant 108 : index
    %c0_20 = arith.constant 0 : index
    %20 = vector.load %arg0[%c108, %c0_20] : memref<288x4xf32, #tpu.memory_space<vmem>>, vector<12x4xf32>
    %c157 = arith.constant 157 : index
    %c0_21 = arith.constant 0 : index
    %21 = vector.load %arg3[%c157, %c0_21] : memref<424x4xf32, #tpu.memory_space<vmem>>, vector<12x4xf32>
    tpu.vector_store %arg3[%c157, %c0_21], %20 {strides = array<i32>} : memref<424x4xf32, #tpu.memory_space<vmem>>, vector<12x4xf32>,
    %c120 = arith.constant 120 : index
    %c0_22 = arith.constant 0 : index
    %22 = vector.load %arg0[%c120, %c0_22] : memref<288x4xf32, #tpu.memory_space<vmem>>, vector<12x4xf32>
    %c171 = arith.constant 171 : index
    %c0_23 = arith.constant 0 : index
    %23 = vector.load %arg3[%c171, %c0_23] : memref<424x4xf32, #tpu.memory_space<vmem>>, vector<12x4xf32>
    tpu.vector_store %arg3[%c171, %c0_23], %22 {strides = array<i32>} : memref<424x4xf32, #tpu.memory_space<vmem>>, vector<12x4xf32>,
    %c132 = arith.constant 132 : index
    %c0_24 = arith.constant 0 : index
    %24 = vector.load %arg0[%c132, %c0_24] : memref<288x4xf32, #tpu.memory_space<vmem>>, vector<12x4xf32>
    %c185 = arith.constant 185 : index
    %c0_25 = arith.constant 0 : index
    %25 = vector.load %arg3[%c185, %c0_25] : memref<424x4xf32, #tpu.memory_space<vmem>>, vector<12x4xf32>
    tpu.vector_store %arg3[%c185, %c0_25], %24 {strides = array<i32>} : memref<424x4xf32, #tpu.memory_space<vmem>>, vector<12x4xf32>,
    %c144 = arith.constant 144 : index
    %c0_26 = arith.constant 0 : index
    %26 = vector.load %arg0[%c144, %c0_26] : memref<288x4xf32, #tpu.memory_space<vmem>>, vector<12x4xf32>
    %c227 = arith.constant 227 : index
    %c0_27 = arith.constant 0 : index
    %27 = vector.load %arg3[%c227, %c0_27] : memref<424x4xf32, #tpu.memory_space<vmem>>, vector<12x4xf32>
    tpu.vector_store %arg3[%c227, %c0_27], %26 {strides = array<i32>} : memref<424x4xf32, #tpu.memory_space<vmem>>, vector<12x4xf32>,
    %c156 = arith.constant 156 : index
    %c0_28 = arith.constant 0 : index
    %28 = vector.load %arg0[%c156, %c0_28] : memref<288x4xf32, #tpu.memory_space<vmem>>, vector<12x4xf32>
    %c241 = arith.constant 241 : index
    %c0_29 = arith.constant 0 : index
    %29 = vector.load %arg3[%c241, %c0_29] : memref<424x4xf32, #tpu.memory_space<vmem>>, vector<12x4xf32>
    tpu.vector_store %arg3[%c241, %c0_29], %28 {strides = array<i32>} : memref<424x4xf32, #tpu.memory_space<vmem>>, vector<12x4xf32>,
    %c168 = arith.constant 168 : index
    %c0_30 = arith.constant 0 : index
    %30 = vector.load %arg0[%c168, %c0_30] : memref<288x4xf32, #tpu.memory_space<vmem>>, vector<12x4xf32>
    %c255 = arith.constant 255 : index
    %c0_31 = arith.constant 0 : index
    %31 = vector.load %arg3[%c255, %c0_31] : memref<424x4xf32, #tpu.memory_space<vmem>>, vector<12x4xf32>
    tpu.vector_store %arg3[%c255, %c0_31], %30 {strides = array<i32>} : memref<424x4xf32, #tpu.memory_space<vmem>>, vector<12x4xf32>,
    %c180 = arith.constant 180 : index
    %c0_32 = arith.constant 0 : index
    %32 = vector.load %arg0[%c180, %c0_32] : memref<288x4xf32, #tpu.memory_space<vmem>>, vector<12x4xf32>
    %c269 = arith.constant 269 : index
    %c0_33 = arith.constant 0 : index
    %33 = vector.load %arg3[%c269, %c0_33] : memref<424x4xf32, #tpu.memory_space<vmem>>, vector<12x4xf32>
    tpu.vector_store %arg3[%c269, %c0_33], %32 {strides = array<i32>} : memref<424x4xf32, #tpu.memory_space<vmem>>, vector<12x4xf32>,
    %c192 = arith.constant 192 : index
    %c0_34 = arith.constant 0 : index
    %34 = vector.load %arg0[%c192, %c0_34] : memref<288x4xf32, #tpu.memory_space<vmem>>, vector<12x4xf32>
    %c283 = arith.constant 283 : index
    %c0_35 = arith.constant 0 : index
    %35 = vector.load %arg3[%c283, %c0_35] : memref<424x4xf32, #tpu.memory_space<vmem>>, vector<12x4xf32>
    tpu.vector_store %arg3[%c283, %c0_35], %34 {strides = array<i32>} : memref<424x4xf32, #tpu.memory_space<vmem>>, vector<12x4xf32>,
    %c204 = arith.constant 204 : index
    %c0_36 = arith.constant 0 : index
    %36 = vector.load %arg0[%c204, %c0_36] : memref<288x4xf32, #tpu.memory_space<vmem>>, vector<12x4xf32>
    %c297 = arith.constant 297 : index
    %c0_37 = arith.constant 0 : index
    %37 = vector.load %arg3[%c297, %c0_37] : memref<424x4xf32, #tpu.memory_space<vmem>>, vector<12x4xf32>
    tpu.vector_store %arg3[%c297, %c0_37], %36 {strides = array<i32>} : memref<424x4xf32, #tpu.memory_space<vmem>>, vector<12x4xf32>,
    %c216 = arith.constant 216 : index
    %c0_38 = arith.constant 0 : index
    %38 = vector.load %arg0[%c216, %c0_38] : memref<288x4xf32, #tpu.memory_space<vmem>>, vector<12x4xf32>
    %c311 = arith.constant 311 : index
    %c0_39 = arith.constant 0 : index
    %39 = vector.load %arg3[%c311, %c0_39] : memref<424x4xf32, #tpu.memory_space<vmem>>, vector<12x4xf32>
    tpu.vector_store %arg3[%c311, %c0_39], %38 {strides = array<i32>} : memref<424x4xf32, #tpu.memory_space<vmem>>, vector<12x4xf32>,
    %c228 = arith.constant 228 : index
    %c0_40 = arith.constant 0 : index
    %40 = vector.load %arg0[%c228, %c0_40] : memref<288x4xf32, #tpu.memory_space<vmem>>, vector<12x4xf32>
    %c325 = arith.constant 325 : index
    %c0_41 = arith.constant 0 : index
    %41 = vector.load %arg3[%c325, %c0_41] : memref<424x4xf32, #tpu.memory_space<vmem>>, vector<12x4xf32>
    tpu.vector_store %arg3[%c325, %c0_41], %40 {strides = array<i32>} : memref<424x4xf32, #tpu.memory_space<vmem>>, vector<12x4xf32>,
    %c240 = arith.constant 240 : index
    %c0_42 = arith.constant 0 : index
    %42 = vector.load %arg0[%c240, %c0_42] : memref<288x4xf32, #tpu.memory_space<vmem>>, vector<12x4xf32>
    %c339 = arith.constant 339 : index
    %c0_43 = arith.constant 0 : index
    %43 = vector.load %arg3[%c339, %c0_43] : memref<424x4xf32, #tpu.memory_space<vmem>>, vector<12x4xf32>
    tpu.vector_store %arg3[%c339, %c0_43], %42 {strides = array<i32>} : memref<424x4xf32, #tpu.memory_space<vmem>>, vector<12x4xf32>,
    %c252 = arith.constant 252 : index
    %c0_44 = arith.constant 0 : index
    %44 = vector.load %arg0[%c252, %c0_44] : memref<288x4xf32, #tpu.memory_space<vmem>>, vector<12x4xf32>
    %c353 = arith.constant 353 : index
    %c0_45 = arith.constant 0 : index
    %45 = vector.load %arg3[%c353, %c0_45] : memref<424x4xf32, #tpu.memory_space<vmem>>, vector<12x4xf32>
    tpu.vector_store %arg3[%c353, %c0_45], %44 {strides = array<i32>} : memref<424x4xf32, #tpu.memory_space<vmem>>, vector<12x4xf32>,
    %c264 = arith.constant 264 : index
    %c0_46 = arith.constant 0 : index
    %46 = vector.load %arg0[%c264, %c0_46] : memref<288x4xf32, #tpu.memory_space<vmem>>, vector<12x4xf32>
    %c367 = arith.constant 367 : index
    %c0_47 = arith.constant 0 : index
    %47 = vector.load %arg3[%c367, %c0_47] : memref<424x4xf32, #tpu.memory_space<vmem>>, vector<12x4xf32>
    tpu.vector_store %arg3[%c367, %c0_47], %46 {strides = array<i32>} : memref<424x4xf32, #tpu.memory_space<vmem>>, vector<12x4xf32>,
    %c276 = arith.constant 276 : index
    %c0_48 = arith.constant 0 : index
    %48 = vector.load %arg0[%c276, %c0_48] : memref<288x4xf32, #tpu.memory_space<vmem>>, vector<12x4xf32>
    %c381 = arith.constant 381 : index
    %c0_49 = arith.constant 0 : index
    %49 = vector.load %arg3[%c381, %c0_49] : memref<424x4xf32, #tpu.memory_space<vmem>>, vector<12x4xf32>
    tpu.vector_store %arg3[%c381, %c0_49], %48 {strides = array<i32>} : memref<424x4xf32, #tpu.memory_space<vmem>>, vector<12x4xf32>,
    %c1 = arith.constant 1 : index
    %c0_50 = arith.constant 0 : index
    %50 = vector.load %arg3[%c1, %c0_50] : memref<424x4xf32, #tpu.memory_space<vmem>>, vector<392x4xf32>
    %c0_51 = arith.constant 0 : index
    %c0_52 = arith.constant 0 : index
    %51 = vector.load %arg4[%c0_51, %c0_52] : memref<392x36xf32, #tpu.memory_space<vmem>>, vector<392x4xf32>
    tpu.vector_store %arg4[%c0_51, %c0_52], %50 {strides = array<i32>} : memref<392x36xf32, #tpu.memory_space<vmem>>, vector<392x4xf32>,
    %c2 = arith.constant 2 : index
    %c0_53 = arith.constant 0 : index
    %52 = vector.load %arg3[%c2, %c0_53] : memref<424x4xf32, #tpu.memory_space<vmem>>, vector<392x4xf32>
    %c0_54 = arith.constant 0 : index
    %c4 = arith.constant 4 : index
    %53 = vector.load %arg4[%c0_54, %c4] : memref<392x36xf32, #tpu.memory_space<vmem>>, vector<392x4xf32>
    tpu.vector_store %arg4[%c0_54, %c4], %52 {strides = array<i32>} : memref<392x36xf32, #tpu.memory_space<vmem>>, vector<392x4xf32>,
    %c3 = arith.constant 3 : index
    %c0_55 = arith.constant 0 : index
    %54 = vector.load %arg3[%c3, %c0_55] : memref<424x4xf32, #tpu.memory_space<vmem>>, vector<392x4xf32>
    %c0_56 = arith.constant 0 : index
    %c8 = arith.constant 8 : index
    %55 = vector.load %arg4[%c0_56, %c8] : memref<392x36xf32, #tpu.memory_space<vmem>>, vector<392x4xf32>
    tpu.vector_store %arg4[%c0_56, %c8], %54 {strides = array<i32>} : memref<392x36xf32, #tpu.memory_space<vmem>>, vector<392x4xf32>,
    %c15 = arith.constant 15 : index
    %c0_57 = arith.constant 0 : index
    %56 = vector.load %arg3[%c15, %c0_57] : memref<424x4xf32, #tpu.memory_space<vmem>>, vector<392x4xf32>
    %c0_58 = arith.constant 0 : index
    %c12_59 = arith.constant 12 : index
    %57 = vector.load %arg4[%c0_58, %c12_59] : memref<392x36xf32, #tpu.memory_space<vmem>>, vector<392x4xf32>
    tpu.vector_store %arg4[%c0_58, %c12_59], %56 {strides = array<i32>} : memref<392x36xf32, #tpu.memory_space<vmem>>, vector<392x4xf32>,
    %c16 = arith.constant 16 : index
    %c0_60 = arith.constant 0 : index
    %58 = vector.load %arg3[%c16, %c0_60] : memref<424x4xf32, #tpu.memory_space<vmem>>, vector<392x4xf32>
    %c0_61 = arith.constant 0 : index
    %c16_62 = arith.constant 16 : index
    %59 = vector.load %arg4[%c0_61, %c16_62] : memref<392x36xf32, #tpu.memory_space<vmem>>, vector<392x4xf32>
    tpu.vector_store %arg4[%c0_61, %c16_62], %58 {strides = array<i32>} : memref<392x36xf32, #tpu.memory_space<vmem>>, vector<392x4xf32>,
    %c17 = arith.constant 17 : index
    %c0_63 = arith.constant 0 : index
    %60 = vector.load %arg3[%c17, %c0_63] : memref<424x4xf32, #tpu.memory_space<vmem>>, vector<392x4xf32>
    %c0_64 = arith.constant 0 : index
    %c20 = arith.constant 20 : index
    %61 = vector.load %arg4[%c0_64, %c20] : memref<392x36xf32, #tpu.memory_space<vmem>>, vector<392x4xf32>
    tpu.vector_store %arg4[%c0_64, %c20], %60 {strides = array<i32>} : memref<392x36xf32, #tpu.memory_space<vmem>>, vector<392x4xf32>,
    %c29 = arith.constant 29 : index
    %c0_65 = arith.constant 0 : index
    %62 = vector.load %arg3[%c29, %c0_65] : memref<424x4xf32, #tpu.memory_space<vmem>>, vector<392x4xf32>
    %c0_66 = arith.constant 0 : index
    %c24_67 = arith.constant 24 : index
    %63 = vector.load %arg4[%c0_66, %c24_67] : memref<392x36xf32, #tpu.memory_space<vmem>>, vector<392x4xf32>
    tpu.vector_store %arg4[%c0_66, %c24_67], %62 {strides = array<i32>} : memref<392x36xf32, #tpu.memory_space<vmem>>, vector<392x4xf32>,
    %c30 = arith.constant 30 : index
    %c0_68 = arith.constant 0 : index
    %64 = vector.load %arg3[%c30, %c0_68] : memref<424x4xf32, #tpu.memory_space<vmem>>, vector<392x4xf32>
    %c0_69 = arith.constant 0 : index
    %c28 = arith.constant 28 : index
    %65 = vector.load %arg4[%c0_69, %c28] : memref<392x36xf32, #tpu.memory_space<vmem>>, vector<392x4xf32>
    tpu.vector_store %arg4[%c0_69, %c28], %64 {strides = array<i32>} : memref<392x36xf32, #tpu.memory_space<vmem>>, vector<392x4xf32>,
    %c31_70 = arith.constant 31 : index
    %c0_71 = arith.constant 0 : index
    %66 = vector.load %arg3[%c31_70, %c0_71] : memref<424x4xf32, #tpu.memory_space<vmem>>, vector<392x4xf32>
    %c0_72 = arith.constant 0 : index
    %c32 = arith.constant 32 : index
    %67 = vector.load %arg4[%c0_72, %c32] : memref<392x36xf32, #tpu.memory_space<vmem>>, vector<392x4xf32>
    tpu.vector_store %arg4[%c0_72, %c32], %66 {strides = array<i32>} : memref<392x36xf32, #tpu.memory_space<vmem>>, vector<392x4xf32>,
    %c0_73 = arith.constant 0 : index
    %c0_74 = arith.constant 0 : index
    %68 = vector.load %arg4[%c0_73, %c0_74] : memref<392x36xf32, #tpu.memory_space<vmem>>, vector<392x36xf32>
    %c0_75 = arith.constant 0 : index
    %c0_76 = arith.constant 0 : index
    %69 = vector.load %arg1[%c0_75, %c0_76] : memref<1064x128xf32, #tpu.memory_space<vmem>>, vector<36x32xf32>
    %cst_77 = arith.constant dense<0.000000e+00> : vector<392x32xf32>
    %70 = tpu.matmul %68, %69, %cst_77 {dimension_numbers = #tpu.dot_dimension_numbers<[1], [0], [0], [1], [0, 0, 1, 1], [], []>} : vector<392x36xf32>, vector<36x32xf32>, vector<392x32xf32> -> vector<392x32xf32>
    %c40 = arith.constant 40 : index
    %c0_78 = arith.constant 0 : index
    %71 = vector.load %arg1[%c40, %c0_78] : memref<1064x128xf32, #tpu.memory_space<vmem>>, vector<1x32xf32>
    %72 = vector.broadcast %71 : vector<1x32xf32> to vector<392x32xf32>
    %73 = arith.addf %70, %72 : vector<392x32xf32>
    %cst_79 = arith.constant 0.000000e+00 : f32
    %74 = vector.broadcast %cst_79 : f32 to vector<392x32xf32>
    %75 = arith.maximumf %73, %74 : vector<392x32xf32>
    %c0_80 = arith.constant 0 : index
    %c0_81 = arith.constant 0 : index
    %76 = vector.load %arg5[%c0_80, %c0_81] : memref<408x32xf32, #tpu.memory_space<vmem>>, vector<392x32xf32>
    tpu.vector_store %arg5[%c0_80, %c0_81], %75 {strides = array<i32>} : memref<408x32xf32, #tpu.memory_space<vmem>>, vector<392x32xf32>,
    %c0_82 = arith.constant 0 : index
    %c0_83 = arith.constant 0 : index
    %77 = vector.load %arg5[%c0_82, %c0_83] : memref<408x32xf32, #tpu.memory_space<vmem>>, vector<392x32xf32>
    %c1_84 = arith.constant 1 : index
    %c0_85 = arith.constant 0 : index
    %78 = vector.load %arg5[%c1_84, %c0_85] : memref<408x32xf32, #tpu.memory_space<vmem>>, vector<392x32xf32>
    %79 = arith.maximumf %77, %78 : vector<392x32xf32>
    %c14 = arith.constant 14 : index
    %c0_86 = arith.constant 0 : index
    %80 = vector.load %arg5[%c14, %c0_86] : memref<408x32xf32, #tpu.memory_space<vmem>>, vector<392x32xf32>
    %c15_87 = arith.constant 15 : index
    %c0_88 = arith.constant 0 : index
    %81 = vector.load %arg5[%c15_87, %c0_88] : memref<408x32xf32, #tpu.memory_space<vmem>>, vector<392x32xf32>
    %82 = arith.maximumf %80, %81 : vector<392x32xf32>
    %83 = arith.maximumf %79, %82 : vector<392x32xf32>
    %c0_89 = arith.constant 0 : index
    %c0_90 = arith.constant 0 : index
    %84 = vector.load %arg6[%c0_89, %c0_90] : memref<392x32xf32, #tpu.memory_space<vmem>>, vector<392x32xf32>
    tpu.vector_store %arg6[%c0_89, %c0_90], %83 {strides = array<i32>} : memref<392x32xf32, #tpu.memory_space<vmem>>, vector<392x32xf32>,
    %cst_91 = arith.constant 0.000000e+00 : f32
    %85 = vector.broadcast %cst_91 : f32 to vector<160x32xf32>
    %c0_92 = arith.constant 0 : index
    %c0_93 = arith.constant 0 : index
    %86 = vector.load %arg7[%c0_92, %c0_93] : memref<160x32xf32, #tpu.memory_space<vmem>>, vector<160x32xf32>
    tpu.vector_store %arg7[%c0_92, %c0_93], %85 {strides = array<i32>} : memref<160x32xf32, #tpu.memory_space<vmem>>, vector<160x32xf32>,
    %c15_94 = arith.constant 15 : index
    %c0_95 = arith.constant 0 : index
    %87 = vector.load %arg6[%c15_94, %c0_95] : memref<392x32xf32, #tpu.memory_space<vmem>>, vector<1x32xf32>
    %c25 = arith.constant 25 : index
    %c0_96 = arith.constant 0 : index
    %88 = vector.load %arg7[%c25, %c0_96] : memref<160x32xf32, #tpu.memory_space<vmem>>, vector<1x32xf32>
    tpu.vector_store %arg7[%c25, %c0_96], %87 {strides = array<i32>} : memref<160x32xf32, #tpu.memory_space<vmem>>, vector<1x32xf32>,
    %c17_97 = arith.constant 17 : index
    %c0_98 = arith.constant 0 : index
    %89 = vector.load %arg6[%c17_97, %c0_98] : memref<392x32xf32, #tpu.memory_space<vmem>>, vector<1x32xf32>
    %c26 = arith.constant 26 : index
    %c0_99 = arith.constant 0 : index
    %90 = vector.load %arg7[%c26, %c0_99] : memref<160x32xf32, #tpu.memory_space<vmem>>, vector<1x32xf32>
    tpu.vector_store %arg7[%c26, %c0_99], %89 {strides = array<i32>} : memref<160x32xf32, #tpu.memory_space<vmem>>, vector<1x32xf32>,
    %c19 = arith.constant 19 : index
    %c0_100 = arith.constant 0 : index
    %91 = vector.load %arg6[%c19, %c0_100] : memref<392x32xf32, #tpu.memory_space<vmem>>, vector<1x32xf32>
    %c27 = arith.constant 27 : index
    %c0_101 = arith.constant 0 : index
    %92 = vector.load %arg7[%c27, %c0_101] : memref<160x32xf32, #tpu.memory_space<vmem>>, vector<1x32xf32>
    tpu.vector_store %arg7[%c27, %c0_101], %91 {strides = array<i32>} : memref<160x32xf32, #tpu.memory_space<vmem>>, vector<1x32xf32>,
    %c21 = arith.constant 21 : index
    %c0_102 = arith.constant 0 : index
    %93 = vector.load %arg6[%c21, %c0_102] : memref<392x32xf32, #tpu.memory_space<vmem>>, vector<1x32xf32>
    %c28_103 = arith.constant 28 : index
    %c0_104 = arith.constant 0 : index
    %94 = vector.load %arg7[%c28_103, %c0_104] : memref<160x32xf32, #tpu.memory_space<vmem>>, vector<1x32xf32>
    tpu.vector_store %arg7[%c28_103, %c0_104], %93 {strides = array<i32>} : memref<160x32xf32, #tpu.memory_space<vmem>>, vector<1x32xf32>,
    %c23 = arith.constant 23 : index
    %c0_105 = arith.constant 0 : index
    %95 = vector.load %arg6[%c23, %c0_105] : memref<392x32xf32, #tpu.memory_space<vmem>>, vector<1x32xf32>
    %c29_106 = arith.constant 29 : index
    %c0_107 = arith.constant 0 : index
    %96 = vector.load %arg7[%c29_106, %c0_107] : memref<160x32xf32, #tpu.memory_space<vmem>>, vector<1x32xf32>
    tpu.vector_store %arg7[%c29_106, %c0_107], %95 {strides = array<i32>} : memref<160x32xf32, #tpu.memory_space<vmem>>, vector<1x32xf32>,
    %c25_108 = arith.constant 25 : index
    %c0_109 = arith.constant 0 : index
    %97 = vector.load %arg6[%c25_108, %c0_109] : memref<392x32xf32, #tpu.memory_space<vmem>>, vector<1x32xf32>
    %c30_110 = arith.constant 30 : index
    %c0_111 = arith.constant 0 : index
    %98 = vector.load %arg7[%c30_110, %c0_111] : memref<160x32xf32, #tpu.memory_space<vmem>>, vector<1x32xf32>
    tpu.vector_store %arg7[%c30_110, %c0_111], %97 {strides = array<i32>} : memref<160x32xf32, #tpu.memory_space<vmem>>, vector<1x32xf32>,
    %c43 = arith.constant 43 : index
    %c0_112 = arith.constant 0 : index
    %99 = vector.load %arg6[%c43, %c0_112] : memref<392x32xf32, #tpu.memory_space<vmem>>, vector<1x32xf32>
    %c33 = arith.constant 33 : index
    %c0_113 = arith.constant 0 : index
    %100 = vector.load %arg7[%c33, %c0_113] : memref<160x32xf32, #tpu.memory_space<vmem>>, vector<1x32xf32>
    tpu.vector_store %arg7[%c33, %c0_113], %99 {strides = array<i32>} : memref<160x32xf32, #tpu.memory_space<vmem>>, vector<1x32xf32>,
    %c45_114 = arith.constant 45 : index
    %c0_115 = arith.constant 0 : index
    %101 = vector.load %arg6[%c45_114, %c0_115] : memref<392x32xf32, #tpu.memory_space<vmem>>, vector<1x32xf32>
    %c34 = arith.constant 34 : index
    %c0_116 = arith.constant 0 : index
    %102 = vector.load %arg7[%c34, %c0_116] : memref<160x32xf32, #tpu.memory_space<vmem>>, vector<1x32xf32>
    tpu.vector_store %arg7[%c34, %c0_116], %101 {strides = array<i32>} : memref<160x32xf32, #tpu.memory_space<vmem>>, vector<1x32xf32>,
    %c47 = arith.constant 47 : index
    %c0_117 = arith.constant 0 : index
    %103 = vector.load %arg6[%c47, %c0_117] : memref<392x32xf32, #tpu.memory_space<vmem>>, vector<1x32xf32>
    %c35 = arith.constant 35 : index
    %c0_118 = arith.constant 0 : index
    %104 = vector.load %arg7[%c35, %c0_118] : memref<160x32xf32, #tpu.memory_space<vmem>>, vector<1x32xf32>
    tpu.vector_store %arg7[%c35, %c0_118], %103 {strides = array<i32>} : memref<160x32xf32, #tpu.memory_space<vmem>>, vector<1x32xf32>,
    %c49 = arith.constant 49 : index
    %c0_119 = arith.constant 0 : index
    %105 = vector.load %arg6[%c49, %c0_119] : memref<392x32xf32, #tpu.memory_space<vmem>>, vector<1x32xf32>
    %c36_120 = arith.constant 36 : index
    %c0_121 = arith.constant 0 : index
    %106 = vector.load %arg7[%c36_120, %c0_121] : memref<160x32xf32, #tpu.memory_space<vmem>>, vector<1x32xf32>
    tpu.vector_store %arg7[%c36_120, %c0_121], %105 {strides = array<i32>} : memref<160x32xf32, #tpu.memory_space<vmem>>, vector<1x32xf32>,
    %c51 = arith.constant 51 : index
    %c0_122 = arith.constant 0 : index
    %107 = vector.load %arg6[%c51, %c0_122] : memref<392x32xf32, #tpu.memory_space<vmem>>, vector<1x32xf32>
    %c37 = arith.constant 37 : index
    %c0_123 = arith.constant 0 : index
    %108 = vector.load %arg7[%c37, %c0_123] : memref<160x32xf32, #tpu.memory_space<vmem>>, vector<1x32xf32>
    tpu.vector_store %arg7[%c37, %c0_123], %107 {strides = array<i32>} : memref<160x32xf32, #tpu.memory_space<vmem>>, vector<1x32xf32>,
    %c53 = arith.constant 53 : index
    %c0_124 = arith.constant 0 : index
    %109 = vector.load %arg6[%c53, %c0_124] : memref<392x32xf32, #tpu.memory_space<vmem>>, vector<1x32xf32>
    %c38 = arith.constant 38 : index
    %c0_125 = arith.constant 0 : index
    %110 = vector.load %arg7[%c38, %c0_125] : memref<160x32xf32, #tpu.memory_space<vmem>>, vector<1x32xf32>
    tpu.vector_store %arg7[%c38, %c0_125], %109 {strides = array<i32>} : memref<160x32xf32, #tpu.memory_space<vmem>>, vector<1x32xf32>,
    %c71 = arith.constant 71 : index
    %c0_126 = arith.constant 0 : index
    %111 = vector.load %arg6[%c71, %c0_126] : memref<392x32xf32, #tpu.memory_space<vmem>>, vector<1x32xf32>
    %c41 = arith.constant 41 : index
    %c0_127 = arith.constant 0 : index
    %112 = vector.load %arg7[%c41, %c0_127] : memref<160x32xf32, #tpu.memory_space<vmem>>, vector<1x32xf32>
    tpu.vector_store %arg7[%c41, %c0_127], %111 {strides = array<i32>} : memref<160x32xf32, #tpu.memory_space<vmem>>, vector<1x32xf32>,
    %c73_128 = arith.constant 73 : index
    %c0_129 = arith.constant 0 : index
    %113 = vector.load %arg6[%c73_128, %c0_129] : memref<392x32xf32, #tpu.memory_space<vmem>>, vector<1x32xf32>
    %c42 = arith.constant 42 : index
    %c0_130 = arith.constant 0 : index
    %114 = vector.load %arg7[%c42, %c0_130] : memref<160x32xf32, #tpu.memory_space<vmem>>, vector<1x32xf32>
    tpu.vector_store %arg7[%c42, %c0_130], %113 {strides = array<i32>} : memref<160x32xf32, #tpu.memory_space<vmem>>, vector<1x32xf32>,
    %c75 = arith.constant 75 : index
    %c0_131 = arith.constant 0 : index
    %115 = vector.load %arg6[%c75, %c0_131] : memref<392x32xf32, #tpu.memory_space<vmem>>, vector<1x32xf32>
    %c43_132 = arith.constant 43 : index
    %c0_133 = arith.constant 0 : index
    %116 = vector.load %arg7[%c43_132, %c0_133] : memref<160x32xf32, #tpu.memory_space<vmem>>, vector<1x32xf32>
    tpu.vector_store %arg7[%c43_132, %c0_133], %115 {strides = array<i32>} : memref<160x32xf32, #tpu.memory_space<vmem>>, vector<1x32xf32>,
    %c77 = arith.constant 77 : index
    %c0_134 = arith.constant 0 : index
    %117 = vector.load %arg6[%c77, %c0_134] : memref<392x32xf32, #tpu.memory_space<vmem>>, vector<1x32xf32>
    %c44 = arith.constant 44 : index
    %c0_135 = arith.constant 0 : index
    %118 = vector.load %arg7[%c44, %c0_135] : memref<160x32xf32, #tpu.memory_space<vmem>>, vector<1x32xf32>
    tpu.vector_store %arg7[%c44, %c0_135], %117 {strides = array<i32>} : memref<160x32xf32, #tpu.memory_space<vmem>>, vector<1x32xf32>,
    %c79 = arith.constant 79 : index
    %c0_136 = arith.constant 0 : index
    %119 = vector.load %arg6[%c79, %c0_136] : memref<392x32xf32, #tpu.memory_space<vmem>>, vector<1x32xf32>
    %c45_137 = arith.constant 45 : index
    %c0_138 = arith.constant 0 : index
    %120 = vector.load %arg7[%c45_137, %c0_138] : memref<160x32xf32, #tpu.memory_space<vmem>>, vector<1x32xf32>
    tpu.vector_store %arg7[%c45_137, %c0_138], %119 {strides = array<i32>} : memref<160x32xf32, #tpu.memory_space<vmem>>, vector<1x32xf32>,
    %c81 = arith.constant 81 : index
    %c0_139 = arith.constant 0 : index
    %121 = vector.load %arg6[%c81, %c0_139] : memref<392x32xf32, #tpu.memory_space<vmem>>, vector<1x32xf32>
    %c46 = arith.constant 46 : index
    %c0_140 = arith.constant 0 : index
    %122 = vector.load %arg7[%c46, %c0_140] : memref<160x32xf32, #tpu.memory_space<vmem>>, vector<1x32xf32>
    tpu.vector_store %arg7[%c46, %c0_140], %121 {strides = array<i32>} : memref<160x32xf32, #tpu.memory_space<vmem>>, vector<1x32xf32>,
    %c99 = arith.constant 99 : index
    %c0_141 = arith.constant 0 : index
    %123 = vector.load %arg6[%c99, %c0_141] : memref<392x32xf32, #tpu.memory_space<vmem>>, vector<1x32xf32>
    %c49_142 = arith.constant 49 : index
    %c0_143 = arith.constant 0 : index
    %124 = vector.load %arg7[%c49_142, %c0_143] : memref<160x32xf32, #tpu.memory_space<vmem>>, vector<1x32xf32>
    tpu.vector_store %arg7[%c49_142, %c0_143], %123 {strides = array<i32>} : memref<160x32xf32, #tpu.memory_space<vmem>>, vector<1x32xf32>,
    %c101_144 = arith.constant 101 : index
    %c0_145 = arith.constant 0 : index
    %125 = vector.load %arg6[%c101_144, %c0_145] : memref<392x32xf32, #tpu.memory_space<vmem>>, vector<1x32xf32>
    %c50 = arith.constant 50 : index
    %c0_146 = arith.constant 0 : index
    %126 = vector.load %arg7[%c50, %c0_146] : memref<160x32xf32, #tpu.memory_space<vmem>>, vector<1x32xf32>
    tpu.vector_store %arg7[%c50, %c0_146], %125 {strides = array<i32>} : memref<160x32xf32, #tpu.memory_space<vmem>>, vector<1x32xf32>,
    %c103 = arith.constant 103 : index
    %c0_147 = arith.constant 0 : index
    %127 = vector.load %arg6[%c103, %c0_147] : memref<392x32xf32, #tpu.memory_space<vmem>>, vector<1x32xf32>
    %c51_148 = arith.constant 51 : index
    %c0_149 = arith.constant 0 : index
    %128 = vector.load %arg7[%c51_148, %c0_149] : memref<160x32xf32, #tpu.memory_space<vmem>>, vector<1x32xf32>
    tpu.vector_store %arg7[%c51_148, %c0_149], %127 {strides = array<i32>} : memref<160x32xf32, #tpu.memory_space<vmem>>, vector<1x32xf32>,
    %c105 = arith.constant 105 : index
    %c0_150 = arith.constant 0 : index
    %129 = vector.load %arg6[%c105, %c0_150] : memref<392x32xf32, #tpu.memory_space<vmem>>, vector<1x32xf32>
    %c52 = arith.constant 52 : index
    %c0_151 = arith.constant 0 : index
    %130 = vector.load %arg7[%c52, %c0_151] : memref<160x32xf32, #tpu.memory_space<vmem>>, vector<1x32xf32>
    tpu.vector_store %arg7[%c52, %c0_151], %129 {strides = array<i32>} : memref<160x32xf32, #tpu.memory_space<vmem>>, vector<1x32xf32>,
    %c107 = arith.constant 107 : index
    %c0_152 = arith.constant 0 : index
    %131 = vector.load %arg6[%c107, %c0_152] : memref<392x32xf32, #tpu.memory_space<vmem>>, vector<1x32xf32>
    %c53_153 = arith.constant 53 : index
    %c0_154 = arith.constant 0 : index
    %132 = vector.load %arg7[%c53_153, %c0_154] : memref<160x32xf32, #tpu.memory_space<vmem>>, vector<1x32xf32>
    tpu.vector_store %arg7[%c53_153, %c0_154], %131 {strides = array<i32>} : memref<160x32xf32, #tpu.memory_space<vmem>>, vector<1x32xf32>,
    %c109 = arith.constant 109 : index
    %c0_155 = arith.constant 0 : index
    %133 = vector.load %arg6[%c109, %c0_155] : memref<392x32xf32, #tpu.memory_space<vmem>>, vector<1x32xf32>
    %c54 = arith.constant 54 : index
    %c0_156 = arith.constant 0 : index
    %134 = vector.load %arg7[%c54, %c0_156] : memref<160x32xf32, #tpu.memory_space<vmem>>, vector<1x32xf32>
    tpu.vector_store %arg7[%c54, %c0_156], %133 {strides = array<i32>} : memref<160x32xf32, #tpu.memory_space<vmem>>, vector<1x32xf32>,
    %c127 = arith.constant 127 : index
    %c0_157 = arith.constant 0 : index
    %135 = vector.load %arg6[%c127, %c0_157] : memref<392x32xf32, #tpu.memory_space<vmem>>, vector<1x32xf32>
    %c57 = arith.constant 57 : index
    %c0_158 = arith.constant 0 : index
    %136 = vector.load %arg7[%c57, %c0_158] : memref<160x32xf32, #tpu.memory_space<vmem>>, vector<1x32xf32>
    tpu.vector_store %arg7[%c57, %c0_158], %135 {strides = array<i32>} : memref<160x32xf32, #tpu.memory_space<vmem>>, vector<1x32xf32>,
    %c129_159 = arith.constant 129 : index
    %c0_160 = arith.constant 0 : index
    %137 = vector.load %arg6[%c129_159, %c0_160] : memref<392x32xf32, #tpu.memory_space<vmem>>, vector<1x32xf32>
    %c58 = arith.constant 58 : index
    %c0_161 = arith.constant 0 : index
    %138 = vector.load %arg7[%c58, %c0_161] : memref<160x32xf32, #tpu.memory_space<vmem>>, vector<1x32xf32>
    tpu.vector_store %arg7[%c58, %c0_161], %137 {strides = array<i32>} : memref<160x32xf32, #tpu.memory_space<vmem>>, vector<1x32xf32>,
    %c131 = arith.constant 131 : index
    %c0_162 = arith.constant 0 : index
    %139 = vector.load %arg6[%c131, %c0_162] : memref<392x32xf32, #tpu.memory_space<vmem>>, vector<1x32xf32>
    %c59_163 = arith.constant 59 : index
    %c0_164 = arith.constant 0 : index
    %140 = vector.load %arg7[%c59_163, %c0_164] : memref<160x32xf32, #tpu.memory_space<vmem>>, vector<1x32xf32>
    tpu.vector_store %arg7[%c59_163, %c0_164], %139 {strides = array<i32>} : memref<160x32xf32, #tpu.memory_space<vmem>>, vector<1x32xf32>,
    %c133 = arith.constant 133 : index
    %c0_165 = arith.constant 0 : index
    %141 = vector.load %arg6[%c133, %c0_165] : memref<392x32xf32, #tpu.memory_space<vmem>>, vector<1x32xf32>
    %c60_166 = arith.constant 60 : index
    %c0_167 = arith.constant 0 : index
    %142 = vector.load %arg7[%c60_166, %c0_167] : memref<160x32xf32, #tpu.memory_space<vmem>>, vector<1x32xf32>
    tpu.vector_store %arg7[%c60_166, %c0_167], %141 {strides = array<i32>} : memref<160x32xf32, #tpu.memory_space<vmem>>, vector<1x32xf32>,
    %c135 = arith.constant 135 : index
    %c0_168 = arith.constant 0 : index
    %143 = vector.load %arg6[%c135, %c0_168] : memref<392x32xf32, #tpu.memory_space<vmem>>, vector<1x32xf32>
    %c61 = arith.constant 61 : index
    %c0_169 = arith.constant 0 : index
    %144 = vector.load %arg7[%c61, %c0_169] : memref<160x32xf32, #tpu.memory_space<vmem>>, vector<1x32xf32>
    tpu.vector_store %arg7[%c61, %c0_169], %143 {strides = array<i32>} : memref<160x32xf32, #tpu.memory_space<vmem>>, vector<1x32xf32>,
    %c137 = arith.constant 137 : index
    %c0_170 = arith.constant 0 : index
    %145 = vector.load %arg6[%c137, %c0_170] : memref<392x32xf32, #tpu.memory_space<vmem>>, vector<1x32xf32>
    %c62 = arith.constant 62 : index
    %c0_171 = arith.constant 0 : index
    %146 = vector.load %arg7[%c62, %c0_171] : memref<160x32xf32, #tpu.memory_space<vmem>>, vector<1x32xf32>
    tpu.vector_store %arg7[%c62, %c0_171], %145 {strides = array<i32>} : memref<160x32xf32, #tpu.memory_space<vmem>>, vector<1x32xf32>,
    %c155 = arith.constant 155 : index
    %c0_172 = arith.constant 0 : index
    %147 = vector.load %arg6[%c155, %c0_172] : memref<392x32xf32, #tpu.memory_space<vmem>>, vector<1x32xf32>
    %c65 = arith.constant 65 : index
    %c0_173 = arith.constant 0 : index
    %148 = vector.load %arg7[%c65, %c0_173] : memref<160x32xf32, #tpu.memory_space<vmem>>, vector<1x32xf32>
    tpu.vector_store %arg7[%c65, %c0_173], %147 {strides = array<i32>} : memref<160x32xf32, #tpu.memory_space<vmem>>, vector<1x32xf32>,
    %c157_174 = arith.constant 157 : index
    %c0_175 = arith.constant 0 : index
    %149 = vector.load %arg6[%c157_174, %c0_175] : memref<392x32xf32, #tpu.memory_space<vmem>>, vector<1x32xf32>
    %c66 = arith.constant 66 : index
    %c0_176 = arith.constant 0 : index
    %150 = vector.load %arg7[%c66, %c0_176] : memref<160x32xf32, #tpu.memory_space<vmem>>, vector<1x32xf32>
    tpu.vector_store %arg7[%c66, %c0_176], %149 {strides = array<i32>} : memref<160x32xf32, #tpu.memory_space<vmem>>, vector<1x32xf32>,
    %c159 = arith.constant 159 : index
    %c0_177 = arith.constant 0 : index
    %151 = vector.load %arg6[%c159, %c0_177] : memref<392x32xf32, #tpu.memory_space<vmem>>, vector<1x32xf32>
    %c67 = arith.constant 67 : index
    %c0_178 = arith.constant 0 : index
    %152 = vector.load %arg7[%c67, %c0_178] : memref<160x32xf32, #tpu.memory_space<vmem>>, vector<1x32xf32>
    tpu.vector_store %arg7[%c67, %c0_178], %151 {strides = array<i32>} : memref<160x32xf32, #tpu.memory_space<vmem>>, vector<1x32xf32>,
    %c161 = arith.constant 161 : index
    %c0_179 = arith.constant 0 : index
    %153 = vector.load %arg6[%c161, %c0_179] : memref<392x32xf32, #tpu.memory_space<vmem>>, vector<1x32xf32>
    %c68 = arith.constant 68 : index
    %c0_180 = arith.constant 0 : index
    %154 = vector.load %arg7[%c68, %c0_180] : memref<160x32xf32, #tpu.memory_space<vmem>>, vector<1x32xf32>
    tpu.vector_store %arg7[%c68, %c0_180], %153 {strides = array<i32>} : memref<160x32xf32, #tpu.memory_space<vmem>>, vector<1x32xf32>,
    %c163 = arith.constant 163 : index
    %c0_181 = arith.constant 0 : index
    %155 = vector.load %arg6[%c163, %c0_181] : memref<392x32xf32, #tpu.memory_space<vmem>>, vector<1x32xf32>
    %c69 = arith.constant 69 : index
    %c0_182 = arith.constant 0 : index
    %156 = vector.load %arg7[%c69, %c0_182] : memref<160x32xf32, #tpu.memory_space<vmem>>, vector<1x32xf32>
    tpu.vector_store %arg7[%c69, %c0_182], %155 {strides = array<i32>} : memref<160x32xf32, #tpu.memory_space<vmem>>, vector<1x32xf32>,
    %c165 = arith.constant 165 : index
    %c0_183 = arith.constant 0 : index
    %157 = vector.load %arg6[%c165, %c0_183] : memref<392x32xf32, #tpu.memory_space<vmem>>, vector<1x32xf32>
    %c70 = arith.constant 70 : index
    %c0_184 = arith.constant 0 : index
    %158 = vector.load %arg7[%c70, %c0_184] : memref<160x32xf32, #tpu.memory_space<vmem>>, vector<1x32xf32>
    tpu.vector_store %arg7[%c70, %c0_184], %157 {strides = array<i32>} : memref<160x32xf32, #tpu.memory_space<vmem>>, vector<1x32xf32>,
    %c211 = arith.constant 211 : index
    %c0_185 = arith.constant 0 : index
    %159 = vector.load %arg6[%c211, %c0_185] : memref<392x32xf32, #tpu.memory_space<vmem>>, vector<1x32xf32>
    %c89 = arith.constant 89 : index
    %c0_186 = arith.constant 0 : index
    %160 = vector.load %arg7[%c89, %c0_186] : memref<160x32xf32, #tpu.memory_space<vmem>>, vector<1x32xf32>
    tpu.vector_store %arg7[%c89, %c0_186], %159 {strides = array<i32>} : memref<160x32xf32, #tpu.memory_space<vmem>>, vector<1x32xf32>,
    %c213 = arith.constant 213 : index
    %c0_187 = arith.constant 0 : index
    %161 = vector.load %arg6[%c213, %c0_187] : memref<392x32xf32, #tpu.memory_space<vmem>>, vector<1x32xf32>
    %c90 = arith.constant 90 : index
    %c0_188 = arith.constant 0 : index
    %162 = vector.load %arg7[%c90, %c0_188] : memref<160x32xf32, #tpu.memory_space<vmem>>, vector<1x32xf32>
    tpu.vector_store %arg7[%c90, %c0_188], %161 {strides = array<i32>} : memref<160x32xf32, #tpu.memory_space<vmem>>, vector<1x32xf32>,
    %c215 = arith.constant 215 : index
    %c0_189 = arith.constant 0 : index
    %163 = vector.load %arg6[%c215, %c0_189] : memref<392x32xf32, #tpu.memory_space<vmem>>, vector<1x32xf32>
    %c91 = arith.constant 91 : index
    %c0_190 = arith.constant 0 : index
    %164 = vector.load %arg7[%c91, %c0_190] : memref<160x32xf32, #tpu.memory_space<vmem>>, vector<1x32xf32>
    tpu.vector_store %arg7[%c91, %c0_190], %163 {strides = array<i32>} : memref<160x32xf32, #tpu.memory_space<vmem>>, vector<1x32xf32>,
    %c217 = arith.constant 217 : index
    %c0_191 = arith.constant 0 : index
    %165 = vector.load %arg6[%c217, %c0_191] : memref<392x32xf32, #tpu.memory_space<vmem>>, vector<1x32xf32>
    %c92 = arith.constant 92 : index
    %c0_192 = arith.constant 0 : index
    %166 = vector.load %arg7[%c92, %c0_192] : memref<160x32xf32, #tpu.memory_space<vmem>>, vector<1x32xf32>
    tpu.vector_store %arg7[%c92, %c0_192], %165 {strides = array<i32>} : memref<160x32xf32, #tpu.memory_space<vmem>>, vector<1x32xf32>,
    %c219 = arith.constant 219 : index
    %c0_193 = arith.constant 0 : index
    %167 = vector.load %arg6[%c219, %c0_193] : memref<392x32xf32, #tpu.memory_space<vmem>>, vector<1x32xf32>
    %c93 = arith.constant 93 : index
    %c0_194 = arith.constant 0 : index
    %168 = vector.load %arg7[%c93, %c0_194] : memref<160x32xf32, #tpu.memory_space<vmem>>, vector<1x32xf32>
    tpu.vector_store %arg7[%c93, %c0_194], %167 {strides = array<i32>} : memref<160x32xf32, #tpu.memory_space<vmem>>, vector<1x32xf32>,
    %c221 = arith.constant 221 : index
    %c0_195 = arith.constant 0 : index
    %169 = vector.load %arg6[%c221, %c0_195] : memref<392x32xf32, #tpu.memory_space<vmem>>, vector<1x32xf32>
    %c94 = arith.constant 94 : index
    %c0_196 = arith.constant 0 : index
    %170 = vector.load %arg7[%c94, %c0_196] : memref<160x32xf32, #tpu.memory_space<vmem>>, vector<1x32xf32>
    tpu.vector_store %arg7[%c94, %c0_196], %169 {strides = array<i32>} : memref<160x32xf32, #tpu.memory_space<vmem>>, vector<1x32xf32>,
    %c239 = arith.constant 239 : index
    %c0_197 = arith.constant 0 : index
    %171 = vector.load %arg6[%c239, %c0_197] : memref<392x32xf32, #tpu.memory_space<vmem>>, vector<1x32xf32>
    %c97 = arith.constant 97 : index
    %c0_198 = arith.constant 0 : index
    %172 = vector.load %arg7[%c97, %c0_198] : memref<160x32xf32, #tpu.memory_space<vmem>>, vector<1x32xf32>
    tpu.vector_store %arg7[%c97, %c0_198], %171 {strides = array<i32>} : memref<160x32xf32, #tpu.memory_space<vmem>>, vector<1x32xf32>,
    %c241_199 = arith.constant 241 : index
    %c0_200 = arith.constant 0 : index
    %173 = vector.load %arg6[%c241_199, %c0_200] : memref<392x32xf32, #tpu.memory_space<vmem>>, vector<1x32xf32>
    %c98 = arith.constant 98 : index
    %c0_201 = arith.constant 0 : index
    %174 = vector.load %arg7[%c98, %c0_201] : memref<160x32xf32, #tpu.memory_space<vmem>>, vector<1x32xf32>
    tpu.vector_store %arg7[%c98, %c0_201], %173 {strides = array<i32>} : memref<160x32xf32, #tpu.memory_space<vmem>>, vector<1x32xf32>,
    %c243 = arith.constant 243 : index
    %c0_202 = arith.constant 0 : index
    %175 = vector.load %arg6[%c243, %c0_202] : memref<392x32xf32, #tpu.memory_space<vmem>>, vector<1x32xf32>
    %c99_203 = arith.constant 99 : index
    %c0_204 = arith.constant 0 : index
    %176 = vector.load %arg7[%c99_203, %c0_204] : memref<160x32xf32, #tpu.memory_space<vmem>>, vector<1x32xf32>
    tpu.vector_store %arg7[%c99_203, %c0_204], %175 {strides = array<i32>} : memref<160x32xf32, #tpu.memory_space<vmem>>, vector<1x32xf32>,
    %c245 = arith.constant 245 : index
    %c0_205 = arith.constant 0 : index
    %177 = vector.load %arg6[%c245, %c0_205] : memref<392x32xf32, #tpu.memory_space<vmem>>, vector<1x32xf32>
    %c100 = arith.constant 100 : index
    %c0_206 = arith.constant 0 : index
    %178 = vector.load %arg7[%c100, %c0_206] : memref<160x32xf32, #tpu.memory_space<vmem>>, vector<1x32xf32>
    tpu.vector_store %arg7[%c100, %c0_206], %177 {strides = array<i32>} : memref<160x32xf32, #tpu.memory_space<vmem>>, vector<1x32xf32>,
    %c247 = arith.constant 247 : index
    %c0_207 = arith.constant 0 : index
    %179 = vector.load %arg6[%c247, %c0_207] : memref<392x32xf32, #tpu.memory_space<vmem>>, vector<1x32xf32>
    %c101_208 = arith.constant 101 : index
    %c0_209 = arith.constant 0 : index
    %180 = vector.load %arg7[%c101_208, %c0_209] : memref<160x32xf32, #tpu.memory_space<vmem>>, vector<1x32xf32>
    tpu.vector_store %arg7[%c101_208, %c0_209], %179 {strides = array<i32>} : memref<160x32xf32, #tpu.memory_space<vmem>>, vector<1x32xf32>,
    %c249 = arith.constant 249 : index
    %c0_210 = arith.constant 0 : index
    %181 = vector.load %arg6[%c249, %c0_210] : memref<392x32xf32, #tpu.memory_space<vmem>>, vector<1x32xf32>
    %c102 = arith.constant 102 : index
    %c0_211 = arith.constant 0 : index
    %182 = vector.load %arg7[%c102, %c0_211] : memref<160x32xf32, #tpu.memory_space<vmem>>, vector<1x32xf32>
    tpu.vector_store %arg7[%c102, %c0_211], %181 {strides = array<i32>} : memref<160x32xf32, #tpu.memory_space<vmem>>, vector<1x32xf32>,
    %c267 = arith.constant 267 : index
    %c0_212 = arith.constant 0 : index
    %183 = vector.load %arg6[%c267, %c0_212] : memref<392x32xf32, #tpu.memory_space<vmem>>, vector<1x32xf32>
    %c105_213 = arith.constant 105 : index
    %c0_214 = arith.constant 0 : index
    %184 = vector.load %arg7[%c105_213, %c0_214] : memref<160x32xf32, #tpu.memory_space<vmem>>, vector<1x32xf32>
    tpu.vector_store %arg7[%c105_213, %c0_214], %183 {strides = array<i32>} : memref<160x32xf32, #tpu.memory_space<vmem>>, vector<1x32xf32>,
    %c269_215 = arith.constant 269 : index
    %c0_216 = arith.constant 0 : index
    %185 = vector.load %arg6[%c269_215, %c0_216] : memref<392x32xf32, #tpu.memory_space<vmem>>, vector<1x32xf32>
    %c106 = arith.constant 106 : index
    %c0_217 = arith.constant 0 : index
    %186 = vector.load %arg7[%c106, %c0_217] : memref<160x32xf32, #tpu.memory_space<vmem>>, vector<1x32xf32>
    tpu.vector_store %arg7[%c106, %c0_217], %185 {strides = array<i32>} : memref<160x32xf32, #tpu.memory_space<vmem>>, vector<1x32xf32>,
    %c271 = arith.constant 271 : index
    %c0_218 = arith.constant 0 : index
    %187 = vector.load %arg6[%c271, %c0_218] : memref<392x32xf32, #tpu.memory_space<vmem>>, vector<1x32xf32>
    %c107_219 = arith.constant 107 : index
    %c0_220 = arith.constant 0 : index
    %188 = vector.load %arg7[%c107_219, %c0_220] : memref<160x32xf32, #tpu.memory_space<vmem>>, vector<1x32xf32>
    tpu.vector_store %arg7[%c107_219, %c0_220], %187 {strides = array<i32>} : memref<160x32xf32, #tpu.memory_space<vmem>>, vector<1x32xf32>,
    %c273 = arith.constant 273 : index
    %c0_221 = arith.constant 0 : index
    %189 = vector.load %arg6[%c273, %c0_221] : memref<392x32xf32, #tpu.memory_space<vmem>>, vector<1x32xf32>
    %c108_222 = arith.constant 108 : index
    %c0_223 = arith.constant 0 : index
    %190 = vector.load %arg7[%c108_222, %c0_223] : memref<160x32xf32, #tpu.memory_space<vmem>>, vector<1x32xf32>
    tpu.vector_store %arg7[%c108_222, %c0_223], %189 {strides = array<i32>} : memref<160x32xf32, #tpu.memory_space<vmem>>, vector<1x32xf32>,
    %c275 = arith.constant 275 : index
    %c0_224 = arith.constant 0 : index
    %191 = vector.load %arg6[%c275, %c0_224] : memref<392x32xf32, #tpu.memory_space<vmem>>, vector<1x32xf32>
    %c109_225 = arith.constant 109 : index
    %c0_226 = arith.constant 0 : index
    %192 = vector.load %arg7[%c109_225, %c0_226] : memref<160x32xf32, #tpu.memory_space<vmem>>, vector<1x32xf32>
    tpu.vector_store %arg7[%c109_225, %c0_226], %191 {strides = array<i32>} : memref<160x32xf32, #tpu.memory_space<vmem>>, vector<1x32xf32>,
    %c277 = arith.constant 277 : index
    %c0_227 = arith.constant 0 : index
    %193 = vector.load %arg6[%c277, %c0_227] : memref<392x32xf32, #tpu.memory_space<vmem>>, vector<1x32xf32>
    %c110 = arith.constant 110 : index
    %c0_228 = arith.constant 0 : index
    %194 = vector.load %arg7[%c110, %c0_228] : memref<160x32xf32, #tpu.memory_space<vmem>>, vector<1x32xf32>
    tpu.vector_store %arg7[%c110, %c0_228], %193 {strides = array<i32>} : memref<160x32xf32, #tpu.memory_space<vmem>>, vector<1x32xf32>,
    %c295 = arith.constant 295 : index
    %c0_229 = arith.constant 0 : index
    %195 = vector.load %arg6[%c295, %c0_229] : memref<392x32xf32, #tpu.memory_space<vmem>>, vector<1x32xf32>
    %c113 = arith.constant 113 : index
    %c0_230 = arith.constant 0 : index
    %196 = vector.load %arg7[%c113, %c0_230] : memref<160x32xf32, #tpu.memory_space<vmem>>, vector<1x32xf32>
    tpu.vector_store %arg7[%c113, %c0_230], %195 {strides = array<i32>} : memref<160x32xf32, #tpu.memory_space<vmem>>, vector<1x32xf32>,
    %c297_231 = arith.constant 297 : index
    %c0_232 = arith.constant 0 : index
    %197 = vector.load %arg6[%c297_231, %c0_232] : memref<392x32xf32, #tpu.memory_space<vmem>>, vector<1x32xf32>
    %c114 = arith.constant 114 : index
    %c0_233 = arith.constant 0 : index
    %198 = vector.load %arg7[%c114, %c0_233] : memref<160x32xf32, #tpu.memory_space<vmem>>, vector<1x32xf32>
    tpu.vector_store %arg7[%c114, %c0_233], %197 {strides = array<i32>} : memref<160x32xf32, #tpu.memory_space<vmem>>, vector<1x32xf32>,
    %c299 = arith.constant 299 : index
    %c0_234 = arith.constant 0 : index
    %199 = vector.load %arg6[%c299, %c0_234] : memref<392x32xf32, #tpu.memory_space<vmem>>, vector<1x32xf32>
    %c115_235 = arith.constant 115 : index
    %c0_236 = arith.constant 0 : index
    %200 = vector.load %arg7[%c115_235, %c0_236] : memref<160x32xf32, #tpu.memory_space<vmem>>, vector<1x32xf32>
    tpu.vector_store %arg7[%c115_235, %c0_236], %199 {strides = array<i32>} : memref<160x32xf32, #tpu.memory_space<vmem>>, vector<1x32xf32>,
    %c301 = arith.constant 301 : index
    %c0_237 = arith.constant 0 : index
    %201 = vector.load %arg6[%c301, %c0_237] : memref<392x32xf32, #tpu.memory_space<vmem>>, vector<1x32xf32>
    %c116 = arith.constant 116 : index
    %c0_238 = arith.constant 0 : index
    %202 = vector.load %arg7[%c116, %c0_238] : memref<160x32xf32, #tpu.memory_space<vmem>>, vector<1x32xf32>
    tpu.vector_store %arg7[%c116, %c0_238], %201 {strides = array<i32>} : memref<160x32xf32, #tpu.memory_space<vmem>>, vector<1x32xf32>,
    %c303 = arith.constant 303 : index
    %c0_239 = arith.constant 0 : index
    %203 = vector.load %arg6[%c303, %c0_239] : memref<392x32xf32, #tpu.memory_space<vmem>>, vector<1x32xf32>
    %c117 = arith.constant 117 : index
    %c0_240 = arith.constant 0 : index
    %204 = vector.load %arg7[%c117, %c0_240] : memref<160x32xf32, #tpu.memory_space<vmem>>, vector<1x32xf32>
    tpu.vector_store %arg7[%c117, %c0_240], %203 {strides = array<i32>} : memref<160x32xf32, #tpu.memory_space<vmem>>, vector<1x32xf32>,
    %c305 = arith.constant 305 : index
    %c0_241 = arith.constant 0 : index
    %205 = vector.load %arg6[%c305, %c0_241] : memref<392x32xf32, #tpu.memory_space<vmem>>, vector<1x32xf32>
    %c118 = arith.constant 118 : index
    %c0_242 = arith.constant 0 : index
    %206 = vector.load %arg7[%c118, %c0_242] : memref<160x32xf32, #tpu.memory_space<vmem>>, vector<1x32xf32>
    tpu.vector_store %arg7[%c118, %c0_242], %205 {strides = array<i32>} : memref<160x32xf32, #tpu.memory_space<vmem>>, vector<1x32xf32>,
    %c323 = arith.constant 323 : index
    %c0_243 = arith.constant 0 : index
    %207 = vector.load %arg6[%c323, %c0_243] : memref<392x32xf32, #tpu.memory_space<vmem>>, vector<1x32xf32>
    %c121 = arith.constant 121 : index
    %c0_244 = arith.constant 0 : index
    %208 = vector.load %arg7[%c121, %c0_244] : memref<160x32xf32, #tpu.memory_space<vmem>>, vector<1x32xf32>
    tpu.vector_store %arg7[%c121, %c0_244], %207 {strides = array<i32>} : memref<160x32xf32, #tpu.memory_space<vmem>>, vector<1x32xf32>,
    %c325_245 = arith.constant 325 : index
    %c0_246 = arith.constant 0 : index
    %209 = vector.load %arg6[%c325_245, %c0_246] : memref<392x32xf32, #tpu.memory_space<vmem>>, vector<1x32xf32>
    %c122 = arith.constant 122 : index
    %c0_247 = arith.constant 0 : index
    %210 = vector.load %arg7[%c122, %c0_247] : memref<160x32xf32, #tpu.memory_space<vmem>>, vector<1x32xf32>
    tpu.vector_store %arg7[%c122, %c0_247], %209 {strides = array<i32>} : memref<160x32xf32, #tpu.memory_space<vmem>>, vector<1x32xf32>,
    %c327 = arith.constant 327 : index
    %c0_248 = arith.constant 0 : index
    %211 = vector.load %arg6[%c327, %c0_248] : memref<392x32xf32, #tpu.memory_space<vmem>>, vector<1x32xf32>
    %c123 = arith.constant 123 : index
    %c0_249 = arith.constant 0 : index
    %212 = vector.load %arg7[%c123, %c0_249] : memref<160x32xf32, #tpu.memory_space<vmem>>, vector<1x32xf32>
    tpu.vector_store %arg7[%c123, %c0_249], %211 {strides = array<i32>} : memref<160x32xf32, #tpu.memory_space<vmem>>, vector<1x32xf32>,
    %c329 = arith.constant 329 : index
    %c0_250 = arith.constant 0 : index
    %213 = vector.load %arg6[%c329, %c0_250] : memref<392x32xf32, #tpu.memory_space<vmem>>, vector<1x32xf32>
    %c124 = arith.constant 124 : index
    %c0_251 = arith.constant 0 : index
    %214 = vector.load %arg7[%c124, %c0_251] : memref<160x32xf32, #tpu.memory_space<vmem>>, vector<1x32xf32>
    tpu.vector_store %arg7[%c124, %c0_251], %213 {strides = array<i32>} : memref<160x32xf32, #tpu.memory_space<vmem>>, vector<1x32xf32>,
    %c331 = arith.constant 331 : index
    %c0_252 = arith.constant 0 : index
    %215 = vector.load %arg6[%c331, %c0_252] : memref<392x32xf32, #tpu.memory_space<vmem>>, vector<1x32xf32>
    %c125 = arith.constant 125 : index
    %c0_253 = arith.constant 0 : index
    %216 = vector.load %arg7[%c125, %c0_253] : memref<160x32xf32, #tpu.memory_space<vmem>>, vector<1x32xf32>
    tpu.vector_store %arg7[%c125, %c0_253], %215 {strides = array<i32>} : memref<160x32xf32, #tpu.memory_space<vmem>>, vector<1x32xf32>,
    %c333 = arith.constant 333 : index
    %c0_254 = arith.constant 0 : index
    %217 = vector.load %arg6[%c333, %c0_254] : memref<392x32xf32, #tpu.memory_space<vmem>>, vector<1x32xf32>
    %c126 = arith.constant 126 : index
    %c0_255 = arith.constant 0 : index
    %218 = vector.load %arg7[%c126, %c0_255] : memref<160x32xf32, #tpu.memory_space<vmem>>, vector<1x32xf32>
    tpu.vector_store %arg7[%c126, %c0_255], %217 {strides = array<i32>} : memref<160x32xf32, #tpu.memory_space<vmem>>, vector<1x32xf32>,
    %c351 = arith.constant 351 : index
    %c0_256 = arith.constant 0 : index
    %219 = vector.load %arg6[%c351, %c0_256] : memref<392x32xf32, #tpu.memory_space<vmem>>, vector<1x32xf32>
    %c129_257 = arith.constant 129 : index
    %c0_258 = arith.constant 0 : index
    %220 = vector.load %arg7[%c129_257, %c0_258] : memref<160x32xf32, #tpu.memory_space<vmem>>, vector<1x32xf32>
    tpu.vector_store %arg7[%c129_257, %c0_258], %219 {strides = array<i32>} : memref<160x32xf32, #tpu.memory_space<vmem>>, vector<1x32xf32>,
    %c353_259 = arith.constant 353 : index
    %c0_260 = arith.constant 0 : index
    %221 = vector.load %arg6[%c353_259, %c0_260] : memref<392x32xf32, #tpu.memory_space<vmem>>, vector<1x32xf32>
    %c130 = arith.constant 130 : index
    %c0_261 = arith.constant 0 : index
    %222 = vector.load %arg7[%c130, %c0_261] : memref<160x32xf32, #tpu.memory_space<vmem>>, vector<1x32xf32>
    tpu.vector_store %arg7[%c130, %c0_261], %221 {strides = array<i32>} : memref<160x32xf32, #tpu.memory_space<vmem>>, vector<1x32xf32>,
    %c355 = arith.constant 355 : index
    %c0_262 = arith.constant 0 : index
    %223 = vector.load %arg6[%c355, %c0_262] : memref<392x32xf32, #tpu.memory_space<vmem>>, vector<1x32xf32>
    %c131_263 = arith.constant 131 : index
    %c0_264 = arith.constant 0 : index
    %224 = vector.load %arg7[%c131_263, %c0_264] : memref<160x32xf32, #tpu.memory_space<vmem>>, vector<1x32xf32>
    tpu.vector_store %arg7[%c131_263, %c0_264], %223 {strides = array<i32>} : memref<160x32xf32, #tpu.memory_space<vmem>>, vector<1x32xf32>,
    %c357 = arith.constant 357 : index
    %c0_265 = arith.constant 0 : index
    %225 = vector.load %arg6[%c357, %c0_265] : memref<392x32xf32, #tpu.memory_space<vmem>>, vector<1x32xf32>
    %c132_266 = arith.constant 132 : index
    %c0_267 = arith.constant 0 : index
    %226 = vector.load %arg7[%c132_266, %c0_267] : memref<160x32xf32, #tpu.memory_space<vmem>>, vector<1x32xf32>
    tpu.vector_store %arg7[%c132_266, %c0_267], %225 {strides = array<i32>} : memref<160x32xf32, #tpu.memory_space<vmem>>, vector<1x32xf32>,
    %c359 = arith.constant 359 : index
    %c0_268 = arith.constant 0 : index
    %227 = vector.load %arg6[%c359, %c0_268] : memref<392x32xf32, #tpu.memory_space<vmem>>, vector<1x32xf32>
    %c133_269 = arith.constant 133 : index
    %c0_270 = arith.constant 0 : index
    %228 = vector.load %arg7[%c133_269, %c0_270] : memref<160x32xf32, #tpu.memory_space<vmem>>, vector<1x32xf32>
    tpu.vector_store %arg7[%c133_269, %c0_270], %227 {strides = array<i32>} : memref<160x32xf32, #tpu.memory_space<vmem>>, vector<1x32xf32>,
    %c361 = arith.constant 361 : index
    %c0_271 = arith.constant 0 : index
    %229 = vector.load %arg6[%c361, %c0_271] : memref<392x32xf32, #tpu.memory_space<vmem>>, vector<1x32xf32>
    %c134 = arith.constant 134 : index
    %c0_272 = arith.constant 0 : index
    %230 = vector.load %arg7[%c134, %c0_272] : memref<160x32xf32, #tpu.memory_space<vmem>>, vector<1x32xf32>
    tpu.vector_store %arg7[%c134, %c0_272], %229 {strides = array<i32>} : memref<160x32xf32, #tpu.memory_space<vmem>>, vector<1x32xf32>,
    %c7 = arith.constant 7 : index
    %c0_273 = arith.constant 0 : index
    %231 = vector.load %arg7[%c7, %c0_273] : memref<160x32xf32, #tpu.memory_space<vmem>>, vector<128x32xf32>
    %c0_274 = arith.constant 0 : index
    %c0_275 = arith.constant 0 : index
    %232 = vector.load %arg8[%c0_274, %c0_275] : memref<128x288xf32, #tpu.memory_space<vmem>>, vector<128x32xf32>
    tpu.vector_store %arg8[%c0_274, %c0_275], %231 {strides = array<i32>} : memref<128x288xf32, #tpu.memory_space<vmem>>, vector<128x32xf32>,
    %c8_276 = arith.constant 8 : index
    %c0_277 = arith.constant 0 : index
    %233 = vector.load %arg7[%c8_276, %c0_277] : memref<160x32xf32, #tpu.memory_space<vmem>>, vector<128x32xf32>
    %c0_278 = arith.constant 0 : index
    %c32_279 = arith.constant 32 : index
    %234 = vector.load %arg8[%c0_278, %c32_279] : memref<128x288xf32, #tpu.memory_space<vmem>>, vector<128x32xf32>
    tpu.vector_store %arg8[%c0_278, %c32_279], %233 {strides = array<i32>} : memref<128x288xf32, #tpu.memory_space<vmem>>, vector<128x32xf32>,
    %c9 = arith.constant 9 : index
    %c0_280 = arith.constant 0 : index
    %235 = vector.load %arg7[%c9, %c0_280] : memref<160x32xf32, #tpu.memory_space<vmem>>, vector<128x32xf32>
    %c0_281 = arith.constant 0 : index
    %c64 = arith.constant 64 : index
    %236 = vector.load %arg8[%c0_281, %c64] : memref<128x288xf32, #tpu.memory_space<vmem>>, vector<128x32xf32>
    tpu.vector_store %arg8[%c0_281, %c64], %235 {strides = array<i32>} : memref<128x288xf32, #tpu.memory_space<vmem>>, vector<128x32xf32>,
    %c15_282 = arith.constant 15 : index
    %c0_283 = arith.constant 0 : index
    %237 = vector.load %arg7[%c15_282, %c0_283] : memref<160x32xf32, #tpu.memory_space<vmem>>, vector<128x32xf32>
    %c0_284 = arith.constant 0 : index
    %c96_285 = arith.constant 96 : index
    %238 = vector.load %arg8[%c0_284, %c96_285] : memref<128x288xf32, #tpu.memory_space<vmem>>, vector<128x32xf32>
    tpu.vector_store %arg8[%c0_284, %c96_285], %237 {strides = array<i32>} : memref<128x288xf32, #tpu.memory_space<vmem>>, vector<128x32xf32>,
    %c16_286 = arith.constant 16 : index
    %c0_287 = arith.constant 0 : index
    %239 = vector.load %arg7[%c16_286, %c0_287] : memref<160x32xf32, #tpu.memory_space<vmem>>, vector<128x32xf32>
    %c0_288 = arith.constant 0 : index
    %c128 = arith.constant 128 : index
    %240 = vector.load %arg8[%c0_288, %c128] : memref<128x288xf32, #tpu.memory_space<vmem>>, vector<128x32xf32>
    tpu.vector_store %arg8[%c0_288, %c128], %239 {strides = array<i32>} : memref<128x288xf32, #tpu.memory_space<vmem>>, vector<128x32xf32>,
    %c17_289 = arith.constant 17 : index
    %c0_290 = arith.constant 0 : index
    %241 = vector.load %arg7[%c17_289, %c0_290] : memref<160x32xf32, #tpu.memory_space<vmem>>, vector<128x32xf32>
    %c0_291 = arith.constant 0 : index
    %c160 = arith.constant 160 : index
    %242 = vector.load %arg8[%c0_291, %c160] : memref<128x288xf32, #tpu.memory_space<vmem>>, vector<128x32xf32>
    tpu.vector_store %arg8[%c0_291, %c160], %241 {strides = array<i32>} : memref<128x288xf32, #tpu.memory_space<vmem>>, vector<128x32xf32>,
    %c23_292 = arith.constant 23 : index
    %c0_293 = arith.constant 0 : index
    %243 = vector.load %arg7[%c23_292, %c0_293] : memref<160x32xf32, #tpu.memory_space<vmem>>, vector<128x32xf32>
    %c0_294 = arith.constant 0 : index
    %c192_295 = arith.constant 192 : index
    %244 = vector.load %arg8[%c0_294, %c192_295] : memref<128x288xf32, #tpu.memory_space<vmem>>, vector<128x32xf32>
    tpu.vector_store %arg8[%c0_294, %c192_295], %243 {strides = array<i32>} : memref<128x288xf32, #tpu.memory_space<vmem>>, vector<128x32xf32>,
    %c24_296 = arith.constant 24 : index
    %c0_297 = arith.constant 0 : index
    %245 = vector.load %arg7[%c24_296, %c0_297] : memref<160x32xf32, #tpu.memory_space<vmem>>, vector<128x32xf32>
    %c0_298 = arith.constant 0 : index
    %c224 = arith.constant 224 : index
    %246 = vector.load %arg8[%c0_298, %c224] : memref<128x288xf32, #tpu.memory_space<vmem>>, vector<128x32xf32>
    tpu.vector_store %arg8[%c0_298, %c224], %245 {strides = array<i32>} : memref<128x288xf32, #tpu.memory_space<vmem>>, vector<128x32xf32>,
    %c25_299 = arith.constant 25 : index
    %c0_300 = arith.constant 0 : index
    %247 = vector.load %arg7[%c25_299, %c0_300] : memref<160x32xf32, #tpu.memory_space<vmem>>, vector<128x32xf32>
    %c0_301 = arith.constant 0 : index
    %c256 = arith.constant 256 : index
    %248 = vector.load %arg8[%c0_301, %c256] : memref<128x288xf32, #tpu.memory_space<vmem>>, vector<128x32xf32>
    tpu.vector_store %arg8[%c0_301, %c256], %247 {strides = array<i32>} : memref<128x288xf32, #tpu.memory_space<vmem>>, vector<128x32xf32>,
    %c0_302 = arith.constant 0 : index
    %c0_303 = arith.constant 0 : index
    %249 = vector.load %arg8[%c0_302, %c0_303] : memref<128x288xf32, #tpu.memory_space<vmem>>, vector<128x288xf32>
    %c48_304 = arith.constant 48 : index
    %c0_305 = arith.constant 0 : index
    %250 = vector.load %arg1[%c48_304, %c0_305] : memref<1064x128xf32, #tpu.memory_space<vmem>>, vector<288x64xf32>
    %cst_306 = arith.constant dense<0.000000e+00> : vector<128x64xf32>
    %251 = tpu.matmul %249, %250, %cst_306 {dimension_numbers = #tpu.dot_dimension_numbers<[1], [0], [0], [1], [0, 0, 1, 1], [], []>} : vector<128x288xf32>, vector<288x64xf32>, vector<128x64xf32> -> vector<128x64xf32>
    %c336 = arith.constant 336 : index
    %c0_307 = arith.constant 0 : index
    %252 = vector.load %arg1[%c336, %c0_307] : memref<1064x128xf32, #tpu.memory_space<vmem>>, vector<1x64xf32>
    %253 = vector.broadcast %252 : vector<1x64xf32> to vector<128x64xf32>
    %254 = arith.addf %251, %253 : vector<128x64xf32>
    %cst_308 = arith.constant 0.000000e+00 : f32
    %255 = vector.broadcast %cst_308 : f32 to vector<128x64xf32>
    %256 = arith.maximumf %254, %255 : vector<128x64xf32>
    %c0_309 = arith.constant 0 : index
    %c0_310 = arith.constant 0 : index
    %257 = vector.load %arg9[%c0_309, %c0_310] : memref<144x64xf32, #tpu.memory_space<vmem>>, vector<128x64xf32>
    tpu.vector_store %arg9[%c0_309, %c0_310], %256 {strides = array<i32>} : memref<144x64xf32, #tpu.memory_space<vmem>>, vector<128x64xf32>,
    %c0_311 = arith.constant 0 : index
    %c0_312 = arith.constant 0 : index
    %258 = vector.load %arg9[%c0_311, %c0_312] : memref<144x64xf32, #tpu.memory_space<vmem>>, vector<128x64xf32>
    %c1_313 = arith.constant 1 : index
    %c0_314 = arith.constant 0 : index
    %259 = vector.load %arg9[%c1_313, %c0_314] : memref<144x64xf32, #tpu.memory_space<vmem>>, vector<128x64xf32>
    %260 = arith.maximumf %258, %259 : vector<128x64xf32>
    %c8_315 = arith.constant 8 : index
    %c0_316 = arith.constant 0 : index
    %261 = vector.load %arg9[%c8_315, %c0_316] : memref<144x64xf32, #tpu.memory_space<vmem>>, vector<128x64xf32>
    %c9_317 = arith.constant 9 : index
    %c0_318 = arith.constant 0 : index
    %262 = vector.load %arg9[%c9_317, %c0_318] : memref<144x64xf32, #tpu.memory_space<vmem>>, vector<128x64xf32>
    %263 = arith.maximumf %261, %262 : vector<128x64xf32>
    %264 = arith.maximumf %260, %263 : vector<128x64xf32>
    %c0_319 = arith.constant 0 : index
    %c0_320 = arith.constant 0 : index
    %265 = vector.load %arg10[%c0_319, %c0_320] : memref<128x64xf32, #tpu.memory_space<vmem>>, vector<128x64xf32>
    tpu.vector_store %arg10[%c0_319, %c0_320], %264 {strides = array<i32>} : memref<128x64xf32, #tpu.memory_space<vmem>>, vector<128x64xf32>,
    %cst_321 = arith.constant 0.000000e+00 : f32
    %266 = vector.broadcast %cst_321 : f32 to vector<8x576xf32>
    %c0_322 = arith.constant 0 : index
    %c0_323 = arith.constant 0 : index
    %267 = vector.load %arg11[%c0_322, %c0_323] : memref<8x576xf32, #tpu.memory_space<vmem>>, vector<8x576xf32>
    tpu.vector_store %arg11[%c0_322, %c0_323], %266 {strides = array<i32>} : memref<8x576xf32, #tpu.memory_space<vmem>>, vector<8x576xf32>,
    %c9_324 = arith.constant 9 : index
    %c0_325 = arith.constant 0 : index
    %268 = vector.load %arg10[%c9_324, %c0_325] : memref<128x64xf32, #tpu.memory_space<vmem>>, vector<1x64xf32>
    %c0_326 = arith.constant 0 : index
    %c0_327 = arith.constant 0 : index
    %269 = vector.load %arg11[%c0_326, %c0_327] : memref<8x576xf32, #tpu.memory_space<vmem>>, vector<1x64xf32>
    tpu.vector_store %arg11[%c0_326, %c0_327], %268 {strides = array<i32>} : memref<8x576xf32, #tpu.memory_space<vmem>>, vector<1x64xf32>,
    %c11 = arith.constant 11 : index
    %c0_328 = arith.constant 0 : index
    %270 = vector.load %arg10[%c11, %c0_328] : memref<128x64xf32, #tpu.memory_space<vmem>>, vector<1x64xf32>
    %c0_329 = arith.constant 0 : index
    %c64_330 = arith.constant 64 : index
    %271 = vector.load %arg11[%c0_329, %c64_330] : memref<8x576xf32, #tpu.memory_space<vmem>>, vector<1x64xf32>
    tpu.vector_store %arg11[%c0_329, %c64_330], %270 {strides = array<i32>} : memref<8x576xf32, #tpu.memory_space<vmem>>, vector<1x64xf32>,
    %c13 = arith.constant 13 : index
    %c0_331 = arith.constant 0 : index
    %272 = vector.load %arg10[%c13, %c0_331] : memref<128x64xf32, #tpu.memory_space<vmem>>, vector<1x64xf32>
    %c0_332 = arith.constant 0 : index
    %c128_333 = arith.constant 128 : index
    %273 = vector.load %arg11[%c0_332, %c128_333] : memref<8x576xf32, #tpu.memory_space<vmem>>, vector<1x64xf32>
    tpu.vector_store %arg11[%c0_332, %c128_333], %272 {strides = array<i32>} : memref<8x576xf32, #tpu.memory_space<vmem>>, vector<1x64xf32>,
    %c25_334 = arith.constant 25 : index
    %c0_335 = arith.constant 0 : index
    %274 = vector.load %arg10[%c25_334, %c0_335] : memref<128x64xf32, #tpu.memory_space<vmem>>, vector<1x64xf32>
    %c0_336 = arith.constant 0 : index
    %c192_337 = arith.constant 192 : index
    %275 = vector.load %arg11[%c0_336, %c192_337] : memref<8x576xf32, #tpu.memory_space<vmem>>, vector<1x64xf32>
    tpu.vector_store %arg11[%c0_336, %c192_337], %274 {strides = array<i32>} : memref<8x576xf32, #tpu.memory_space<vmem>>, vector<1x64xf32>,
    %c27_338 = arith.constant 27 : index
    %c0_339 = arith.constant 0 : index
    %276 = vector.load %arg10[%c27_338, %c0_339] : memref<128x64xf32, #tpu.memory_space<vmem>>, vector<1x64xf32>
    %c0_340 = arith.constant 0 : index
    %c256_341 = arith.constant 256 : index
    %277 = vector.load %arg11[%c0_340, %c256_341] : memref<8x576xf32, #tpu.memory_space<vmem>>, vector<1x64xf32>
    tpu.vector_store %arg11[%c0_340, %c256_341], %276 {strides = array<i32>} : memref<8x576xf32, #tpu.memory_space<vmem>>, vector<1x64xf32>,
    %c29_342 = arith.constant 29 : index
    %c0_343 = arith.constant 0 : index
    %278 = vector.load %arg10[%c29_342, %c0_343] : memref<128x64xf32, #tpu.memory_space<vmem>>, vector<1x64xf32>
    %c0_344 = arith.constant 0 : index
    %c320 = arith.constant 320 : index
    %279 = vector.load %arg11[%c0_344, %c320] : memref<8x576xf32, #tpu.memory_space<vmem>>, vector<1x64xf32>
    tpu.vector_store %arg11[%c0_344, %c320], %278 {strides = array<i32>} : memref<8x576xf32, #tpu.memory_space<vmem>>, vector<1x64xf32>,
    %c41_345 = arith.constant 41 : index
    %c0_346 = arith.constant 0 : index
    %280 = vector.load %arg10[%c41_345, %c0_346] : memref<128x64xf32, #tpu.memory_space<vmem>>, vector<1x64xf32>
    %c0_347 = arith.constant 0 : index
    %c384 = arith.constant 384 : index
    %281 = vector.load %arg11[%c0_347, %c384] : memref<8x576xf32, #tpu.memory_space<vmem>>, vector<1x64xf32>
    tpu.vector_store %arg11[%c0_347, %c384], %280 {strides = array<i32>} : memref<8x576xf32, #tpu.memory_space<vmem>>, vector<1x64xf32>,
    %c43_348 = arith.constant 43 : index
    %c0_349 = arith.constant 0 : index
    %282 = vector.load %arg10[%c43_348, %c0_349] : memref<128x64xf32, #tpu.memory_space<vmem>>, vector<1x64xf32>
    %c0_350 = arith.constant 0 : index
    %c448 = arith.constant 448 : index
    %283 = vector.load %arg11[%c0_350, %c448] : memref<8x576xf32, #tpu.memory_space<vmem>>, vector<1x64xf32>
    tpu.vector_store %arg11[%c0_350, %c448], %282 {strides = array<i32>} : memref<8x576xf32, #tpu.memory_space<vmem>>, vector<1x64xf32>,
    %c45_351 = arith.constant 45 : index
    %c0_352 = arith.constant 0 : index
    %284 = vector.load %arg10[%c45_351, %c0_352] : memref<128x64xf32, #tpu.memory_space<vmem>>, vector<1x64xf32>
    %c0_353 = arith.constant 0 : index
    %c512 = arith.constant 512 : index
    %285 = vector.load %arg11[%c0_353, %c512] : memref<8x576xf32, #tpu.memory_space<vmem>>, vector<1x64xf32>
    tpu.vector_store %arg11[%c0_353, %c512], %284 {strides = array<i32>} : memref<8x576xf32, #tpu.memory_space<vmem>>, vector<1x64xf32>,
    %c73_354 = arith.constant 73 : index
    %c0_355 = arith.constant 0 : index
    %286 = vector.load %arg10[%c73_354, %c0_355] : memref<128x64xf32, #tpu.memory_space<vmem>>, vector<1x64xf32>
    %c1_356 = arith.constant 1 : index
    %c0_357 = arith.constant 0 : index
    %287 = vector.load %arg11[%c1_356, %c0_357] : memref<8x576xf32, #tpu.memory_space<vmem>>, vector<1x64xf32>
    tpu.vector_store %arg11[%c1_356, %c0_357], %286 {strides = array<i32>} : memref<8x576xf32, #tpu.memory_space<vmem>>, vector<1x64xf32>,
    %c75_358 = arith.constant 75 : index
    %c0_359 = arith.constant 0 : index
    %288 = vector.load %arg10[%c75_358, %c0_359] : memref<128x64xf32, #tpu.memory_space<vmem>>, vector<1x64xf32>
    %c1_360 = arith.constant 1 : index
    %c64_361 = arith.constant 64 : index
    %289 = vector.load %arg11[%c1_360, %c64_361] : memref<8x576xf32, #tpu.memory_space<vmem>>, vector<1x64xf32>
    tpu.vector_store %arg11[%c1_360, %c64_361], %288 {strides = array<i32>} : memref<8x576xf32, #tpu.memory_space<vmem>>, vector<1x64xf32>,
    %c77_362 = arith.constant 77 : index
    %c0_363 = arith.constant 0 : index
    %290 = vector.load %arg10[%c77_362, %c0_363] : memref<128x64xf32, #tpu.memory_space<vmem>>, vector<1x64xf32>
    %c1_364 = arith.constant 1 : index
    %c128_365 = arith.constant 128 : index
    %291 = vector.load %arg11[%c1_364, %c128_365] : memref<8x576xf32, #tpu.memory_space<vmem>>, vector<1x64xf32>
    tpu.vector_store %arg11[%c1_364, %c128_365], %290 {strides = array<i32>} : memref<8x576xf32, #tpu.memory_space<vmem>>, vector<1x64xf32>,
    %c89_366 = arith.constant 89 : index
    %c0_367 = arith.constant 0 : index
    %292 = vector.load %arg10[%c89_366, %c0_367] : memref<128x64xf32, #tpu.memory_space<vmem>>, vector<1x64xf32>
    %c1_368 = arith.constant 1 : index
    %c192_369 = arith.constant 192 : index
    %293 = vector.load %arg11[%c1_368, %c192_369] : memref<8x576xf32, #tpu.memory_space<vmem>>, vector<1x64xf32>
    tpu.vector_store %arg11[%c1_368, %c192_369], %292 {strides = array<i32>} : memref<8x576xf32, #tpu.memory_space<vmem>>, vector<1x64xf32>,
    %c91_370 = arith.constant 91 : index
    %c0_371 = arith.constant 0 : index
    %294 = vector.load %arg10[%c91_370, %c0_371] : memref<128x64xf32, #tpu.memory_space<vmem>>, vector<1x64xf32>
    %c1_372 = arith.constant 1 : index
    %c256_373 = arith.constant 256 : index
    %295 = vector.load %arg11[%c1_372, %c256_373] : memref<8x576xf32, #tpu.memory_space<vmem>>, vector<1x64xf32>
    tpu.vector_store %arg11[%c1_372, %c256_373], %294 {strides = array<i32>} : memref<8x576xf32, #tpu.memory_space<vmem>>, vector<1x64xf32>,
    %c93_374 = arith.constant 93 : index
    %c0_375 = arith.constant 0 : index
    %296 = vector.load %arg10[%c93_374, %c0_375] : memref<128x64xf32, #tpu.memory_space<vmem>>, vector<1x64xf32>
    %c1_376 = arith.constant 1 : index
    %c320_377 = arith.constant 320 : index
    %297 = vector.load %arg11[%c1_376, %c320_377] : memref<8x576xf32, #tpu.memory_space<vmem>>, vector<1x64xf32>
    tpu.vector_store %arg11[%c1_376, %c320_377], %296 {strides = array<i32>} : memref<8x576xf32, #tpu.memory_space<vmem>>, vector<1x64xf32>,
    %c105_378 = arith.constant 105 : index
    %c0_379 = arith.constant 0 : index
    %298 = vector.load %arg10[%c105_378, %c0_379] : memref<128x64xf32, #tpu.memory_space<vmem>>, vector<1x64xf32>
    %c1_380 = arith.constant 1 : index
    %c384_381 = arith.constant 384 : index
    %299 = vector.load %arg11[%c1_380, %c384_381] : memref<8x576xf32, #tpu.memory_space<vmem>>, vector<1x64xf32>
    tpu.vector_store %arg11[%c1_380, %c384_381], %298 {strides = array<i32>} : memref<8x576xf32, #tpu.memory_space<vmem>>, vector<1x64xf32>,
    %c107_382 = arith.constant 107 : index
    %c0_383 = arith.constant 0 : index
    %300 = vector.load %arg10[%c107_382, %c0_383] : memref<128x64xf32, #tpu.memory_space<vmem>>, vector<1x64xf32>
    %c1_384 = arith.constant 1 : index
    %c448_385 = arith.constant 448 : index
    %301 = vector.load %arg11[%c1_384, %c448_385] : memref<8x576xf32, #tpu.memory_space<vmem>>, vector<1x64xf32>
    tpu.vector_store %arg11[%c1_384, %c448_385], %300 {strides = array<i32>} : memref<8x576xf32, #tpu.memory_space<vmem>>, vector<1x64xf32>,
    %c109_386 = arith.constant 109 : index
    %c0_387 = arith.constant 0 : index
    %302 = vector.load %arg10[%c109_386, %c0_387] : memref<128x64xf32, #tpu.memory_space<vmem>>, vector<1x64xf32>
    %c1_388 = arith.constant 1 : index
    %c512_389 = arith.constant 512 : index
    %303 = vector.load %arg11[%c1_388, %c512_389] : memref<8x576xf32, #tpu.memory_space<vmem>>, vector<1x64xf32>
    tpu.vector_store %arg11[%c1_388, %c512_389], %302 {strides = array<i32>} : memref<8x576xf32, #tpu.memory_space<vmem>>, vector<1x64xf32>,
    %c0_390 = arith.constant 0 : index
    %c0_391 = arith.constant 0 : index
    %304 = vector.load %arg11[%c0_390, %c0_391] : memref<8x576xf32, #tpu.memory_space<vmem>>, vector<8x576xf32>
    %c344 = arith.constant 344 : index
    %c0_392 = arith.constant 0 : index
    %305 = vector.load %arg1[%c344, %c0_392] : memref<1064x128xf32, #tpu.memory_space<vmem>>, vector<576x128xf32>
    %cst_393 = arith.constant dense<0.000000e+00> : vector<8x128xf32>
    %306 = tpu.matmul %304, %305, %cst_393 {dimension_numbers = #tpu.dot_dimension_numbers<[1], [0], [0], [1], [0, 0, 1, 1], [], []>} : vector<8x576xf32>, vector<576x128xf32>, vector<8x128xf32> -> vector<8x128xf32>
    %c920 = arith.constant 920 : index
    %c0_394 = arith.constant 0 : index
    %307 = vector.load %arg1[%c920, %c0_394] : memref<1064x128xf32, #tpu.memory_space<vmem>>, vector<1x128xf32>
    %308 = vector.broadcast %307 : vector<1x128xf32> to vector<8x128xf32>
    %309 = arith.addf %306, %308 : vector<8x128xf32>
    %cst_395 = arith.constant 0.000000e+00 : f32
    %310 = vector.broadcast %cst_395 : f32 to vector<8x128xf32>
    %311 = arith.maximumf %309, %310 : vector<8x128xf32>
    %c928 = arith.constant 928 : index
    %c0_396 = arith.constant 0 : index
    %312 = vector.load %arg1[%c928, %c0_396] : memref<1064x128xf32, #tpu.memory_space<vmem>>, vector<128x5xf32>
    %cst_397 = arith.constant dense<0.000000e+00> : vector<8x5xf32>
    %313 = tpu.matmul %311, %312, %cst_397 {dimension_numbers = #tpu.dot_dimension_numbers<[1], [0], [0], [1], [0, 0, 1, 1], [], []>} : vector<8x128xf32>, vector<128x5xf32>, vector<8x5xf32> -> vector<8x5xf32>
    %c1056 = arith.constant 1056 : index
    %c0_398 = arith.constant 0 : index
    %314 = vector.load %arg1[%c1056, %c0_398] : memref<1064x128xf32, #tpu.memory_space<vmem>>, vector<1x5xf32>
    %315 = vector.broadcast %314 : vector<1x5xf32> to vector<8x5xf32>
    %316 = arith.addf %313, %315 : vector<8x5xf32>
    %317 = vector.extract_strided_slice %316 {offsets = [0, 0], sizes = [2, 5], strides = [1, 1]} : vector<8x5xf32> to vector<2x5xf32>
    %c0_399 = arith.constant 0 : index
    %c0_400 = arith.constant 0 : index
    %318 = vector.load %arg2[%c0_399, %c0_400] : memref<2x5xf32, #tpu.memory_space<vmem>>, vector<2x5xf32>
    tpu.vector_store %arg2[%c0_399, %c0_400], %317 {strides = array<i32>} : memref<2x5xf32, #tpu.memory_space<vmem>>, vector<2x5xf32>,
    return
  }
}

</mosaic_0001>

<llo_original>
// kernel: _lambda_.1
$region0: #{_lambda_.1}
  #allocation0 [shape = 'u32[]', space=smem, size = 0x4, offset = 0x4, fixed_abs, tag = 'smem constant byte address 0x4 - core index']
  #allocation1 [shape = 'u32[72,128]{1,0:T(1,128)}', space=vmem, size = 0x9000, scoped, tag = 'internal scratch']
  #allocation2 [shape = 'f32[424,4]{1,0:T(8,128)}', space=vmem, size = 0x35000, scoped, tag = 'scratch operand']
  #allocation3 [shape = 'f32[392,36]{1,0:T(8,128)}', space=vmem, size = 0x31000, scoped, tag = 'scratch operand']
  #allocation4 [shape = 'f32[408,32]{1,0:T(8,128)}', space=vmem, size = 0x33000, scoped, tag = 'scratch operand']
  #allocation5 [shape = 'f32[392,32]{1,0:T(8,128)}', space=vmem, size = 0x31000, scoped, tag = 'scratch operand']
  #allocation6 [shape = 'f32[160,32]{1,0:T(8,128)}', space=vmem, size = 0x14000, scoped, tag = 'scratch operand']
  #allocation7 [shape = 'f32[128,288]{1,0:T(8,128)}', space=vmem, size = 0x30000, scoped, tag = 'scratch operand']
  #allocation8 [shape = 'f32[144,64]{1,0:T(8,128)}', space=vmem, size = 0x12000, scoped, tag = 'scratch operand']
  #allocation9 [shape = 'f32[128,64]{1,0:T(8,128)}', space=vmem, size = 0x10000, scoped, tag = 'scratch operand']
  #allocation10 [shape = 'f32[8,576]{1,0:T(8,128)}', space=vmem, size = 0x5000, scoped, tag = 'scratch operand']
  %s0 = inlined_call_operand.vmem [shape: f32[288,4], index: 0, kind: input, shape index: {}]
  %s1 = inlined_call_operand.hbm [shape: f32[1064,128], index: 1, kind: input, shape index: {}]
  %s2 = inlined_call_operand.hbm [shape: f32[2,5], index: 2, kind: output, shape index: {}]
  %s3 = sld [smem:[#allocation0]]
  $region22: #{_lambda_.1} parent=0
    _
  %s5 = ssub.s32 1, %s3
  %s6 = scalar_select 0, %s5, %s3
  $region1: #{_lambda_.1} parent=0
    #allocation11 [shape = 'u8[544768]{0}', space=vmem, size = 0x85000, scoped, tag = 'input window, operand 1, single buffered']
    #allocation12 [shape = 's32[1]{0}', space=sflag, size = 0x4, scoped, tag = 'scoped memory for _lambda_.1']
    #allocation13 [shape = 's32[1]{0}', space=sflag, size = 0x4, scoped, tag = 'scoped memory for _lambda_.1']
    #allocation14 [shape = 'u8[1024]{0}', space=vmem, size = 0x400, scoped, tag = 'output window, operand 0, single buffered']
    %7 = vsyncpa [#allocation12], 0
    %8 = vsyncpa [#allocation13], 0
    // Predicated region
    $region2: #{_lambda_.1} parent=1 // pred_check
      _
    $region3: #{_lambda_.1} parent=1 // pred_check_branch
      %10 = sbr.rel (0) target = $region5
    $region4: #{_lambda_.1} parent=1 // pred_region
      _
    $region5: #{_lambda_.1} parent=1 // pred_fallthru
      _
    // Predicated region
    $region6: #{_lambda_.1} parent=1 // pred_check
      _
    $region7: #{_lambda_.1} parent=1 // pred_check_branch
      %12 = sbr.rel (0) target = $region9
    $region8: #{_lambda_.1} parent=1 // pred_region
      %14 = vsyncadd [#allocation12], 0
      %s15 = sshll.u32 %s1, 4
      %s16 = int_to_ptr.hbm [resolvable:$true] %s15
      %s17 = sshll.u32 [#allocation11], 4
      %s18 = int_to_ptr.vmem [resolvable:$true] %s17
      %23 = dma.hbm_to_vmem [thread:$0]  %s16, 17024, %s18, [#allocation12], 128, 128, 8
    $region9: #{_lambda_.1} parent=1 // pred_fallthru
      _
    // Predicated region
    $region10: #{_lambda_.1} parent=1 // pred_check
      _
    $region11: #{_lambda_.1} parent=1 // pred_check_branch
      %25 = sbr.rel (0) target = $region13
    $region12: #{_lambda_.1} parent=1 // pred_region
      %27 = dma.done [#allocation12], 17024
    $region13: #{_lambda_.1} parent=1 // pred_fallthru
      _
    %vm28 = vcmask 31744
    %29 = vst.msk [vmem:[#allocation2] sm:$0xff] %vm28, 0.0
    %30 = vst.msk [vmem:[#allocation2 + $0x8] sm:$0xff] %vm28, 0.0
    %31 = vst.msk [vmem:[#allocation2 + $0x10] sm:$0xff] %vm28, 0.0
    %32 = vst.msk [vmem:[#allocation2 + $0x18] sm:$0xff] %vm28, 0.0
    %33 = vst.msk [vmem:[#allocation2 + $0x20] sm:$0xff] %vm28, 0.0
    %34 = vst.msk [vmem:[#allocation2 + $0x28] sm:$0xff] %vm28, 0.0
    %35 = vst.msk [vmem:[#allocation2 + $0x30] sm:$0xff] %vm28, 0.0
    %36 = vst.msk [vmem:[#allocation2 + $0x38] sm:$0xff] %vm28, 0.0
    %37 = vst.msk [vmem:[#allocation2 + $0x40] sm:$0xff] %vm28, 0.0
    %38 = vst.msk [vmem:[#allocation2 + $0x48] sm:$0xff] %vm28, 0.0
    %39 = vst.msk [vmem:[#allocation2 + $0x50] sm:$0xff] %vm28, 0.0
    %40 = vst.msk [vmem:[#allocation2 + $0x58] sm:$0xff] %vm28, 0.0
    %41 = vst.msk [vmem:[#allocation2 + $0x60] sm:$0xff] %vm28, 0.0
    %42 = vst.msk [vmem:[#allocation2 + $0x68] sm:$0xff] %vm28, 0.0
    %43 = vst.msk [vmem:[#allocation2 + $0x70] sm:$0xff] %vm28, 0.0
    %44 = vst.msk [vmem:[#allocation2 + $0x78] sm:$0xff] %vm28, 0.0
    %45 = vst.msk [vmem:[#allocation2 + $0x80] sm:$0xff] %vm28, 0.0
    %46 = vst.msk [vmem:[#allocation2 + $0x88] sm:$0xff] %vm28, 0.0
    %47 = vst.msk [vmem:[#allocation2 + $0x90] sm:$0xff] %vm28, 0.0
    %48 = vst.msk [vmem:[#allocation2 + $0x98] sm:$0xff] %vm28, 0.0
    %49 = vst.msk [vmem:[#allocation2 + $0xa0] sm:$0xff] %vm28, 0.0
    %50 = vst.msk [vmem:[#allocation2 + $0xa8] sm:$0xff] %vm28, 0.0
    %51 = vst.msk [vmem:[#allocation2 + $0xb0] sm:$0xff] %vm28, 0.0
    %52 = vst.msk [vmem:[#allocation2 + $0xb8] sm:$0xff] %vm28, 0.0
    %53 = vst.msk [vmem:[#allocation2 + $0xc0] sm:$0xff] %vm28, 0.0
    %54 = vst.msk [vmem:[#allocation2 + $0xc8] sm:$0xff] %vm28, 0.0
    %55 = vst.msk [vmem:[#allocation2 + $0xd0] sm:$0xff] %vm28, 0.0
    %56 = vst.msk [vmem:[#allocation2 + $0xd8] sm:$0xff] %vm28, 0.0
    %57 = vst.msk [vmem:[#allocation2 + $0xe0] sm:$0xff] %vm28, 0.0
    %58 = vst.msk [vmem:[#allocation2 + $0xe8] sm:$0xff] %vm28, 0.0
    %59 = vst.msk [vmem:[#allocation2 + $0xf0] sm:$0xff] %vm28, 0.0
    %60 = vst.msk [vmem:[#allocation2 + $0xf8] sm:$0xff] %vm28, 0.0
    %61 = vst.msk [vmem:[#allocation2 + $0x100] sm:$0xff] %vm28, 0.0
    %62 = vst.msk [vmem:[#allocation2 + $0x108] sm:$0xff] %vm28, 0.0
    %63 = vst.msk [vmem:[#allocation2 + $0x110] sm:$0xff] %vm28, 0.0
    %64 = vst.msk [vmem:[#allocation2 + $0x118] sm:$0xff] %vm28, 0.0
    %65 = vst.msk [vmem:[#allocation2 + $0x120] sm:$0xff] %vm28, 0.0
    %66 = vst.msk [vmem:[#allocation2 + $0x128] sm:$0xff] %vm28, 0.0
    %67 = vst.msk [vmem:[#allocation2 + $0x130] sm:$0xff] %vm28, 0.0
    %68 = vst.msk [vmem:[#allocation2 + $0x138] sm:$0xff] %vm28, 0.0
    %69 = vst.msk [vmem:[#allocation2 + $0x140] sm:$0xff] %vm28, 0.0
    %70 = vst.msk [vmem:[#allocation2 + $0x148] sm:$0xff] %vm28, 0.0
    %71 = vst.msk [vmem:[#allocation2 + $0x150] sm:$0xff] %vm28, 0.0
    %72 = vst.msk [vmem:[#allocation2 + $0x158] sm:$0xff] %vm28, 0.0
    %73 = vst.msk [vmem:[#allocation2 + $0x160] sm:$0xff] %vm28, 0.0
    %74 = vst.msk [vmem:[#allocation2 + $0x168] sm:$0xff] %vm28, 0.0
    %75 = vst.msk [vmem:[#allocation2 + $0x170] sm:$0xff] %vm28, 0.0
    %76 = vst.msk [vmem:[#allocation2 + $0x178] sm:$0xff] %vm28, 0.0
    %77 = vst.msk [vmem:[#allocation2 + $0x180] sm:$0xff] %vm28, 0.0
    %78 = vst.msk [vmem:[#allocation2 + $0x188] sm:$0xff] %vm28, 0.0
    %79 = vst.msk [vmem:[#allocation2 + $0x190] sm:$0xff] %vm28, 0.0
    %80 = vst.msk [vmem:[#allocation2 + $0x198] sm:$0xff] %vm28, 0.0
    %81 = vst.msk [vmem:[#allocation2 + $0x1a0] sm:$0xff] %vm28, 0.0
    %v82 = vld [vmem:[%s0] sm:$0xff]
    %v83 = vld [vmem:[%s0 + $0x8] sm:$0xf]
    %84 = vst.msk [vmem:[#allocation2 + $0x1f] sm:$0xff] %vm28, %v82
    %vm85 = vcmask 27648
    %86 = vst.msk [vmem:[#allocation2 + $0x27] sm:$0xf] %vm85, %v83
    %v87 = vld [vmem:[%s0 + $0xc] sm:$0xff]
    %v88 = vld [vmem:[%s0 + $0x14] sm:$0xf]
    %89 = vst.msk [vmem:[#allocation2 + $0x2d] sm:$0xff] %vm28, %v87
    %90 = vst.msk [vmem:[#allocation2 + $0x35] sm:$0xf] %vm85, %v88
    %v91 = vld [vmem:[%s0 + $0x18] sm:$0xff]
    %v92 = vld [vmem:[%s0 + $0x20] sm:$0xf]
    %93 = vst.msk [vmem:[#allocation2 + $0x3b] sm:$0xff] %vm28, %v91
    %94 = vst.msk [vmem:[#allocation2 + $0x43] sm:$0xf] %vm85, %v92
    %v95 = vld [vmem:[%s0 + $0x24] sm:$0xff]
    %v96 = vld [vmem:[%s0 + $0x2c] sm:$0xf]
    %97 = vst.msk [vmem:[#allocation2 + $0x49] sm:$0xff] %vm28, %v95
    %98 = vst.msk [vmem:[#allocation2 + $0x51] sm:$0xf] %vm85, %v96
    %v99 = vld [vmem:[%s0 + $0x30] sm:$0xff]
    %v100 = vld [vmem:[%s0 + $0x38] sm:$0xf]
    %101 = vst.msk [vmem:[#allocation2 + $0x57] sm:$0xff] %vm28, %v99
    %102 = vst.msk [vmem:[#allocation2 + $0x5f] sm:$0xf] %vm85, %v100
    %v103 = vld [vmem:[%s0 + $0x3c] sm:$0xff]
    %v104 = vld [vmem:[%s0 + $0x44] sm:$0xf]
    %105 = vst.msk [vmem:[#allocation2 + $0x65] sm:$0xff] %vm28, %v103
    %106 = vst.msk [vmem:[#allocation2 + $0x6d] sm:$0xf] %vm85, %v104
    %v107 = vld [vmem:[%s0 + $0x48] sm:$0xff]
    %v108 = vld [vmem:[%s0 + $0x50] sm:$0xf]
    %109 = vst.msk [vmem:[#allocation2 + $0x73] sm:$0xff] %vm28, %v107
    %110 = vst.msk [vmem:[#allocation2 + $0x7b] sm:$0xf] %vm85, %v108
    %v111 = vld [vmem:[%s0 + $0x54] sm:$0xff]
    %v112 = vld [vmem:[%s0 + $0x5c] sm:$0xf]
    %113 = vst.msk [vmem:[#allocation2 + $0x81] sm:$0xff] %vm28, %v111
    %114 = vst.msk [vmem:[#allocation2 + $0x89] sm:$0xf] %vm85, %v112
    %v115 = vld [vmem:[%s0 + $0x60] sm:$0xff]
    %v116 = vld [vmem:[%s0 + $0x68] sm:$0xf]
    %117 = vst.msk [vmem:[#allocation2 + $0x8f] sm:$0xff] %vm28, %v115
    %118 = vst.msk [vmem:[#allocation2 + $0x97] sm:$0xf] %vm85, %v116
    %v119 = vld [vmem:[%s0 + $0x6c] sm:$0xff]
    %v120 = vld [vmem:[%s0 + $0x74] sm:$0xf]
    %121 = vst.msk [vmem:[#allocation2 + $0x9d] sm:$0xff] %vm28, %v119
    %122 = vst.msk [vmem:[#allocation2 + $0xa5] sm:$0xf] %vm85, %v120
    %v123 = vld [vmem:[%s0 + $0x78] sm:$0xff]
    %v124 = vld [vmem:[%s0 + $0x80] sm:$0xf]
    %125 = vst.msk [vmem:[#allocation2 + $0xab] sm:$0xff] %vm28, %v123
    %126 = vst.msk [vmem:[#allocation2 + $0xb3] sm:$0xf] %vm85, %v124
    %v127 = vld [vmem:[%s0 + $0x84] sm:$0xff]
    %v128 = vld [vmem:[%s0 + $0x8c] sm:$0xf]
    %129 = vst.msk [vmem:[#allocation2 + $0xb9] sm:$0xff] %vm28, %v127
    %130 = vst.msk [vmem:[#allocation2 + $0xc1] sm:$0xf] %vm85, %v128
    %v131 = vld [vmem:[%s0 + $0x90] sm:$0xff]
    %v132 = vld [vmem:[%s0 + $0x98] sm:$0xf]
    %133 = vst.msk [vmem:[#allocation2 + $0xe3] sm:$0xff] %vm28, %v131
    %134 = vst.msk [vmem:[#allocation2 + $0xeb] sm:$0xf] %vm85, %v132
    %v135 = vld [vmem:[%s0 + $0x9c] sm:$0xff]
    %v136 = vld [vmem:[%s0 + $0xa4] sm:$0xf]
    %137 = vst.msk [vmem:[#allocation2 + $0xf1] sm:$0xff] %vm28, %v135
    %138 = vst.msk [vmem:[#allocation2 + $0xf9] sm:$0xf] %vm85, %v136
    %v139 = vld [vmem:[%s0 + $0xa8] sm:$0xff]
    %v140 = vld [vmem:[%s0 + $0xb0] sm:$0xf]
    %141 = vst.msk [vmem:[#allocation2 + $0xff] sm:$0xff] %vm28, %v139
    %142 = vst.msk [vmem:[#allocation2 + $0x107] sm:$0xf] %vm85, %v140
    %v143 = vld [vmem:[%s0 + $0xb4] sm:$0xff]
    %v144 = vld [vmem:[%s0 + $0xbc] sm:$0xf]
    %145 = vst.msk [vmem:[#allocation2 + $0x10d] sm:$0xff] %vm28, %v143
    %146 = vst.msk [vmem:[#allocation2 + $0x115] sm:$0xf] %vm85, %v144
    %v147 = vld [vmem:[%s0 + $0xc0] sm:$0xff]
    %v148 = vld [vmem:[%s0 + $0xc8] sm:$0xf]
    %149 = vst.msk [vmem:[#allocation2 + $0x11b] sm:$0xff] %vm28, %v147
    %150 = vst.msk [vmem:[#allocation2 + $0x123] sm:$0xf] %vm85, %v148
    %v151 = vld [vmem:[%s0 + $0xcc] sm:$0xff]
    %v152 = vld [vmem:[%s0 + $0xd4] sm:$0xf]
    %153 = vst.msk [vmem:[#allocation2 + $0x129] sm:$0xff] %vm28, %v151
    %154 = vst.msk [vmem:[#allocation2 + $0x131] sm:$0xf] %vm85, %v152
    %v155 = vld [vmem:[%s0 + $0xd8] sm:$0xff]
    %v156 = vld [vmem:[%s0 + $0xe0] sm:$0xf]
    %157 = vst.msk [vmem:[#allocation2 + $0x137] sm:$0xff] %vm28, %v155
    %158 = vst.msk [vmem:[#allocation2 + $0x13f] sm:$0xf] %vm85, %v156
    %v159 = vld [vmem:[%s0 + $0xe4] sm:$0xff]
    %v160 = vld [vmem:[%s0 + $0xec] sm:$0xf]
    %161 = vst.msk [vmem:[#allocation2 + $0x145] sm:$0xff] %vm28, %v159
    %162 = vst.msk [vmem:[#allocation2 + $0x14d] sm:$0xf] %vm85, %v160
    %v163 = vld [vmem:[%s0 + $0xf0] sm:$0xff]
    %v164 = vld [vmem:[%s0 + $0xf8] sm:$0xf]
    %165 = vst.msk [vmem:[#allocation2 + $0x153] sm:$0xff] %vm28, %v163
    %166 = vst.msk [vmem:[#allocation2 + $0x15b] sm:$0xf] %vm85, %v164
    %v167 = vld [vmem:[%s0 + $0xfc] sm:$0xff]
    %v168 = vld [vmem:[%s0 + $0x104] sm:$0xf]
    %169 = vst.msk [vmem:[#allocation2 + $0x161] sm:$0xff] %vm28, %v167
    %170 = vst.msk [vmem:[#allocation2 + $0x169] sm:$0xf] %vm85, %v168
    %v171 = vld [vmem:[%s0 + $0x108] sm:$0xff]
    %v172 = vld [vmem:[%s0 + $0x110] sm:$0xf]
    %173 = vst.msk [vmem:[#allocation2 + $0x16f] sm:$0xff] %vm28, %v171
    %174 = vst.msk [vmem:[#allocation2 + $0x177] sm:$0xf] %vm85, %v172
    %v175 = vld [vmem:[%s0 + $0x114] sm:$0xff]
    %v176 = vld [vmem:[%s0 + $0x11c] sm:$0xf]
    %177 = vst.msk [vmem:[#allocation2 + $0x17d] sm:$0xff] %vm28, %v175
    %178 = vst.msk [vmem:[#allocation2 + $0x185] sm:$0xf] %vm85, %v176
    %v179 = vld [vmem:[#allocation2 + $0x1] sm:$0xff]
    %v180 = vld [vmem:[#allocation2 + $0x9] sm:$0xff]
    %v181 = vld [vmem:[#allocation2 + $0x11] sm:$0xff]
    %v182 = vld [vmem:[#allocation2 + $0x19] sm:$0xff]
    %v183 = vld [vmem:[#allocation2 + $0x21] sm:$0xff]
    %v184 = vld [vmem:[#allocation2 + $0x29] sm:$0xff]
    %v185 = vld [vmem:[#allocation2 + $0x31] sm:$0xff]
    %v186 = vld [vmem:[#allocation2 + $0x39] sm:$0xff]
    %v187 = vld [vmem:[#allocation2 + $0x41] sm:$0xff]
    %v188 = vld [vmem:[#allocation2 + $0x49] sm:$0xff]
    %v189 = vld [vmem:[#allocation2 + $0x51] sm:$0xff]
    %v190 = vld [vmem:[#allocation2 + $0x59] sm:$0xff]
    %v191 = vld [vmem:[#allocation2 + $0x61] sm:$0xff]
    %v192 = vld [vmem:[#allocation2 + $0x69] sm:$0xff]
    %v193 = vld [vmem:[#allocation2 + $0x71] sm:$0xff]
    %v194 = vld [vmem:[#allocation2 + $0x79] sm:$0xff]
    %v195 = vld [vmem:[#allocation2 + $0x81] sm:$0xff]
    %v196 = vld [vmem:[#allocation2 + $0x89] sm:$0xff]
    %v197 = vld [vmem:[#allocation2 + $0x91] sm:$0xff]
    %v198 = vld [vmem:[#allocation2 + $0x99] sm:$0xff]
    %v199 = vld [vmem:[#allocation2 + $0xa1] sm:$0xff]
    %v200 = vld [vmem:[#allocation2 + $0xa9] sm:$0xff]
    %v201 = vld [vmem:[#allocation2 + $0xb1] sm:$0xff]
    %v202 = vld [vmem:[#allocation2 + $0xb9] sm:$0xff]
    %v203 = vld [vmem:[#allocation2 + $0xc1] sm:$0xff]
    %v204 = vld [vmem:[#allocation2 + $0xc9] sm:$0xff]
    %v205 = vld [vmem:[#allocation2 + $0xd1] sm:$0xff]
    %v206 = vld [vmem:[#allocation2 + $0xd9] sm:$0xff]
    %v207 = vld [vmem:[#allocation2 + $0xe1] sm:$0xff]
    %v208 = vld [vmem:[#allocation2 + $0xe9] sm:$0xff]
    %v209 = vld [vmem:[#allocation2 + $0xf1] sm:$0xff]
    %v210 = vld [vmem:[#allocation2 + $0xf9] sm:$0xff]
    %v211 = vld [vmem:[#allocation2 + $0x101] sm:$0xff]
    %v212 = vld [vmem:[#allocation2 + $0x109] sm:$0xff]
    %v213 = vld [vmem:[#allocation2 + $0x111] sm:$0xff]
    %v214 = vld [vmem:[#allocation2 + $0x119] sm:$0xff]
    %v215 = vld [vmem:[#allocation2 + $0x121] sm:$0xff]
    %v216 = vld [vmem:[#allocation2 + $0x129] sm:$0xff]
    %v217 = vld [vmem:[#allocation2 + $0x131] sm:$0xff]
    %v218 = vld [vmem:[#allocation2 + $0x139] sm:$0xff]
    %v219 = vld [vmem:[#allocation2 + $0x141] sm:$0xff]
    %v220 = vld [vmem:[#allocation2 + $0x149] sm:$0xff]
    %v221 = vld [vmem:[#allocation2 + $0x151] sm:$0xff]
    %v222 = vld [vmem:[#allocation2 + $0x159] sm:$0xff]
    %v223 = vld [vmem:[#allocation2 + $0x161] sm:$0xff]
    %v224 = vld [vmem:[#allocation2 + $0x169] sm:$0xff]
    %v225 = vld [vmem:[#allocation2 + $0x171] sm:$0xff]
    %v226 = vld [vmem:[#allocation2 + $0x179] sm:$0xff]
    %v227 = vld [vmem:[#allocation2 + $0x181] sm:$0xff]
    %228 = vst.msk [vmem:[#allocation3] sm:$0xff] %vm28, %v179
    %229 = vst.msk [vmem:[#allocation3 + $0x8] sm:$0xff] %vm28, %v180
    %230 = vst.msk [vmem:[#allocation3 + $0x10] sm:$0xff] %vm28, %v181
    %231 = vst.msk [vmem:[#allocation3 + $0x18] sm:$0xff] %vm28, %v182
    %232 = vst.msk [vmem:[#allocation3 + $0x20] sm:$0xff] %vm28, %v183
    %233 = vst.msk [vmem:[#allocation3 + $0x28] sm:$0xff] %vm28, %v184
    %234 = vst.msk [vmem:[#allocation3 + $0x30] sm:$0xff] %vm28, %v185
    %235 = vst.msk [vmem:[#allocation3 + $0x38] sm:$0xff] %vm28, %v186
    %236 = vst.msk [vmem:[#allocation3 + $0x40] sm:$0xff] %vm28, %v187
    %237 = vst.msk [vmem:[#allocation3 + $0x48] sm:$0xff] %vm28, %v188
    %238 = vst.msk [vmem:[#allocation3 + $0x50] sm:$0xff] %vm28, %v189
    %239 = vst.msk [vmem:[#allocation3 + $0x58] sm:$0xff] %vm28, %v190
    %240 = vst.msk [vmem:[#allocation3 + $0x60] sm:$0xff] %vm28, %v191
    %241 = vst.msk [vmem:[#allocation3 + $0x68] sm:$0xff] %vm28, %v192
    %242 = vst.msk [vmem:[#allocation3 + $0x70] sm:$0xff] %vm28, %v193
    %243 = vst.msk [vmem:[#allocation3 + $0x78] sm:$0xff] %vm28, %v194
    %244 = vst.msk [vmem:[#allocation3 + $0x80] sm:$0xff] %vm28, %v195
    %245 = vst.msk [vmem:[#allocation3 + $0x88] sm:$0xff] %vm28, %v196
    %246 = vst.msk [vmem:[#allocation3 + $0x90] sm:$0xff] %vm28, %v197
    %247 = vst.msk [vmem:[#allocation3 + $0x98] sm:$0xff] %vm28, %v198
    %248 = vst.msk [vmem:[#allocation3 + $0xa0] sm:$0xff] %vm28, %v199
    %249 = vst.msk [vmem:[#allocation3 + $0xa8] sm:$0xff] %vm28, %v200
    %250 = vst.msk [vmem:[#allocation3 + $0xb0] sm:$0xff] %vm28, %v201
    %251 = vst.msk [vmem:[#allocation3 + $0xb8] sm:$0xff] %vm28, %v202
    %252 = vst.msk [vmem:[#allocation3 + $0xc0] sm:$0xff] %vm28, %v203
    %253 = vst.msk [vmem:[#allocation3 + $0xc8] sm:$0xff] %vm28, %v204
    %254 = vst.msk [vmem:[#allocation3 + $0xd0] sm:$0xff] %vm28, %v205
    %255 = vst.msk [vmem:[#allocation3 + $0xd8] sm:$0xff] %vm28, %v206
    %256 = vst.msk [vmem:[#allocation3 + $0xe0] sm:$0xff] %vm28, %v207
    %257 = vst.msk [vmem:[#allocation3 + $0xe8] sm:$0xff] %vm28, %v208
    %258 = vst.msk [vmem:[#allocation3 + $0xf0] sm:$0xff] %vm28, %v209
    %259 = vst.msk [vmem:[#allocation3 + $0xf8] sm:$0xff] %vm28, %v210
    %260 = vst.msk [vmem:[#allocation3 + $0x100] sm:$0xff] %vm28, %v211
    %261 = vst.msk [vmem:[#allocation3 + $0x108] sm:$0xff] %vm28, %v212
    %262 = vst.msk [vmem:[#allocation3 + $0x110] sm:$0xff] %vm28, %v213
    %263 = vst.msk [vmem:[#allocation3 + $0x118] sm:$0xff] %vm28, %v214
    %264 = vst.msk [vmem:[#allocation3 + $0x120] sm:$0xff] %vm28, %v215
    %265 = vst.msk [vmem:[#allocation3 + $0x128] sm:$0xff] %vm28, %v216
    %266 = vst.msk [vmem:[#allocation3 + $0x130] sm:$0xff] %vm28, %v217
    %267 = vst.msk [vmem:[#allocation3 + $0x138] sm:$0xff] %vm28, %v218
    %268 = vst.msk [vmem:[#allocation3 + $0x140] sm:$0xff] %vm28, %v219
    %269 = vst.msk [vmem:[#allocation3 + $0x148] sm:$0xff] %vm28, %v220
    %270 = vst.msk [vmem:[#allocation3 + $0x150] sm:$0xff] %vm28, %v221
    %271 = vst.msk [vmem:[#allocation3 + $0x158] sm:$0xff] %vm28, %v222
    %272 = vst.msk [vmem:[#allocation3 + $0x160] sm:$0xff] %vm28, %v223
    %273 = vst.msk [vmem:[#allocation3 + $0x168] sm:$0xff] %vm28, %v224
    %274 = vst.msk [vmem:[#allocation3 + $0x170] sm:$0xff] %vm28, %v225
    %275 = vst.msk [vmem:[#allocation3 + $0x178] sm:$0xff] %vm28, %v226
    %276 = vst.msk [vmem:[#allocation3 + $0x180] sm:$0xff] %vm28, %v227
    %v277 = vld [vmem:[#allocation2 + $0x2] sm:$0xff]
    %v278 = vld [vmem:[#allocation2 + $0xa] sm:$0xff]
    %v279 = vld [vmem:[#allocation2 + $0x12] sm:$0xff]
    %v280 = vld [vmem:[#allocation2 + $0x1a] sm:$0xff]
    %v281 = vld [vmem:[#allocation2 + $0x22] sm:$0xff]
    %v282 = vld [vmem:[#allocation2 + $0x2a] sm:$0xff]
    %v283 = vld [vmem:[#allocation2 + $0x32] sm:$0xff]
    %v284 = vld [vmem:[#allocation2 + $0x3a] sm:$0xff]
    %v285 = vld [vmem:[#allocation2 + $0x42] sm:$0xff]
    %v286 = vld [vmem:[#allocation2 + $0x4a] sm:$0xff]
    %v287 = vld [vmem:[#allocation2 + $0x52] sm:$0xff]
    %v288 = vld [vmem:[#allocation2 + $0x5a] sm:$0xff]
    %v289 = vld [vmem:[#allocation2 + $0x62] sm:$0xff]
    %v290 = vld [vmem:[#allocation2 + $0x6a] sm:$0xff]
    %v291 = vld [vmem:[#allocation2 + $0x72] sm:$0xff]
    %v292 = vld [vmem:[#allocation2 + $0x7a] sm:$0xff]
    %v293 = vld [vmem:[#allocation2 + $0x82] sm:$0xff]
    %v294 = vld [vmem:[#allocation2 + $0x8a] sm:$0xff]
    %v295 = vld [vmem:[#allocation2 + $0x92] sm:$0xff]
    %v296 = vld [vmem:[#allocation2 + $0x9a] sm:$0xff]
    %v297 = vld [vmem:[#allocation2 + $0xa2] sm:$0xff]
    %v298 = vld [vmem:[#allocation2 + $0xaa] sm:$0xff]
    %v299 = vld [vmem:[#allocation2 + $0xb2] sm:$0xff]
    %v300 = vld [vmem:[#allocation2 + $0xba] sm:$0xff]
    %v301 = vld [vmem:[#allocation2 + $0xc2] sm:$0xff]
    %v302 = vld [vmem:[#allocation2 + $0xca] sm:$0xff]
    %v303 = vld [vmem:[#allocation2 + $0xd2] sm:$0xff]
    %v304 = vld [vmem:[#allocation2 + $0xda] sm:$0xff]
    %v305 = vld [vmem:[#allocation2 + $0xe2] sm:$0xff]
    %v306 = vld [vmem:[#allocation2 + $0xea] sm:$0xff]
    %v307 = vld [vmem:[#allocation2 + $0xf2] sm:$0xff]
    %v308 = vld [vmem:[#allocation2 + $0xfa] sm:$0xff]
    %v309 = vld [vmem:[#allocation2 + $0x102] sm:$0xff]
    %v310 = vld [vmem:[#allocation2 + $0x10a] sm:$0xff]
    %v311 = vld [vmem:[#allocation2 + $0x112] sm:$0xff]
    %v312 = vld [vmem:[#allocation2 + $0x11a] sm:$0xff]
    %v313 = vld [vmem:[#allocation2 + $0x122] sm:$0xff]
    %v314 = vld [vmem:[#allocation2 + $0x12a] sm:$0xff]
    %v315 = vld [vmem:[#allocation2 + $0x132] sm:$0xff]
    %v316 = vld [vmem:[#allocation2 + $0x13a] sm:$0xff]
    %v317 = vld [vmem:[#allocation2 + $0x142] sm:$0xff]
    %v318 = vld [vmem:[#allocation2 + $0x14a] sm:$0xff]
    %v319 = vld [vmem:[#allocation2 + $0x152] sm:$0xff]
    %v320 = vld [vmem:[#allocation2 + $0x15a] sm:$0xff]
    %v321 = vld [vmem:[#allocation2 + $0x162] sm:$0xff]
    %v322 = vld [vmem:[#allocation2 + $0x16a] sm:$0xff]
    %v323 = vld [vmem:[#allocation2 + $0x172] sm:$0xff]
    %v324 = vld [vmem:[#allocation2 + $0x17a] sm:$0xff]
    %v325 = vld [vmem:[#allocation2 + $0x182] sm:$0xff]
    %375 = vrot.lane.b32.xlu0 %v277, 4
    %v376 = vpop.permute.xlu0 %375
    %377 = vrot.lane.b32.xlu0 %v278, 4
    %v378 = vpop.permute.xlu0 %377
    %379 = vrot.lane.b32.xlu0 %v279, 4
    %v380 = vpop.permute.xlu0 %379
    %381 = vrot.lane.b32.xlu0 %v280, 4
    %v382 = vpop.permute.xlu0 %381
    %383 = vrot.lane.b32.xlu0 %v281, 4
    %v384 = vpop.permute.xlu0 %383
    %385 = vrot.lane.b32.xlu0 %v282, 4
    %v386 = vpop.permute.xlu0 %385
    %387 = vrot.lane.b32.xlu0 %v283, 4
    %v388 = vpop.permute.xlu0 %387
    %389 = vrot.lane.b32.xlu0 %v284, 4
    %v390 = vpop.permute.xlu0 %389
    %391 = vrot.lane.b32.xlu0 %v285, 4
    %v392 = vpop.permute.xlu0 %391
    %393 = vrot.lane.b32.xlu0 %v286, 4
    %v394 = vpop.permute.xlu0 %393
    %395 = vrot.lane.b32.xlu0 %v287, 4
    %v396 = vpop.permute.xlu0 %395
    %397 = vrot.lane.b32.xlu0 %v288, 4
    %v398 = vpop.permute.xlu0 %397
    %399 = vrot.lane.b32.xlu0 %v289, 4
    %v400 = vpop.permute.xlu0 %399
    %401 = vrot.lane.b32.xlu0 %v290, 4
    %v402 = vpop.permute.xlu0 %401
    %403 = vrot.lane.b32.xlu0 %v291, 4
    %v404 = vpop.permute.xlu0 %403
    %405 = vrot.lane.b32.xlu0 %v292, 4
    %v406 = vpop.permute.xlu0 %405
    %407 = vrot.lane.b32.xlu0 %v293, 4
    %v408 = vpop.permute.xlu0 %407
    %409 = vrot.lane.b32.xlu0 %v294, 4
    %v410 = vpop.permute.xlu0 %409
    %411 = vrot.lane.b32.xlu0 %v295, 4
    %v412 = vpop.permute.xlu0 %411
    %413 = vrot.lane.b32.xlu0 %v296, 4
    %v414 = vpop.permute.xlu0 %413
    %415 = vrot.lane.b32.xlu0 %v297, 4
    %v416 = vpop.permute.xlu0 %415
    %417 = vrot.lane.b32.xlu0 %v298, 4
    %v418 = vpop.permute.xlu0 %417
    %419 = vrot.lane.b32.xlu0 %v299, 4
    %v420 = vpop.permute.xlu0 %419
    %421 = vrot.lane.b32.xlu0 %v300, 4
    %v422 = vpop.permute.xlu0 %421
    %423 = vrot.lane.b32.xlu0 %v301, 4
    %v424 = vpop.permute.xlu0 %423
    %425 = vrot.lane.b32.xlu0 %v302, 4
    %v426 = vpop.permute.xlu0 %425
    %427 = vrot.lane.b32.xlu0 %v303, 4
    %v428 = vpop.permute.xlu0 %427
    %429 = vrot.lane.b32.xlu0 %v304, 4
    %v430 = vpop.permute.xlu0 %429
    %431 = vrot.lane.b32.xlu0 %v305, 4
    %v432 = vpop.permute.xlu0 %431
    %433 = vrot.lane.b32.xlu0 %v306, 4
    %v434 = vpop.permute.xlu0 %433
    %435 = vrot.lane.b32.xlu0 %v307, 4
    %v436 = vpop.permute.xlu0 %435
    %437 = vrot.lane.b32.xlu0 %v308, 4
    %v438 = vpop.permute.xlu0 %437
    %439 = vrot.lane.b32.xlu0 %v309, 4
    %v440 = vpop.permute.xlu0 %439
    %441 = vrot.lane.b32.xlu0 %v310, 4
    %v442 = vpop.permute.xlu0 %441
    %443 = vrot.lane.b32.xlu0 %v311, 4
    %v444 = vpop.permute.xlu0 %443
    %445 = vrot.lane.b32.xlu0 %v312, 4
    %v446 = vpop.permute.xlu0 %445
    %447 = vrot.lane.b32.xlu0 %v313, 4
    %v448 = vpop.permute.xlu0 %447
    %449 = vrot.lane.b32.xlu0 %v314, 4
    %v450 = vpop.permute.xlu0 %449
    %451 = vrot.lane.b32.xlu0 %v315, 4
    %v452 = vpop.permute.xlu0 %451
    %453 = vrot.lane.b32.xlu0 %v316, 4
    %v454 = vpop.permute.xlu0 %453
    %455 = vrot.lane.b32.xlu0 %v317, 4
    %v456 = vpop.permute.xlu0 %455
    %457 = vrot.lane.b32.xlu0 %v318, 4
    %v458 = vpop.permute.xlu0 %457
    %459 = vrot.lane.b32.xlu0 %v319, 4
    %v460 = vpop.permute.xlu0 %459
    %461 = vrot.lane.b32.xlu0 %v320, 4
    %v462 = vpop.permute.xlu0 %461
    %463 = vrot.lane.b32.xlu0 %v321, 4
    %v464 = vpop.permute.xlu0 %463
    %465 = vrot.lane.b32.xlu0 %v322, 4
    %v466 = vpop.permute.xlu0 %465
    %467 = vrot.lane.b32.xlu0 %v323, 4
    %v468 = vpop.permute.xlu0 %467
    %469 = vrot.lane.b32.xlu0 %v324, 4
    %v470 = vpop.permute.xlu0 %469
    %471 = vrot.lane.b32.xlu0 %v325, 4
    %v472 = vpop.permute.xlu0 %471
    %vm522 = vcmask 64544
    %523 = vst.msk [vmem:[#allocation3] sm:$0xff] %vm522, %v376
    %524 = vst.msk [vmem:[#allocation3 + $0x8] sm:$0xff] %vm522, %v378
    %525 = vst.msk [vmem:[#allocation3 + $0x10] sm:$0xff] %vm522, %v380
    %526 = vst.msk [vmem:[#allocation3 + $0x18] sm:$0xff] %vm522, %v382
    %527 = vst.msk [vmem:[#allocation3 + $0x20] sm:$0xff] %vm522, %v384
    %528 = vst.msk [vmem:[#allocation3 + $0x28] sm:$0xff] %vm522, %v386
    %529 = vst.msk [vmem:[#allocation3 + $0x30] sm:$0xff] %vm522, %v388
    %530 = vst.msk [vmem:[#allocation3 + $0x38] sm:$0xff] %vm522, %v390
    %531 = vst.msk [vmem:[#allocation3 + $0x40] sm:$0xff] %vm522, %v392
    %532 = vst.msk [vmem:[#allocation3 + $0x48] sm:$0xff] %vm522, %v394
    %533 = vst.msk [vmem:[#allocation3 + $0x50] sm:$0xff] %vm522, %v396
    %534 = vst.msk [vmem:[#allocation3 + $0x58] sm:$0xff] %vm522, %v398
    %535 = vst.msk [vmem:[#allocation3 + $0x60] sm:$0xff] %vm522, %v400
    %536 = vst.msk [vmem:[#allocation3 + $0x68] sm:$0xff] %vm522, %v402
    %537 = vst.msk [vmem:[#allocation3 + $0x70] sm:$0xff] %vm522, %v404
    %538 = vst.msk [vmem:[#allocation3 + $0x78] sm:$0xff] %vm522, %v406
    %539 = vst.msk [vmem:[#allocation3 + $0x80] sm:$0xff] %vm522, %v408
    %540 = vst.msk [vmem:[#allocation3 + $0x88] sm:$0xff] %vm522, %v410
    %541 = vst.msk [vmem:[#allocation3 + $0x90] sm:$0xff] %vm522, %v412
    %542 = vst.msk [vmem:[#allocation3 + $0x98] sm:$0xff] %vm522, %v414
    %543 = vst.msk [vmem:[#allocation3 + $0xa0] sm:$0xff] %vm522, %v416
    %544 = vst.msk [vmem:[#allocation3 + $0xa8] sm:$0xff] %vm522, %v418
    %545 = vst.msk [vmem:[#allocation3 + $0xb0] sm:$0xff] %vm522, %v420
    %546 = vst.msk [vmem:[#allocation3 + $0xb8] sm:$0xff] %vm522, %v422
    %547 = vst.msk [vmem:[#allocation3 + $0xc0] sm:$0xff] %vm522, %v424
    %548 = vst.msk [vmem:[#allocation3 + $0xc8] sm:$0xff] %vm522, %v426
    %549 = vst.msk [vmem:[#allocation3 + $0xd0] sm:$0xff] %vm522, %v428
    %550 = vst.msk [vmem:[#allocation3 + $0xd8] sm:$0xff] %vm522, %v430
    %551 = vst.msk [vmem:[#allocation3 + $0xe0] sm:$0xff] %vm522, %v432
    %552 = vst.msk [vmem:[#allocation3 + $0xe8] sm:$0xff] %vm522, %v434
    %553 = vst.msk [vmem:[#allocation3 + $0xf0] sm:$0xff] %vm522, %v436
    %554 = vst.msk [vmem:[#allocation3 + $0xf8] sm:$0xff] %vm522, %v438
    %555 = vst.msk [vmem:[#allocation3 + $0x100] sm:$0xff] %vm522, %v440
    %556 = vst.msk [vmem:[#allocation3 + $0x108] sm:$0xff] %vm522, %v442
    %557 = vst.msk [vmem:[#allocation3 + $0x110] sm:$0xff] %vm522, %v444
    %558 = vst.msk [vmem:[#allocation3 + $0x118] sm:$0xff] %vm522, %v446
    %559 = vst.msk [vmem:[#allocation3 + $0x120] sm:$0xff] %vm522, %v448
    %560 = vst.msk [vmem:[#allocation3 + $0x128] sm:$0xff] %vm522, %v450
    %561 = vst.msk [vmem:[#allocation3 + $0x130] sm:$0xff] %vm522, %v452
    %562 = vst.msk [vmem:[#allocation3 + $0x138] sm:$0xff] %vm522, %v454
    %563 = vst.msk [vmem:[#allocation3 + $0x140] sm:$0xff] %vm522, %v456
    %564 = vst.msk [vmem:[#allocation3 + $0x148] sm:$0xff] %vm522, %v458
    %565 = vst.msk [vmem:[#allocation3 + $0x150] sm:$0xff] %vm522, %v460
    %566 = vst.msk [vmem:[#allocation3 + $0x158] sm:$0xff] %vm522, %v462
    %567 = vst.msk [vmem:[#allocation3 + $0x160] sm:$0xff] %vm522, %v464
    %568 = vst.msk [vmem:[#allocation3 + $0x168] sm:$0xff] %vm522, %v466
    %569 = vst.msk [vmem:[#allocation3 + $0x170] sm:$0xff] %vm522, %v468
    %570 = vst.msk [vmem:[#allocation3 + $0x178] sm:$0xff] %vm522, %v470
    %571 = vst.msk [vmem:[#allocation3 + $0x180] sm:$0xff] %vm522, %v472
    %v572 = vld [vmem:[#allocation2 + $0x3] sm:$0xff]
    %v573 = vld [vmem:[#allocation2 + $0xb] sm:$0xff]
    %v574 = vld [vmem:[#allocation2 + $0x13] sm:$0xff]
    %v575 = vld [vmem:[#allocation2 + $0x1b] sm:$0xff]
    %v576 = vld [vmem:[#allocation2 + $0x23] sm:$0xff]
    %v577 = vld [vmem:[#allocation2 + $0x2b] sm:$0xff]
    %v578 = vld [vmem:[#allocation2 + $0x33] sm:$0xff]
    %v579 = vld [vmem:[#allocation2 + $0x3b] sm:$0xff]
    %v580 = vld [vmem:[#allocation2 + $0x43] sm:$0xff]
    %v581 = vld [vmem:[#allocation2 + $0x4b] sm:$0xff]
    %v582 = vld [vmem:[#allocation2 + $0x53] sm:$0xff]
    %v583 = vld [vmem:[#allocation2 + $0x5b] sm:$0xff]
    %v584 = vld [vmem:[#allocation2 + $0x63] sm:$0xff]
    %v585 = vld [vmem:[#allocation2 + $0x6b] sm:$0xff]
    %v586 = vld [vmem:[#allocation2 + $0x73] sm:$0xff]
    %v587 = vld [vmem:[#allocation2 + $0x7b] sm:$0xff]
    %v588 = vld [vmem:[#allocation2 + $0x83] sm:$0xff]
    %v589 = vld [vmem:[#allocation2 + $0x8b] sm:$0xff]
    %v590 = vld [vmem:[#allocation2 + $0x93] sm:$0xff]
    %v591 = vld [vmem:[#allocation2 + $0x9b] sm:$0xff]
    %v592 = vld [vmem:[#allocation2 + $0xa3] sm:$0xff]
    %v593 = vld [vmem:[#allocation2 + $0xab] sm:$0xff]
    %v594 = vld [vmem:[#allocation2 + $0xb3] sm:$0xff]
    %v595 = vld [vmem:[#allocation2 + $0xbb] sm:$0xff]
    %v596 = vld [vmem:[#allocation2 + $0xc3] sm:$0xff]
    %v597 = vld [vmem:[#allocation2 + $0xcb] sm:$0xff]
    %v598 = vld [vmem:[#allocation2 + $0xd3] sm:$0xff]
    %v599 = vld [vmem:[#allocation2 + $0xdb] sm:$0xff]
    %v600 = vld [vmem:[#allocation2 + $0xe3] sm:$0xff]
    %v601 = vld [vmem:[#allocation2 + $0xeb] sm:$0xff]
    %v602 = vld [vmem:[#allocation2 + $0xf3] sm:$0xff]
    %v603 = vld [vmem:[#allocation2 + $0xfb] sm:$0xff]
    %v604 = vld [vmem:[#allocation2 + $0x103] sm:$0xff]
    %v605 = vld [vmem:[#allocation2 + $0x10b] sm:$0xff]
    %v606 = vld [vmem:[#allocation2 + $0x113] sm:$0xff]
    %v607 = vld [vmem:[#allocation2 + $0x11b] sm:$0xff]
    %v608 = vld [vmem:[#allocation2 + $0x123] sm:$0xff]
    %v609 = vld [vmem:[#allocation2 + $0x12b] sm:$0xff]
    %v610 = vld [vmem:[#allocation2 + $0x133] sm:$0xff]
    %v611 = vld [vmem:[#allocation2 + $0x13b] sm:$0xff]
    %v612 = vld [vmem:[#allocation2 + $0x143] sm:$0xff]
    %v613 = vld [vmem:[#allocation2 + $0x14b] sm:$0xff]
    %v614 = vld [vmem:[#allocation2 + $0x153] sm:$0xff]
    %v615 = vld [vmem:[#allocation2 + $0x15b] sm:$0xff]
    %v616 = vld [vmem:[#allocation2 + $0x163] sm:$0xff]
    %v617 = vld [vmem:[#allocation2 + $0x16b] sm:$0xff]
    %v618 = vld [vmem:[#allocation2 + $0x173] sm:$0xff]
    %v619 = vld [vmem:[#allocation2 + $0x17b] sm:$0xff]
    %v620 = vld [vmem:[#allocation2 + $0x183] sm:$0xff]
    %670 = vrot.lane.b32.xlu0 %v572, 8
    %v671 = vpop.permute.xlu0 %670
    %672 = vrot.lane.b32.xlu0 %v573, 8
    %v673 = vpop.permute.xlu0 %672
    %674 = vrot.lane.b32.xlu0 %v574, 8
    %v675 = vpop.permute.xlu0 %674
    %676 = vrot.lane.b32.xlu0 %v575, 8
    %v677 = vpop.permute.xlu0 %676
    %678 = vrot.lane.b32.xlu0 %v576, 8
    %v679 = vpop.permute.xlu0 %678
    %680 = vrot.lane.b32.xlu0 %v577, 8
    %v681 = vpop.permute.xlu0 %680
    %682 = vrot.lane.b32.xlu0 %v578, 8
    %v683 = vpop.permute.xlu0 %682
    %684 = vrot.lane.b32.xlu0 %v579, 8
    %v685 = vpop.permute.xlu0 %684
    %686 = vrot.lane.b32.xlu0 %v580, 8
    %v687 = vpop.permute.xlu0 %686
    %688 = vrot.lane.b32.xlu0 %v581, 8
    %v689 = vpop.permute.xlu0 %688
    %690 = vrot.lane.b32.xlu0 %v582, 8
    %v691 = vpop.permute.xlu0 %690
    %692 = vrot.lane.b32.xlu0 %v583, 8
    %v693 = vpop.permute.xlu0 %692
    %694 = vrot.lane.b32.xlu0 %v584, 8
    %v695 = vpop.permute.xlu0 %694
    %696 = vrot.lane.b32.xlu0 %v585, 8
    %v697 = vpop.permute.xlu0 %696
    %698 = vrot.lane.b32.xlu0 %v586, 8
    %v699 = vpop.permute.xlu0 %698
    %700 = vrot.lane.b32.xlu0 %v587, 8
    %v701 = vpop.permute.xlu0 %700
    %702 = vrot.lane.b32.xlu0 %v588, 8
    %v703 = vpop.permute.xlu0 %702
    %704 = vrot.lane.b32.xlu0 %v589, 8
    %v705 = vpop.permute.xlu0 %704
    %706 = vrot.lane.b32.xlu0 %v590, 8
    %v707 = vpop.permute.xlu0 %706
    %708 = vrot.lane.b32.xlu0 %v591, 8
    %v709 = vpop.permute.xlu0 %708
    %710 = vrot.lane.b32.xlu0 %v592, 8
    %v711 = vpop.permute.xlu0 %710
    %712 = vrot.lane.b32.xlu0 %v593, 8
    %v713 = vpop.permute.xlu0 %712
    %714 = vrot.lane.b32.xlu0 %v594, 8
    %v715 = vpop.permute.xlu0 %714
    %716 = vrot.lane.b32.xlu0 %v595, 8
    %v717 = vpop.permute.xlu0 %716
    %718 = vrot.lane.b32.xlu0 %v596, 8
    %v719 = vpop.permute.xlu0 %718
    %720 = vrot.lane.b32.xlu0 %v597, 8
    %v721 = vpop.permute.xlu0 %720
    %722 = vrot.lane.b32.xlu0 %v598, 8
    %v723 = vpop.permute.xlu0 %722
    %724 = vrot.lane.b32.xlu0 %v599, 8
    %v725 = vpop.permute.xlu0 %724
    %726 = vrot.lane.b32.xlu0 %v600, 8
    %v727 = vpop.permute.xlu0 %726
    %728 = vrot.lane.b32.xlu0 %v601, 8
    %v729 = vpop.permute.xlu0 %728
    %730 = vrot.lane.b32.xlu0 %v602, 8
    %v731 = vpop.permute.xlu0 %730
    %732 = vrot.lane.b32.xlu0 %v603, 8
    %v733 = vpop.permute.xlu0 %732
    %734 = vrot.lane.b32.xlu0 %v604, 8
    %v735 = vpop.permute.xlu0 %734
    %736 = vrot.lane.b32.xlu0 %v605, 8
    %v737 = vpop.permute.xlu0 %736
    %738 = vrot.lane.b32.xlu0 %v606, 8
    %v739 = vpop.permute.xlu0 %738
    %740 = vrot.lane.b32.xlu0 %v607, 8
    %v741 = vpop.permute.xlu0 %740
    %742 = vrot.lane.b32.xlu0 %v608, 8
    %v743 = vpop.permute.xlu0 %742
    %744 = vrot.lane.b32.xlu0 %v609, 8
    %v745 = vpop.permute.xlu0 %744
    %746 = vrot.lane.b32.xlu0 %v610, 8
    %v747 = vpop.permute.xlu0 %746
    %748 = vrot.lane.b32.xlu0 %v611, 8
    %v749 = vpop.permute.xlu0 %748
    %750 = vrot.lane.b32.xlu0 %v612, 8
    %v751 = vpop.permute.xlu0 %750
    %752 = vrot.lane.b32.xlu0 %v613, 8
    %v753 = vpop.permute.xlu0 %752
    %754 = vrot.lane.b32.xlu0 %v614, 8
    %v755 = vpop.permute.xlu0 %754
    %756 = vrot.lane.b32.xlu0 %v615, 8
    %v757 = vpop.permute.xlu0 %756
    %758 = vrot.lane.b32.xlu0 %v616, 8
    %v759 = vpop.permute.xlu0 %758
    %760 = vrot.lane.b32.xlu0 %v617, 8
    %v761 = vpop.permute.xlu0 %760
    %762 = vrot.lane.b32.xlu0 %v618, 8
    %v763 = vpop.permute.xlu0 %762
    %764 = vrot.lane.b32.xlu0 %v619, 8
    %v765 = vpop.permute.xlu0 %764
    %766 = vrot.lane.b32.xlu0 %v620, 8
    %v767 = vpop.permute.xlu0 %766
    %vm817 = vcmask 97344
    %818 = vst.msk [vmem:[#allocation3] sm:$0xff] %vm817, %v671
    %819 = vst.msk [vmem:[#allocation3 + $0x8] sm:$0xff] %vm817, %v673
    %820 = vst.msk [vmem:[#allocation3 + $0x10] sm:$0xff] %vm817, %v675
    %821 = vst.msk [vmem:[#allocation3 + $0x18] sm:$0xff] %vm817, %v677
    %822 = vst.msk [vmem:[#allocation3 + $0x20] sm:$0xff] %vm817, %v679
    %823 = vst.msk [vmem:[#allocation3 + $0x28] sm:$0xff] %vm817, %v681
    %824 = vst.msk [vmem:[#allocation3 + $0x30] sm:$0xff] %vm817, %v683
    %825 = vst.msk [vmem:[#allocation3 + $0x38] sm:$0xff] %vm817, %v685
    %826 = vst.msk [vmem:[#allocation3 + $0x40] sm:$0xff] %vm817, %v687
    %827 = vst.msk [vmem:[#allocation3 + $0x48] sm:$0xff] %vm817, %v689
    %828 = vst.msk [vmem:[#allocation3 + $0x50] sm:$0xff] %vm817, %v691
    %829 = vst.msk [vmem:[#allocation3 + $0x58] sm:$0xff] %vm817, %v693
    %830 = vst.msk [vmem:[#allocation3 + $0x60] sm:$0xff] %vm817, %v695
    %831 = vst.msk [vmem:[#allocation3 + $0x68] sm:$0xff] %vm817, %v697
    %832 = vst.msk [vmem:[#allocation3 + $0x70] sm:$0xff] %vm817, %v699
    %833 = vst.msk [vmem:[#allocation3 + $0x78] sm:$0xff] %vm817, %v701
    %834 = vst.msk [vmem:[#allocation3 + $0x80] sm:$0xff] %vm817, %v703
    %835 = vst.msk [vmem:[#allocation3 + $0x88] sm:$0xff] %vm817, %v705
    %836 = vst.msk [vmem:[#allocation3 + $0x90] sm:$0xff] %vm817, %v707
    %837 = vst.msk [vmem:[#allocation3 + $0x98] sm:$0xff] %vm817, %v709
    %838 = vst.msk [vmem:[#allocation3 + $0xa0] sm:$0xff] %vm817, %v711
    %839 = vst.msk [vmem:[#allocation3 + $0xa8] sm:$0xff] %vm817, %v713
    %840 = vst.msk [vmem:[#allocation3 + $0xb0] sm:$0xff] %vm817, %v715
    %841 = vst.msk [vmem:[#allocation3 + $0xb8] sm:$0xff] %vm817, %v717
    %842 = vst.msk [vmem:[#allocation3 + $0xc0] sm:$0xff] %vm817, %v719
    %843 = vst.msk [vmem:[#allocation3 + $0xc8] sm:$0xff] %vm817, %v721
    %844 = vst.msk [vmem:[#allocation3 + $0xd0] sm:$0xff] %vm817, %v723
    %845 = vst.msk [vmem:[#allocation3 + $0xd8] sm:$0xff] %vm817, %v725
    %846 = vst.msk [vmem:[#allocation3 + $0xe0] sm:$0xff] %vm817, %v727
    %847 = vst.msk [vmem:[#allocation3 + $0xe8] sm:$0xff] %vm817, %v729
    %848 = vst.msk [vmem:[#allocation3 + $0xf0] sm:$0xff] %vm817, %v731
    %849 = vst.msk [vmem:[#allocation3 + $0xf8] sm:$0xff] %vm817, %v733
    %850 = vst.msk [vmem:[#allocation3 + $0x100] sm:$0xff] %vm817, %v735
    %851 = vst.msk [vmem:[#allocation3 + $0x108] sm:$0xff] %vm817, %v737
    %852 = vst.msk [vmem:[#allocation3 + $0x110] sm:$0xff] %vm817, %v739
    %853 = vst.msk [vmem:[#allocation3 + $0x118] sm:$0xff] %vm817, %v741
    %854 = vst.msk [vmem:[#allocation3 + $0x120] sm:$0xff] %vm817, %v743
    %855 = vst.msk [vmem:[#allocation3 + $0x128] sm:$0xff] %vm817, %v745
    %856 = vst.msk [vmem:[#allocation3 + $0x130] sm:$0xff] %vm817, %v747
    %857 = vst.msk [vmem:[#allocation3 + $0x138] sm:$0xff] %vm817, %v749
    %858 = vst.msk [vmem:[#allocation3 + $0x140] sm:$0xff] %vm817, %v751
    %859 = vst.msk [vmem:[#allocation3 + $0x148] sm:$0xff] %vm817, %v753
    %860 = vst.msk [vmem:[#allocation3 + $0x150] sm:$0xff] %vm817, %v755
    %861 = vst.msk [vmem:[#allocation3 + $0x158] sm:$0xff] %vm817, %v757
    %862 = vst.msk [vmem:[#allocation3 + $0x160] sm:$0xff] %vm817, %v759
    %863 = vst.msk [vmem:[#allocation3 + $0x168] sm:$0xff] %vm817, %v761
    %864 = vst.msk [vmem:[#allocation3 + $0x170] sm:$0xff] %vm817, %v763
    %865 = vst.msk [vmem:[#allocation3 + $0x178] sm:$0xff] %vm817, %v765
    %866 = vst.msk [vmem:[#allocation3 + $0x180] sm:$0xff] %vm817, %v767
    %v867 = vld [vmem:[#allocation2 + $0xf] sm:$0xff]
    %v868 = vld [vmem:[#allocation2 + $0x17] sm:$0xff]
    %v869 = vld [vmem:[#allocation2 + $0x1f] sm:$0xff]
    %v870 = vld [vmem:[#allocation2 + $0x27] sm:$0xff]
    %v871 = vld [vmem:[#allocation2 + $0x2f] sm:$0xff]
    %v872 = vld [vmem:[#allocation2 + $0x37] sm:$0xff]
    %v873 = vld [vmem:[#allocation2 + $0x3f] sm:$0xff]
    %v874 = vld [vmem:[#allocation2 + $0x47] sm:$0xff]
    %v875 = vld [vmem:[#allocation2 + $0x4f] sm:$0xff]
    %v876 = vld [vmem:[#allocation2 + $0x57] sm:$0xff]
    %v877 = vld [vmem:[#allocation2 + $0x5f] sm:$0xff]
    %v878 = vld [vmem:[#allocation2 + $0x67] sm:$0xff]
    %v879 = vld [vmem:[#allocation2 + $0x6f] sm:$0xff]
    %v880 = vld [vmem:[#allocation2 + $0x77] sm:$0xff]
    %v881 = vld [vmem:[#allocation2 + $0x7f] sm:$0xff]
    %v882 = vld [vmem:[#allocation2 + $0x87] sm:$0xff]
    %v883 = vld [vmem:[#allocation2 + $0x8f] sm:$0xff]
    %v884 = vld [vmem:[#allocation2 + $0x97] sm:$0xff]
    %v885 = vld [vmem:[#allocation2 + $0x9f] sm:$0xff]
    %v886 = vld [vmem:[#allocation2 + $0xa7] sm:$0xff]
    %v887 = vld [vmem:[#allocation2 + $0xaf] sm:$0xff]
    %v888 = vld [vmem:[#allocation2 + $0xb7] sm:$0xff]
    %v889 = vld [vmem:[#allocation2 + $0xbf] sm:$0xff]
    %v890 = vld [vmem:[#allocation2 + $0xc7] sm:$0xff]
    %v891 = vld [vmem:[#allocation2 + $0xcf] sm:$0xff]
    %v892 = vld [vmem:[#allocation2 + $0xd7] sm:$0xff]
    %v893 = vld [vmem:[#allocation2 + $0xdf] sm:$0xff]
    %v894 = vld [vmem:[#allocation2 + $0xe7] sm:$0xff]
    %v895 = vld [vmem:[#allocation2 + $0xef] sm:$0xff]
    %v896 = vld [vmem:[#allocation2 + $0xf7] sm:$0xff]
    %v897 = vld [vmem:[#allocation2 + $0xff] sm:$0xff]
    %v898 = vld [vmem:[#allocation2 + $0x107] sm:$0xff]
    %v899 = vld [vmem:[#allocation2 + $0x10f] sm:$0xff]
    %v900 = vld [vmem:[#allocation2 + $0x117] sm:$0xff]
    %v901 = vld [vmem:[#allocation2 + $0x11f] sm:$0xff]
    %v902 = vld [vmem:[#allocation2 + $0x127] sm:$0xff]
    %v903 = vld [vmem:[#allocation2 + $0x12f] sm:$0xff]
    %v904 = vld [vmem:[#allocation2 + $0x137] sm:$0xff]
    %v905 = vld [vmem:[#allocation2 + $0x13f] sm:$0xff]
    %v906 = vld [vmem:[#allocation2 + $0x147] sm:$0xff]
    %v907 = vld [vmem:[#allocation2 + $0x14f] sm:$0xff]
    %v908 = vld [vmem:[#allocation2 + $0x157] sm:$0xff]
    %v909 = vld [vmem:[#allocation2 + $0x15f] sm:$0xff]
    %v910 = vld [vmem:[#allocation2 + $0x167] sm:$0xff]
    %v911 = vld [vmem:[#allocation2 + $0x16f] sm:$0xff]
    %v912 = vld [vmem:[#allocation2 + $0x177] sm:$0xff]
    %v913 = vld [vmem:[#allocation2 + $0x17f] sm:$0xff]
    %v914 = vld [vmem:[#allocation2 + $0x187] sm:$0xff]
    %v915 = vld [vmem:[#allocation2 + $0x18f] sm:$0xff]
    %965 = vrot.lane.b32.xlu0 %v867, 12
    %v966 = vpop.permute.xlu0 %965
    %967 = vrot.lane.b32.xlu0 %v868, 12
    %v968 = vpop.permute.xlu0 %967
    %969 = vrot.lane.b32.xlu0 %v869, 12
    %v970 = vpop.permute.xlu0 %969
    %971 = vrot.lane.b32.xlu0 %v870, 12
    %v972 = vpop.permute.xlu0 %971
    %973 = vrot.lane.b32.xlu0 %v871, 12
    %v974 = vpop.permute.xlu0 %973
    %975 = vrot.lane.b32.xlu0 %v872, 12
    %v976 = vpop.permute.xlu0 %975
    %977 = vrot.lane.b32.xlu0 %v873, 12
    %v978 = vpop.permute.xlu0 %977
    %979 = vrot.lane.b32.xlu0 %v874, 12
    %v980 = vpop.permute.xlu0 %979
    %981 = vrot.lane.b32.xlu0 %v875, 12
    %v982 = vpop.permute.xlu0 %981
    %983 = vrot.lane.b32.xlu0 %v876, 12
    %v984 = vpop.permute.xlu0 %983
    %985 = vrot.lane.b32.xlu0 %v877, 12
    %v986 = vpop.permute.xlu0 %985
    %987 = vrot.lane.b32.xlu0 %v878, 12
    %v988 = vpop.permute.xlu0 %987
    %989 = vrot.lane.b32.xlu0 %v879, 12
    %v990 = vpop.permute.xlu0 %989
    %991 = vrot.lane.b32.xlu0 %v880, 12
    %v992 = vpop.permute.xlu0 %991
    %993 = vrot.lane.b32.xlu0 %v881, 12
    %v994 = vpop.permute.xlu0 %993
    %995 = vrot.lane.b32.xlu0 %v882, 12
    %v996 = vpop.permute.xlu0 %995
    %997 = vrot.lane.b32.xlu0 %v883, 12
    %v998 = vpop.permute.xlu0 %997
    %999 = vrot.lane.b32.xlu0 %v884, 12
    %v1000 = vpop.permute.xlu0 %999
    %1001 = vrot.lane.b32.xlu0 %v885, 12
    %v1002 = vpop.permute.xlu0 %1001
    %1003 = vrot.lane.b32.xlu0 %v886, 12
    %v1004 = vpop.permute.xlu0 %1003
    %1005 = vrot.lane.b32.xlu0 %v887, 12
    %v1006 = vpop.permute.xlu0 %1005
    %1007 = vrot.lane.b32.xlu0 %v888, 12
    %v1008 = vpop.permute.xlu0 %1007
    %1009 = vrot.lane.b32.xlu0 %v889, 12
    %v1010 = vpop.permute.xlu0 %1009
    %1011 = vrot.lane.b32.xlu0 %v890, 12
    %v1012 = vpop.permute.xlu0 %1011
    %1013 = vrot.lane.b32.xlu0 %v891, 12
    %v1014 = vpop.permute.xlu0 %1013
    %1015 = vrot.lane.b32.xlu0 %v892, 12
    %v1016 = vpop.permute.xlu0 %1015
    %1017 = vrot.lane.b32.xlu0 %v893, 12
    %v1018 = vpop.permute.xlu0 %1017
    %1019 = vrot.lane.b32.xlu0 %v894, 12
    %v1020 = vpop.permute.xlu0 %1019
    %1021 = vrot.lane.b32.xlu0 %v895, 12
    %v1022 = vpop.permute.xlu0 %1021
    %1023 = vrot.lane.b32.xlu0 %v896, 12
    %v1024 = vpop.permute.xlu0 %1023
    %1025 = vrot.lane.b32.xlu0 %v897, 12
    %v1026 = vpop.permute.xlu0 %1025
    %1027 = vrot.lane.b32.xlu0 %v898, 12
    %v1028 = vpop.permute.xlu0 %1027
    %1029 = vrot.lane.b32.xlu0 %v899, 12
    %v1030 = vpop.permute.xlu0 %1029
    %1031 = vrot.lane.b32.xlu0 %v900, 12
    %v1032 = vpop.permute.xlu0 %1031
    %1033 = vrot.lane.b32.xlu0 %v901, 12
    %v1034 = vpop.permute.xlu0 %1033
    %1035 = vrot.lane.b32.xlu0 %v902, 12
    %v1036 = vpop.permute.xlu0 %1035
    %1037 = vrot.lane.b32.xlu0 %v903, 12
    %v1038 = vpop.permute.xlu0 %1037
    %1039 = vrot.lane.b32.xlu0 %v904, 12
    %v1040 = vpop.permute.xlu0 %1039
    %1041 = vrot.lane.b32.xlu0 %v905, 12
    %v1042 = vpop.permute.xlu0 %1041
    %1043 = vrot.lane.b32.xlu0 %v906, 12
    %v1044 = vpop.permute.xlu0 %1043
    %1045 = vrot.lane.b32.xlu0 %v907, 12
    %v1046 = vpop.permute.xlu0 %1045
    %1047 = vrot.lane.b32.xlu0 %v908, 12
    %v1048 = vpop.permute.xlu0 %1047
    %1049 = vrot.lane.b32.xlu0 %v909, 12
    %v1050 = vpop.permute.xlu0 %1049
    %1051 = vrot.lane.b32.xlu0 %v910, 12
    %v1052 = vpop.permute.xlu0 %1051
    %1053 = vrot.lane.b32.xlu0 %v911, 12
    %v1054 = vpop.permute.xlu0 %1053
    %1055 = vrot.lane.b32.xlu0 %v912, 12
    %v1056 = vpop.permute.xlu0 %1055
    %1057 = vrot.lane.b32.xlu0 %v913, 12
    %v1058 = vpop.permute.xlu0 %1057
    %1059 = vrot.lane.b32.xlu0 %v914, 12
    %v1060 = vpop.permute.xlu0 %1059
    %1061 = vrot.lane.b32.xlu0 %v915, 12
    %v1062 = vpop.permute.xlu0 %1061
    %vm1112 = vcmask 130144
    %1113 = vst.msk [vmem:[#allocation3] sm:$0xff] %vm1112, %v966
    %1114 = vst.msk [vmem:[#allocation3 + $0x8] sm:$0xff] %vm1112, %v968
    %1115 = vst.msk [vmem:[#allocation3 + $0x10] sm:$0xff] %vm1112, %v970
    %1116 = vst.msk [vmem:[#allocation3 + $0x18] sm:$0xff] %vm1112, %v972
    %1117 = vst.msk [vmem:[#allocation3 + $0x20] sm:$0xff] %vm1112, %v974
    %1118 = vst.msk [vmem:[#allocation3 + $0x28] sm:$0xff] %vm1112, %v976
    %1119 = vst.msk [vmem:[#allocation3 + $0x30] sm:$0xff] %vm1112, %v978
    %1120 = vst.msk [vmem:[#allocation3 + $0x38] sm:$0xff] %vm1112, %v980
    %1121 = vst.msk [vmem:[#allocation3 + $0x40] sm:$0xff] %vm1112, %v982
    %1122 = vst.msk [vmem:[#allocation3 + $0x48] sm:$0xff] %vm1112, %v984
    %1123 = vst.msk [vmem:[#allocation3 + $0x50] sm:$0xff] %vm1112, %v986
    %1124 = vst.msk [vmem:[#allocation3 + $0x58] sm:$0xff] %vm1112, %v988
    %1125 = vst.msk [vmem:[#allocation3 + $0x60] sm:$0xff] %vm1112, %v990
    %1126 = vst.msk [vmem:[#allocation3 + $0x68] sm:$0xff] %vm1112, %v992
    %1127 = vst.msk [vmem:[#allocation3 + $0x70] sm:$0xff] %vm1112, %v994
    %1128 = vst.msk [vmem:[#allocation3 + $0x78] sm:$0xff] %vm1112, %v996
    %1129 = vst.msk [vmem:[#allocation3 + $0x80] sm:$0xff] %vm1112, %v998
    %1130 = vst.msk [vmem:[#allocation3 + $0x88] sm:$0xff] %vm1112, %v1000
    %1131 = vst.msk [vmem:[#allocation3 + $0x90] sm:$0xff] %vm1112, %v1002
    %1132 = vst.msk [vmem:[#allocation3 + $0x98] sm:$0xff] %vm1112, %v1004
    %1133 = vst.msk [vmem:[#allocation3 + $0xa0] sm:$0xff] %vm1112, %v1006
    %1134 = vst.msk [vmem:[#allocation3 + $0xa8] sm:$0xff] %vm1112, %v1008
    %1135 = vst.msk [vmem:[#allocation3 + $0xb0] sm:$0xff] %vm1112, %v1010
    %1136 = vst.msk [vmem:[#allocation3 + $0xb8] sm:$0xff] %vm1112, %v1012
    %1137 = vst.msk [vmem:[#allocation3 + $0xc0] sm:$0xff] %vm1112, %v1014
    %1138 = vst.msk [vmem:[#allocation3 + $0xc8] sm:$0xff] %vm1112, %v1016
    %1139 = vst.msk [vmem:[#allocation3 + $0xd0] sm:$0xff] %vm1112, %v1018
    %1140 = vst.msk [vmem:[#allocation3 + $0xd8] sm:$0xff] %vm1112, %v1020
    %1141 = vst.msk [vmem:[#allocation3 + $0xe0] sm:$0xff] %vm1112, %v1022
    %1142 = vst.msk [vmem:[#allocation3 + $0xe8] sm:$0xff] %vm1112, %v1024
    %1143 = vst.msk [vmem:[#allocation3 + $0xf0] sm:$0xff] %vm1112, %v1026
    %1144 = vst.msk [vmem:[#allocation3 + $0xf8] sm:$0xff] %vm1112, %v1028
    %1145 = vst.msk [vmem:[#allocation3 + $0x100] sm:$0xff] %vm1112, %v1030
    %1146 = vst.msk [vmem:[#allocation3 + $0x108] sm:$0xff] %vm1112, %v1032
    %1147 = vst.msk [vmem:[#allocation3 + $0x110] sm:$0xff] %vm1112, %v1034
    %1148 = vst.msk [vmem:[#allocation3 + $0x118] sm:$0xff] %vm1112, %v1036
    %1149 = vst.msk [vmem:[#allocation3 + $0x120] sm:$0xff] %vm1112, %v1038
    %1150 = vst.msk [vmem:[#allocation3 + $0x128] sm:$0xff] %vm1112, %v1040
    %1151 = vst.msk [vmem:[#allocation3 + $0x130] sm:$0xff] %vm1112, %v1042
    %1152 = vst.msk [vmem:[#allocation3 + $0x138] sm:$0xff] %vm1112, %v1044
    %1153 = vst.msk [vmem:[#allocation3 + $0x140] sm:$0xff] %vm1112, %v1046
    %1154 = vst.msk [vmem:[#allocation3 + $0x148] sm:$0xff] %vm1112, %v1048
    %1155 = vst.msk [vmem:[#allocation3 + $0x150] sm:$0xff] %vm1112, %v1050
    %1156 = vst.msk [vmem:[#allocation3 + $0x158] sm:$0xff] %vm1112, %v1052
    %1157 = vst.msk [vmem:[#allocation3 + $0x160] sm:$0xff] %vm1112, %v1054
    %1158 = vst.msk [vmem:[#allocation3 + $0x168] sm:$0xff] %vm1112, %v1056
    %1159 = vst.msk [vmem:[#allocation3 + $0x170] sm:$0xff] %vm1112, %v1058
    %1160 = vst.msk [vmem:[#allocation3 + $0x178] sm:$0xff] %vm1112, %v1060
    %1161 = vst.msk [vmem:[#allocation3 + $0x180] sm:$0xff] %vm1112, %v1062
    %v1162 = vld [vmem:[#allocation2 + $0x10] sm:$0xff]
    %v1163 = vld [vmem:[#allocation2 + $0x18] sm:$0xff]
    %v1164 = vld [vmem:[#allocation2 + $0x20] sm:$0xff]
    %v1165 = vld [vmem:[#allocation2 + $0x28] sm:$0xff]
    %v1166 = vld [vmem:[#allocation2 + $0x30] sm:$0xff]
    %v1167 = vld [vmem:[#allocation2 + $0x38] sm:$0xff]
    %v1168 = vld [vmem:[#allocation2 + $0x40] sm:$0xff]
    %v1169 = vld [vmem:[#allocation2 + $0x48] sm:$0xff]
    %v1170 = vld [vmem:[#allocation2 + $0x50] sm:$0xff]
    %v1171 = vld [vmem:[#allocation2 + $0x58] sm:$0xff]
    %v1172 = vld [vmem:[#allocation2 + $0x60] sm:$0xff]
    %v1173 = vld [vmem:[#allocation2 + $0x68] sm:$0xff]
    %v1174 = vld [vmem:[#allocation2 + $0x70] sm:$0xff]
    %v1175 = vld [vmem:[#allocation2 + $0x78] sm:$0xff]
    %v1176 = vld [vmem:[#allocation2 + $0x80] sm:$0xff]
    %v1177 = vld [vmem:[#allocation2 + $0x88] sm:$0xff]
    %v1178 = vld [vmem:[#allocation2 + $0x90] sm:$0xff]
    %v1179 = vld [vmem:[#allocation2 + $0x98] sm:$0xff]
    %v1180 = vld [vmem:[#allocation2 + $0xa0] sm:$0xff]
    %v1181 = vld [vmem:[#allocation2 + $0xa8] sm:$0xff]
    %v1182 = vld [vmem:[#allocation2 + $0xb0] sm:$0xff]
    %v1183 = vld [vmem:[#allocation2 + $0xb8] sm:$0xff]
    %v1184 = vld [vmem:[#allocation2 + $0xc0] sm:$0xff]
    %v1185 = vld [vmem:[#allocation2 + $0xc8] sm:$0xff]
    %v1186 = vld [vmem:[#allocation2 + $0xd0] sm:$0xff]
    %v1187 = vld [vmem:[#allocation2 + $0xd8] sm:$0xff]
    %v1188 = vld [vmem:[#allocation2 + $0xe0] sm:$0xff]
    %v1189 = vld [vmem:[#allocation2 + $0xe8] sm:$0xff]
    %v1190 = vld [vmem:[#allocation2 + $0xf0] sm:$0xff]
    %v1191 = vld [vmem:[#allocation2 + $0xf8] sm:$0xff]
    %v1192 = vld [vmem:[#allocation2 + $0x100] sm:$0xff]
    %v1193 = vld [vmem:[#allocation2 + $0x108] sm:$0xff]
    %v1194 = vld [vmem:[#allocation2 + $0x110] sm:$0xff]
    %v1195 = vld [vmem:[#allocation2 + $0x118] sm:$0xff]
    %v1196 = vld [vmem:[#allocation2 + $0x120] sm:$0xff]
    %v1197 = vld [vmem:[#allocation2 + $0x128] sm:$0xff]
    %v1198 = vld [vmem:[#allocation2 + $0x130] sm:$0xff]
    %v1199 = vld [vmem:[#allocation2 + $0x138] sm:$0xff]
    %v1200 = vld [vmem:[#allocation2 + $0x140] sm:$0xff]
    %v1201 = vld [vmem:[#allocation2 + $0x148] sm:$0xff]
    %v1202 = vld [vmem:[#allocation2 + $0x150] sm:$0xff]
    %v1203 = vld [vmem:[#allocation2 + $0x158] sm:$0xff]
    %v1204 = vld [vmem:[#allocation2 + $0x160] sm:$0xff]
    %v1205 = vld [vmem:[#allocation2 + $0x168] sm:$0xff]
    %v1206 = vld [vmem:[#allocation2 + $0x170] sm:$0xff]
    %v1207 = vld [vmem:[#allocation2 + $0x178] sm:$0xff]
    %v1208 = vld [vmem:[#allocation2 + $0x180] sm:$0xff]
    %v1209 = vld [vmem:[#allocation2 + $0x188] sm:$0xff]
    %v1210 = vld [vmem:[#allocation2 + $0x190] sm:$0xff]
    %1260 = vrot.lane.b32.xlu0 %v1162, 16
    %v1261 = vpop.permute.xlu0 %1260
    %1262 = vrot.lane.b32.xlu0 %v1163, 16
    %v1263 = vpop.permute.xlu0 %1262
    %1264 = vrot.lane.b32.xlu0 %v1164, 16
    %v1265 = vpop.permute.xlu0 %1264
    %1266 = vrot.lane.b32.xlu0 %v1165, 16
    %v1267 = vpop.permute.xlu0 %1266
    %1268 = vrot.lane.b32.xlu0 %v1166, 16
    %v1269 = vpop.permute.xlu0 %1268
    %1270 = vrot.lane.b32.xlu0 %v1167, 16
    %v1271 = vpop.permute.xlu0 %1270
    %1272 = vrot.lane.b32.xlu0 %v1168, 16
    %v1273 = vpop.permute.xlu0 %1272
    %1274 = vrot.lane.b32.xlu0 %v1169, 16
    %v1275 = vpop.permute.xlu0 %1274
    %1276 = vrot.lane.b32.xlu0 %v1170, 16
    %v1277 = vpop.permute.xlu0 %1276
    %1278 = vrot.lane.b32.xlu0 %v1171, 16
    %v1279 = vpop.permute.xlu0 %1278
    %1280 = vrot.lane.b32.xlu0 %v1172, 16
    %v1281 = vpop.permute.xlu0 %1280
    %1282 = vrot.lane.b32.xlu0 %v1173, 16
    %v1283 = vpop.permute.xlu0 %1282
    %1284 = vrot.lane.b32.xlu0 %v1174, 16
    %v1285 = vpop.permute.xlu0 %1284
    %1286 = vrot.lane.b32.xlu0 %v1175, 16
    %v1287 = vpop.permute.xlu0 %1286
    %1288 = vrot.lane.b32.xlu0 %v1176, 16
    %v1289 = vpop.permute.xlu0 %1288
    %1290 = vrot.lane.b32.xlu0 %v1177, 16
    %v1291 = vpop.permute.xlu0 %1290
    %1292 = vrot.lane.b32.xlu0 %v1178, 16
    %v1293 = vpop.permute.xlu0 %1292
    %1294 = vrot.lane.b32.xlu0 %v1179, 16
    %v1295 = vpop.permute.xlu0 %1294
    %1296 = vrot.lane.b32.xlu0 %v1180, 16
    %v1297 = vpop.permute.xlu0 %1296
    %1298 = vrot.lane.b32.xlu0 %v1181, 16
    %v1299 = vpop.permute.xlu0 %1298
    %1300 = vrot.lane.b32.xlu0 %v1182, 16
    %v1301 = vpop.permute.xlu0 %1300
    %1302 = vrot.lane.b32.xlu0 %v1183, 16
    %v1303 = vpop.permute.xlu0 %1302
    %1304 = vrot.lane.b32.xlu0 %v1184, 16
    %v1305 = vpop.permute.xlu0 %1304
    %1306 = vrot.lane.b32.xlu0 %v1185, 16
    %v1307 = vpop.permute.xlu0 %1306
    %1308 = vrot.lane.b32.xlu0 %v1186, 16
    %v1309 = vpop.permute.xlu0 %1308
    %1310 = vrot.lane.b32.xlu0 %v1187, 16
    %v1311 = vpop.permute.xlu0 %1310
    %1312 = vrot.lane.b32.xlu0 %v1188, 16
    %v1313 = vpop.permute.xlu0 %1312
    %1314 = vrot.lane.b32.xlu0 %v1189, 16
    %v1315 = vpop.permute.xlu0 %1314
    %1316 = vrot.lane.b32.xlu0 %v1190, 16
    %v1317 = vpop.permute.xlu0 %1316
    %1318 = vrot.lane.b32.xlu0 %v1191, 16
    %v1319 = vpop.permute.xlu0 %1318
    %1320 = vrot.lane.b32.xlu0 %v1192, 16
    %v1321 = vpop.permute.xlu0 %1320
    %1322 = vrot.lane.b32.xlu0 %v1193, 16
    %v1323 = vpop.permute.xlu0 %1322
    %1324 = vrot.lane.b32.xlu0 %v1194, 16
    %v1325 = vpop.permute.xlu0 %1324
    %1326 = vrot.lane.b32.xlu0 %v1195, 16
    %v1327 = vpop.permute.xlu0 %1326
    %1328 = vrot.lane.b32.xlu0 %v1196, 16
    %v1329 = vpop.permute.xlu0 %1328
    %1330 = vrot.lane.b32.xlu0 %v1197, 16
    %v1331 = vpop.permute.xlu0 %1330
    %1332 = vrot.lane.b32.xlu0 %v1198, 16
    %v1333 = vpop.permute.xlu0 %1332
    %1334 = vrot.lane.b32.xlu0 %v1199, 16
    %v1335 = vpop.permute.xlu0 %1334
    %1336 = vrot.lane.b32.xlu0 %v1200, 16
    %v1337 = vpop.permute.xlu0 %1336
    %1338 = vrot.lane.b32.xlu0 %v1201, 16
    %v1339 = vpop.permute.xlu0 %1338
    %1340 = vrot.lane.b32.xlu0 %v1202, 16
    %v1341 = vpop.permute.xlu0 %1340
    %1342 = vrot.lane.b32.xlu0 %v1203, 16
    %v1343 = vpop.permute.xlu0 %1342
    %1344 = vrot.lane.b32.xlu0 %v1204, 16
    %v1345 = vpop.permute.xlu0 %1344
    %1346 = vrot.lane.b32.xlu0 %v1205, 16
    %v1347 = vpop.permute.xlu0 %1346
    %1348 = vrot.lane.b32.xlu0 %v1206, 16
    %v1349 = vpop.permute.xlu0 %1348
    %1350 = vrot.lane.b32.xlu0 %v1207, 16
    %v1351 = vpop.permute.xlu0 %1350
    %1352 = vrot.lane.b32.xlu0 %v1208, 16
    %v1353 = vpop.permute.xlu0 %1352
    %1354 = vrot.lane.b32.xlu0 %v1209, 16
    %v1355 = vpop.permute.xlu0 %1354
    %1356 = vrot.lane.b32.xlu0 %v1210, 16
    %v1357 = vpop.permute.xlu0 %1356
    %vm1407 = vcmask 162944
    %1408 = vst.msk [vmem:[#allocation3] sm:$0xff] %vm1407, %v1261
    %1409 = vst.msk [vmem:[#allocation3 + $0x8] sm:$0xff] %vm1407, %v1263
    %1410 = vst.msk [vmem:[#allocation3 + $0x10] sm:$0xff] %vm1407, %v1265
    %1411 = vst.msk [vmem:[#allocation3 + $0x18] sm:$0xff] %vm1407, %v1267
    %1412 = vst.msk [vmem:[#allocation3 + $0x20] sm:$0xff] %vm1407, %v1269
    %1413 = vst.msk [vmem:[#allocation3 + $0x28] sm:$0xff] %vm1407, %v1271
    %1414 = vst.msk [vmem:[#allocation3 + $0x30] sm:$0xff] %vm1407, %v1273
    %1415 = vst.msk [vmem:[#allocation3 + $0x38] sm:$0xff] %vm1407, %v1275
    %1416 = vst.msk [vmem:[#allocation3 + $0x40] sm:$0xff] %vm1407, %v1277
    %1417 = vst.msk [vmem:[#allocation3 + $0x48] sm:$0xff] %vm1407, %v1279
    %1418 = vst.msk [vmem:[#allocation3 + $0x50] sm:$0xff] %vm1407, %v1281
    %1419 = vst.msk [vmem:[#allocation3 + $0x58] sm:$0xff] %vm1407, %v1283
    %1420 = vst.msk [vmem:[#allocation3 + $0x60] sm:$0xff] %vm1407, %v1285
    %1421 = vst.msk [vmem:[#allocation3 + $0x68] sm:$0xff] %vm1407, %v1287
    %1422 = vst.msk [vmem:[#allocation3 + $0x70] sm:$0xff] %vm1407, %v1289
    %1423 = vst.msk [vmem:[#allocation3 + $0x78] sm:$0xff] %vm1407, %v1291
    %1424 = vst.msk [vmem:[#allocation3 + $0x80] sm:$0xff] %vm1407, %v1293
    %1425 = vst.msk [vmem:[#allocation3 + $0x88] sm:$0xff] %vm1407, %v1295
    %1426 = vst.msk [vmem:[#allocation3 + $0x90] sm:$0xff] %vm1407, %v1297
    %1427 = vst.msk [vmem:[#allocation3 + $0x98] sm:$0xff] %vm1407, %v1299
    %1428 = vst.msk [vmem:[#allocation3 + $0xa0] sm:$0xff] %vm1407, %v1301
    %1429 = vst.msk [vmem:[#allocation3 + $0xa8] sm:$0xff] %vm1407, %v1303
    %1430 = vst.msk [vmem:[#allocation3 + $0xb0] sm:$0xff] %vm1407, %v1305
    %1431 = vst.msk [vmem:[#allocation3 + $0xb8] sm:$0xff] %vm1407, %v1307
    %1432 = vst.msk [vmem:[#allocation3 + $0xc0] sm:$0xff] %vm1407, %v1309
    %1433 = vst.msk [vmem:[#allocation3 + $0xc8] sm:$0xff] %vm1407, %v1311
    %1434 = vst.msk [vmem:[#allocation3 + $0xd0] sm:$0xff] %vm1407, %v1313
    %1435 = vst.msk [vmem:[#allocation3 + $0xd8] sm:$0xff] %vm1407, %v1315
    %1436 = vst.msk [vmem:[#allocation3 + $0xe0] sm:$0xff] %vm1407, %v1317
    %1437 = vst.msk [vmem:[#allocation3 + $0xe8] sm:$0xff] %vm1407, %v1319
    %1438 = vst.msk [vmem:[#allocation3 + $0xf0] sm:$0xff] %vm1407, %v1321
    %1439 = vst.msk [vmem:[#allocation3 + $0xf8] sm:$0xff] %vm1407, %v1323
    %1440 = vst.msk [vmem:[#allocation3 + $0x100] sm:$0xff] %vm1407, %v1325
    %1441 = vst.msk [vmem:[#allocation3 + $0x108] sm:$0xff] %vm1407, %v1327
    %1442 = vst.msk [vmem:[#allocation3 + $0x110] sm:$0xff] %vm1407, %v1329
    %1443 = vst.msk [vmem:[#allocation3 + $0x118] sm:$0xff] %vm1407, %v1331
    %1444 = vst.msk [vmem:[#allocation3 + $0x120] sm:$0xff] %vm1407, %v1333
    %1445 = vst.msk [vmem:[#allocation3 + $0x128] sm:$0xff] %vm1407, %v1335
    %1446 = vst.msk [vmem:[#allocation3 + $0x130] sm:$0xff] %vm1407, %v1337
    %1447 = vst.msk [vmem:[#allocation3 + $0x138] sm:$0xff] %vm1407, %v1339
    %1448 = vst.msk [vmem:[#allocation3 + $0x140] sm:$0xff] %vm1407, %v1341
    %1449 = vst.msk [vmem:[#allocation3 + $0x148] sm:$0xff] %vm1407, %v1343
    %1450 = vst.msk [vmem:[#allocation3 + $0x150] sm:$0xff] %vm1407, %v1345
    %1451 = vst.msk [vmem:[#allocation3 + $0x158] sm:$0xff] %vm1407, %v1347
    %1452 = vst.msk [vmem:[#allocation3 + $0x160] sm:$0xff] %vm1407, %v1349
    %1453 = vst.msk [vmem:[#allocation3 + $0x168] sm:$0xff] %vm1407, %v1351
    %1454 = vst.msk [vmem:[#allocation3 + $0x170] sm:$0xff] %vm1407, %v1353
    %1455 = vst.msk [vmem:[#allocation3 + $0x178] sm:$0xff] %vm1407, %v1355
    %1456 = vst.msk [vmem:[#allocation3 + $0x180] sm:$0xff] %vm1407, %v1357
    %v1457 = vld [vmem:[#allocation2 + $0x11] sm:$0xff]
    %v1458 = vld [vmem:[#allocation2 + $0x19] sm:$0xff]
    %v1459 = vld [vmem:[#allocation2 + $0x21] sm:$0xff]
    %v1460 = vld [vmem:[#allocation2 + $0x29] sm:$0xff]
    %v1461 = vld [vmem:[#allocation2 + $0x31] sm:$0xff]
    %v1462 = vld [vmem:[#allocation2 + $0x39] sm:$0xff]
    %v1463 = vld [vmem:[#allocation2 + $0x41] sm:$0xff]
    %v1464 = vld [vmem:[#allocation2 + $0x49] sm:$0xff]
    %v1465 = vld [vmem:[#allocation2 + $0x51] sm:$0xff]
    %v1466 = vld [vmem:[#allocation2 + $0x59] sm:$0xff]
    %v1467 = vld [vmem:[#allocation2 + $0x61] sm:$0xff]
    %v1468 = vld [vmem:[#allocation2 + $0x69] sm:$0xff]
    %v1469 = vld [vmem:[#allocation2 + $0x71] sm:$0xff]
    %v1470 = vld [vmem:[#allocation2 + $0x79] sm:$0xff]
    %v1471 = vld [vmem:[#allocation2 + $0x81] sm:$0xff]
    %v1472 = vld [vmem:[#allocation2 + $0x89] sm:$0xff]
    %v1473 = vld [vmem:[#allocation2 + $0x91] sm:$0xff]
    %v1474 = vld [vmem:[#allocation2 + $0x99] sm:$0xff]
    %v1475 = vld [vmem:[#allocation2 + $0xa1] sm:$0xff]
    %v1476 = vld [vmem:[#allocation2 + $0xa9] sm:$0xff]
    %v1477 = vld [vmem:[#allocation2 + $0xb1] sm:$0xff]
    %v1478 = vld [vmem:[#allocation2 + $0xb9] sm:$0xff]
    %v1479 = vld [vmem:[#allocation2 + $0xc1] sm:$0xff]
    %v1480 = vld [vmem:[#allocation2 + $0xc9] sm:$0xff]
    %v1481 = vld [vmem:[#allocation2 + $0xd1] sm:$0xff]
    %v1482 = vld [vmem:[#allocation2 + $0xd9] sm:$0xff]
    %v1483 = vld [vmem:[#allocation2 + $0xe1] sm:$0xff]
    %v1484 = vld [vmem:[#allocation2 + $0xe9] sm:$0xff]
    %v1485 = vld [vmem:[#allocation2 + $0xf1] sm:$0xff]
    %v1486 = vld [vmem:[#allocation2 + $0xf9] sm:$0xff]
    %v1487 = vld [vmem:[#allocation2 + $0x101] sm:$0xff]
    %v1488 = vld [vmem:[#allocation2 + $0x109] sm:$0xff]
    %v1489 = vld [vmem:[#allocation2 + $0x111] sm:$0xff]
    %v1490 = vld [vmem:[#allocation2 + $0x119] sm:$0xff]
    %v1491 = vld [vmem:[#allocation2 + $0x121] sm:$0xff]
    %v1492 = vld [vmem:[#allocation2 + $0x129] sm:$0xff]
    %v1493 = vld [vmem:[#allocation2 + $0x131] sm:$0xff]
    %v1494 = vld [vmem:[#allocation2 + $0x139] sm:$0xff]
    %v1495 = vld [vmem:[#allocation2 + $0x141] sm:$0xff]
    %v1496 = vld [vmem:[#allocation2 + $0x149] sm:$0xff]
    %v1497 = vld [vmem:[#allocation2 + $0x151] sm:$0xff]
    %v1498 = vld [vmem:[#allocation2 + $0x159] sm:$0xff]
    %v1499 = vld [vmem:[#allocation2 + $0x161] sm:$0xff]
    %v1500 = vld [vmem:[#allocation2 + $0x169] sm:$0xff]
    %v1501 = vld [vmem:[#allocation2 + $0x171] sm:$0xff]
    %v1502 = vld [vmem:[#allocation2 + $0x179] sm:$0xff]
    %v1503 = vld [vmem:[#allocation2 + $0x181] sm:$0xff]
    %v1504 = vld [vmem:[#allocation2 + $0x189] sm:$0xff]
    %v1505 = vld [vmem:[#allocation2 + $0x191] sm:$0xff]
    %1555 = vrot.lane.b32.xlu0 %v1457, 20
    %v1556 = vpop.permute.xlu0 %1555
    %1557 = vrot.lane.b32.xlu0 %v1458, 20
    %v1558 = vpop.permute.xlu0 %1557
    %1559 = vrot.lane.b32.xlu0 %v1459, 20
    %v1560 = vpop.permute.xlu0 %1559
    %1561 = vrot.lane.b32.xlu0 %v1460, 20
    %v1562 = vpop.permute.xlu0 %1561
    %1563 = vrot.lane.b32.xlu0 %v1461, 20
    %v1564 = vpop.permute.xlu0 %1563
    %1565 = vrot.lane.b32.xlu0 %v1462, 20
    %v1566 = vpop.permute.xlu0 %1565
    %1567 = vrot.lane.b32.xlu0 %v1463, 20
    %v1568 = vpop.permute.xlu0 %1567
    %1569 = vrot.lane.b32.xlu0 %v1464, 20
    %v1570 = vpop.permute.xlu0 %1569
    %1571 = vrot.lane.b32.xlu0 %v1465, 20
    %v1572 = vpop.permute.xlu0 %1571
    %1573 = vrot.lane.b32.xlu0 %v1466, 20
    %v1574 = vpop.permute.xlu0 %1573
    %1575 = vrot.lane.b32.xlu0 %v1467, 20
    %v1576 = vpop.permute.xlu0 %1575
    %1577 = vrot.lane.b32.xlu0 %v1468, 20
    %v1578 = vpop.permute.xlu0 %1577
    %1579 = vrot.lane.b32.xlu0 %v1469, 20
    %v1580 = vpop.permute.xlu0 %1579
    %1581 = vrot.lane.b32.xlu0 %v1470, 20
    %v1582 = vpop.permute.xlu0 %1581
    %1583 = vrot.lane.b32.xlu0 %v1471, 20
    %v1584 = vpop.permute.xlu0 %1583
    %1585 = vrot.lane.b32.xlu0 %v1472, 20
    %v1586 = vpop.permute.xlu0 %1585
    %1587 = vrot.lane.b32.xlu0 %v1473, 20
    %v1588 = vpop.permute.xlu0 %1587
    %1589 = vrot.lane.b32.xlu0 %v1474, 20
    %v1590 = vpop.permute.xlu0 %1589
    %1591 = vrot.lane.b32.xlu0 %v1475, 20
    %v1592 = vpop.permute.xlu0 %1591
    %1593 = vrot.lane.b32.xlu0 %v1476, 20
    %v1594 = vpop.permute.xlu0 %1593
    %1595 = vrot.lane.b32.xlu0 %v1477, 20
    %v1596 = vpop.permute.xlu0 %1595
    %1597 = vrot.lane.b32.xlu0 %v1478, 20
    %v1598 = vpop.permute.xlu0 %1597
    %1599 = vrot.lane.b32.xlu0 %v1479, 20
    %v1600 = vpop.permute.xlu0 %1599
    %1601 = vrot.lane.b32.xlu0 %v1480, 20
    %v1602 = vpop.permute.xlu0 %1601
    %1603 = vrot.lane.b32.xlu0 %v1481, 20
    %v1604 = vpop.permute.xlu0 %1603
    %1605 = vrot.lane.b32.xlu0 %v1482, 20
    %v1606 = vpop.permute.xlu0 %1605
    %1607 = vrot.lane.b32.xlu0 %v1483, 20
    %v1608 = vpop.permute.xlu0 %1607
    %1609 = vrot.lane.b32.xlu0 %v1484, 20
    %v1610 = vpop.permute.xlu0 %1609
    %1611 = vrot.lane.b32.xlu0 %v1485, 20
    %v1612 = vpop.permute.xlu0 %1611
    %1613 = vrot.lane.b32.xlu0 %v1486, 20
    %v1614 = vpop.permute.xlu0 %1613
    %1615 = vrot.lane.b32.xlu0 %v1487, 20
    %v1616 = vpop.permute.xlu0 %1615
    %1617 = vrot.lane.b32.xlu0 %v1488, 20
    %v1618 = vpop.permute.xlu0 %1617
    %1619 = vrot.lane.b32.xlu0 %v1489, 20
    %v1620 = vpop.permute.xlu0 %1619
    %1621 = vrot.lane.b32.xlu0 %v1490, 20
    %v1622 = vpop.permute.xlu0 %1621
    %1623 = vrot.lane.b32.xlu0 %v1491, 20
    %v1624 = vpop.permute.xlu0 %1623
    %1625 = vrot.lane.b32.xlu0 %v1492, 20
    %v1626 = vpop.permute.xlu0 %1625
    %1627 = vrot.lane.b32.xlu0 %v1493, 20
    %v1628 = vpop.permute.xlu0 %1627
    %1629 = vrot.lane.b32.xlu0 %v1494, 20
    %v1630 = vpop.permute.xlu0 %1629
    %1631 = vrot.lane.b32.xlu0 %v1495, 20
    %v1632 = vpop.permute.xlu0 %1631
    %1633 = vrot.lane.b32.xlu0 %v1496, 20
    %v1634 = vpop.permute.xlu0 %1633
    %1635 = vrot.lane.b32.xlu0 %v1497, 20
    %v1636 = vpop.permute.xlu0 %1635
    %1637 = vrot.lane.b32.xlu0 %v1498, 20
    %v1638 = vpop.permute.xlu0 %1637
    %1639 = vrot.lane.b32.xlu0 %v1499, 20
    %v1640 = vpop.permute.xlu0 %1639
    %1641 = vrot.lane.b32.xlu0 %v1500, 20
    %v1642 = vpop.permute.xlu0 %1641
    %1643 = vrot.lane.b32.xlu0 %v1501, 20
    %v1644 = vpop.permute.xlu0 %1643
    %1645 = vrot.lane.b32.xlu0 %v1502, 20
    %v1646 = vpop.permute.xlu0 %1645
    %1647 = vrot.lane.b32.xlu0 %v1503, 20
    %v1648 = vpop.permute.xlu0 %1647
    %1649 = vrot.lane.b32.xlu0 %v1504, 20
    %v1650 = vpop.permute.xlu0 %1649
    %1651 = vrot.lane.b32.xlu0 %v1505, 20
    %v1652 = vpop.permute.xlu0 %1651
    %vm1702 = vcmask 195744
    %1703 = vst.msk [vmem:[#allocation3] sm:$0xff] %vm1702, %v1556
    %1704 = vst.msk [vmem:[#allocation3 + $0x8] sm:$0xff] %vm1702, %v1558
    %1705 = vst.msk [vmem:[#allocation3 + $0x10] sm:$0xff] %vm1702, %v1560
    %1706 = vst.msk [vmem:[#allocation3 + $0x18] sm:$0xff] %vm1702, %v1562
    %1707 = vst.msk [vmem:[#allocation3 + $0x20] sm:$0xff] %vm1702, %v1564
    %1708 = vst.msk [vmem:[#allocation3 + $0x28] sm:$0xff] %vm1702, %v1566
    %1709 = vst.msk [vmem:[#allocation3 + $0x30] sm:$0xff] %vm1702, %v1568
    %1710 = vst.msk [vmem:[#allocation3 + $0x38] sm:$0xff] %vm1702, %v1570
    %1711 = vst.msk [vmem:[#allocation3 + $0x40] sm:$0xff] %vm1702, %v1572
    %1712 = vst.msk [vmem:[#allocation3 + $0x48] sm:$0xff] %vm1702, %v1574
    %1713 = vst.msk [vmem:[#allocation3 + $0x50] sm:$0xff] %vm1702, %v1576
    %1714 = vst.msk [vmem:[#allocation3 + $0x58] sm:$0xff] %vm1702, %v1578
    %1715 = vst.msk [vmem:[#allocation3 + $0x60] sm:$0xff] %vm1702, %v1580
    %1716 = vst.msk [vmem:[#allocation3 + $0x68] sm:$0xff] %vm1702, %v1582
    %1717 = vst.msk [vmem:[#allocation3 + $0x70] sm:$0xff] %vm1702, %v1584
    %1718 = vst.msk [vmem:[#allocation3 + $0x78] sm:$0xff] %vm1702, %v1586
    %1719 = vst.msk [vmem:[#allocation3 + $0x80] sm:$0xff] %vm1702, %v1588
    %1720 = vst.msk [vmem:[#allocation3 + $0x88] sm:$0xff] %vm1702, %v1590
    %1721 = vst.msk [vmem:[#allocation3 + $0x90] sm:$0xff] %vm1702, %v1592
    %1722 = vst.msk [vmem:[#allocation3 + $0x98] sm:$0xff] %vm1702, %v1594
    %1723 = vst.msk [vmem:[#allocation3 + $0xa0] sm:$0xff] %vm1702, %v1596
    %1724 = vst.msk [vmem:[#allocation3 + $0xa8] sm:$0xff] %vm1702, %v1598
    %1725 = vst.msk [vmem:[#allocation3 + $0xb0] sm:$0xff] %vm1702, %v1600
    %1726 = vst.msk [vmem:[#allocation3 + $0xb8] sm:$0xff] %vm1702, %v1602
    %1727 = vst.msk [vmem:[#allocation3 + $0xc0] sm:$0xff] %vm1702, %v1604
    %1728 = vst.msk [vmem:[#allocation3 + $0xc8] sm:$0xff] %vm1702, %v1606
    %1729 = vst.msk [vmem:[#allocation3 + $0xd0] sm:$0xff] %vm1702, %v1608
    %1730 = vst.msk [vmem:[#allocation3 + $0xd8] sm:$0xff] %vm1702, %v1610
    %1731 = vst.msk [vmem:[#allocation3 + $0xe0] sm:$0xff] %vm1702, %v1612
    %1732 = vst.msk [vmem:[#allocation3 + $0xe8] sm:$0xff] %vm1702, %v1614
    %1733 = vst.msk [vmem:[#allocation3 + $0xf0] sm:$0xff] %vm1702, %v1616
    %1734 = vst.msk [vmem:[#allocation3 + $0xf8] sm:$0xff] %vm1702, %v1618
    %1735 = vst.msk [vmem:[#allocation3 + $0x100] sm:$0xff] %vm1702, %v1620
    %1736 = vst.msk [vmem:[#allocation3 + $0x108] sm:$0xff] %vm1702, %v1622
    %1737 = vst.msk [vmem:[#allocation3 + $0x110] sm:$0xff] %vm1702, %v1624
    %1738 = vst.msk [vmem:[#allocation3 + $0x118] sm:$0xff] %vm1702, %v1626
    %1739 = vst.msk [vmem:[#allocation3 + $0x120] sm:$0xff] %vm1702, %v1628
    %1740 = vst.msk [vmem:[#allocation3 + $0x128] sm:$0xff] %vm1702, %v1630
    %1741 = vst.msk [vmem:[#allocation3 + $0x130] sm:$0xff] %vm1702, %v1632
    %1742 = vst.msk [vmem:[#allocation3 + $0x138] sm:$0xff] %vm1702, %v1634
    %1743 = vst.msk [vmem:[#allocation3 + $0x140] sm:$0xff] %vm1702, %v1636
    %1744 = vst.msk [vmem:[#allocation3 + $0x148] sm:$0xff] %vm1702, %v1638
    %1745 = vst.msk [vmem:[#allocation3 + $0x150] sm:$0xff] %vm1702, %v1640
    %1746 = vst.msk [vmem:[#allocation3 + $0x158] sm:$0xff] %vm1702, %v1642
    %1747 = vst.msk [vmem:[#allocation3 + $0x160] sm:$0xff] %vm1702, %v1644
    %1748 = vst.msk [vmem:[#allocation3 + $0x168] sm:$0xff] %vm1702, %v1646
    %1749 = vst.msk [vmem:[#allocation3 + $0x170] sm:$0xff] %vm1702, %v1648
    %1750 = vst.msk [vmem:[#allocation3 + $0x178] sm:$0xff] %vm1702, %v1650
    %1751 = vst.msk [vmem:[#allocation3 + $0x180] sm:$0xff] %vm1702, %v1652
    %v1752 = vld [vmem:[#allocation2 + $0x1d] sm:$0xff]
    %v1753 = vld [vmem:[#allocation2 + $0x25] sm:$0xff]
    %v1754 = vld [vmem:[#allocation2 + $0x2d] sm:$0xff]
    %v1755 = vld [vmem:[#allocation2 + $0x35] sm:$0xff]
    %v1756 = vld [vmem:[#allocation2 + $0x3d] sm:$0xff]
    %v1757 = vld [vmem:[#allocation2 + $0x45] sm:$0xff]
    %v1758 = vld [vmem:[#allocation2 + $0x4d] sm:$0xff]
    %v1759 = vld [vmem:[#allocation2 + $0x55] sm:$0xff]
    %v1760 = vld [vmem:[#allocation2 + $0x5d] sm:$0xff]
    %v1761 = vld [vmem:[#allocation2 + $0x65] sm:$0xff]
    %v1762 = vld [vmem:[#allocation2 + $0x6d] sm:$0xff]
    %v1763 = vld [vmem:[#allocation2 + $0x75] sm:$0xff]
    %v1764 = vld [vmem:[#allocation2 + $0x7d] sm:$0xff]
    %v1765 = vld [vmem:[#allocation2 + $0x85] sm:$0xff]
    %v1766 = vld [vmem:[#allocation2 + $0x8d] sm:$0xff]
    %v1767 = vld [vmem:[#allocation2 + $0x95] sm:$0xff]
    %v1768 = vld [vmem:[#allocation2 + $0x9d] sm:$0xff]
    %v1769 = vld [vmem:[#allocation2 + $0xa5] sm:$0xff]
    %v1770 = vld [vmem:[#allocation2 + $0xad] sm:$0xff]
    %v1771 = vld [vmem:[#allocation2 + $0xb5] sm:$0xff]
    %v1772 = vld [vmem:[#allocation2 + $0xbd] sm:$0xff]
    %v1773 = vld [vmem:[#allocation2 + $0xc5] sm:$0xff]
    %v1774 = vld [vmem:[#allocation2 + $0xcd] sm:$0xff]
    %v1775 = vld [vmem:[#allocation2 + $0xd5] sm:$0xff]
    %v1776 = vld [vmem:[#allocation2 + $0xdd] sm:$0xff]
    %v1777 = vld [vmem:[#allocation2 + $0xe5] sm:$0xff]
    %v1778 = vld [vmem:[#allocation2 + $0xed] sm:$0xff]
    %v1779 = vld [vmem:[#allocation2 + $0xf5] sm:$0xff]
    %v1780 = vld [vmem:[#allocation2 + $0xfd] sm:$0xff]
    %v1781 = vld [vmem:[#allocation2 + $0x105] sm:$0xff]
    %v1782 = vld [vmem:[#allocation2 + $0x10d] sm:$0xff]
    %v1783 = vld [vmem:[#allocation2 + $0x115] sm:$0xff]
    %v1784 = vld [vmem:[#allocation2 + $0x11d] sm:$0xff]
    %v1785 = vld [vmem:[#allocation2 + $0x125] sm:$0xff]
    %v1786 = vld [vmem:[#allocation2 + $0x12d] sm:$0xff]
    %v1787 = vld [vmem:[#allocation2 + $0x135] sm:$0xff]
    %v1788 = vld [vmem:[#allocation2 + $0x13d] sm:$0xff]
    %v1789 = vld [vmem:[#allocation2 + $0x145] sm:$0xff]
    %v1790 = vld [vmem:[#allocation2 + $0x14d] sm:$0xff]
    %v1791 = vld [vmem:[#allocation2 + $0x155] sm:$0xff]
    %v1792 = vld [vmem:[#allocation2 + $0x15d] sm:$0xff]
    %v1793 = vld [vmem:[#allocation2 + $0x165] sm:$0xff]
    %v1794 = vld [vmem:[#allocation2 + $0x16d] sm:$0xff]
    %v1795 = vld [vmem:[#allocation2 + $0x175] sm:$0xff]
    %v1796 = vld [vmem:[#allocation2 + $0x17d] sm:$0xff]
    %v1797 = vld [vmem:[#allocation2 + $0x185] sm:$0xff]
    %v1798 = vld [vmem:[#allocation2 + $0x18d] sm:$0xff]
    %v1799 = vld [vmem:[#allocation2 + $0x195] sm:$0xff]
    %v1800 = vld [vmem:[#allocation2 + $0x19d] sm:$0xff]
    %1850 = vrot.lane.b32.xlu0 %v1752, 24
    %v1851 = vpop.permute.xlu0 %1850
    %1852 = vrot.lane.b32.xlu0 %v1753, 24
    %v1853 = vpop.permute.xlu0 %1852
    %1854 = vrot.lane.b32.xlu0 %v1754, 24
    %v1855 = vpop.permute.xlu0 %1854
    %1856 = vrot.lane.b32.xlu0 %v1755, 24
    %v1857 = vpop.permute.xlu0 %1856
    %1858 = vrot.lane.b32.xlu0 %v1756, 24
    %v1859 = vpop.permute.xlu0 %1858
    %1860 = vrot.lane.b32.xlu0 %v1757, 24
    %v1861 = vpop.permute.xlu0 %1860
    %1862 = vrot.lane.b32.xlu0 %v1758, 24
    %v1863 = vpop.permute.xlu0 %1862
    %1864 = vrot.lane.b32.xlu0 %v1759, 24
    %v1865 = vpop.permute.xlu0 %1864
    %1866 = vrot.lane.b32.xlu0 %v1760, 24
    %v1867 = vpop.permute.xlu0 %1866
    %1868 = vrot.lane.b32.xlu0 %v1761, 24
    %v1869 = vpop.permute.xlu0 %1868
    %1870 = vrot.lane.b32.xlu0 %v1762, 24
    %v1871 = vpop.permute.xlu0 %1870
    %1872 = vrot.lane.b32.xlu0 %v1763, 24
    %v1873 = vpop.permute.xlu0 %1872
    %1874 = vrot.lane.b32.xlu0 %v1764, 24
    %v1875 = vpop.permute.xlu0 %1874
    %1876 = vrot.lane.b32.xlu0 %v1765, 24
    %v1877 = vpop.permute.xlu0 %1876
    %1878 = vrot.lane.b32.xlu0 %v1766, 24
    %v1879 = vpop.permute.xlu0 %1878
    %1880 = vrot.lane.b32.xlu0 %v1767, 24
    %v1881 = vpop.permute.xlu0 %1880
    %1882 = vrot.lane.b32.xlu0 %v1768, 24
    %v1883 = vpop.permute.xlu0 %1882
    %1884 = vrot.lane.b32.xlu0 %v1769, 24
    %v1885 = vpop.permute.xlu0 %1884
    %1886 = vrot.lane.b32.xlu0 %v1770, 24
    %v1887 = vpop.permute.xlu0 %1886
    %1888 = vrot.lane.b32.xlu0 %v1771, 24
    %v1889 = vpop.permute.xlu0 %1888
    %1890 = vrot.lane.b32.xlu0 %v1772, 24
    %v1891 = vpop.permute.xlu0 %1890
    %1892 = vrot.lane.b32.xlu0 %v1773, 24
    %v1893 = vpop.permute.xlu0 %1892
    %1894 = vrot.lane.b32.xlu0 %v1774, 24
    %v1895 = vpop.permute.xlu0 %1894
    %1896 = vrot.lane.b32.xlu0 %v1775, 24
    %v1897 = vpop.permute.xlu0 %1896
    %1898 = vrot.lane.b32.xlu0 %v1776, 24
    %v1899 = vpop.permute.xlu0 %1898
    %1900 = vrot.lane.b32.xlu0 %v1777, 24
    %v1901 = vpop.permute.xlu0 %1900
    %1902 = vrot.lane.b32.xlu0 %v1778, 24
    %v1903 = vpop.permute.xlu0 %1902
    %1904 = vrot.lane.b32.xlu0 %v1779, 24
    %v1905 = vpop.permute.xlu0 %1904
    %1906 = vrot.lane.b32.xlu0 %v1780, 24
    %v1907 = vpop.permute.xlu0 %1906
    %1908 = vrot.lane.b32.xlu0 %v1781, 24
    %v1909 = vpop.permute.xlu0 %1908
    %1910 = vrot.lane.b32.xlu0 %v1782, 24
    %v1911 = vpop.permute.xlu0 %1910
    %1912 = vrot.lane.b32.xlu0 %v1783, 24
    %v1913 = vpop.permute.xlu0 %1912
    %1914 = vrot.lane.b32.xlu0 %v1784, 24
    %v1915 = vpop.permute.xlu0 %1914
    %1916 = vrot.lane.b32.xlu0 %v1785, 24
    %v1917 = vpop.permute.xlu0 %1916
    %1918 = vrot.lane.b32.xlu0 %v1786, 24
    %v1919 = vpop.permute.xlu0 %1918
    %1920 = vrot.lane.b32.xlu0 %v1787, 24
    %v1921 = vpop.permute.xlu0 %1920
    %1922 = vrot.lane.b32.xlu0 %v1788, 24
    %v1923 = vpop.permute.xlu0 %1922
    %1924 = vrot.lane.b32.xlu0 %v1789, 24
    %v1925 = vpop.permute.xlu0 %1924
    %1926 = vrot.lane.b32.xlu0 %v1790, 24
    %v1927 = vpop.permute.xlu0 %1926
    %1928 = vrot.lane.b32.xlu0 %v1791, 24
    %v1929 = vpop.permute.xlu0 %1928
    %1930 = vrot.lane.b32.xlu0 %v1792, 24
    %v1931 = vpop.permute.xlu0 %1930
    %1932 = vrot.lane.b32.xlu0 %v1793, 24
    %v1933 = vpop.permute.xlu0 %1932
    %1934 = vrot.lane.b32.xlu0 %v1794, 24
    %v1935 = vpop.permute.xlu0 %1934
    %1936 = vrot.lane.b32.xlu0 %v1795, 24
    %v1937 = vpop.permute.xlu0 %1936
    %1938 = vrot.lane.b32.xlu0 %v1796, 24
    %v1939 = vpop.permute.xlu0 %1938
    %1940 = vrot.lane.b32.xlu0 %v1797, 24
    %v1941 = vpop.permute.xlu0 %1940
    %1942 = vrot.lane.b32.xlu0 %v1798, 24
    %v1943 = vpop.permute.xlu0 %1942
    %1944 = vrot.lane.b32.xlu0 %v1799, 24
    %v1945 = vpop.permute.xlu0 %1944
    %1946 = vrot.lane.b32.xlu0 %v1800, 24
    %v1947 = vpop.permute.xlu0 %1946
    %vm1997 = vcmask 228544
    %1998 = vst.msk [vmem:[#allocation3] sm:$0xff] %vm1997, %v1851
    %1999 = vst.msk [vmem:[#allocation3 + $0x8] sm:$0xff] %vm1997, %v1853
    %2000 = vst.msk [vmem:[#allocation3 + $0x10] sm:$0xff] %vm1997, %v1855
    %2001 = vst.msk [vmem:[#allocation3 + $0x18] sm:$0xff] %vm1997, %v1857
    %2002 = vst.msk [vmem:[#allocation3 + $0x20] sm:$0xff] %vm1997, %v1859
    %2003 = vst.msk [vmem:[#allocation3 + $0x28] sm:$0xff] %vm1997, %v1861
    %2004 = vst.msk [vmem:[#allocation3 + $0x30] sm:$0xff] %vm1997, %v1863
    %2005 = vst.msk [vmem:[#allocation3 + $0x38] sm:$0xff] %vm1997, %v1865
    %2006 = vst.msk [vmem:[#allocation3 + $0x40] sm:$0xff] %vm1997, %v1867
    %2007 = vst.msk [vmem:[#allocation3 + $0x48] sm:$0xff] %vm1997, %v1869
    %2008 = vst.msk [vmem:[#allocation3 + $0x50] sm:$0xff] %vm1997, %v1871
    %2009 = vst.msk [vmem:[#allocation3 + $0x58] sm:$0xff] %vm1997, %v1873
    %2010 = vst.msk [vmem:[#allocation3 + $0x60] sm:$0xff] %vm1997, %v1875
    %2011 = vst.msk [vmem:[#allocation3 + $0x68] sm:$0xff] %vm1997, %v1877
    %2012 = vst.msk [vmem:[#allocation3 + $0x70] sm:$0xff] %vm1997, %v1879
    %2013 = vst.msk [vmem:[#allocation3 + $0x78] sm:$0xff] %vm1997, %v1881
    %2014 = vst.msk [vmem:[#allocation3 + $0x80] sm:$0xff] %vm1997, %v1883
    %2015 = vst.msk [vmem:[#allocation3 + $0x88] sm:$0xff] %vm1997, %v1885
    %2016 = vst.msk [vmem:[#allocation3 + $0x90] sm:$0xff] %vm1997, %v1887
    %2017 = vst.msk [vmem:[#allocation3 + $0x98] sm:$0xff] %vm1997, %v1889
    %2018 = vst.msk [vmem:[#allocation3 + $0xa0] sm:$0xff] %vm1997, %v1891
    %2019 = vst.msk [vmem:[#allocation3 + $0xa8] sm:$0xff] %vm1997, %v1893
    %2020 = vst.msk [vmem:[#allocation3 + $0xb0] sm:$0xff] %vm1997, %v1895
    %2021 = vst.msk [vmem:[#allocation3 + $0xb8] sm:$0xff] %vm1997, %v1897
    %2022 = vst.msk [vmem:[#allocation3 + $0xc0] sm:$0xff] %vm1997, %v1899
    %2023 = vst.msk [vmem:[#allocation3 + $0xc8] sm:$0xff] %vm1997, %v1901
    %2024 = vst.msk [vmem:[#allocation3 + $0xd0] sm:$0xff] %vm1997, %v1903
    %2025 = vst.msk [vmem:[#allocation3 + $0xd8] sm:$0xff] %vm1997, %v1905
    %2026 = vst.msk [vmem:[#allocation3 + $0xe0] sm:$0xff] %vm1997, %v1907
    %2027 = vst.msk [vmem:[#allocation3 + $0xe8] sm:$0xff] %vm1997, %v1909
    %2028 = vst.msk [vmem:[#allocation3 + $0xf0] sm:$0xff] %vm1997, %v1911
    %2029 = vst.msk [vmem:[#allocation3 + $0xf8] sm:$0xff] %vm1997, %v1913
    %2030 = vst.msk [vmem:[#allocation3 + $0x100] sm:$0xff] %vm1997, %v1915
    %2031 = vst.msk [vmem:[#allocation3 + $0x108] sm:$0xff] %vm1997, %v1917
    %2032 = vst.msk [vmem:[#allocation3 + $0x110] sm:$0xff] %vm1997, %v1919
    %2033 = vst.msk [vmem:[#allocation3 + $0x118] sm:$0xff] %vm1997, %v1921
    %2034 = vst.msk [vmem:[#allocation3 + $0x120] sm:$0xff] %vm1997, %v1923
    %2035 = vst.msk [vmem:[#allocation3 + $0x128] sm:$0xff] %vm1997, %v1925
    %2036 = vst.msk [vmem:[#allocation3 + $0x130] sm:$0xff] %vm1997, %v1927
    %2037 = vst.msk [vmem:[#allocation3 + $0x138] sm:$0xff] %vm1997, %v1929
    %2038 = vst.msk [vmem:[#allocation3 + $0x140] sm:$0xff] %vm1997, %v1931
    %2039 = vst.msk [vmem:[#allocation3 + $0x148] sm:$0xff] %vm1997, %v1933
    %2040 = vst.msk [vmem:[#allocation3 + $0x150] sm:$0xff] %vm1997, %v1935
    %2041 = vst.msk [vmem:[#allocation3 + $0x158] sm:$0xff] %vm1997, %v1937
    %2042 = vst.msk [vmem:[#allocation3 + $0x160] sm:$0xff] %vm1997, %v1939
    %2043 = vst.msk [vmem:[#allocation3 + $0x168] sm:$0xff] %vm1997, %v1941
    %2044 = vst.msk [vmem:[#allocation3 + $0x170] sm:$0xff] %vm1997, %v1943
    %2045 = vst.msk [vmem:[#allocation3 + $0x178] sm:$0xff] %vm1997, %v1945
    %2046 = vst.msk [vmem:[#allocation3 + $0x180] sm:$0xff] %vm1997, %v1947
    %v2047 = vld [vmem:[#allocation2 + $0x1e] sm:$0xff]
    %v2048 = vld [vmem:[#allocation2 + $0x26] sm:$0xff]
    %v2049 = vld [vmem:[#allocation2 + $0x2e] sm:$0xff]
    %v2050 = vld [vmem:[#allocation2 + $0x36] sm:$0xff]
    %v2051 = vld [vmem:[#allocation2 + $0x3e] sm:$0xff]
    %v2052 = vld [vmem:[#allocation2 + $0x46] sm:$0xff]
    %v2053 = vld [vmem:[#allocation2 + $0x4e] sm:$0xff]
    %v2054 = vld [vmem:[#allocation2 + $0x56] sm:$0xff]
    %v2055 = vld [vmem:[#allocation2 + $0x5e] sm:$0xff]
    %v2056 = vld [vmem:[#allocation2 + $0x66] sm:$0xff]
    %v2057 = vld [vmem:[#allocation2 + $0x6e] sm:$0xff]
    %v2058 = vld [vmem:[#allocation2 + $0x76] sm:$0xff]
    %v2059 = vld [vmem:[#allocation2 + $0x7e] sm:$0xff]
    %v2060 = vld [vmem:[#allocation2 + $0x86] sm:$0xff]
    %v2061 = vld [vmem:[#allocation2 + $0x8e] sm:$0xff]
    %v2062 = vld [vmem:[#allocation2 + $0x96] sm:$0xff]
    %v2063 = vld [vmem:[#allocation2 + $0x9e] sm:$0xff]
    %v2064 = vld [vmem:[#allocation2 + $0xa6] sm:$0xff]
    %v2065 = vld [vmem:[#allocation2 + $0xae] sm:$0xff]
    %v2066 = vld [vmem:[#allocation2 + $0xb6] sm:$0xff]
    %v2067 = vld [vmem:[#allocation2 + $0xbe] sm:$0xff]
    %v2068 = vld [vmem:[#allocation2 + $0xc6] sm:$0xff]
    %v2069 = vld [vmem:[#allocation2 + $0xce] sm:$0xff]
    %v2070 = vld [vmem:[#allocation2 + $0xd6] sm:$0xff]
    %v2071 = vld [vmem:[#allocation2 + $0xde] sm:$0xff]
    %v2072 = vld [vmem:[#allocation2 + $0xe6] sm:$0xff]
    %v2073 = vld [vmem:[#allocation2 + $0xee] sm:$0xff]
    %v2074 = vld [vmem:[#allocation2 + $0xf6] sm:$0xff]
    %v2075 = vld [vmem:[#allocation2 + $0xfe] sm:$0xff]
    %v2076 = vld [vmem:[#allocation2 + $0x106] sm:$0xff]
    %v2077 = vld [vmem:[#allocation2 + $0x10e] sm:$0xff]
    %v2078 = vld [vmem:[#allocation2 + $0x116] sm:$0xff]
    %v2079 = vld [vmem:[#allocation2 + $0x11e] sm:$0xff]
    %v2080 = vld [vmem:[#allocation2 + $0x126] sm:$0xff]
    %v2081 = vld [vmem:[#allocation2 + $0x12e] sm:$0xff]
    %v2082 = vld [vmem:[#allocation2 + $0x136] sm:$0xff]
    %v2083 = vld [vmem:[#allocation2 + $0x13e] sm:$0xff]
    %v2084 = vld [vmem:[#allocation2 + $0x146] sm:$0xff]
    %v2085 = vld [vmem:[#allocation2 + $0x14e] sm:$0xff]
    %v2086 = vld [vmem:[#allocation2 + $0x156] sm:$0xff]
    %v2087 = vld [vmem:[#allocation2 + $0x15e] sm:$0xff]
    %v2088 = vld [vmem:[#allocation2 + $0x166] sm:$0xff]
    %v2089 = vld [vmem:[#allocation2 + $0x16e] sm:$0xff]
    %v2090 = vld [vmem:[#allocation2 + $0x176] sm:$0xff]
    %v2091 = vld [vmem:[#allocation2 + $0x17e] sm:$0xff]
    %v2092 = vld [vmem:[#allocation2 + $0x186] sm:$0xff]
    %v2093 = vld [vmem:[#allocation2 + $0x18e] sm:$0xff]
    %v2094 = vld [vmem:[#allocation2 + $0x196] sm:$0xff]
    %v2095 = vld [vmem:[#allocation2 + $0x19e] sm:$0xff]
    %2145 = vrot.lane.b32.xlu0 %v2047, 28
    %v2146 = vpop.permute.xlu0 %2145
    %2147 = vrot.lane.b32.xlu0 %v2048, 28
    %v2148 = vpop.permute.xlu0 %2147
    %2149 = vrot.lane.b32.xlu0 %v2049, 28
    %v2150 = vpop.permute.xlu0 %2149
    %2151 = vrot.lane.b32.xlu0 %v2050, 28
    %v2152 = vpop.permute.xlu0 %2151
    %2153 = vrot.lane.b32.xlu0 %v2051, 28
    %v2154 = vpop.permute.xlu0 %2153
    %2155 = vrot.lane.b32.xlu0 %v2052, 28
    %v2156 = vpop.permute.xlu0 %2155
    %2157 = vrot.lane.b32.xlu0 %v2053, 28
    %v2158 = vpop.permute.xlu0 %2157
    %2159 = vrot.lane.b32.xlu0 %v2054, 28
    %v2160 = vpop.permute.xlu0 %2159
    %2161 = vrot.lane.b32.xlu0 %v2055, 28
    %v2162 = vpop.permute.xlu0 %2161
    %2163 = vrot.lane.b32.xlu0 %v2056, 28
    %v2164 = vpop.permute.xlu0 %2163
    %2165 = vrot.lane.b32.xlu0 %v2057, 28
    %v2166 = vpop.permute.xlu0 %2165
    %2167 = vrot.lane.b32.xlu0 %v2058, 28
    %v2168 = vpop.permute.xlu0 %2167
    %2169 = vrot.lane.b32.xlu0 %v2059, 28
    %v2170 = vpop.permute.xlu0 %2169
    %2171 = vrot.lane.b32.xlu0 %v2060, 28
    %v2172 = vpop.permute.xlu0 %2171
    %2173 = vrot.lane.b32.xlu0 %v2061, 28
    %v2174 = vpop.permute.xlu0 %2173
    %2175 = vrot.lane.b32.xlu0 %v2062, 28
    %v2176 = vpop.permute.xlu0 %2175
    %2177 = vrot.lane.b32.xlu0 %v2063, 28
    %v2178 = vpop.permute.xlu0 %2177
    %2179 = vrot.lane.b32.xlu0 %v2064, 28
    %v2180 = vpop.permute.xlu0 %2179
    %2181 = vrot.lane.b32.xlu0 %v2065, 28
    %v2182 = vpop.permute.xlu0 %2181
    %2183 = vrot.lane.b32.xlu0 %v2066, 28
    %v2184 = vpop.permute.xlu0 %2183
    %2185 = vrot.lane.b32.xlu0 %v2067, 28
    %v2186 = vpop.permute.xlu0 %2185
    %2187 = vrot.lane.b32.xlu0 %v2068, 28
    %v2188 = vpop.permute.xlu0 %2187
    %2189 = vrot.lane.b32.xlu0 %v2069, 28
    %v2190 = vpop.permute.xlu0 %2189
    %2191 = vrot.lane.b32.xlu0 %v2070, 28
    %v2192 = vpop.permute.xlu0 %2191
    %2193 = vrot.lane.b32.xlu0 %v2071, 28
    %v2194 = vpop.permute.xlu0 %2193
    %2195 = vrot.lane.b32.xlu0 %v2072, 28
    %v2196 = vpop.permute.xlu0 %2195
    %2197 = vrot.lane.b32.xlu0 %v2073, 28
    %v2198 = vpop.permute.xlu0 %2197
    %2199 = vrot.lane.b32.xlu0 %v2074, 28
    %v2200 = vpop.permute.xlu0 %2199
    %2201 = vrot.lane.b32.xlu0 %v2075, 28
    %v2202 = vpop.permute.xlu0 %2201
    %2203 = vrot.lane.b32.xlu0 %v2076, 28
    %v2204 = vpop.permute.xlu0 %2203
    %2205 = vrot.lane.b32.xlu0 %v2077, 28
    %v2206 = vpop.permute.xlu0 %2205
    %2207 = vrot.lane.b32.xlu0 %v2078, 28
    %v2208 = vpop.permute.xlu0 %2207
    %2209 = vrot.lane.b32.xlu0 %v2079, 28
    %v2210 = vpop.permute.xlu0 %2209
    %2211 = vrot.lane.b32.xlu0 %v2080, 28
    %v2212 = vpop.permute.xlu0 %2211
    %2213 = vrot.lane.b32.xlu0 %v2081, 28
    %v2214 = vpop.permute.xlu0 %2213
    %2215 = vrot.lane.b32.xlu0 %v2082, 28
    %v2216 = vpop.permute.xlu0 %2215
    %2217 = vrot.lane.b32.xlu0 %v2083, 28
    %v2218 = vpop.permute.xlu0 %2217
    %2219 = vrot.lane.b32.xlu0 %v2084, 28
    %v2220 = vpop.permute.xlu0 %2219
    %2221 = vrot.lane.b32.xlu0 %v2085, 28
    %v2222 = vpop.permute.xlu0 %2221
    %2223 = vrot.lane.b32.xlu0 %v2086, 28
    %v2224 = vpop.permute.xlu0 %2223
    %2225 = vrot.lane.b32.xlu0 %v2087, 28
    %v2226 = vpop.permute.xlu0 %2225
    %2227 = vrot.lane.b32.xlu0 %v2088, 28
    %v2228 = vpop.permute.xlu0 %2227
    %2229 = vrot.lane.b32.xlu0 %v2089, 28
    %v2230 = vpop.permute.xlu0 %2229
    %2231 = vrot.lane.b32.xlu0 %v2090, 28
    %v2232 = vpop.permute.xlu0 %2231
    %2233 = vrot.lane.b32.xlu0 %v2091, 28
    %v2234 = vpop.permute.xlu0 %2233
    %2235 = vrot.lane.b32.xlu0 %v2092, 28
    %v2236 = vpop.permute.xlu0 %2235
    %2237 = vrot.lane.b32.xlu0 %v2093, 28
    %v2238 = vpop.permute.xlu0 %2237
    %2239 = vrot.lane.b32.xlu0 %v2094, 28
    %v2240 = vpop.permute.xlu0 %2239
    %2241 = vrot.lane.b32.xlu0 %v2095, 28
    %v2242 = vpop.permute.xlu0 %2241
    %vm2292 = vcmask 261344
    %2293 = vst.msk [vmem:[#allocation3] sm:$0xff] %vm2292, %v2146
    %2294 = vst.msk [vmem:[#allocation3 + $0x8] sm:$0xff] %vm2292, %v2148
    %2295 = vst.msk [vmem:[#allocation3 + $0x10] sm:$0xff] %vm2292, %v2150
    %2296 = vst.msk [vmem:[#allocation3 + $0x18] sm:$0xff] %vm2292, %v2152
    %2297 = vst.msk [vmem:[#allocation3 + $0x20] sm:$0xff] %vm2292, %v2154
    %2298 = vst.msk [vmem:[#allocation3 + $0x28] sm:$0xff] %vm2292, %v2156
    %2299 = vst.msk [vmem:[#allocation3 + $0x30] sm:$0xff] %vm2292, %v2158
    %2300 = vst.msk [vmem:[#allocation3 + $0x38] sm:$0xff] %vm2292, %v2160
    %2301 = vst.msk [vmem:[#allocation3 + $0x40] sm:$0xff] %vm2292, %v2162
    %2302 = vst.msk [vmem:[#allocation3 + $0x48] sm:$0xff] %vm2292, %v2164
    %2303 = vst.msk [vmem:[#allocation3 + $0x50] sm:$0xff] %vm2292, %v2166
    %2304 = vst.msk [vmem:[#allocation3 + $0x58] sm:$0xff] %vm2292, %v2168
    %2305 = vst.msk [vmem:[#allocation3 + $0x60] sm:$0xff] %vm2292, %v2170
    %2306 = vst.msk [vmem:[#allocation3 + $0x68] sm:$0xff] %vm2292, %v2172
    %2307 = vst.msk [vmem:[#allocation3 + $0x70] sm:$0xff] %vm2292, %v2174
    %2308 = vst.msk [vmem:[#allocation3 + $0x78] sm:$0xff] %vm2292, %v2176
    %2309 = vst.msk [vmem:[#allocation3 + $0x80] sm:$0xff] %vm2292, %v2178
    %2310 = vst.msk [vmem:[#allocation3 + $0x88] sm:$0xff] %vm2292, %v2180
    %2311 = vst.msk [vmem:[#allocation3 + $0x90] sm:$0xff] %vm2292, %v2182
    %2312 = vst.msk [vmem:[#allocation3 + $0x98] sm:$0xff] %vm2292, %v2184
    %2313 = vst.msk [vmem:[#allocation3 + $0xa0] sm:$0xff] %vm2292, %v2186
    %2314 = vst.msk [vmem:[#allocation3 + $0xa8] sm:$0xff] %vm2292, %v2188
    %2315 = vst.msk [vmem:[#allocation3 + $0xb0] sm:$0xff] %vm2292, %v2190
    %2316 = vst.msk [vmem:[#allocation3 + $0xb8] sm:$0xff] %vm2292, %v2192
    %2317 = vst.msk [vmem:[#allocation3 + $0xc0] sm:$0xff] %vm2292, %v2194
    %2318 = vst.msk [vmem:[#allocation3 + $0xc8] sm:$0xff] %vm2292, %v2196
    %2319 = vst.msk [vmem:[#allocation3 + $0xd0] sm:$0xff] %vm2292, %v2198
    %2320 = vst.msk [vmem:[#allocation3 + $0xd8] sm:$0xff] %vm2292, %v2200
    %2321 = vst.msk [vmem:[#allocation3 + $0xe0] sm:$0xff] %vm2292, %v2202
    %2322 = vst.msk [vmem:[#allocation3 + $0xe8] sm:$0xff] %vm2292, %v2204
    %2323 = vst.msk [vmem:[#allocation3 + $0xf0] sm:$0xff] %vm2292, %v2206
    %2324 = vst.msk [vmem:[#allocation3 + $0xf8] sm:$0xff] %vm2292, %v2208
    %2325 = vst.msk [vmem:[#allocation3 + $0x100] sm:$0xff] %vm2292, %v2210
    %2326 = vst.msk [vmem:[#allocation3 + $0x108] sm:$0xff] %vm2292, %v2212
    %2327 = vst.msk [vmem:[#allocation3 + $0x110] sm:$0xff] %vm2292, %v2214
    %2328 = vst.msk [vmem:[#allocation3 + $0x118] sm:$0xff] %vm2292, %v2216
    %2329 = vst.msk [vmem:[#allocation3 + $0x120] sm:$0xff] %vm2292, %v2218
    %2330 = vst.msk [vmem:[#allocation3 + $0x128] sm:$0xff] %vm2292, %v2220
    %2331 = vst.msk [vmem:[#allocation3 + $0x130] sm:$0xff] %vm2292, %v2222
    %2332 = vst.msk [vmem:[#allocation3 + $0x138] sm:$0xff] %vm2292, %v2224
    %2333 = vst.msk [vmem:[#allocation3 + $0x140] sm:$0xff] %vm2292, %v2226
    %2334 = vst.msk [vmem:[#allocation3 + $0x148] sm:$0xff] %vm2292, %v2228
    %2335 = vst.msk [vmem:[#allocation3 + $0x150] sm:$0xff] %vm2292, %v2230
    %2336 = vst.msk [vmem:[#allocation3 + $0x158] sm:$0xff] %vm2292, %v2232
    %2337 = vst.msk [vmem:[#allocation3 + $0x160] sm:$0xff] %vm2292, %v2234
    %2338 = vst.msk [vmem:[#allocation3 + $0x168] sm:$0xff] %vm2292, %v2236
    %2339 = vst.msk [vmem:[#allocation3 + $0x170] sm:$0xff] %vm2292, %v2238
    %2340 = vst.msk [vmem:[#allocation3 + $0x178] sm:$0xff] %vm2292, %v2240
    %2341 = vst.msk [vmem:[#allocation3 + $0x180] sm:$0xff] %vm2292, %v2242
    %v2342 = vld [vmem:[#allocation2 + $0x1f] sm:$0xff]
    %v2343 = vld [vmem:[#allocation2 + $0x27] sm:$0xff]
    %v2344 = vld [vmem:[#allocation2 + $0x2f] sm:$0xff]
    %v2345 = vld [vmem:[#allocation2 + $0x37] sm:$0xff]
    %v2346 = vld [vmem:[#allocation2 + $0x3f] sm:$0xff]
    %v2347 = vld [vmem:[#allocation2 + $0x47] sm:$0xff]
    %v2348 = vld [vmem:[#allocation2 + $0x4f] sm:$0xff]
    %v2349 = vld [vmem:[#allocation2 + $0x57] sm:$0xff]
    %v2350 = vld [vmem:[#allocation2 + $0x5f] sm:$0xff]
    %v2351 = vld [vmem:[#allocation2 + $0x67] sm:$0xff]
    %v2352 = vld [vmem:[#allocation2 + $0x6f] sm:$0xff]
    %v2353 = vld [vmem:[#allocation2 + $0x77] sm:$0xff]
    %v2354 = vld [vmem:[#allocation2 + $0x7f] sm:$0xff]
    %v2355 = vld [vmem:[#allocation2 + $0x87] sm:$0xff]
    %v2356 = vld [vmem:[#allocation2 + $0x8f] sm:$0xff]
    %v2357 = vld [vmem:[#allocation2 + $0x97] sm:$0xff]
    %v2358 = vld [vmem:[#allocation2 + $0x9f] sm:$0xff]
    %v2359 = vld [vmem:[#allocation2 + $0xa7] sm:$0xff]
    %v2360 = vld [vmem:[#allocation2 + $0xaf] sm:$0xff]
    %v2361 = vld [vmem:[#allocation2 + $0xb7] sm:$0xff]
    %v2362 = vld [vmem:[#allocation2 + $0xbf] sm:$0xff]
    %v2363 = vld [vmem:[#allocation2 + $0xc7] sm:$0xff]
    %v2364 = vld [vmem:[#allocation2 + $0xcf] sm:$0xff]
    %v2365 = vld [vmem:[#allocation2 + $0xd7] sm:$0xff]
    %v2366 = vld [vmem:[#allocation2 + $0xdf] sm:$0xff]
    %v2367 = vld [vmem:[#allocation2 + $0xe7] sm:$0xff]
    %v2368 = vld [vmem:[#allocation2 + $0xef] sm:$0xff]
    %v2369 = vld [vmem:[#allocation2 + $0xf7] sm:$0xff]
    %v2370 = vld [vmem:[#allocation2 + $0xff] sm:$0xff]
    %v2371 = vld [vmem:[#allocation2 + $0x107] sm:$0xff]
    %v2372 = vld [vmem:[#allocation2 + $0x10f] sm:$0xff]
    %v2373 = vld [vmem:[#allocation2 + $0x117] sm:$0xff]
    %v2374 = vld [vmem:[#allocation2 + $0x11f] sm:$0xff]
    %v2375 = vld [vmem:[#allocation2 + $0x127] sm:$0xff]
    %v2376 = vld [vmem:[#allocation2 + $0x12f] sm:$0xff]
    %v2377 = vld [vmem:[#allocation2 + $0x137] sm:$0xff]
    %v2378 = vld [vmem:[#allocation2 + $0x13f] sm:$0xff]
    %v2379 = vld [vmem:[#allocation2 + $0x147] sm:$0xff]
    %v2380 = vld [vmem:[#allocation2 + $0x14f] sm:$0xff]
    %v2381 = vld [vmem:[#allocation2 + $0x157] sm:$0xff]
    %v2382 = vld [vmem:[#allocation2 + $0x15f] sm:$0xff]
    %v2383 = vld [vmem:[#allocation2 + $0x167] sm:$0xff]
    %v2384 = vld [vmem:[#allocation2 + $0x16f] sm:$0xff]
    %v2385 = vld [vmem:[#allocation2 + $0x177] sm:$0xff]
    %v2386 = vld [vmem:[#allocation2 + $0x17f] sm:$0xff]
    %v2387 = vld [vmem:[#allocation2 + $0x187] sm:$0xff]
    %v2388 = vld [vmem:[#allocation2 + $0x18f] sm:$0xff]
    %v2389 = vld [vmem:[#allocation2 + $0x197] sm:$0xff]
    %v2390 = vld [vmem:[#allocation2 + $0x19f] sm:$0xff]
    %2440 = vrot.lane.b32.xlu0 %v2342, 32
    %v2441 = vpop.permute.xlu0 %2440
    %2442 = vrot.lane.b32.xlu0 %v2343, 32
    %v2443 = vpop.permute.xlu0 %2442
    %2444 = vrot.lane.b32.xlu0 %v2344, 32
    %v2445 = vpop.permute.xlu0 %2444
    %2446 = vrot.lane.b32.xlu0 %v2345, 32
    %v2447 = vpop.permute.xlu0 %2446
    %2448 = vrot.lane.b32.xlu0 %v2346, 32
    %v2449 = vpop.permute.xlu0 %2448
    %2450 = vrot.lane.b32.xlu0 %v2347, 32
    %v2451 = vpop.permute.xlu0 %2450
    %2452 = vrot.lane.b32.xlu0 %v2348, 32
    %v2453 = vpop.permute.xlu0 %2452
    %2454 = vrot.lane.b32.xlu0 %v2349, 32
    %v2455 = vpop.permute.xlu0 %2454
    %2456 = vrot.lane.b32.xlu0 %v2350, 32
    %v2457 = vpop.permute.xlu0 %2456
    %2458 = vrot.lane.b32.xlu0 %v2351, 32
    %v2459 = vpop.permute.xlu0 %2458
    %2460 = vrot.lane.b32.xlu0 %v2352, 32
    %v2461 = vpop.permute.xlu0 %2460
    %2462 = vrot.lane.b32.xlu0 %v2353, 32
    %v2463 = vpop.permute.xlu0 %2462
    %2464 = vrot.lane.b32.xlu0 %v2354, 32
    %v2465 = vpop.permute.xlu0 %2464
    %2466 = vrot.lane.b32.xlu0 %v2355, 32
    %v2467 = vpop.permute.xlu0 %2466
    %2468 = vrot.lane.b32.xlu0 %v2356, 32
    %v2469 = vpop.permute.xlu0 %2468
    %2470 = vrot.lane.b32.xlu0 %v2357, 32
    %v2471 = vpop.permute.xlu0 %2470
    %2472 = vrot.lane.b32.xlu0 %v2358, 32
    %v2473 = vpop.permute.xlu0 %2472
    %2474 = vrot.lane.b32.xlu0 %v2359, 32
    %v2475 = vpop.permute.xlu0 %2474
    %2476 = vrot.lane.b32.xlu0 %v2360, 32
    %v2477 = vpop.permute.xlu0 %2476
    %2478 = vrot.lane.b32.xlu0 %v2361, 32
    %v2479 = vpop.permute.xlu0 %2478
    %2480 = vrot.lane.b32.xlu0 %v2362, 32
    %v2481 = vpop.permute.xlu0 %2480
    %2482 = vrot.lane.b32.xlu0 %v2363, 32
    %v2483 = vpop.permute.xlu0 %2482
    %2484 = vrot.lane.b32.xlu0 %v2364, 32
    %v2485 = vpop.permute.xlu0 %2484
    %2486 = vrot.lane.b32.xlu0 %v2365, 32
    %v2487 = vpop.permute.xlu0 %2486
    %2488 = vrot.lane.b32.xlu0 %v2366, 32
    %v2489 = vpop.permute.xlu0 %2488
    %2490 = vrot.lane.b32.xlu0 %v2367, 32
    %v2491 = vpop.permute.xlu0 %2490
    %2492 = vrot.lane.b32.xlu0 %v2368, 32
    %v2493 = vpop.permute.xlu0 %2492
    %2494 = vrot.lane.b32.xlu0 %v2369, 32
    %v2495 = vpop.permute.xlu0 %2494
    %2496 = vrot.lane.b32.xlu0 %v2370, 32
    %v2497 = vpop.permute.xlu0 %2496
    %2498 = vrot.lane.b32.xlu0 %v2371, 32
    %v2499 = vpop.permute.xlu0 %2498
    %2500 = vrot.lane.b32.xlu0 %v2372, 32
    %v2501 = vpop.permute.xlu0 %2500
    %2502 = vrot.lane.b32.xlu0 %v2373, 32
    %v2503 = vpop.permute.xlu0 %2502
    %2504 = vrot.lane.b32.xlu0 %v2374, 32
    %v2505 = vpop.permute.xlu0 %2504
    %2506 = vrot.lane.b32.xlu0 %v2375, 32
    %v2507 = vpop.permute.xlu0 %2506
    %2508 = vrot.lane.b32.xlu0 %v2376, 32
    %v2509 = vpop.permute.xlu0 %2508
    %2510 = vrot.lane.b32.xlu0 %v2377, 32
    %v2511 = vpop.permute.xlu0 %2510
    %2512 = vrot.lane.b32.xlu0 %v2378, 32
    %v2513 = vpop.permute.xlu0 %2512
    %2514 = vrot.lane.b32.xlu0 %v2379, 32
    %v2515 = vpop.permute.xlu0 %2514
    %2516 = vrot.lane.b32.xlu0 %v2380, 32
    %v2517 = vpop.permute.xlu0 %2516
    %2518 = vrot.lane.b32.xlu0 %v2381, 32
    %v2519 = vpop.permute.xlu0 %2518
    %2520 = vrot.lane.b32.xlu0 %v2382, 32
    %v2521 = vpop.permute.xlu0 %2520
    %2522 = vrot.lane.b32.xlu0 %v2383, 32
    %v2523 = vpop.permute.xlu0 %2522
    %2524 = vrot.lane.b32.xlu0 %v2384, 32
    %v2525 = vpop.permute.xlu0 %2524
    %2526 = vrot.lane.b32.xlu0 %v2385, 32
    %v2527 = vpop.permute.xlu0 %2526
    %2528 = vrot.lane.b32.xlu0 %v2386, 32
    %v2529 = vpop.permute.xlu0 %2528
    %2530 = vrot.lane.b32.xlu0 %v2387, 32
    %v2531 = vpop.permute.xlu0 %2530
    %2532 = vrot.lane.b32.xlu0 %v2388, 32
    %v2533 = vpop.permute.xlu0 %2532
    %2534 = vrot.lane.b32.xlu0 %v2389, 32
    %v2535 = vpop.permute.xlu0 %2534
    %2536 = vrot.lane.b32.xlu0 %v2390, 32
    %v2537 = vpop.permute.xlu0 %2536
    %vm2587 = vcmask 294144
    %2588 = vst.msk [vmem:[#allocation3] sm:$0xff] %vm2587, %v2441
    %2589 = vst.msk [vmem:[#allocation3 + $0x8] sm:$0xff] %vm2587, %v2443
    %2590 = vst.msk [vmem:[#allocation3 + $0x10] sm:$0xff] %vm2587, %v2445
    %2591 = vst.msk [vmem:[#allocation3 + $0x18] sm:$0xff] %vm2587, %v2447
    %2592 = vst.msk [vmem:[#allocation3 + $0x20] sm:$0xff] %vm2587, %v2449
    %2593 = vst.msk [vmem:[#allocation3 + $0x28] sm:$0xff] %vm2587, %v2451
    %2594 = vst.msk [vmem:[#allocation3 + $0x30] sm:$0xff] %vm2587, %v2453
    %2595 = vst.msk [vmem:[#allocation3 + $0x38] sm:$0xff] %vm2587, %v2455
    %2596 = vst.msk [vmem:[#allocation3 + $0x40] sm:$0xff] %vm2587, %v2457
    %2597 = vst.msk [vmem:[#allocation3 + $0x48] sm:$0xff] %vm2587, %v2459
    %2598 = vst.msk [vmem:[#allocation3 + $0x50] sm:$0xff] %vm2587, %v2461
    %2599 = vst.msk [vmem:[#allocation3 + $0x58] sm:$0xff] %vm2587, %v2463
    %2600 = vst.msk [vmem:[#allocation3 + $0x60] sm:$0xff] %vm2587, %v2465
    %2601 = vst.msk [vmem:[#allocation3 + $0x68] sm:$0xff] %vm2587, %v2467
    %2602 = vst.msk [vmem:[#allocation3 + $0x70] sm:$0xff] %vm2587, %v2469
    %2603 = vst.msk [vmem:[#allocation3 + $0x78] sm:$0xff] %vm2587, %v2471
    %2604 = vst.msk [vmem:[#allocation3 + $0x80] sm:$0xff] %vm2587, %v2473
    %2605 = vst.msk [vmem:[#allocation3 + $0x88] sm:$0xff] %vm2587, %v2475
    %2606 = vst.msk [vmem:[#allocation3 + $0x90] sm:$0xff] %vm2587, %v2477
    %2607 = vst.msk [vmem:[#allocation3 + $0x98] sm:$0xff] %vm2587, %v2479
    %2608 = vst.msk [vmem:[#allocation3 + $0xa0] sm:$0xff] %vm2587, %v2481
    %2609 = vst.msk [vmem:[#allocation3 + $0xa8] sm:$0xff] %vm2587, %v2483
    %2610 = vst.msk [vmem:[#allocation3 + $0xb0] sm:$0xff] %vm2587, %v2485
    %2611 = vst.msk [vmem:[#allocation3 + $0xb8] sm:$0xff] %vm2587, %v2487
    %2612 = vst.msk [vmem:[#allocation3 + $0xc0] sm:$0xff] %vm2587, %v2489
    %2613 = vst.msk [vmem:[#allocation3 + $0xc8] sm:$0xff] %vm2587, %v2491
    %2614 = vst.msk [vmem:[#allocation3 + $0xd0] sm:$0xff] %vm2587, %v2493
    %2615 = vst.msk [vmem:[#allocation3 + $0xd8] sm:$0xff] %vm2587, %v2495
    %2616 = vst.msk [vmem:[#allocation3 + $0xe0] sm:$0xff] %vm2587, %v2497
    %2617 = vst.msk [vmem:[#allocation3 + $0xe8] sm:$0xff] %vm2587, %v2499
    %2618 = vst.msk [vmem:[#allocation3 + $0xf0] sm:$0xff] %vm2587, %v2501
    %2619 = vst.msk [vmem:[#allocation3 + $0xf8] sm:$0xff] %vm2587, %v2503
    %2620 = vst.msk [vmem:[#allocation3 + $0x100] sm:$0xff] %vm2587, %v2505
    %2621 = vst.msk [vmem:[#allocation3 + $0x108] sm:$0xff] %vm2587, %v2507
    %2622 = vst.msk [vmem:[#allocation3 + $0x110] sm:$0xff] %vm2587, %v2509
    %2623 = vst.msk [vmem:[#allocation3 + $0x118] sm:$0xff] %vm2587, %v2511
    %2624 = vst.msk [vmem:[#allocation3 + $0x120] sm:$0xff] %vm2587, %v2513
    %2625 = vst.msk [vmem:[#allocation3 + $0x128] sm:$0xff] %vm2587, %v2515
    %2626 = vst.msk [vmem:[#allocation3 + $0x130] sm:$0xff] %vm2587, %v2517
    %2627 = vst.msk [vmem:[#allocation3 + $0x138] sm:$0xff] %vm2587, %v2519
    %2628 = vst.msk [vmem:[#allocation3 + $0x140] sm:$0xff] %vm2587, %v2521
    %2629 = vst.msk [vmem:[#allocation3 + $0x148] sm:$0xff] %vm2587, %v2523
    %2630 = vst.msk [vmem:[#allocation3 + $0x150] sm:$0xff] %vm2587, %v2525
    %2631 = vst.msk [vmem:[#allocation3 + $0x158] sm:$0xff] %vm2587, %v2527
    %2632 = vst.msk [vmem:[#allocation3 + $0x160] sm:$0xff] %vm2587, %v2529
    %2633 = vst.msk [vmem:[#allocation3 + $0x168] sm:$0xff] %vm2587, %v2531
    %2634 = vst.msk [vmem:[#allocation3 + $0x170] sm:$0xff] %vm2587, %v2533
    %2635 = vst.msk [vmem:[#allocation3 + $0x178] sm:$0xff] %vm2587, %v2535
    %2636 = vst.msk [vmem:[#allocation3 + $0x180] sm:$0xff] %vm2587, %v2537
    %v2637 = vld [vmem:[#allocation3] sm:$0xff]
    %v2638 = vld [vmem:[#allocation3 + $0x8] sm:$0xff]
    %v2639 = vld [vmem:[#allocation3 + $0x10] sm:$0xff]
    %v2640 = vld [vmem:[#allocation3 + $0x18] sm:$0xff]
    %v2641 = vld [vmem:[#allocation3 + $0x20] sm:$0xff]
    %v2642 = vld [vmem:[#allocation3 + $0x28] sm:$0xff]
    %v2643 = vld [vmem:[#allocation3 + $0x30] sm:$0xff]
    %v2644 = vld [vmem:[#allocation3 + $0x38] sm:$0xff]
    %v2645 = vld [vmem:[#allocation3 + $0x40] sm:$0xff]
    %v2646 = vld [vmem:[#allocation3 + $0x48] sm:$0xff]
    %v2647 = vld [vmem:[#allocation3 + $0x50] sm:$0xff]
    %v2648 = vld [vmem:[#allocation3 + $0x58] sm:$0xff]
    %v2649 = vld [vmem:[#allocation3 + $0x60] sm:$0xff]
    %v2650 = vld [vmem:[#allocation3 + $0x68] sm:$0xff]
    %v2651 = vld [vmem:[#allocation3 + $0x70] sm:$0xff]
    %v2652 = vld [vmem:[#allocation3 + $0x78] sm:$0xff]
    %v2653 = vld [vmem:[#allocation3 + $0x80] sm:$0xff]
    %v2654 = vld [vmem:[#allocation3 + $0x88] sm:$0xff]
    %v2655 = vld [vmem:[#allocation3 + $0x90] sm:$0xff]
    %v2656 = vld [vmem:[#allocation3 + $0x98] sm:$0xff]
    %v2657 = vld [vmem:[#allocation3 + $0xa0] sm:$0xff]
    %v2658 = vld [vmem:[#allocation3 + $0xa8] sm:$0xff]
    %v2659 = vld [vmem:[#allocation3 + $0xb0] sm:$0xff]
    %v2660 = vld [vmem:[#allocation3 + $0xb8] sm:$0xff]
    %v2661 = vld [vmem:[#allocation3 + $0xc0] sm:$0xff]
    %v2662 = vld [vmem:[#allocation3 + $0xc8] sm:$0xff]
    %v2663 = vld [vmem:[#allocation3 + $0xd0] sm:$0xff]
    %v2664 = vld [vmem:[#allocation3 + $0xd8] sm:$0xff]
    %v2665 = vld [vmem:[#allocation3 + $0xe0] sm:$0xff]
    %v2666 = vld [vmem:[#allocation3 + $0xe8] sm:$0xff]
    %v2667 = vld [vmem:[#allocation3 + $0xf0] sm:$0xff]
    %v2668 = vld [vmem:[#allocation3 + $0xf8] sm:$0xff]
    %v2669 = vld [vmem:[#allocation3 + $0x100] sm:$0xff]
    %v2670 = vld [vmem:[#allocation3 + $0x108] sm:$0xff]
    %v2671 = vld [vmem:[#allocation3 + $0x110] sm:$0xff]
    %v2672 = vld [vmem:[#allocation3 + $0x118] sm:$0xff]
    %v2673 = vld [vmem:[#allocation3 + $0x120] sm:$0xff]
    %v2674 = vld [vmem:[#allocation3 + $0x128] sm:$0xff]
    %v2675 = vld [vmem:[#allocation3 + $0x130] sm:$0xff]
    %v2676 = vld [vmem:[#allocation3 + $0x138] sm:$0xff]
    %v2677 = vld [vmem:[#allocation3 + $0x140] sm:$0xff]
    %v2678 = vld [vmem:[#allocation3 + $0x148] sm:$0xff]
    %v2679 = vld [vmem:[#allocation3 + $0x150] sm:$0xff]
    %v2680 = vld [vmem:[#allocation3 + $0x158] sm:$0xff]
    %v2681 = vld [vmem:[#allocation3 + $0x160] sm:$0xff]
    %v2682 = vld [vmem:[#allocation3 + $0x168] sm:$0xff]
    %v2683 = vld [vmem:[#allocation3 + $0x170] sm:$0xff]
    %v2684 = vld [vmem:[#allocation3 + $0x178] sm:$0xff]
    %v2685 = vld [vmem:[#allocation3 + $0x180] sm:$0xff]
    %v2686 = vld [vmem:[#allocation11] sm:$0xff]
    %v2687 = vld [vmem:[#allocation11 + $0x8] sm:$0xff]
    %v2688 = vld [vmem:[#allocation11 + $0x10] sm:$0xff]
    %v2689 = vld [vmem:[#allocation11 + $0x18] sm:$0xff]
    %v2690 = vld [vmem:[#allocation11 + $0x20] sm:$0xf]
    %v2691 = vld [vmem:[#allocation11 + $0x28] sm:$0x1]
    %v2692 = vperm.slane %v2691, 0
    %vm2693 = vcmask 293888
    %v2695 = vsel %vm2693, %v2637, 0
    %v2698 = vsel %vm2693, %v2638, 0
    %v2701 = vsel %vm2693, %v2639, 0
    %v2704 = vsel %vm2693, %v2640, 0
    %v2707 = vsel %vm2693, %v2641, 0
    %v2710 = vsel %vm2693, %v2642, 0
    %v2713 = vsel %vm2693, %v2643, 0
    %v2716 = vsel %vm2693, %v2644, 0
    %v2719 = vsel %vm2693, %v2645, 0
    %v2722 = vsel %vm2693, %v2646, 0
    %v2725 = vsel %vm2693, %v2647, 0
    %v2728 = vsel %vm2693, %v2648, 0
    %v2731 = vsel %vm2693, %v2649, 0
    %v2734 = vsel %vm2693, %v2650, 0
    %v2737 = vsel %vm2693, %v2651, 0
    %v2740 = vsel %vm2693, %v2652, 0
    %v2743 = vsel %vm2693, %v2653, 0
    %v2746 = vsel %vm2693, %v2654, 0
    %v2749 = vsel %vm2693, %v2655, 0
    %v2752 = vsel %vm2693, %v2656, 0
    %v2755 = vsel %vm2693, %v2657, 0
    %v2758 = vsel %vm2693, %v2658, 0
    %v2761 = vsel %vm2693, %v2659, 0
    %v2764 = vsel %vm2693, %v2660, 0
    %v2767 = vsel %vm2693, %v2661, 0
    %v2770 = vsel %vm2693, %v2662, 0
    %v2773 = vsel %vm2693, %v2663, 0
    %v2776 = vsel %vm2693, %v2664, 0
    %v2779 = vsel %vm2693, %v2665, 0
    %v2782 = vsel %vm2693, %v2666, 0
    %v2785 = vsel %vm2693, %v2667, 0
    %v2788 = vsel %vm2693, %v2668, 0
    %v2791 = vsel %vm2693, %v2669, 0
    %v2794 = vsel %vm2693, %v2670, 0
    %v2797 = vsel %vm2693, %v2671, 0
    %v2800 = vsel %vm2693, %v2672, 0
    %v2803 = vsel %vm2693, %v2673, 0
    %v2806 = vsel %vm2693, %v2674, 0
    %v2809 = vsel %vm2693, %v2675, 0
    %v2812 = vsel %vm2693, %v2676, 0
    %v2815 = vsel %vm2693, %v2677, 0
    %v2818 = vsel %vm2693, %v2678, 0
    %v2821 = vsel %vm2693, %v2679, 0
    %v2824 = vsel %vm2693, %v2680, 0
    %v2827 = vsel %vm2693, %v2681, 0
    %v2830 = vsel %vm2693, %v2682, 0
    %v2833 = vsel %vm2693, %v2683, 0
    %v2836 = vsel %vm2693, %v2684, 0
    %v2839 = vsel %vm2693, %v2685, 0
    %vm2841 = vcmask 1043456
    %v2843 = vsel %vm2841, %v2690, 0
    %2845 = vmatpush.msra.mxu0 0.0
    %2846 = vmatpush.msra.mxu0 0.0
    %2847 = vmatpush.msra.mxu0 0.0
    %2848 = vmatpush.msra.mxu0 0.0
    %2849 = vmatpush.msra.mxu0 0.0
    %2850 = vmatpush.msra.mxu0 0.0
    %2851 = vmatpush.msra.mxu0 0.0
    %2852 = vmatpush.msra.mxu0 0.0
    %2853 = vmatpush.msra.mxu0 0.0
    %2854 = vmatpush.msra.mxu0 0.0
    %2855 = vmatpush.msra.mxu0 0.0
    %2856 = vmatpush.msra.mxu0 %v2843
    %2857 = vmatpush.msra.mxu0 %v2689
    %2858 = vmatpush.msra.mxu0 %v2688
    %2859 = vmatpush.msra.mxu0 %v2687
    %2860 = vmatpush.msra.mxu0 %v2686
    %2861 = vmatmul.f32.gmra.mxu0 %v2695
    %v2862 = vpop.f32.mrf.mxu0
    %v2863 = vadd.f32 %v2692, %v2862
    %2864 = vmatmul.f32.gmra.mxu0 %v2698
    %v2865 = vpop.f32.mrf.mxu0
    %v2866 = vadd.f32 %v2692, %v2865
    %2867 = vmatmul.f32.gmra.mxu0 %v2701
    %v2868 = vpop.f32.mrf.mxu0
    %v2869 = vadd.f32 %v2692, %v2868
    %2870 = vmatmul.f32.gmra.mxu0 %v2704
    %v2871 = vpop.f32.mrf.mxu0
    %v2872 = vadd.f32 %v2692, %v2871
    %2873 = vmatmul.f32.gmra.mxu0 %v2707
    %v2874 = vpop.f32.mrf.mxu0
    %v2875 = vadd.f32 %v2692, %v2874
    %2876 = vmatmul.f32.gmra.mxu0 %v2710
    %v2877 = vpop.f32.mrf.mxu0
    %v2878 = vadd.f32 %v2692, %v2877
    %2879 = vmatmul.f32.gmra.mxu0 %v2713
    %v2880 = vpop.f32.mrf.mxu0
    %v2881 = vadd.f32 %v2692, %v2880
    %2882 = vmatmul.f32.gmra.mxu0 %v2716
    %v2883 = vpop.f32.mrf.mxu0
    %v2884 = vadd.f32 %v2692, %v2883
    %2885 = vmatmul.f32.gmra.mxu0 %v2719
    %v2886 = vpop.f32.mrf.mxu0
    %v2887 = vadd.f32 %v2692, %v2886
    %2888 = vmatmul.f32.gmra.mxu0 %v2722
    %v2889 = vpop.f32.mrf.mxu0
    %v2890 = vadd.f32 %v2692, %v2889
    %2891 = vmatmul.f32.gmra.mxu0 %v2725
    %v2892 = vpop.f32.mrf.mxu0
    %v2893 = vadd.f32 %v2692, %v2892
    %2894 = vmatmul.f32.gmra.mxu0 %v2728
    %v2895 = vpop.f32.mrf.mxu0
    %v2896 = vadd.f32 %v2692, %v2895
    %2897 = vmatmul.f32.gmra.mxu0 %v2731
    %v2898 = vpop.f32.mrf.mxu0
    %v2899 = vadd.f32 %v2692, %v2898
    %2900 = vmatmul.f32.gmra.mxu0 %v2734
    %v2901 = vpop.f32.mrf.mxu0
    %v2902 = vadd.f32 %v2692, %v2901
    %2903 = vmatmul.f32.gmra.mxu0 %v2737
    %v2904 = vpop.f32.mrf.mxu0
    %v2905 = vadd.f32 %v2692, %v2904
    %2906 = vmatmul.f32.gmra.mxu0 %v2740
    %v2907 = vpop.f32.mrf.mxu0
    %v2908 = vadd.f32 %v2692, %v2907
    %2909 = vmatmul.f32.gmra.mxu0 %v2743
    %v2910 = vpop.f32.mrf.mxu0
    %v2911 = vadd.f32 %v2692, %v2910
    %2912 = vmatmul.f32.gmra.mxu0 %v2746
    %v2913 = vpop.f32.mrf.mxu0
    %v2914 = vadd.f32 %v2692, %v2913
    %2915 = vmatmul.f32.gmra.mxu0 %v2749
    %v2916 = vpop.f32.mrf.mxu0
    %v2917 = vadd.f32 %v2692, %v2916
    %2918 = vmatmul.f32.gmra.mxu0 %v2752
    %v2919 = vpop.f32.mrf.mxu0
    %v2920 = vadd.f32 %v2692, %v2919
    %2921 = vmatmul.f32.gmra.mxu0 %v2755
    %v2922 = vpop.f32.mrf.mxu0
    %v2923 = vadd.f32 %v2692, %v2922
    %2924 = vmatmul.f32.gmra.mxu0 %v2758
    %v2925 = vpop.f32.mrf.mxu0
    %v2926 = vadd.f32 %v2692, %v2925
    %2927 = vmatmul.f32.gmra.mxu0 %v2761
    %v2928 = vpop.f32.mrf.mxu0
    %v2929 = vadd.f32 %v2692, %v2928
    %2930 = vmatmul.f32.gmra.mxu0 %v2764
    %v2931 = vpop.f32.mrf.mxu0
    %v2932 = vadd.f32 %v2692, %v2931
    %2933 = vmatmul.f32.gmra.mxu0 %v2767
    %v2934 = vpop.f32.mrf.mxu0
    %v2935 = vadd.f32 %v2692, %v2934
    %2936 = vmatmul.f32.gmra.mxu0 %v2770
    %v2937 = vpop.f32.mrf.mxu0
    %v2938 = vadd.f32 %v2692, %v2937
    %2939 = vmatmul.f32.gmra.mxu0 %v2773
    %v2940 = vpop.f32.mrf.mxu0
    %v2941 = vadd.f32 %v2692, %v2940
    %2942 = vmatmul.f32.gmra.mxu0 %v2776
    %v2943 = vpop.f32.mrf.mxu0
    %v2944 = vadd.f32 %v2692, %v2943
    %2945 = vmatmul.f32.gmra.mxu0 %v2779
    %v2946 = vpop.f32.mrf.mxu0
    %v2947 = vadd.f32 %v2692, %v2946
    %2948 = vmatmul.f32.gmra.mxu0 %v2782
    %v2949 = vpop.f32.mrf.mxu0
    %v2950 = vadd.f32 %v2692, %v2949
    %2951 = vmatmul.f32.gmra.mxu0 %v2785
    %v2952 = vpop.f32.mrf.mxu0
    %v2953 = vadd.f32 %v2692, %v2952
    %2954 = vmatmul.f32.gmra.mxu0 %v2788
    %v2955 = vpop.f32.mrf.mxu0
    %v2956 = vadd.f32 %v2692, %v2955
    %2957 = vmatmul.f32.gmra.mxu0 %v2791
    %v2958 = vpop.f32.mrf.mxu0
    %v2959 = vadd.f32 %v2692, %v2958
    %2960 = vmatmul.f32.gmra.mxu0 %v2794
    %v2961 = vpop.f32.mrf.mxu0
    %v2962 = vadd.f32 %v2692, %v2961
    %2963 = vmatmul.f32.gmra.mxu0 %v2797
    %v2964 = vpop.f32.mrf.mxu0
    %v2965 = vadd.f32 %v2692, %v2964
    %2966 = vmatmul.f32.gmra.mxu0 %v2800
    %v2967 = vpop.f32.mrf.mxu0
    %v2968 = vadd.f32 %v2692, %v2967
    %2969 = vmatmul.f32.gmra.mxu0 %v2803
    %v2970 = vpop.f32.mrf.mxu0
    %v2971 = vadd.f32 %v2692, %v2970
    %2972 = vmatmul.f32.gmra.mxu0 %v2806
    %v2973 = vpop.f32.mrf.mxu0
    %v2974 = vadd.f32 %v2692, %v2973
    %2975 = vmatmul.f32.gmra.mxu0 %v2809
    %v2976 = vpop.f32.mrf.mxu0
    %v2977 = vadd.f32 %v2692, %v2976
    %2978 = vmatmul.f32.gmra.mxu0 %v2812
    %v2979 = vpop.f32.mrf.mxu0
    %v2980 = vadd.f32 %v2692, %v2979
    %2981 = vmatmul.f32.gmra.mxu0 %v2815
    %v2982 = vpop.f32.mrf.mxu0
    %v2983 = vadd.f32 %v2692, %v2982
    %2984 = vmatmul.f32.gmra.mxu0 %v2818
    %v2985 = vpop.f32.mrf.mxu0
    %v2986 = vadd.f32 %v2692, %v2985
    %2987 = vmatmul.f32.gmra.mxu0 %v2821
    %v2988 = vpop.f32.mrf.mxu0
    %v2989 = vadd.f32 %v2692, %v2988
    %2990 = vmatmul.f32.gmra.mxu0 %v2824
    %v2991 = vpop.f32.mrf.mxu0
    %v2992 = vadd.f32 %v2692, %v2991
    %2993 = vmatmul.f32.gmra.mxu0 %v2827
    %v2994 = vpop.f32.mrf.mxu0
    %v2995 = vadd.f32 %v2692, %v2994
    %2996 = vmatmul.f32.gmra.mxu0 %v2830
    %v2997 = vpop.f32.mrf.mxu0
    %v2998 = vadd.f32 %v2692, %v2997
    %2999 = vmatmul.f32.gmra.mxu0 %v2833
    %v3000 = vpop.f32.mrf.mxu0
    %v3001 = vadd.f32 %v2692, %v3000
    %3002 = vmatmul.f32.gmra.mxu0 %v2836
    %v3003 = vpop.f32.mrf.mxu0
    %v3004 = vadd.f32 %v2692, %v3003
    %3005 = vmatmul.f32.gmra.mxu0 %v2839
    %v3006 = vpop.f32.mrf.mxu0
    %v3007 = vadd.f32 %v2692, %v3006
    %3008 = vdwg.mxu0
    %v3009 = vmax.f32 %v2863, 0.0
    %v3010 = vmax.f32 %v2866, 0.0
    %v3011 = vmax.f32 %v2869, 0.0
    %v3012 = vmax.f32 %v2872, 0.0
    %v3013 = vmax.f32 %v2875, 0.0
    %v3014 = vmax.f32 %v2878, 0.0
    %v3015 = vmax.f32 %v2881, 0.0
    %v3016 = vmax.f32 %v2884, 0.0
    %v3017 = vmax.f32 %v2887, 0.0
    %v3018 = vmax.f32 %v2890, 0.0
    %v3019 = vmax.f32 %v2893, 0.0
    %v3020 = vmax.f32 %v2896, 0.0
    %v3021 = vmax.f32 %v2899, 0.0
    %v3022 = vmax.f32 %v2902, 0.0
    %v3023 = vmax.f32 %v2905, 0.0
    %v3024 = vmax.f32 %v2908, 0.0
    %v3025 = vmax.f32 %v2911, 0.0
    %v3026 = vmax.f32 %v2914, 0.0
    %v3027 = vmax.f32 %v2917, 0.0
    %v3028 = vmax.f32 %v2920, 0.0
    %v3029 = vmax.f32 %v2923, 0.0
    %v3030 = vmax.f32 %v2926, 0.0
    %v3031 = vmax.f32 %v2929, 0.0
    %v3032 = vmax.f32 %v2932, 0.0
    %v3033 = vmax.f32 %v2935, 0.0
    %v3034 = vmax.f32 %v2938, 0.0
    %v3035 = vmax.f32 %v2941, 0.0
    %v3036 = vmax.f32 %v2944, 0.0
    %v3037 = vmax.f32 %v2947, 0.0
    %v3038 = vmax.f32 %v2950, 0.0
    %v3039 = vmax.f32 %v2953, 0.0
    %v3040 = vmax.f32 %v2956, 0.0
    %v3041 = vmax.f32 %v2959, 0.0
    %v3042 = vmax.f32 %v2962, 0.0
    %v3043 = vmax.f32 %v2965, 0.0
    %v3044 = vmax.f32 %v2968, 0.0
    %v3045 = vmax.f32 %v2971, 0.0
    %v3046 = vmax.f32 %v2974, 0.0
    %v3047 = vmax.f32 %v2977, 0.0
    %v3048 = vmax.f32 %v2980, 0.0
    %v3049 = vmax.f32 %v2983, 0.0
    %v3050 = vmax.f32 %v2986, 0.0
    %v3051 = vmax.f32 %v2989, 0.0
    %v3052 = vmax.f32 %v2992, 0.0
    %v3053 = vmax.f32 %v2995, 0.0
    %v3054 = vmax.f32 %v2998, 0.0
    %v3055 = vmax.f32 %v3001, 0.0
    %v3056 = vmax.f32 %v3004, 0.0
    %v3057 = vmax.f32 %v3007, 0.0
    %vm3058 = vcmask 261120
    %3059 = vst.msk [vmem:[#allocation4] sm:$0xff] %vm3058, %v3009
    %3060 = vst.msk [vmem:[#allocation4 + $0x8] sm:$0xff] %vm3058, %v3010
    %3061 = vst.msk [vmem:[#allocation4 + $0x10] sm:$0xff] %vm3058, %v3011
    %3062 = vst.msk [vmem:[#allocation4 + $0x18] sm:$0xff] %vm3058, %v3012
    %3063 = vst.msk [vmem:[#allocation4 + $0x20] sm:$0xff] %vm3058, %v3013
    %3064 = vst.msk [vmem:[#allocation4 + $0x28] sm:$0xff] %vm3058, %v3014
    %3065 = vst.msk [vmem:[#allocation4 + $0x30] sm:$0xff] %vm3058, %v3015
    %3066 = vst.msk [vmem:[#allocation4 + $0x38] sm:$0xff] %vm3058, %v3016
    %3067 = vst.msk [vmem:[#allocation4 + $0x40] sm:$0xff] %vm3058, %v3017
    %3068 = vst.msk [vmem:[#allocation4 + $0x48] sm:$0xff] %vm3058, %v3018
    %3069 = vst.msk [vmem:[#allocation4 + $0x50] sm:$0xff] %vm3058, %v3019
    %3070 = vst.msk [vmem:[#allocation4 + $0x58] sm:$0xff] %vm3058, %v3020
    %3071 = vst.msk [vmem:[#allocation4 + $0x60] sm:$0xff] %vm3058, %v3021
    %3072 = vst.msk [vmem:[#allocation4 + $0x68] sm:$0xff] %vm3058, %v3022
    %3073 = vst.msk [vmem:[#allocation4 + $0x70] sm:$0xff] %vm3058, %v3023
    %3074 = vst.msk [vmem:[#allocation4 + $0x78] sm:$0xff] %vm3058, %v3024
    %3075 = vst.msk [vmem:[#allocation4 + $0x80] sm:$0xff] %vm3058, %v3025
    %3076 = vst.msk [vmem:[#allocation4 + $0x88] sm:$0xff] %vm3058, %v3026
    %3077 = vst.msk [vmem:[#allocation4 + $0x90] sm:$0xff] %vm3058, %v3027
    %3078 = vst.msk [vmem:[#allocation4 + $0x98] sm:$0xff] %vm3058, %v3028
    %3079 = vst.msk [vmem:[#allocation4 + $0xa0] sm:$0xff] %vm3058, %v3029
    %3080 = vst.msk [vmem:[#allocation4 + $0xa8] sm:$0xff] %vm3058, %v3030
    %3081 = vst.msk [vmem:[#allocation4 + $0xb0] sm:$0xff] %vm3058, %v3031
    %3082 = vst.msk [vmem:[#allocation4 + $0xb8] sm:$0xff] %vm3058, %v3032
    %3083 = vst.msk [vmem:[#allocation4 + $0xc0] sm:$0xff] %vm3058, %v3033
    %3084 = vst.msk [vmem:[#allocation4 + $0xc8] sm:$0xff] %vm3058, %v3034
    %3085 = vst.msk [vmem:[#allocation4 + $0xd0] sm:$0xff] %vm3058, %v3035
    %3086 = vst.msk [vmem:[#allocation4 + $0xd8] sm:$0xff] %vm3058, %v3036
    %3087 = vst.msk [vmem:[#allocation4 + $0xe0] sm:$0xff] %vm3058, %v3037
    %3088 = vst.msk [vmem:[#allocation4 + $0xe8] sm:$0xff] %vm3058, %v3038
    %3089 = vst.msk [vmem:[#allocation4 + $0xf0] sm:$0xff] %vm3058, %v3039
    %3090 = vst.msk [vmem:[#allocation4 + $0xf8] sm:$0xff] %vm3058, %v3040
    %3091 = vst.msk [vmem:[#allocation4 + $0x100] sm:$0xff] %vm3058, %v3041
    %3092 = vst.msk [vmem:[#allocation4 + $0x108] sm:$0xff] %vm3058, %v3042
    %3093 = vst.msk [vmem:[#allocation4 + $0x110] sm:$0xff] %vm3058, %v3043
    %3094 = vst.msk [vmem:[#allocation4 + $0x118] sm:$0xff] %vm3058, %v3044
    %3095 = vst.msk [vmem:[#allocation4 + $0x120] sm:$0xff] %vm3058, %v3045
    %3096 = vst.msk [vmem:[#allocation4 + $0x128] sm:$0xff] %vm3058, %v3046
    %3097 = vst.msk [vmem:[#allocation4 + $0x130] sm:$0xff] %vm3058, %v3047
    %3098 = vst.msk [vmem:[#allocation4 + $0x138] sm:$0xff] %vm3058, %v3048
    %3099 = vst.msk [vmem:[#allocation4 + $0x140] sm:$0xff] %vm3058, %v3049
    %3100 = vst.msk [vmem:[#allocation4 + $0x148] sm:$0xff] %vm3058, %v3050
    %3101 = vst.msk [vmem:[#allocation4 + $0x150] sm:$0xff] %vm3058, %v3051
    %3102 = vst.msk [vmem:[#allocation4 + $0x158] sm:$0xff] %vm3058, %v3052
    %3103 = vst.msk [vmem:[#allocation4 + $0x160] sm:$0xff] %vm3058, %v3053
    %3104 = vst.msk [vmem:[#allocation4 + $0x168] sm:$0xff] %vm3058, %v3054
    %3105 = vst.msk [vmem:[#allocation4 + $0x170] sm:$0xff] %vm3058, %v3055
    %3106 = vst.msk [vmem:[#allocation4 + $0x178] sm:$0xff] %vm3058, %v3056
    %3107 = vst.msk [vmem:[#allocation4 + $0x180] sm:$0xff] %vm3058, %v3057
    %v3108 = vld [vmem:[#allocation4] sm:$0xff]
    %v3109 = vld [vmem:[#allocation4 + $0x8] sm:$0xff]
    %v3110 = vld [vmem:[#allocation4 + $0x10] sm:$0xff]
    %v3111 = vld [vmem:[#allocation4 + $0x18] sm:$0xff]
    %v3112 = vld [vmem:[#allocation4 + $0x20] sm:$0xff]
    %v3113 = vld [vmem:[#allocation4 + $0x28] sm:$0xff]
    %v3114 = vld [vmem:[#allocation4 + $0x30] sm:$0xff]
    %v3115 = vld [vmem:[#allocation4 + $0x38] sm:$0xff]
    %v3116 = vld [vmem:[#allocation4 + $0x40] sm:$0xff]
    %v3117 = vld [vmem:[#allocation4 + $0x48] sm:$0xff]
    %v3118 = vld [vmem:[#allocation4 + $0x50] sm:$0xff]
    %v3119 = vld [vmem:[#allocation4 + $0x58] sm:$0xff]
    %v3120 = vld [vmem:[#allocation4 + $0x60] sm:$0xff]
    %v3121 = vld [vmem:[#allocation4 + $0x68] sm:$0xff]
    %v3122 = vld [vmem:[#allocation4 + $0x70] sm:$0xff]
    %v3123 = vld [vmem:[#allocation4 + $0x78] sm:$0xff]
    %v3124 = vld [vmem:[#allocation4 + $0x80] sm:$0xff]
    %v3125 = vld [vmem:[#allocation4 + $0x88] sm:$0xff]
    %v3126 = vld [vmem:[#allocation4 + $0x90] sm:$0xff]
    %v3127 = vld [vmem:[#allocation4 + $0x98] sm:$0xff]
    %v3128 = vld [vmem:[#allocation4 + $0xa0] sm:$0xff]
    %v3129 = vld [vmem:[#allocation4 + $0xa8] sm:$0xff]
    %v3130 = vld [vmem:[#allocation4 + $0xb0] sm:$0xff]
    %v3131 = vld [vmem:[#allocation4 + $0xb8] sm:$0xff]
    %v3132 = vld [vmem:[#allocation4 + $0xc0] sm:$0xff]
    %v3133 = vld [vmem:[#allocation4 + $0xc8] sm:$0xff]
    %v3134 = vld [vmem:[#allocation4 + $0xd0] sm:$0xff]
    %v3135 = vld [vmem:[#allocation4 + $0xd8] sm:$0xff]
    %v3136 = vld [vmem:[#allocation4 + $0xe0] sm:$0xff]
    %v3137 = vld [vmem:[#allocation4 + $0xe8] sm:$0xff]
    %v3138 = vld [vmem:[#allocation4 + $0xf0] sm:$0xff]
    %v3139 = vld [vmem:[#allocation4 + $0xf8] sm:$0xff]
    %v3140 = vld [vmem:[#allocation4 + $0x100] sm:$0xff]
    %v3141 = vld [vmem:[#allocation4 + $0x108] sm:$0xff]
    %v3142 = vld [vmem:[#allocation4 + $0x110] sm:$0xff]
    %v3143 = vld [vmem:[#allocation4 + $0x118] sm:$0xff]
    %v3144 = vld [vmem:[#allocation4 + $0x120] sm:$0xff]
    %v3145 = vld [vmem:[#allocation4 + $0x128] sm:$0xff]
    %v3146 = vld [vmem:[#allocation4 + $0x130] sm:$0xff]
    %v3147 = vld [vmem:[#allocation4 + $0x138] sm:$0xff]
    %v3148 = vld [vmem:[#allocation4 + $0x140] sm:$0xff]
    %v3149 = vld [vmem:[#allocation4 + $0x148] sm:$0xff]
    %v3150 = vld [vmem:[#allocation4 + $0x150] sm:$0xff]
    %v3151 = vld [vmem:[#allocation4 + $0x158] sm:$0xff]
    %v3152 = vld [vmem:[#allocation4 + $0x160] sm:$0xff]
    %v3153 = vld [vmem:[#allocation4 + $0x168] sm:$0xff]
    %v3154 = vld [vmem:[#allocation4 + $0x170] sm:$0xff]
    %v3155 = vld [vmem:[#allocation4 + $0x178] sm:$0xff]
    %v3156 = vld [vmem:[#allocation4 + $0x180] sm:$0xff]
    %v3157 = vld [vmem:[#allocation4 + $0x1] sm:$0xff]
    %v3158 = vld [vmem:[#allocation4 + $0x9] sm:$0xff]
    %v3159 = vld [vmem:[#allocation4 + $0x11] sm:$0xff]
    %v3160 = vld [vmem:[#allocation4 + $0x19] sm:$0xff]
    %v3161 = vld [vmem:[#allocation4 + $0x21] sm:$0xff]
    %v3162 = vld [vmem:[#allocation4 + $0x29] sm:$0xff]
    %v3163 = vld [vmem:[#allocation4 + $0x31] sm:$0xff]
    %v3164 = vld [vmem:[#allocation4 + $0x39] sm:$0xff]
    %v3165 = vld [vmem:[#allocation4 + $0x41] sm:$0xff]
    %v3166 = vld [vmem:[#allocation4 + $0x49] sm:$0xff]
    %v3167 = vld [vmem:[#allocation4 + $0x51] sm:$0xff]
    %v3168 = vld [vmem:[#allocation4 + $0x59] sm:$0xff]
    %v3169 = vld [vmem:[#allocation4 + $0x61] sm:$0xff]
    %v3170 = vld [vmem:[#allocation4 + $0x69] sm:$0xff]
    %v3171 = vld [vmem:[#allocation4 + $0x71] sm:$0xff]
    %v3172 = vld [vmem:[#allocation4 + $0x79] sm:$0xff]
    %v3173 = vld [vmem:[#allocation4 + $0x81] sm:$0xff]
    %v3174 = vld [vmem:[#allocation4 + $0x89] sm:$0xff]
    %v3175 = vld [vmem:[#allocation4 + $0x91] sm:$0xff]
    %v3176 = vld [vmem:[#allocation4 + $0x99] sm:$0xff]
    %v3177 = vld [vmem:[#allocation4 + $0xa1] sm:$0xff]
    %v3178 = vld [vmem:[#allocation4 + $0xa9] sm:$0xff]
    %v3179 = vld [vmem:[#allocation4 + $0xb1] sm:$0xff]
    %v3180 = vld [vmem:[#allocation4 + $0xb9] sm:$0xff]
    %v3181 = vld [vmem:[#allocation4 + $0xc1] sm:$0xff]
    %v3182 = vld [vmem:[#allocation4 + $0xc9] sm:$0xff]
    %v3183 = vld [vmem:[#allocation4 + $0xd1] sm:$0xff]
    %v3184 = vld [vmem:[#allocation4 + $0xd9] sm:$0xff]
    %v3185 = vld [vmem:[#allocation4 + $0xe1] sm:$0xff]
    %v3186 = vld [vmem:[#allocation4 + $0xe9] sm:$0xff]
    %v3187 = vld [vmem:[#allocation4 + $0xf1] sm:$0xff]
    %v3188 = vld [vmem:[#allocation4 + $0xf9] sm:$0xff]
    %v3189 = vld [vmem:[#allocation4 + $0x101] sm:$0xff]
    %v3190 = vld [vmem:[#allocation4 + $0x109] sm:$0xff]
    %v3191 = vld [vmem:[#allocation4 + $0x111] sm:$0xff]
    %v3192 = vld [vmem:[#allocation4 + $0x119] sm:$0xff]
    %v3193 = vld [vmem:[#allocation4 + $0x121] sm:$0xff]
    %v3194 = vld [vmem:[#allocation4 + $0x129] sm:$0xff]
    %v3195 = vld [vmem:[#allocation4 + $0x131] sm:$0xff]
    %v3196 = vld [vmem:[#allocation4 + $0x139] sm:$0xff]
    %v3197 = vld [vmem:[#allocation4 + $0x141] sm:$0xff]
    %v3198 = vld [vmem:[#allocation4 + $0x149] sm:$0xff]
    %v3199 = vld [vmem:[#allocation4 + $0x151] sm:$0xff]
    %v3200 = vld [vmem:[#allocation4 + $0x159] sm:$0xff]
    %v3201 = vld [vmem:[#allocation4 + $0x161] sm:$0xff]
    %v3202 = vld [vmem:[#allocation4 + $0x169] sm:$0xff]
    %v3203 = vld [vmem:[#allocation4 + $0x171] sm:$0xff]
    %v3204 = vld [vmem:[#allocation4 + $0x179] sm:$0xff]
    %v3205 = vld [vmem:[#allocation4 + $0x181] sm:$0xff]
    %v3206 = vmax.f32 %v3108, %v3157
    %v3207 = vmax.f32 %v3109, %v3158
    %v3208 = vmax.f32 %v3110, %v3159
    %v3209 = vmax.f32 %v3111, %v3160
    %v3210 = vmax.f32 %v3112, %v3161
    %v3211 = vmax.f32 %v3113, %v3162
    %v3212 = vmax.f32 %v3114, %v3163
    %v3213 = vmax.f32 %v3115, %v3164
    %v3214 = vmax.f32 %v3116, %v3165
    %v3215 = vmax.f32 %v3117, %v3166
    %v3216 = vmax.f32 %v3118, %v3167
    %v3217 = vmax.f32 %v3119, %v3168
    %v3218 = vmax.f32 %v3120, %v3169
    %v3219 = vmax.f32 %v3121, %v3170
    %v3220 = vmax.f32 %v3122, %v3171
    %v3221 = vmax.f32 %v3123, %v3172
    %v3222 = vmax.f32 %v3124, %v3173
    %v3223 = vmax.f32 %v3125, %v3174
    %v3224 = vmax.f32 %v3126, %v3175
    %v3225 = vmax.f32 %v3127, %v3176
    %v3226 = vmax.f32 %v3128, %v3177
    %v3227 = vmax.f32 %v3129, %v3178
    %v3228 = vmax.f32 %v3130, %v3179
    %v3229 = vmax.f32 %v3131, %v3180
    %v3230 = vmax.f32 %v3132, %v3181
    %v3231 = vmax.f32 %v3133, %v3182
    %v3232 = vmax.f32 %v3134, %v3183
    %v3233 = vmax.f32 %v3135, %v3184
    %v3234 = vmax.f32 %v3136, %v3185
    %v3235 = vmax.f32 %v3137, %v3186
    %v3236 = vmax.f32 %v3138, %v3187
    %v3237 = vmax.f32 %v3139, %v3188
    %v3238 = vmax.f32 %v3140, %v3189
    %v3239 = vmax.f32 %v3141, %v3190
    %v3240 = vmax.f32 %v3142, %v3191
    %v3241 = vmax.f32 %v3143, %v3192
    %v3242 = vmax.f32 %v3144, %v3193
    %v3243 = vmax.f32 %v3145, %v3194
    %v3244 = vmax.f32 %v3146, %v3195
    %v3245 = vmax.f32 %v3147, %v3196
    %v3246 = vmax.f32 %v3148, %v3197
    %v3247 = vmax.f32 %v3149, %v3198
    %v3248 = vmax.f32 %v3150, %v3199
    %v3249 = vmax.f32 %v3151, %v3200
    %v3250 = vmax.f32 %v3152, %v3201
    %v3251 = vmax.f32 %v3153, %v3202
    %v3252 = vmax.f32 %v3154, %v3203
    %v3253 = vmax.f32 %v3155, %v3204
    %v3254 = vmax.f32 %v3156, %v3205
    %v3255 = vld [vmem:[#allocation4 + $0xe] sm:$0xff]
    %v3256 = vld [vmem:[#allocation4 + $0x16] sm:$0xff]
    %v3257 = vld [vmem:[#allocation4 + $0x1e] sm:$0xff]
    %v3258 = vld [vmem:[#allocation4 + $0x26] sm:$0xff]
    %v3259 = vld [vmem:[#allocation4 + $0x2e] sm:$0xff]
    %v3260 = vld [vmem:[#allocation4 + $0x36] sm:$0xff]
    %v3261 = vld [vmem:[#allocation4 + $0x3e] sm:$0xff]
    %v3262 = vld [vmem:[#allocation4 + $0x46] sm:$0xff]
    %v3263 = vld [vmem:[#allocation4 + $0x4e] sm:$0xff]
    %v3264 = vld [vmem:[#allocation4 + $0x56] sm:$0xff]
    %v3265 = vld [vmem:[#allocation4 + $0x5e] sm:$0xff]
    %v3266 = vld [vmem:[#allocation4 + $0x66] sm:$0xff]
    %v3267 = vld [vmem:[#allocation4 + $0x6e] sm:$0xff]
    %v3268 = vld [vmem:[#allocation4 + $0x76] sm:$0xff]
    %v3269 = vld [vmem:[#allocation4 + $0x7e] sm:$0xff]
    %v3270 = vld [vmem:[#allocation4 + $0x86] sm:$0xff]
    %v3271 = vld [vmem:[#allocation4 + $0x8e] sm:$0xff]
    %v3272 = vld [vmem:[#allocation4 + $0x96] sm:$0xff]
    %v3273 = vld [vmem:[#allocation4 + $0x9e] sm:$0xff]
    %v3274 = vld [vmem:[#allocation4 + $0xa6] sm:$0xff]
    %v3275 = vld [vmem:[#allocation4 + $0xae] sm:$0xff]
    %v3276 = vld [vmem:[#allocation4 + $0xb6] sm:$0xff]
    %v3277 = vld [vmem:[#allocation4 + $0xbe] sm:$0xff]
    %v3278 = vld [vmem:[#allocation4 + $0xc6] sm:$0xff]
    %v3279 = vld [vmem:[#allocation4 + $0xce] sm:$0xff]
    %v3280 = vld [vmem:[#allocation4 + $0xd6] sm:$0xff]
    %v3281 = vld [vmem:[#allocation4 + $0xde] sm:$0xff]
    %v3282 = vld [vmem:[#allocation4 + $0xe6] sm:$0xff]
    %v3283 = vld [vmem:[#allocation4 + $0xee] sm:$0xff]
    %v3284 = vld [vmem:[#allocation4 + $0xf6] sm:$0xff]
    %v3285 = vld [vmem:[#allocation4 + $0xfe] sm:$0xff]
    %v3286 = vld [vmem:[#allocation4 + $0x106] sm:$0xff]
    %v3287 = vld [vmem:[#allocation4 + $0x10e] sm:$0xff]
    %v3288 = vld [vmem:[#allocation4 + $0x116] sm:$0xff]
    %v3289 = vld [vmem:[#allocation4 + $0x11e] sm:$0xff]
    %v3290 = vld [vmem:[#allocation4 + $0x126] sm:$0xff]
    %v3291 = vld [vmem:[#allocation4 + $0x12e] sm:$0xff]
    %v3292 = vld [vmem:[#allocation4 + $0x136] sm:$0xff]
    %v3293 = vld [vmem:[#allocation4 + $0x13e] sm:$0xff]
    %v3294 = vld [vmem:[#allocation4 + $0x146] sm:$0xff]
    %v3295 = vld [vmem:[#allocation4 + $0x14e] sm:$0xff]
    %v3296 = vld [vmem:[#allocation4 + $0x156] sm:$0xff]
    %v3297 = vld [vmem:[#allocation4 + $0x15e] sm:$0xff]
    %v3298 = vld [vmem:[#allocation4 + $0x166] sm:$0xff]
    %v3299 = vld [vmem:[#allocation4 + $0x16e] sm:$0xff]
    %v3300 = vld [vmem:[#allocation4 + $0x176] sm:$0xff]
    %v3301 = vld [vmem:[#allocation4 + $0x17e] sm:$0xff]
    %v3302 = vld [vmem:[#allocation4 + $0x186] sm:$0xff]
    %v3303 = vld [vmem:[#allocation4 + $0x18e] sm:$0xff]
    %v3304 = vld [vmem:[#allocation4 + $0xf] sm:$0xff]
    %v3305 = vld [vmem:[#allocation4 + $0x17] sm:$0xff]
    %v3306 = vld [vmem:[#allocation4 + $0x1f] sm:$0xff]
    %v3307 = vld [vmem:[#allocation4 + $0x27] sm:$0xff]
    %v3308 = vld [vmem:[#allocation4 + $0x2f] sm:$0xff]
    %v3309 = vld [vmem:[#allocation4 + $0x37] sm:$0xff]
    %v3310 = vld [vmem:[#allocation4 + $0x3f] sm:$0xff]
    %v3311 = vld [vmem:[#allocation4 + $0x47] sm:$0xff]
    %v3312 = vld [vmem:[#allocation4 + $0x4f] sm:$0xff]
    %v3313 = vld [vmem:[#allocation4 + $0x57] sm:$0xff]
    %v3314 = vld [vmem:[#allocation4 + $0x5f] sm:$0xff]
    %v3315 = vld [vmem:[#allocation4 + $0x67] sm:$0xff]
    %v3316 = vld [vmem:[#allocation4 + $0x6f] sm:$0xff]
    %v3317 = vld [vmem:[#allocation4 + $0x77] sm:$0xff]
    %v3318 = vld [vmem:[#allocation4 + $0x7f] sm:$0xff]
    %v3319 = vld [vmem:[#allocation4 + $0x87] sm:$0xff]
    %v3320 = vld [vmem:[#allocation4 + $0x8f] sm:$0xff]
    %v3321 = vld [vmem:[#allocation4 + $0x97] sm:$0xff]
    %v3322 = vld [vmem:[#allocation4 + $0x9f] sm:$0xff]
    %v3323 = vld [vmem:[#allocation4 + $0xa7] sm:$0xff]
    %v3324 = vld [vmem:[#allocation4 + $0xaf] sm:$0xff]
    %v3325 = vld [vmem:[#allocation4 + $0xb7] sm:$0xff]
    %v3326 = vld [vmem:[#allocation4 + $0xbf] sm:$0xff]
    %v3327 = vld [vmem:[#allocation4 + $0xc7] sm:$0xff]
    %v3328 = vld [vmem:[#allocation4 + $0xcf] sm:$0xff]
    %v3329 = vld [vmem:[#allocation4 + $0xd7] sm:$0xff]
    %v3330 = vld [vmem:[#allocation4 + $0xdf] sm:$0xff]
    %v3331 = vld [vmem:[#allocation4 + $0xe7] sm:$0xff]
    %v3332 = vld [vmem:[#allocation4 + $0xef] sm:$0xff]
    %v3333 = vld [vmem:[#allocation4 + $0xf7] sm:$0xff]
    %v3334 = vld [vmem:[#allocation4 + $0xff] sm:$0xff]
    %v3335 = vld [vmem:[#allocation4 + $0x107] sm:$0xff]
    %v3336 = vld [vmem:[#allocation4 + $0x10f] sm:$0xff]
    %v3337 = vld [vmem:[#allocation4 + $0x117] sm:$0xff]
    %v3338 = vld [vmem:[#allocation4 + $0x11f] sm:$0xff]
    %v3339 = vld [vmem:[#allocation4 + $0x127] sm:$0xff]
    %v3340 = vld [vmem:[#allocation4 + $0x12f] sm:$0xff]
    %v3341 = vld [vmem:[#allocation4 + $0x137] sm:$0xff]
    %v3342 = vld [vmem:[#allocation4 + $0x13f] sm:$0xff]
    %v3343 = vld [vmem:[#allocation4 + $0x147] sm:$0xff]
    %v3344 = vld [vmem:[#allocation4 + $0x14f] sm:$0xff]
    %v3345 = vld [vmem:[#allocation4 + $0x157] sm:$0xff]
    %v3346 = vld [vmem:[#allocation4 + $0x15f] sm:$0xff]
    %v3347 = vld [vmem:[#allocation4 + $0x167] sm:$0xff]
    %v3348 = vld [vmem:[#allocation4 + $0x16f] sm:$0xff]
    %v3349 = vld [vmem:[#allocation4 + $0x177] sm:$0xff]
    %v3350 = vld [vmem:[#allocation4 + $0x17f] sm:$0xff]
    %v3351 = vld [vmem:[#allocation4 + $0x187] sm:$0xff]
    %v3352 = vld [vmem:[#allocation4 + $0x18f] sm:$0xff]
    %v3353 = vmax.f32 %v3255, %v3304
    %v3354 = vmax.f32 %v3256, %v3305
    %v3355 = vmax.f32 %v3257, %v3306
    %v3356 = vmax.f32 %v3258, %v3307
    %v3357 = vmax.f32 %v3259, %v3308
    %v3358 = vmax.f32 %v3260, %v3309
    %v3359 = vmax.f32 %v3261, %v3310
    %v3360 = vmax.f32 %v3262, %v3311
    %v3361 = vmax.f32 %v3263, %v3312
    %v3362 = vmax.f32 %v3264, %v3313
    %v3363 = vmax.f32 %v3265, %v3314
    %v3364 = vmax.f32 %v3266, %v3315
    %v3365 = vmax.f32 %v3267, %v3316
    %v3366 = vmax.f32 %v3268, %v3317
    %v3367 = vmax.f32 %v3269, %v3318
    %v3368 = vmax.f32 %v3270, %v3319
    %v3369 = vmax.f32 %v3271, %v3320
    %v3370 = vmax.f32 %v3272, %v3321
    %v3371 = vmax.f32 %v3273, %v3322
    %v3372 = vmax.f32 %v3274, %v3323
    %v3373 = vmax.f32 %v3275, %v3324
    %v3374 = vmax.f32 %v3276, %v3325
    %v3375 = vmax.f32 %v3277, %v3326
    %v3376 = vmax.f32 %v3278, %v3327
    %v3377 = vmax.f32 %v3279, %v3328
    %v3378 = vmax.f32 %v3280, %v3329
    %v3379 = vmax.f32 %v3281, %v3330
    %v3380 = vmax.f32 %v3282, %v3331
    %v3381 = vmax.f32 %v3283, %v3332
    %v3382 = vmax.f32 %v3284, %v3333
    %v3383 = vmax.f32 %v3285, %v3334
    %v3384 = vmax.f32 %v3286, %v3335
    %v3385 = vmax.f32 %v3287, %v3336
    %v3386 = vmax.f32 %v3288, %v3337
    %v3387 = vmax.f32 %v3289, %v3338
    %v3388 = vmax.f32 %v3290, %v3339
    %v3389 = vmax.f32 %v3291, %v3340
    %v3390 = vmax.f32 %v3292, %v3341
    %v3391 = vmax.f32 %v3293, %v3342
    %v3392 = vmax.f32 %v3294, %v3343
    %v3393 = vmax.f32 %v3295, %v3344
    %v3394 = vmax.f32 %v3296, %v3345
    %v3395 = vmax.f32 %v3297, %v3346
    %v3396 = vmax.f32 %v3298, %v3347
    %v3397 = vmax.f32 %v3299, %v3348
    %v3398 = vmax.f32 %v3300, %v3349
    %v3399 = vmax.f32 %v3301, %v3350
    %v3400 = vmax.f32 %v3302, %v3351
    %v3401 = vmax.f32 %v3303, %v3352
    %v3402 = vmax.f32 %v3206, %v3353
    %v3403 = vmax.f32 %v3207, %v3354
    %v3404 = vmax.f32 %v3208, %v3355
    %v3405 = vmax.f32 %v3209, %v3356
    %v3406 = vmax.f32 %v3210, %v3357
    %v3407 = vmax.f32 %v3211, %v3358
    %v3408 = vmax.f32 %v3212, %v3359
    %v3409 = vmax.f32 %v3213, %v3360
    %v3410 = vmax.f32 %v3214, %v3361
    %v3411 = vmax.f32 %v3215, %v3362
    %v3412 = vmax.f32 %v3216, %v3363
    %v3413 = vmax.f32 %v3217, %v3364
    %v3414 = vmax.f32 %v3218, %v3365
    %v3415 = vmax.f32 %v3219, %v3366
    %v3416 = vmax.f32 %v3220, %v3367
    %v3417 = vmax.f32 %v3221, %v3368
    %v3418 = vmax.f32 %v3222, %v3369
    %v3419 = vmax.f32 %v3223, %v3370
    %v3420 = vmax.f32 %v3224, %v3371
    %v3421 = vmax.f32 %v3225, %v3372
    %v3422 = vmax.f32 %v3226, %v3373
    %v3423 = vmax.f32 %v3227, %v3374
    %v3424 = vmax.f32 %v3228, %v3375
    %v3425 = vmax.f32 %v3229, %v3376
    %v3426 = vmax.f32 %v3230, %v3377
    %v3427 = vmax.f32 %v3231, %v3378
    %v3428 = vmax.f32 %v3232, %v3379
    %v3429 = vmax.f32 %v3233, %v3380
    %v3430 = vmax.f32 %v3234, %v3381
    %v3431 = vmax.f32 %v3235, %v3382
    %v3432 = vmax.f32 %v3236, %v3383
    %v3433 = vmax.f32 %v3237, %v3384
    %v3434 = vmax.f32 %v3238, %v3385
    %v3435 = vmax.f32 %v3239, %v3386
    %v3436 = vmax.f32 %v3240, %v3387
    %v3437 = vmax.f32 %v3241, %v3388
    %v3438 = vmax.f32 %v3242, %v3389
    %v3439 = vmax.f32 %v3243, %v3390
    %v3440 = vmax.f32 %v3244, %v3391
    %v3441 = vmax.f32 %v3245, %v3392
    %v3442 = vmax.f32 %v3246, %v3393
    %v3443 = vmax.f32 %v3247, %v3394
    %v3444 = vmax.f32 %v3248, %v3395
    %v3445 = vmax.f32 %v3249, %v3396
    %v3446 = vmax.f32 %v3250, %v3397
    %v3447 = vmax.f32 %v3251, %v3398
    %v3448 = vmax.f32 %v3252, %v3399
    %v3449 = vmax.f32 %v3253, %v3400
    %v3450 = vmax.f32 %v3254, %v3401
    %3451 = vst.msk [vmem:[#allocation5] sm:$0xff] %vm3058, %v3402
    %3452 = vst.msk [vmem:[#allocation5 + $0x8] sm:$0xff] %vm3058, %v3403
    %3453 = vst.msk [vmem:[#allocation5 + $0x10] sm:$0xff] %vm3058, %v3404
    %3454 = vst.msk [vmem:[#allocation5 + $0x18] sm:$0xff] %vm3058, %v3405
    %3455 = vst.msk [vmem:[#allocation5 + $0x20] sm:$0xff] %vm3058, %v3406
    %3456 = vst.msk [vmem:[#allocation5 + $0x28] sm:$0xff] %vm3058, %v3407
    %3457 = vst.msk [vmem:[#allocation5 + $0x30] sm:$0xff] %vm3058, %v3408
    %3458 = vst.msk [vmem:[#allocation5 + $0x38] sm:$0xff] %vm3058, %v3409
    %3459 = vst.msk [vmem:[#allocation5 + $0x40] sm:$0xff] %vm3058, %v3410
    %3460 = vst.msk [vmem:[#allocation5 + $0x48] sm:$0xff] %vm3058, %v3411
    %3461 = vst.msk [vmem:[#allocation5 + $0x50] sm:$0xff] %vm3058, %v3412
    %3462 = vst.msk [vmem:[#allocation5 + $0x58] sm:$0xff] %vm3058, %v3413
    %3463 = vst.msk [vmem:[#allocation5 + $0x60] sm:$0xff] %vm3058, %v3414
    %3464 = vst.msk [vmem:[#allocation5 + $0x68] sm:$0xff] %vm3058, %v3415
    %3465 = vst.msk [vmem:[#allocation5 + $0x70] sm:$0xff] %vm3058, %v3416
    %3466 = vst.msk [vmem:[#allocation5 + $0x78] sm:$0xff] %vm3058, %v3417
    %3467 = vst.msk [vmem:[#allocation5 + $0x80] sm:$0xff] %vm3058, %v3418
    %3468 = vst.msk [vmem:[#allocation5 + $0x88] sm:$0xff] %vm3058, %v3419
    %3469 = vst.msk [vmem:[#allocation5 + $0x90] sm:$0xff] %vm3058, %v3420
    %3470 = vst.msk [vmem:[#allocation5 + $0x98] sm:$0xff] %vm3058, %v3421
    %3471 = vst.msk [vmem:[#allocation5 + $0xa0] sm:$0xff] %vm3058, %v3422
    %3472 = vst.msk [vmem:[#allocation5 + $0xa8] sm:$0xff] %vm3058, %v3423
    %3473 = vst.msk [vmem:[#allocation5 + $0xb0] sm:$0xff] %vm3058, %v3424
    %3474 = vst.msk [vmem:[#allocation5 + $0xb8] sm:$0xff] %vm3058, %v3425
    %3475 = vst.msk [vmem:[#allocation5 + $0xc0] sm:$0xff] %vm3058, %v3426
    %3476 = vst.msk [vmem:[#allocation5 + $0xc8] sm:$0xff] %vm3058, %v3427
    %3477 = vst.msk [vmem:[#allocation5 + $0xd0] sm:$0xff] %vm3058, %v3428
    %3478 = vst.msk [vmem:[#allocation5 + $0xd8] sm:$0xff] %vm3058, %v3429
    %3479 = vst.msk [vmem:[#allocation5 + $0xe0] sm:$0xff] %vm3058, %v3430
    %3480 = vst.msk [vmem:[#allocation5 + $0xe8] sm:$0xff] %vm3058, %v3431
    %3481 = vst.msk [vmem:[#allocation5 + $0xf0] sm:$0xff] %vm3058, %v3432
    %3482 = vst.msk [vmem:[#allocation5 + $0xf8] sm:$0xff] %vm3058, %v3433
    %3483 = vst.msk [vmem:[#allocation5 + $0x100] sm:$0xff] %vm3058, %v3434
    %3484 = vst.msk [vmem:[#allocation5 + $0x108] sm:$0xff] %vm3058, %v3435
    %3485 = vst.msk [vmem:[#allocation5 + $0x110] sm:$0xff] %vm3058, %v3436
    %3486 = vst.msk [vmem:[#allocation5 + $0x118] sm:$0xff] %vm3058, %v3437
    %3487 = vst.msk [vmem:[#allocation5 + $0x120] sm:$0xff] %vm3058, %v3438
    %3488 = vst.msk [vmem:[#allocation5 + $0x128] sm:$0xff] %vm3058, %v3439
    %3489 = vst.msk [vmem:[#allocation5 + $0x130] sm:$0xff] %vm3058, %v3440
    %3490 = vst.msk [vmem:[#allocation5 + $0x138] sm:$0xff] %vm3058, %v3441
    %3491 = vst.msk [vmem:[#allocation5 + $0x140] sm:$0xff] %vm3058, %v3442
    %3492 = vst.msk [vmem:[#allocation5 + $0x148] sm:$0xff] %vm3058, %v3443
    %3493 = vst.msk [vmem:[#allocation5 + $0x150] sm:$0xff] %vm3058, %v3444
    %3494 = vst.msk [vmem:[#allocation5 + $0x158] sm:$0xff] %vm3058, %v3445
    %3495 = vst.msk [vmem:[#allocation5 + $0x160] sm:$0xff] %vm3058, %v3446
    %3496 = vst.msk [vmem:[#allocation5 + $0x168] sm:$0xff] %vm3058, %v3447
    %3497 = vst.msk [vmem:[#allocation5 + $0x170] sm:$0xff] %vm3058, %v3448
    %3498 = vst.msk [vmem:[#allocation5 + $0x178] sm:$0xff] %vm3058, %v3449
    %3499 = vst.msk [vmem:[#allocation5 + $0x180] sm:$0xff] %vm3058, %v3450
    %3500 = vst.msk [vmem:[#allocation6] sm:$0xff] %vm3058, 0.0
    %3501 = vst.msk [vmem:[#allocation6 + $0x8] sm:$0xff] %vm3058, 0.0
    %3502 = vst.msk [vmem:[#allocation6 + $0x10] sm:$0xff] %vm3058, 0.0
    %3503 = vst.msk [vmem:[#allocation6 + $0x18] sm:$0xff] %vm3058, 0.0
    %3504 = vst.msk [vmem:[#allocation6 + $0x20] sm:$0xff] %vm3058, 0.0
    %3505 = vst.msk [vmem:[#allocation6 + $0x28] sm:$0xff] %vm3058, 0.0
    %3506 = vst.msk [vmem:[#allocation6 + $0x30] sm:$0xff] %vm3058, 0.0
    %3507 = vst.msk [vmem:[#allocation6 + $0x38] sm:$0xff] %vm3058, 0.0
    %3508 = vst.msk [vmem:[#allocation6 + $0x40] sm:$0xff] %vm3058, 0.0
    %3509 = vst.msk [vmem:[#allocation6 + $0x48] sm:$0xff] %vm3058, 0.0
    %3510 = vst.msk [vmem:[#allocation6 + $0x50] sm:$0xff] %vm3058, 0.0
    %3511 = vst.msk [vmem:[#allocation6 + $0x58] sm:$0xff] %vm3058, 0.0
    %3512 = vst.msk [vmem:[#allocation6 + $0x60] sm:$0xff] %vm3058, 0.0
    %3513 = vst.msk [vmem:[#allocation6 + $0x68] sm:$0xff] %vm3058, 0.0
    %3514 = vst.msk [vmem:[#allocation6 + $0x70] sm:$0xff] %vm3058, 0.0
    %3515 = vst.msk [vmem:[#allocation6 + $0x78] sm:$0xff] %vm3058, 0.0
    %3516 = vst.msk [vmem:[#allocation6 + $0x80] sm:$0xff] %vm3058, 0.0
    %3517 = vst.msk [vmem:[#allocation6 + $0x88] sm:$0xff] %vm3058, 0.0
    %3518 = vst.msk [vmem:[#allocation6 + $0x90] sm:$0xff] %vm3058, 0.0
    %3519 = vst.msk [vmem:[#allocation6 + $0x98] sm:$0xff] %vm3058, 0.0
    %v3520 = vld [vmem:[#allocation5 + $0xf] sm:$0x1]
    %vm3521 = vcmask 253952
    %3522 = vst.msk [vmem:[#allocation6 + $0x19] sm:$0x1] %vm3521, %v3520
    %v3523 = vld [vmem:[#allocation5 + $0x11] sm:$0x1]
    %3524 = vst.msk [vmem:[#allocation6 + $0x1a] sm:$0x1] %vm3521, %v3523
    %v3525 = vld [vmem:[#allocation5 + $0x13] sm:$0x1]
    %3526 = vst.msk [vmem:[#allocation6 + $0x1b] sm:$0x1] %vm3521, %v3525
    %v3527 = vld [vmem:[#allocation5 + $0x15] sm:$0x1]
    %3528 = vst.msk [vmem:[#allocation6 + $0x1c] sm:$0x1] %vm3521, %v3527
    %v3529 = vld [vmem:[#allocation5 + $0x17] sm:$0x1]
    %3530 = vst.msk [vmem:[#allocation6 + $0x1d] sm:$0x1] %vm3521, %v3529
    %v3531 = vld [vmem:[#allocation5 + $0x19] sm:$0x1]
    %3532 = vst.msk [vmem:[#allocation6 + $0x1e] sm:$0x1] %vm3521, %v3531
    %v3533 = vld [vmem:[#allocation5 + $0x2b] sm:$0x1]
    %3534 = vst.msk [vmem:[#allocation6 + $0x21] sm:$0x1] %vm3521, %v3533
    %v3535 = vld [vmem:[#allocation5 + $0x2d] sm:$0x1]
    %3536 = vst.msk [vmem:[#allocation6 + $0x22] sm:$0x1] %vm3521, %v3535
    %v3537 = vld [vmem:[#allocation5 + $0x2f] sm:$0x1]
    %3538 = vst.msk [vmem:[#allocation6 + $0x23] sm:$0x1] %vm3521, %v3537
    %v3539 = vld [vmem:[#allocation5 + $0x31] sm:$0x1]
    %3540 = vst.msk [vmem:[#allocation6 + $0x24] sm:$0x1] %vm3521, %v3539
    %v3541 = vld [vmem:[#allocation5 + $0x33] sm:$0x1]
    %3542 = vst.msk [vmem:[#allocation6 + $0x25] sm:$0x1] %vm3521, %v3541
    %v3543 = vld [vmem:[#allocation5 + $0x35] sm:$0x1]
    %3544 = vst.msk [vmem:[#allocation6 + $0x26] sm:$0x1] %vm3521, %v3543
    %v3545 = vld [vmem:[#allocation5 + $0x47] sm:$0x1]
    %3546 = vst.msk [vmem:[#allocation6 + $0x29] sm:$0x1] %vm3521, %v3545
    %v3547 = vld [vmem:[#allocation5 + $0x49] sm:$0x1]
    %3548 = vst.msk [vmem:[#allocation6 + $0x2a] sm:$0x1] %vm3521, %v3547
    %v3549 = vld [vmem:[#allocation5 + $0x4b] sm:$0x1]
    %3550 = vst.msk [vmem:[#allocation6 + $0x2b] sm:$0x1] %vm3521, %v3549
    %v3551 = vld [vmem:[#allocation5 + $0x4d] sm:$0x1]
    %3552 = vst.msk [vmem:[#allocation6 + $0x2c] sm:$0x1] %vm3521, %v3551
    %v3553 = vld [vmem:[#allocation5 + $0x4f] sm:$0x1]
    %3554 = vst.msk [vmem:[#allocation6 + $0x2d] sm:$0x1] %vm3521, %v3553
    %v3555 = vld [vmem:[#allocation5 + $0x51] sm:$0x1]
    %3556 = vst.msk [vmem:[#allocation6 + $0x2e] sm:$0x1] %vm3521, %v3555
    %v3557 = vld [vmem:[#allocation5 + $0x63] sm:$0x1]
    %3558 = vst.msk [vmem:[#allocation6 + $0x31] sm:$0x1] %vm3521, %v3557
    %v3559 = vld [vmem:[#allocation5 + $0x65] sm:$0x1]
    %3560 = vst.msk [vmem:[#allocation6 + $0x32] sm:$0x1] %vm3521, %v3559
    %v3561 = vld [vmem:[#allocation5 + $0x67] sm:$0x1]
    %3562 = vst.msk [vmem:[#allocation6 + $0x33] sm:$0x1] %vm3521, %v3561
    %v3563 = vld [vmem:[#allocation5 + $0x69] sm:$0x1]
    %3564 = vst.msk [vmem:[#allocation6 + $0x34] sm:$0x1] %vm3521, %v3563
    %v3565 = vld [vmem:[#allocation5 + $0x6b] sm:$0x1]
    %3566 = vst.msk [vmem:[#allocation6 + $0x35] sm:$0x1] %vm3521, %v3565
    %v3567 = vld [vmem:[#allocation5 + $0x6d] sm:$0x1]
    %3568 = vst.msk [vmem:[#allocation6 + $0x36] sm:$0x1] %vm3521, %v3567
    %v3569 = vld [vmem:[#allocation5 + $0x7f] sm:$0x1]
    %3570 = vst.msk [vmem:[#allocation6 + $0x39] sm:$0x1] %vm3521, %v3569
    %v3571 = vld [vmem:[#allocation5 + $0x81] sm:$0x1]
    %3572 = vst.msk [vmem:[#allocation6 + $0x3a] sm:$0x1] %vm3521, %v3571
    %v3573 = vld [vmem:[#allocation5 + $0x83] sm:$0x1]
    %3574 = vst.msk [vmem:[#allocation6 + $0x3b] sm:$0x1] %vm3521, %v3573
    %v3575 = vld [vmem:[#allocation5 + $0x85] sm:$0x1]
    %3576 = vst.msk [vmem:[#allocation6 + $0x3c] sm:$0x1] %vm3521, %v3575
    %v3577 = vld [vmem:[#allocation5 + $0x87] sm:$0x1]
    %3578 = vst.msk [vmem:[#allocation6 + $0x3d] sm:$0x1] %vm3521, %v3577
    %v3579 = vld [vmem:[#allocation5 + $0x89] sm:$0x1]
    %3580 = vst.msk [vmem:[#allocation6 + $0x3e] sm:$0x1] %vm3521, %v3579
    %v3581 = vld [vmem:[#allocation5 + $0x9b] sm:$0x1]
    %3582 = vst.msk [vmem:[#allocation6 + $0x41] sm:$0x1] %vm3521, %v3581
    %v3583 = vld [vmem:[#allocation5 + $0x9d] sm:$0x1]
    %3584 = vst.msk [vmem:[#allocation6 + $0x42] sm:$0x1] %vm3521, %v3583
    %v3585 = vld [vmem:[#allocation5 + $0x9f] sm:$0x1]
    %3586 = vst.msk [vmem:[#allocation6 + $0x43] sm:$0x1] %vm3521, %v3585
    %v3587 = vld [vmem:[#allocation5 + $0xa1] sm:$0x1]
    %3588 = vst.msk [vmem:[#allocation6 + $0x44] sm:$0x1] %vm3521, %v3587
    %v3589 = vld [vmem:[#allocation5 + $0xa3] sm:$0x1]
    %3590 = vst.msk [vmem:[#allocation6 + $0x45] sm:$0x1] %vm3521, %v3589
    %v3591 = vld [vmem:[#allocation5 + $0xa5] sm:$0x1]
    %3592 = vst.msk [vmem:[#allocation6 + $0x46] sm:$0x1] %vm3521, %v3591
    %v3593 = vld [vmem:[#allocation5 + $0xd3] sm:$0x1]
    %3594 = vst.msk [vmem:[#allocation6 + $0x59] sm:$0x1] %vm3521, %v3593
    %v3595 = vld [vmem:[#allocation5 + $0xd5] sm:$0x1]
    %3596 = vst.msk [vmem:[#allocation6 + $0x5a] sm:$0x1] %vm3521, %v3595
    %v3597 = vld [vmem:[#allocation5 + $0xd7] sm:$0x1]
    %3598 = vst.msk [vmem:[#allocation6 + $0x5b] sm:$0x1] %vm3521, %v3597
    %v3599 = vld [vmem:[#allocation5 + $0xd9] sm:$0x1]
    %3600 = vst.msk [vmem:[#allocation6 + $0x5c] sm:$0x1] %vm3521, %v3599
    %v3601 = vld [vmem:[#allocation5 + $0xdb] sm:$0x1]
    %3602 = vst.msk [vmem:[#allocation6 + $0x5d] sm:$0x1] %vm3521, %v3601
    %v3603 = vld [vmem:[#allocation5 + $0xdd] sm:$0x1]
    %3604 = vst.msk [vmem:[#allocation6 + $0x5e] sm:$0x1] %vm3521, %v3603
    %v3605 = vld [vmem:[#allocation5 + $0xef] sm:$0x1]
    %3606 = vst.msk [vmem:[#allocation6 + $0x61] sm:$0x1] %vm3521, %v3605
    %v3607 = vld [vmem:[#allocation5 + $0xf1] sm:$0x1]
    %3608 = vst.msk [vmem:[#allocation6 + $0x62] sm:$0x1] %vm3521, %v3607
    %v3609 = vld [vmem:[#allocation5 + $0xf3] sm:$0x1]
    %3610 = vst.msk [vmem:[#allocation6 + $0x63] sm:$0x1] %vm3521, %v3609
    %v3611 = vld [vmem:[#allocation5 + $0xf5] sm:$0x1]
    %3612 = vst.msk [vmem:[#allocation6 + $0x64] sm:$0x1] %vm3521, %v3611
    %v3613 = vld [vmem:[#allocation5 + $0xf7] sm:$0x1]
    %3614 = vst.msk [vmem:[#allocation6 + $0x65] sm:$0x1] %vm3521, %v3613
    %v3615 = vld [vmem:[#allocation5 + $0xf9] sm:$0x1]
    %3616 = vst.msk [vmem:[#allocation6 + $0x66] sm:$0x1] %vm3521, %v3615
    %v3617 = vld [vmem:[#allocation5 + $0x10b] sm:$0x1]
    %3618 = vst.msk [vmem:[#allocation6 + $0x69] sm:$0x1] %vm3521, %v3617
    %v3619 = vld [vmem:[#allocation5 + $0x10d] sm:$0x1]
    %3620 = vst.msk [vmem:[#allocation6 + $0x6a] sm:$0x1] %vm3521, %v3619
    %v3621 = vld [vmem:[#allocation5 + $0x10f] sm:$0x1]
    %3622 = vst.msk [vmem:[#allocation6 + $0x6b] sm:$0x1] %vm3521, %v3621
    %v3623 = vld [vmem:[#allocation5 + $0x111] sm:$0x1]
    %3624 = vst.msk [vmem:[#allocation6 + $0x6c] sm:$0x1] %vm3521, %v3623
    %v3625 = vld [vmem:[#allocation5 + $0x113] sm:$0x1]
    %3626 = vst.msk [vmem:[#allocation6 + $0x6d] sm:$0x1] %vm3521, %v3625
    %v3627 = vld [vmem:[#allocation5 + $0x115] sm:$0x1]
    %3628 = vst.msk [vmem:[#allocation6 + $0x6e] sm:$0x1] %vm3521, %v3627
    %v3629 = vld [vmem:[#allocation5 + $0x127] sm:$0x1]
    %3630 = vst.msk [vmem:[#allocation6 + $0x71] sm:$0x1] %vm3521, %v3629
    %v3631 = vld [vmem:[#allocation5 + $0x129] sm:$0x1]
    %3632 = vst.msk [vmem:[#allocation6 + $0x72] sm:$0x1] %vm3521, %v3631
    %v3633 = vld [vmem:[#allocation5 + $0x12b] sm:$0x1]
    %3634 = vst.msk [vmem:[#allocation6 + $0x73] sm:$0x1] %vm3521, %v3633
    %v3635 = vld [vmem:[#allocation5 + $0x12d] sm:$0x1]
    %3636 = vst.msk [vmem:[#allocation6 + $0x74] sm:$0x1] %vm3521, %v3635
    %v3637 = vld [vmem:[#allocation5 + $0x12f] sm:$0x1]
    %3638 = vst.msk [vmem:[#allocation6 + $0x75] sm:$0x1] %vm3521, %v3637
    %v3639 = vld [vmem:[#allocation5 + $0x131] sm:$0x1]
    %3640 = vst.msk [vmem:[#allocation6 + $0x76] sm:$0x1] %vm3521, %v3639
    %v3641 = vld [vmem:[#allocation5 + $0x143] sm:$0x1]
    %3642 = vst.msk [vmem:[#allocation6 + $0x79] sm:$0x1] %vm3521, %v3641
    %v3643 = vld [vmem:[#allocation5 + $0x145] sm:$0x1]
    %3644 = vst.msk [vmem:[#allocation6 + $0x7a] sm:$0x1] %vm3521, %v3643
    %v3645 = vld [vmem:[#allocation5 + $0x147] sm:$0x1]
    %3646 = vst.msk [vmem:[#allocation6 + $0x7b] sm:$0x1] %vm3521, %v3645
    %v3647 = vld [vmem:[#allocation5 + $0x149] sm:$0x1]
    %3648 = vst.msk [vmem:[#allocation6 + $0x7c] sm:$0x1] %vm3521, %v3647
    %v3649 = vld [vmem:[#allocation5 + $0x14b] sm:$0x1]
    %3650 = vst.msk [vmem:[#allocation6 + $0x7d] sm:$0x1] %vm3521, %v3649
    %v3651 = vld [vmem:[#allocation5 + $0x14d] sm:$0x1]
    %3652 = vst.msk [vmem:[#allocation6 + $0x7e] sm:$0x1] %vm3521, %v3651
    %v3653 = vld [vmem:[#allocation5 + $0x15f] sm:$0x1]
    %3654 = vst.msk [vmem:[#allocation6 + $0x81] sm:$0x1] %vm3521, %v3653
    %v3655 = vld [vmem:[#allocation5 + $0x161] sm:$0x1]
    %3656 = vst.msk [vmem:[#allocation6 + $0x82] sm:$0x1] %vm3521, %v3655
    %v3657 = vld [vmem:[#allocation5 + $0x163] sm:$0x1]
    %3658 = vst.msk [vmem:[#allocation6 + $0x83] sm:$0x1] %vm3521, %v3657
    %v3659 = vld [vmem:[#allocation5 + $0x165] sm:$0x1]
    %3660 = vst.msk [vmem:[#allocation6 + $0x84] sm:$0x1] %vm3521, %v3659
    %v3661 = vld [vmem:[#allocation5 + $0x167] sm:$0x1]
    %3662 = vst.msk [vmem:[#allocation6 + $0x85] sm:$0x1] %vm3521, %v3661
    %v3663 = vld [vmem:[#allocation5 + $0x169] sm:$0x1]
    %3664 = vst.msk [vmem:[#allocation6 + $0x86] sm:$0x1] %vm3521, %v3663
    %v3665 = vld [vmem:[#allocation6 + $0x7] sm:$0xff]
    %v3666 = vld [vmem:[#allocation6 + $0xf] sm:$0xff]
    %v3667 = vld [vmem:[#allocation6 + $0x17] sm:$0xff]
    %v3668 = vld [vmem:[#allocation6 + $0x1f] sm:$0xff]
    %v3669 = vld [vmem:[#allocation6 + $0x27] sm:$0xff]
    %v3670 = vld [vmem:[#allocation6 + $0x2f] sm:$0xff]
    %v3671 = vld [vmem:[#allocation6 + $0x37] sm:$0xff]
    %v3672 = vld [vmem:[#allocation6 + $0x3f] sm:$0xff]
    %v3673 = vld [vmem:[#allocation6 + $0x47] sm:$0xff]
    %v3674 = vld [vmem:[#allocation6 + $0x4f] sm:$0xff]
    %v3675 = vld [vmem:[#allocation6 + $0x57] sm:$0xff]
    %v3676 = vld [vmem:[#allocation6 + $0x5f] sm:$0xff]
    %v3677 = vld [vmem:[#allocation6 + $0x67] sm:$0xff]
    %v3678 = vld [vmem:[#allocation6 + $0x6f] sm:$0xff]
    %v3679 = vld [vmem:[#allocation6 + $0x77] sm:$0xff]
    %v3680 = vld [vmem:[#allocation6 + $0x7f] sm:$0xff]
    %3681 = vst.msk [vmem:[#allocation7] sm:$0xff] %vm3058, %v3665
    %3682 = vst.msk [vmem:[#allocation7 + $0x18] sm:$0xff] %vm3058, %v3666
    %3683 = vst.msk [vmem:[#allocation7 + $0x30] sm:$0xff] %vm3058, %v3667
    %3684 = vst.msk [vmem:[#allocation7 + $0x48] sm:$0xff] %vm3058, %v3668
    %3685 = vst.msk [vmem:[#allocation7 + $0x60] sm:$0xff] %vm3058, %v3669
    %3686 = vst.msk [vmem:[#allocation7 + $0x78] sm:$0xff] %vm3058, %v3670
    %3687 = vst.msk [vmem:[#allocation7 + $0x90] sm:$0xff] %vm3058, %v3671
    %3688 = vst.msk [vmem:[#allocation7 + $0xa8] sm:$0xff] %vm3058, %v3672
    %3689 = vst.msk [vmem:[#allocation7 + $0xc0] sm:$0xff] %vm3058, %v3673
    %3690 = vst.msk [vmem:[#allocation7 + $0xd8] sm:$0xff] %vm3058, %v3674
    %3691 = vst.msk [vmem:[#allocation7 + $0xf0] sm:$0xff] %vm3058, %v3675
    %3692 = vst.msk [vmem:[#allocation7 + $0x108] sm:$0xff] %vm3058, %v3676
    %3693 = vst.msk [vmem:[#allocation7 + $0x120] sm:$0xff] %vm3058, %v3677
    %3694 = vst.msk [vmem:[#allocation7 + $0x138] sm:$0xff] %vm3058, %v3678
    %3695 = vst.msk [vmem:[#allocation7 + $0x150] sm:$0xff] %vm3058, %v3679
    %3696 = vst.msk [vmem:[#allocation7 + $0x168] sm:$0xff] %vm3058, %v3680
    %v3697 = vld [vmem:[#allocation6 + $0x8] sm:$0xff]
    %v3698 = vld [vmem:[#allocation6 + $0x10] sm:$0xff]
    %v3699 = vld [vmem:[#allocation6 + $0x18] sm:$0xff]
    %v3700 = vld [vmem:[#allocation6 + $0x20] sm:$0xff]
    %v3701 = vld [vmem:[#allocation6 + $0x28] sm:$0xff]
    %v3702 = vld [vmem:[#allocation6 + $0x30] sm:$0xff]
    %v3703 = vld [vmem:[#allocation6 + $0x38] sm:$0xff]
    %v3704 = vld [vmem:[#allocation6 + $0x40] sm:$0xff]
    %v3705 = vld [vmem:[#allocation6 + $0x48] sm:$0xff]
    %v3706 = vld [vmem:[#allocation6 + $0x50] sm:$0xff]
    %v3707 = vld [vmem:[#allocation6 + $0x58] sm:$0xff]
    %v3708 = vld [vmem:[#allocation6 + $0x60] sm:$0xff]
    %v3709 = vld [vmem:[#allocation6 + $0x68] sm:$0xff]
    %v3710 = vld [vmem:[#allocation6 + $0x70] sm:$0xff]
    %v3711 = vld [vmem:[#allocation6 + $0x78] sm:$0xff]
    %v3712 = vld [vmem:[#allocation6 + $0x80] sm:$0xff]
    %3729 = vrot.lane.b32.xlu0 %v3697, 32
    %v3730 = vpop.permute.xlu0 %3729
    %3731 = vrot.lane.b32.xlu0 %v3698, 32
    %v3732 = vpop.permute.xlu0 %3731
    %3733 = vrot.lane.b32.xlu0 %v3699, 32
    %v3734 = vpop.permute.xlu0 %3733
    %3735 = vrot.lane.b32.xlu0 %v3700, 32
    %v3736 = vpop.permute.xlu0 %3735
    %3737 = vrot.lane.b32.xlu0 %v3701, 32
    %v3738 = vpop.permute.xlu0 %3737
    %3739 = vrot.lane.b32.xlu0 %v3702, 32
    %v3740 = vpop.permute.xlu0 %3739
    %3741 = vrot.lane.b32.xlu0 %v3703, 32
    %v3742 = vpop.permute.xlu0 %3741
    %3743 = vrot.lane.b32.xlu0 %v3704, 32
    %v3744 = vpop.permute.xlu0 %3743
    %3745 = vrot.lane.b32.xlu0 %v3705, 32
    %v3746 = vpop.permute.xlu0 %3745
    %3747 = vrot.lane.b32.xlu0 %v3706, 32
    %v3748 = vpop.permute.xlu0 %3747
    %3749 = vrot.lane.b32.xlu0 %v3707, 32
    %v3750 = vpop.permute.xlu0 %3749
    %3751 = vrot.lane.b32.xlu0 %v3708, 32
    %v3752 = vpop.permute.xlu0 %3751
    %3753 = vrot.lane.b32.xlu0 %v3709, 32
    %v3754 = vpop.permute.xlu0 %3753
    %3755 = vrot.lane.b32.xlu0 %v3710, 32
    %v3756 = vpop.permute.xlu0 %3755
    %3757 = vrot.lane.b32.xlu0 %v3711, 32
    %v3758 = vpop.permute.xlu0 %3757
    %3759 = vrot.lane.b32.xlu0 %v3712, 32
    %v3760 = vpop.permute.xlu0 %3759
    %vm3777 = vcmask 523520
    %3778 = vst.msk [vmem:[#allocation7] sm:$0xff] %vm3777, %v3730
    %3779 = vst.msk [vmem:[#allocation7 + $0x18] sm:$0xff] %vm3777, %v3732
    %3780 = vst.msk [vmem:[#allocation7 + $0x30] sm:$0xff] %vm3777, %v3734
    %3781 = vst.msk [vmem:[#allocation7 + $0x48] sm:$0xff] %vm3777, %v3736
    %3782 = vst.msk [vmem:[#allocation7 + $0x60] sm:$0xff] %vm3777, %v3738
    %3783 = vst.msk [vmem:[#allocation7 + $0x78] sm:$0xff] %vm3777, %v3740
    %3784 = vst.msk [vmem:[#allocation7 + $0x90] sm:$0xff] %vm3777, %v3742
    %3785 = vst.msk [vmem:[#allocation7 + $0xa8] sm:$0xff] %vm3777, %v3744
    %3786 = vst.msk [vmem:[#allocation7 + $0xc0] sm:$0xff] %vm3777, %v3746
    %3787 = vst.msk [vmem:[#allocation7 + $0xd8] sm:$0xff] %vm3777, %v3748
    %3788 = vst.msk [vmem:[#allocation7 + $0xf0] sm:$0xff] %vm3777, %v3750
    %3789 = vst.msk [vmem:[#allocation7 + $0x108] sm:$0xff] %vm3777, %v3752
    %3790 = vst.msk [vmem:[#allocation7 + $0x120] sm:$0xff] %vm3777, %v3754
    %3791 = vst.msk [vmem:[#allocation7 + $0x138] sm:$0xff] %vm3777, %v3756
    %3792 = vst.msk [vmem:[#allocation7 + $0x150] sm:$0xff] %vm3777, %v3758
    %3793 = vst.msk [vmem:[#allocation7 + $0x168] sm:$0xff] %vm3777, %v3760
    %v3794 = vld [vmem:[#allocation6 + $0x9] sm:$0xff]
    %v3795 = vld [vmem:[#allocation6 + $0x11] sm:$0xff]
    %v3796 = vld [vmem:[#allocation6 + $0x19] sm:$0xff]
    %v3797 = vld [vmem:[#allocation6 + $0x21] sm:$0xff]
    %v3798 = vld [vmem:[#allocation6 + $0x29] sm:$0xff]
    %v3799 = vld [vmem:[#allocation6 + $0x31] sm:$0xff]
    %v3800 = vld [vmem:[#allocation6 + $0x39] sm:$0xff]
    %v3801 = vld [vmem:[#allocation6 + $0x41] sm:$0xff]
    %v3802 = vld [vmem:[#allocation6 + $0x49] sm:$0xff]
    %v3803 = vld [vmem:[#allocation6 + $0x51] sm:$0xff]
    %v3804 = vld [vmem:[#allocation6 + $0x59] sm:$0xff]
    %v3805 = vld [vmem:[#allocation6 + $0x61] sm:$0xff]
    %v3806 = vld [vmem:[#allocation6 + $0x69] sm:$0xff]
    %v3807 = vld [vmem:[#allocation6 + $0x71] sm:$0xff]
    %v3808 = vld [vmem:[#allocation6 + $0x79] sm:$0xff]
    %v3809 = vld [vmem:[#allocation6 + $0x81] sm:$0xff]
    %3826 = vrot.lane.b32.xlu0 %v3794, 64
    %v3827 = vpop.permute.xlu0 %3826
    %3828 = vrot.lane.b32.xlu0 %v3795, 64
    %v3829 = vpop.permute.xlu0 %3828
    %3830 = vrot.lane.b32.xlu0 %v3796, 64
    %v3831 = vpop.permute.xlu0 %3830
    %3832 = vrot.lane.b32.xlu0 %v3797, 64
    %v3833 = vpop.permute.xlu0 %3832
    %3834 = vrot.lane.b32.xlu0 %v3798, 64
    %v3835 = vpop.permute.xlu0 %3834
    %3836 = vrot.lane.b32.xlu0 %v3799, 64
    %v3837 = vpop.permute.xlu0 %3836
    %3838 = vrot.lane.b32.xlu0 %v3800, 64
    %v3839 = vpop.permute.xlu0 %3838
    %3840 = vrot.lane.b32.xlu0 %v3801, 64
    %v3841 = vpop.permute.xlu0 %3840
    %3842 = vrot.lane.b32.xlu0 %v3802, 64
    %v3843 = vpop.permute.xlu0 %3842
    %3844 = vrot.lane.b32.xlu0 %v3803, 64
    %v3845 = vpop.permute.xlu0 %3844
    %3846 = vrot.lane.b32.xlu0 %v3804, 64
    %v3847 = vpop.permute.xlu0 %3846
    %3848 = vrot.lane.b32.xlu0 %v3805, 64
    %v3849 = vpop.permute.xlu0 %3848
    %3850 = vrot.lane.b32.xlu0 %v3806, 64
    %v3851 = vpop.permute.xlu0 %3850
    %3852 = vrot.lane.b32.xlu0 %v3807, 64
    %v3853 = vpop.permute.xlu0 %3852
    %3854 = vrot.lane.b32.xlu0 %v3808, 64
    %v3855 = vpop.permute.xlu0 %3854
    %3856 = vrot.lane.b32.xlu0 %v3809, 64
    %v3857 = vpop.permute.xlu0 %3856
    %vm3874 = vcmask 785920
    %3875 = vst.msk [vmem:[#allocation7] sm:$0xff] %vm3874, %v3827
    %3876 = vst.msk [vmem:[#allocation7 + $0x18] sm:$0xff] %vm3874, %v3829
    %3877 = vst.msk [vmem:[#allocation7 + $0x30] sm:$0xff] %vm3874, %v3831
    %3878 = vst.msk [vmem:[#allocation7 + $0x48] sm:$0xff] %vm3874, %v3833
    %3879 = vst.msk [vmem:[#allocation7 + $0x60] sm:$0xff] %vm3874, %v3835
    %3880 = vst.msk [vmem:[#allocation7 + $0x78] sm:$0xff] %vm3874, %v3837
    %3881 = vst.msk [vmem:[#allocation7 + $0x90] sm:$0xff] %vm3874, %v3839
    %3882 = vst.msk [vmem:[#allocation7 + $0xa8] sm:$0xff] %vm3874, %v3841
    %3883 = vst.msk [vmem:[#allocation7 + $0xc0] sm:$0xff] %vm3874, %v3843
    %3884 = vst.msk [vmem:[#allocation7 + $0xd8] sm:$0xff] %vm3874, %v3845
    %3885 = vst.msk [vmem:[#allocation7 + $0xf0] sm:$0xff] %vm3874, %v3847
    %3886 = vst.msk [vmem:[#allocation7 + $0x108] sm:$0xff] %vm3874, %v3849
    %3887 = vst.msk [vmem:[#allocation7 + $0x120] sm:$0xff] %vm3874, %v3851
    %3888 = vst.msk [vmem:[#allocation7 + $0x138] sm:$0xff] %vm3874, %v3853
    %3889 = vst.msk [vmem:[#allocation7 + $0x150] sm:$0xff] %vm3874, %v3855
    %3890 = vst.msk [vmem:[#allocation7 + $0x168] sm:$0xff] %vm3874, %v3857
    %v3891 = vld [vmem:[#allocation6 + $0xf] sm:$0xff]
    %v3892 = vld [vmem:[#allocation6 + $0x17] sm:$0xff]
    %v3893 = vld [vmem:[#allocation6 + $0x1f] sm:$0xff]
    %v3894 = vld [vmem:[#allocation6 + $0x27] sm:$0xff]
    %v3895 = vld [vmem:[#allocation6 + $0x2f] sm:$0xff]
    %v3896 = vld [vmem:[#allocation6 + $0x37] sm:$0xff]
    %v3897 = vld [vmem:[#allocation6 + $0x3f] sm:$0xff]
    %v3898 = vld [vmem:[#allocation6 + $0x47] sm:$0xff]
    %v3899 = vld [vmem:[#allocation6 + $0x4f] sm:$0xff]
    %v3900 = vld [vmem:[#allocation6 + $0x57] sm:$0xff]
    %v3901 = vld [vmem:[#allocation6 + $0x5f] sm:$0xff]
    %v3902 = vld [vmem:[#allocation6 + $0x67] sm:$0xff]
    %v3903 = vld [vmem:[#allocation6 + $0x6f] sm:$0xff]
    %v3904 = vld [vmem:[#allocation6 + $0x77] sm:$0xff]
    %v3905 = vld [vmem:[#allocation6 + $0x7f] sm:$0xff]
    %v3906 = vld [vmem:[#allocation6 + $0x87] sm:$0xff]
    %3923 = vrot.lane.b32.xlu0 %v3891, 96
    %v3924 = vpop.permute.xlu0 %3923
    %3925 = vrot.lane.b32.xlu0 %v3892, 96
    %v3926 = vpop.permute.xlu0 %3925
    %3927 = vrot.lane.b32.xlu0 %v3893, 96
    %v3928 = vpop.permute.xlu0 %3927
    %3929 = vrot.lane.b32.xlu0 %v3894, 96
    %v3930 = vpop.permute.xlu0 %3929
    %3931 = vrot.lane.b32.xlu0 %v3895, 96
    %v3932 = vpop.permute.xlu0 %3931
    %3933 = vrot.lane.b32.xlu0 %v3896, 96
    %v3934 = vpop.permute.xlu0 %3933
    %3935 = vrot.lane.b32.xlu0 %v3897, 96
    %v3936 = vpop.permute.xlu0 %3935
    %3937 = vrot.lane.b32.xlu0 %v3898, 96
    %v3938 = vpop.permute.xlu0 %3937
    %3939 = vrot.lane.b32.xlu0 %v3899, 96
    %v3940 = vpop.permute.xlu0 %3939
    %3941 = vrot.lane.b32.xlu0 %v3900, 96
    %v3942 = vpop.permute.xlu0 %3941
    %3943 = vrot.lane.b32.xlu0 %v3901, 96
    %v3944 = vpop.permute.xlu0 %3943
    %3945 = vrot.lane.b32.xlu0 %v3902, 96
    %v3946 = vpop.permute.xlu0 %3945
    %3947 = vrot.lane.b32.xlu0 %v3903, 96
    %v3948 = vpop.permute.xlu0 %3947
    %3949 = vrot.lane.b32.xlu0 %v3904, 96
    %v3950 = vpop.permute.xlu0 %3949
    %3951 = vrot.lane.b32.xlu0 %v3905, 96
    %v3952 = vpop.permute.xlu0 %3951
    %3953 = vrot.lane.b32.xlu0 %v3906, 96
    %v3954 = vpop.permute.xlu0 %3953
    %vm3971 = vcmask 1048320
    %3972 = vst.msk [vmem:[#allocation7] sm:$0xff] %vm3971, %v3924
    %3973 = vst.msk [vmem:[#allocation7 + $0x18] sm:$0xff] %vm3971, %v3926
    %3974 = vst.msk [vmem:[#allocation7 + $0x30] sm:$0xff] %vm3971, %v3928
    %3975 = vst.msk [vmem:[#allocation7 + $0x48] sm:$0xff] %vm3971, %v3930
    %3976 = vst.msk [vmem:[#allocation7 + $0x60] sm:$0xff] %vm3971, %v3932
    %3977 = vst.msk [vmem:[#allocation7 + $0x78] sm:$0xff] %vm3971, %v3934
    %3978 = vst.msk [vmem:[#allocation7 + $0x90] sm:$0xff] %vm3971, %v3936
    %3979 = vst.msk [vmem:[#allocation7 + $0xa8] sm:$0xff] %vm3971, %v3938
    %3980 = vst.msk [vmem:[#allocation7 + $0xc0] sm:$0xff] %vm3971, %v3940
    %3981 = vst.msk [vmem:[#allocation7 + $0xd8] sm:$0xff] %vm3971, %v3942
    %3982 = vst.msk [vmem:[#allocation7 + $0xf0] sm:$0xff] %vm3971, %v3944
    %3983 = vst.msk [vmem:[#allocation7 + $0x108] sm:$0xff] %vm3971, %v3946
    %3984 = vst.msk [vmem:[#allocation7 + $0x120] sm:$0xff] %vm3971, %v3948
    %3985 = vst.msk [vmem:[#allocation7 + $0x138] sm:$0xff] %vm3971, %v3950
    %3986 = vst.msk [vmem:[#allocation7 + $0x150] sm:$0xff] %vm3971, %v3952
    %3987 = vst.msk [vmem:[#allocation7 + $0x168] sm:$0xff] %vm3971, %v3954
    %v3988 = vld [vmem:[#allocation6 + $0x10] sm:$0xff]
    %v3989 = vld [vmem:[#allocation6 + $0x18] sm:$0xff]
    %v3990 = vld [vmem:[#allocation6 + $0x20] sm:$0xff]
    %v3991 = vld [vmem:[#allocation6 + $0x28] sm:$0xff]
    %v3992 = vld [vmem:[#allocation6 + $0x30] sm:$0xff]
    %v3993 = vld [vmem:[#allocation6 + $0x38] sm:$0xff]
    %v3994 = vld [vmem:[#allocation6 + $0x40] sm:$0xff]
    %v3995 = vld [vmem:[#allocation6 + $0x48] sm:$0xff]
    %v3996 = vld [vmem:[#allocation6 + $0x50] sm:$0xff]
    %v3997 = vld [vmem:[#allocation6 + $0x58] sm:$0xff]
    %v3998 = vld [vmem:[#allocation6 + $0x60] sm:$0xff]
    %v3999 = vld [vmem:[#allocation6 + $0x68] sm:$0xff]
    %v4000 = vld [vmem:[#allocation6 + $0x70] sm:$0xff]
    %v4001 = vld [vmem:[#allocation6 + $0x78] sm:$0xff]
    %v4002 = vld [vmem:[#allocation6 + $0x80] sm:$0xff]
    %v4003 = vld [vmem:[#allocation6 + $0x88] sm:$0xff]
    %4004 = vst.msk [vmem:[#allocation7 + $0x8] sm:$0xff] %vm3058, %v3988
    %4005 = vst.msk [vmem:[#allocation7 + $0x20] sm:$0xff] %vm3058, %v3989
    %4006 = vst.msk [vmem:[#allocation7 + $0x38] sm:$0xff] %vm3058, %v3990
    %4007 = vst.msk [vmem:[#allocation7 + $0x50] sm:$0xff] %vm3058, %v3991
    %4008 = vst.msk [vmem:[#allocation7 + $0x68] sm:$0xff] %vm3058, %v3992
    %4009 = vst.msk [vmem:[#allocation7 + $0x80] sm:$0xff] %vm3058, %v3993
    %4010 = vst.msk [vmem:[#allocation7 + $0x98] sm:$0xff] %vm3058, %v3994
    %4011 = vst.msk [vmem:[#allocation7 + $0xb0] sm:$0xff] %vm3058, %v3995
    %4012 = vst.msk [vmem:[#allocation7 + $0xc8] sm:$0xff] %vm3058, %v3996
    %4013 = vst.msk [vmem:[#allocation7 + $0xe0] sm:$0xff] %vm3058, %v3997
    %4014 = vst.msk [vmem:[#allocation7 + $0xf8] sm:$0xff] %vm3058, %v3998
    %4015 = vst.msk [vmem:[#allocation7 + $0x110] sm:$0xff] %vm3058, %v3999
    %4016 = vst.msk [vmem:[#allocation7 + $0x128] sm:$0xff] %vm3058, %v4000
    %4017 = vst.msk [vmem:[#allocation7 + $0x140] sm:$0xff] %vm3058, %v4001
    %4018 = vst.msk [vmem:[#allocation7 + $0x158] sm:$0xff] %vm3058, %v4002
    %4019 = vst.msk [vmem:[#allocation7 + $0x170] sm:$0xff] %vm3058, %v4003
    %v4020 = vld [vmem:[#allocation6 + $0x11] sm:$0xff]
    %v4021 = vld [vmem:[#allocation6 + $0x19] sm:$0xff]
    %v4022 = vld [vmem:[#allocation6 + $0x21] sm:$0xff]
    %v4023 = vld [vmem:[#allocation6 + $0x29] sm:$0xff]
    %v4024 = vld [vmem:[#allocation6 + $0x31] sm:$0xff]
    %v4025 = vld [vmem:[#allocation6 + $0x39] sm:$0xff]
    %v4026 = vld [vmem:[#allocation6 + $0x41] sm:$0xff]
    %v4027 = vld [vmem:[#allocation6 + $0x49] sm:$0xff]
    %v4028 = vld [vmem:[#allocation6 + $0x51] sm:$0xff]
    %v4029 = vld [vmem:[#allocation6 + $0x59] sm:$0xff]
    %v4030 = vld [vmem:[#allocation6 + $0x61] sm:$0xff]
    %v4031 = vld [vmem:[#allocation6 + $0x69] sm:$0xff]
    %v4032 = vld [vmem:[#allocation6 + $0x71] sm:$0xff]
    %v4033 = vld [vmem:[#allocation6 + $0x79] sm:$0xff]
    %v4034 = vld [vmem:[#allocation6 + $0x81] sm:$0xff]
    %v4035 = vld [vmem:[#allocation6 + $0x89] sm:$0xff]
    %4052 = vrot.lane.b32.xlu0 %v4020, 32
    %v4053 = vpop.permute.xlu0 %4052
    %4054 = vrot.lane.b32.xlu0 %v4021, 32
    %v4055 = vpop.permute.xlu0 %4054
    %4056 = vrot.lane.b32.xlu0 %v4022, 32
    %v4057 = vpop.permute.xlu0 %4056
    %4058 = vrot.lane.b32.xlu0 %v4023, 32
    %v4059 = vpop.permute.xlu0 %4058
    %4060 = vrot.lane.b32.xlu0 %v4024, 32
    %v4061 = vpop.permute.xlu0 %4060
    %4062 = vrot.lane.b32.xlu0 %v4025, 32
    %v4063 = vpop.permute.xlu0 %4062
    %4064 = vrot.lane.b32.xlu0 %v4026, 32
    %v4065 = vpop.permute.xlu0 %4064
    %4066 = vrot.lane.b32.xlu0 %v4027, 32
    %v4067 = vpop.permute.xlu0 %4066
    %4068 = vrot.lane.b32.xlu0 %v4028, 32
    %v4069 = vpop.permute.xlu0 %4068
    %4070 = vrot.lane.b32.xlu0 %v4029, 32
    %v4071 = vpop.permute.xlu0 %4070
    %4072 = vrot.lane.b32.xlu0 %v4030, 32
    %v4073 = vpop.permute.xlu0 %4072
    %4074 = vrot.lane.b32.xlu0 %v4031, 32
    %v4075 = vpop.permute.xlu0 %4074
    %4076 = vrot.lane.b32.xlu0 %v4032, 32
    %v4077 = vpop.permute.xlu0 %4076
    %4078 = vrot.lane.b32.xlu0 %v4033, 32
    %v4079 = vpop.permute.xlu0 %4078
    %4080 = vrot.lane.b32.xlu0 %v4034, 32
    %v4081 = vpop.permute.xlu0 %4080
    %4082 = vrot.lane.b32.xlu0 %v4035, 32
    %v4083 = vpop.permute.xlu0 %4082
    %4100 = vst.msk [vmem:[#allocation7 + $0x8] sm:$0xff] %vm3777, %v4053
    %4101 = vst.msk [vmem:[#allocation7 + $0x20] sm:$0xff] %vm3777, %v4055
    %4102 = vst.msk [vmem:[#allocation7 + $0x38] sm:$0xff] %vm3777, %v4057
    %4103 = vst.msk [vmem:[#allocation7 + $0x50] sm:$0xff] %vm3777, %v4059
    %4104 = vst.msk [vmem:[#allocation7 + $0x68] sm:$0xff] %vm3777, %v4061
    %4105 = vst.msk [vmem:[#allocation7 + $0x80] sm:$0xff] %vm3777, %v4063
    %4106 = vst.msk [vmem:[#allocation7 + $0x98] sm:$0xff] %vm3777, %v4065
    %4107 = vst.msk [vmem:[#allocation7 + $0xb0] sm:$0xff] %vm3777, %v4067
    %4108 = vst.msk [vmem:[#allocation7 + $0xc8] sm:$0xff] %vm3777, %v4069
    %4109 = vst.msk [vmem:[#allocation7 + $0xe0] sm:$0xff] %vm3777, %v4071
    %4110 = vst.msk [vmem:[#allocation7 + $0xf8] sm:$0xff] %vm3777, %v4073
    %4111 = vst.msk [vmem:[#allocation7 + $0x110] sm:$0xff] %vm3777, %v4075
    %4112 = vst.msk [vmem:[#allocation7 + $0x128] sm:$0xff] %vm3777, %v4077
    %4113 = vst.msk [vmem:[#allocation7 + $0x140] sm:$0xff] %vm3777, %v4079
    %4114 = vst.msk [vmem:[#allocation7 + $0x158] sm:$0xff] %vm3777, %v4081
    %4115 = vst.msk [vmem:[#allocation7 + $0x170] sm:$0xff] %vm3777, %v4083
    %v4116 = vld [vmem:[#allocation6 + $0x17] sm:$0xff]
    %v4117 = vld [vmem:[#allocation6 + $0x1f] sm:$0xff]
    %v4118 = vld [vmem:[#allocation6 + $0x27] sm:$0xff]
    %v4119 = vld [vmem:[#allocation6 + $0x2f] sm:$0xff]
    %v4120 = vld [vmem:[#allocation6 + $0x37] sm:$0xff]
    %v4121 = vld [vmem:[#allocation6 + $0x3f] sm:$0xff]
    %v4122 = vld [vmem:[#allocation6 + $0x47] sm:$0xff]
    %v4123 = vld [vmem:[#allocation6 + $0x4f] sm:$0xff]
    %v4124 = vld [vmem:[#allocation6 + $0x57] sm:$0xff]
    %v4125 = vld [vmem:[#allocation6 + $0x5f] sm:$0xff]
    %v4126 = vld [vmem:[#allocation6 + $0x67] sm:$0xff]
    %v4127 = vld [vmem:[#allocation6 + $0x6f] sm:$0xff]
    %v4128 = vld [vmem:[#allocation6 + $0x77] sm:$0xff]
    %v4129 = vld [vmem:[#allocation6 + $0x7f] sm:$0xff]
    %v4130 = vld [vmem:[#allocation6 + $0x87] sm:$0xff]
    %v4131 = vld [vmem:[#allocation6 + $0x8f] sm:$0xff]
    %4148 = vrot.lane.b32.xlu0 %v4116, 64
    %v4149 = vpop.permute.xlu0 %4148
    %4150 = vrot.lane.b32.xlu0 %v4117, 64
    %v4151 = vpop.permute.xlu0 %4150
    %4152 = vrot.lane.b32.xlu0 %v4118, 64
    %v4153 = vpop.permute.xlu0 %4152
    %4154 = vrot.lane.b32.xlu0 %v4119, 64
    %v4155 = vpop.permute.xlu0 %4154
    %4156 = vrot.lane.b32.xlu0 %v4120, 64
    %v4157 = vpop.permute.xlu0 %4156
    %4158 = vrot.lane.b32.xlu0 %v4121, 64
    %v4159 = vpop.permute.xlu0 %4158
    %4160 = vrot.lane.b32.xlu0 %v4122, 64
    %v4161 = vpop.permute.xlu0 %4160
    %4162 = vrot.lane.b32.xlu0 %v4123, 64
    %v4163 = vpop.permute.xlu0 %4162
    %4164 = vrot.lane.b32.xlu0 %v4124, 64
    %v4165 = vpop.permute.xlu0 %4164
    %4166 = vrot.lane.b32.xlu0 %v4125, 64
    %v4167 = vpop.permute.xlu0 %4166
    %4168 = vrot.lane.b32.xlu0 %v4126, 64
    %v4169 = vpop.permute.xlu0 %4168
    %4170 = vrot.lane.b32.xlu0 %v4127, 64
    %v4171 = vpop.permute.xlu0 %4170
    %4172 = vrot.lane.b32.xlu0 %v4128, 64
    %v4173 = vpop.permute.xlu0 %4172
    %4174 = vrot.lane.b32.xlu0 %v4129, 64
    %v4175 = vpop.permute.xlu0 %4174
    %4176 = vrot.lane.b32.xlu0 %v4130, 64
    %v4177 = vpop.permute.xlu0 %4176
    %4178 = vrot.lane.b32.xlu0 %v4131, 64
    %v4179 = vpop.permute.xlu0 %4178
    %4196 = vst.msk [vmem:[#allocation7 + $0x8] sm:$0xff] %vm3874, %v4149
    %4197 = vst.msk [vmem:[#allocation7 + $0x20] sm:$0xff] %vm3874, %v4151
    %4198 = vst.msk [vmem:[#allocation7 + $0x38] sm:$0xff] %vm3874, %v4153
    %4199 = vst.msk [vmem:[#allocation7 + $0x50] sm:$0xff] %vm3874, %v4155
    %4200 = vst.msk [vmem:[#allocation7 + $0x68] sm:$0xff] %vm3874, %v4157
    %4201 = vst.msk [vmem:[#allocation7 + $0x80] sm:$0xff] %vm3874, %v4159
    %4202 = vst.msk [vmem:[#allocation7 + $0x98] sm:$0xff] %vm3874, %v4161
    %4203 = vst.msk [vmem:[#allocation7 + $0xb0] sm:$0xff] %vm3874, %v4163
    %4204 = vst.msk [vmem:[#allocation7 + $0xc8] sm:$0xff] %vm3874, %v4165
    %4205 = vst.msk [vmem:[#allocation7 + $0xe0] sm:$0xff] %vm3874, %v4167
    %4206 = vst.msk [vmem:[#allocation7 + $0xf8] sm:$0xff] %vm3874, %v4169
    %4207 = vst.msk [vmem:[#allocation7 + $0x110] sm:$0xff] %vm3874, %v4171
    %4208 = vst.msk [vmem:[#allocation7 + $0x128] sm:$0xff] %vm3874, %v4173
    %4209 = vst.msk [vmem:[#allocation7 + $0x140] sm:$0xff] %vm3874, %v4175
    %4210 = vst.msk [vmem:[#allocation7 + $0x158] sm:$0xff] %vm3874, %v4177
    %4211 = vst.msk [vmem:[#allocation7 + $0x170] sm:$0xff] %vm3874, %v4179
    %v4212 = vld [vmem:[#allocation6 + $0x18] sm:$0xff]
    %v4213 = vld [vmem:[#allocation6 + $0x20] sm:$0xff]
    %v4214 = vld [vmem:[#allocation6 + $0x28] sm:$0xff]
    %v4215 = vld [vmem:[#allocation6 + $0x30] sm:$0xff]
    %v4216 = vld [vmem:[#allocation6 + $0x38] sm:$0xff]
    %v4217 = vld [vmem:[#allocation6 + $0x40] sm:$0xff]
    %v4218 = vld [vmem:[#allocation6 + $0x48] sm:$0xff]
    %v4219 = vld [vmem:[#allocation6 + $0x50] sm:$0xff]
    %v4220 = vld [vmem:[#allocation6 + $0x58] sm:$0xff]
    %v4221 = vld [vmem:[#allocation6 + $0x60] sm:$0xff]
    %v4222 = vld [vmem:[#allocation6 + $0x68] sm:$0xff]
    %v4223 = vld [vmem:[#allocation6 + $0x70] sm:$0xff]
    %v4224 = vld [vmem:[#allocation6 + $0x78] sm:$0xff]
    %v4225 = vld [vmem:[#allocation6 + $0x80] sm:$0xff]
    %v4226 = vld [vmem:[#allocation6 + $0x88] sm:$0xff]
    %v4227 = vld [vmem:[#allocation6 + $0x90] sm:$0xff]
    %4244 = vrot.lane.b32.xlu0 %v4212, 96
    %v4245 = vpop.permute.xlu0 %4244
    %4246 = vrot.lane.b32.xlu0 %v4213, 96
    %v4247 = vpop.permute.xlu0 %4246
    %4248 = vrot.lane.b32.xlu0 %v4214, 96
    %v4249 = vpop.permute.xlu0 %4248
    %4250 = vrot.lane.b32.xlu0 %v4215, 96
    %v4251 = vpop.permute.xlu0 %4250
    %4252 = vrot.lane.b32.xlu0 %v4216, 96
    %v4253 = vpop.permute.xlu0 %4252
    %4254 = vrot.lane.b32.xlu0 %v4217, 96
    %v4255 = vpop.permute.xlu0 %4254
    %4256 = vrot.lane.b32.xlu0 %v4218, 96
    %v4257 = vpop.permute.xlu0 %4256
    %4258 = vrot.lane.b32.xlu0 %v4219, 96
    %v4259 = vpop.permute.xlu0 %4258
    %4260 = vrot.lane.b32.xlu0 %v4220, 96
    %v4261 = vpop.permute.xlu0 %4260
    %4262 = vrot.lane.b32.xlu0 %v4221, 96
    %v4263 = vpop.permute.xlu0 %4262
    %4264 = vrot.lane.b32.xlu0 %v4222, 96
    %v4265 = vpop.permute.xlu0 %4264
    %4266 = vrot.lane.b32.xlu0 %v4223, 96
    %v4267 = vpop.permute.xlu0 %4266
    %4268 = vrot.lane.b32.xlu0 %v4224, 96
    %v4269 = vpop.permute.xlu0 %4268
    %4270 = vrot.lane.b32.xlu0 %v4225, 96
    %v4271 = vpop.permute.xlu0 %4270
    %4272 = vrot.lane.b32.xlu0 %v4226, 96
    %v4273 = vpop.permute.xlu0 %4272
    %4274 = vrot.lane.b32.xlu0 %v4227, 96
    %v4275 = vpop.permute.xlu0 %4274
    %4292 = vst.msk [vmem:[#allocation7 + $0x8] sm:$0xff] %vm3971, %v4245
    %4293 = vst.msk [vmem:[#allocation7 + $0x20] sm:$0xff] %vm3971, %v4247
    %4294 = vst.msk [vmem:[#allocation7 + $0x38] sm:$0xff] %vm3971, %v4249
    %4295 = vst.msk [vmem:[#allocation7 + $0x50] sm:$0xff] %vm3971, %v4251
    %4296 = vst.msk [vmem:[#allocation7 + $0x68] sm:$0xff] %vm3971, %v4253
    %4297 = vst.msk [vmem:[#allocation7 + $0x80] sm:$0xff] %vm3971, %v4255
    %4298 = vst.msk [vmem:[#allocation7 + $0x98] sm:$0xff] %vm3971, %v4257
    %4299 = vst.msk [vmem:[#allocation7 + $0xb0] sm:$0xff] %vm3971, %v4259
    %4300 = vst.msk [vmem:[#allocation7 + $0xc8] sm:$0xff] %vm3971, %v4261
    %4301 = vst.msk [vmem:[#allocation7 + $0xe0] sm:$0xff] %vm3971, %v4263
    %4302 = vst.msk [vmem:[#allocation7 + $0xf8] sm:$0xff] %vm3971, %v4265
    %4303 = vst.msk [vmem:[#allocation7 + $0x110] sm:$0xff] %vm3971, %v4267
    %4304 = vst.msk [vmem:[#allocation7 + $0x128] sm:$0xff] %vm3971, %v4269
    %4305 = vst.msk [vmem:[#allocation7 + $0x140] sm:$0xff] %vm3971, %v4271
    %4306 = vst.msk [vmem:[#allocation7 + $0x158] sm:$0xff] %vm3971, %v4273
    %4307 = vst.msk [vmem:[#allocation7 + $0x170] sm:$0xff] %vm3971, %v4275
    %v4308 = vld [vmem:[#allocation6 + $0x19] sm:$0xff]
    %v4309 = vld [vmem:[#allocation6 + $0x21] sm:$0xff]
    %v4310 = vld [vmem:[#allocation6 + $0x29] sm:$0xff]
    %v4311 = vld [vmem:[#allocation6 + $0x31] sm:$0xff]
    %v4312 = vld [vmem:[#allocation6 + $0x39] sm:$0xff]
    %v4313 = vld [vmem:[#allocation6 + $0x41] sm:$0xff]
    %v4314 = vld [vmem:[#allocation6 + $0x49] sm:$0xff]
    %v4315 = vld [vmem:[#allocation6 + $0x51] sm:$0xff]
    %v4316 = vld [vmem:[#allocation6 + $0x59] sm:$0xff]
    %v4317 = vld [vmem:[#allocation6 + $0x61] sm:$0xff]
    %v4318 = vld [vmem:[#allocation6 + $0x69] sm:$0xff]
    %v4319 = vld [vmem:[#allocation6 + $0x71] sm:$0xff]
    %v4320 = vld [vmem:[#allocation6 + $0x79] sm:$0xff]
    %v4321 = vld [vmem:[#allocation6 + $0x81] sm:$0xff]
    %v4322 = vld [vmem:[#allocation6 + $0x89] sm:$0xff]
    %v4323 = vld [vmem:[#allocation6 + $0x91] sm:$0xff]
    %4324 = vst.msk [vmem:[#allocation7 + $0x10] sm:$0xff] %vm3058, %v4308
    %4325 = vst.msk [vmem:[#allocation7 + $0x28] sm:$0xff] %vm3058, %v4309
    %4326 = vst.msk [vmem:[#allocation7 + $0x40] sm:$0xff] %vm3058, %v4310
    %4327 = vst.msk [vmem:[#allocation7 + $0x58] sm:$0xff] %vm3058, %v4311
    %4328 = vst.msk [vmem:[#allocation7 + $0x70] sm:$0xff] %vm3058, %v4312
    %4329 = vst.msk [vmem:[#allocation7 + $0x88] sm:$0xff] %vm3058, %v4313
    %4330 = vst.msk [vmem:[#allocation7 + $0xa0] sm:$0xff] %vm3058, %v4314
    %4331 = vst.msk [vmem:[#allocation7 + $0xb8] sm:$0xff] %vm3058, %v4315
    %4332 = vst.msk [vmem:[#allocation7 + $0xd0] sm:$0xff] %vm3058, %v4316
    %4333 = vst.msk [vmem:[#allocation7 + $0xe8] sm:$0xff] %vm3058, %v4317
    %4334 = vst.msk [vmem:[#allocation7 + $0x100] sm:$0xff] %vm3058, %v4318
    %4335 = vst.msk [vmem:[#allocation7 + $0x118] sm:$0xff] %vm3058, %v4319
    %4336 = vst.msk [vmem:[#allocation7 + $0x130] sm:$0xff] %vm3058, %v4320
    %4337 = vst.msk [vmem:[#allocation7 + $0x148] sm:$0xff] %vm3058, %v4321
    %4338 = vst.msk [vmem:[#allocation7 + $0x160] sm:$0xff] %vm3058, %v4322
    %4339 = vst.msk [vmem:[#allocation7 + $0x178] sm:$0xff] %vm3058, %v4323
    %v4340 = vld [vmem:[#allocation7] sm:$0xff]
    %v4341 = vld [vmem:[#allocation7 + $0x8] sm:$0xff]
    %v4342 = vld [vmem:[#allocation7 + $0x10] sm:$0xff]
    %v4343 = vld [vmem:[#allocation7 + $0x18] sm:$0xff]
    %v4344 = vld [vmem:[#allocation7 + $0x20] sm:$0xff]
    %v4345 = vld [vmem:[#allocation7 + $0x28] sm:$0xff]
    %v4346 = vld [vmem:[#allocation7 + $0x30] sm:$0xff]
    %v4347 = vld [vmem:[#allocation7 + $0x38] sm:$0xff]
    %v4348 = vld [vmem:[#allocation7 + $0x40] sm:$0xff]
    %v4349 = vld [vmem:[#allocation7 + $0x48] sm:$0xff]
    %v4350 = vld [vmem:[#allocation7 + $0x50] sm:$0xff]
    %v4351 = vld [vmem:[#allocation7 + $0x58] sm:$0xff]
    %v4352 = vld [vmem:[#allocation7 + $0x60] sm:$0xff]
    %v4353 = vld [vmem:[#allocation7 + $0x68] sm:$0xff]
    %v4354 = vld [vmem:[#allocation7 + $0x70] sm:$0xff]
    %v4355 = vld [vmem:[#allocation7 + $0x78] sm:$0xff]
    %v4356 = vld [vmem:[#allocation7 + $0x80] sm:$0xff]
    %v4357 = vld [vmem:[#allocation7 + $0x88] sm:$0xff]
    %v4358 = vld [vmem:[#allocation7 + $0x90] sm:$0xff]
    %v4359 = vld [vmem:[#allocation7 + $0x98] sm:$0xff]
    %v4360 = vld [vmem:[#allocation7 + $0xa0] sm:$0xff]
    %v4361 = vld [vmem:[#allocation7 + $0xa8] sm:$0xff]
    %v4362 = vld [vmem:[#allocation7 + $0xb0] sm:$0xff]
    %v4363 = vld [vmem:[#allocation7 + $0xb8] sm:$0xff]
    %v4364 = vld [vmem:[#allocation7 + $0xc0] sm:$0xff]
    %v4365 = vld [vmem:[#allocation7 + $0xc8] sm:$0xff]
    %v4366 = vld [vmem:[#allocation7 + $0xd0] sm:$0xff]
    %v4367 = vld [vmem:[#allocation7 + $0xd8] sm:$0xff]
    %v4368 = vld [vmem:[#allocation7 + $0xe0] sm:$0xff]
    %v4369 = vld [vmem:[#allocation7 + $0xe8] sm:$0xff]
    %v4370 = vld [vmem:[#allocation7 + $0xf0] sm:$0xff]
    %v4371 = vld [vmem:[#allocation7 + $0xf8] sm:$0xff]
    %v4372 = vld [vmem:[#allocation7 + $0x100] sm:$0xff]
    %v4373 = vld [vmem:[#allocation7 + $0x108] sm:$0xff]
    %v4374 = vld [vmem:[#allocation7 + $0x110] sm:$0xff]
    %v4375 = vld [vmem:[#allocation7 + $0x118] sm:$0xff]
    %v4376 = vld [vmem:[#allocation7 + $0x120] sm:$0xff]
    %v4377 = vld [vmem:[#allocation7 + $0x128] sm:$0xff]
    %v4378 = vld [vmem:[#allocation7 + $0x130] sm:$0xff]
    %v4379 = vld [vmem:[#allocation7 + $0x138] sm:$0xff]
    %v4380 = vld [vmem:[#allocation7 + $0x140] sm:$0xff]
    %v4381 = vld [vmem:[#allocation7 + $0x148] sm:$0xff]
    %v4382 = vld [vmem:[#allocation7 + $0x150] sm:$0xff]
    %v4383 = vld [vmem:[#allocation7 + $0x158] sm:$0xff]
    %v4384 = vld [vmem:[#allocation7 + $0x160] sm:$0xff]
    %v4385 = vld [vmem:[#allocation7 + $0x168] sm:$0xff]
    %v4386 = vld [vmem:[#allocation7 + $0x170] sm:$0xff]
    %v4387 = vld [vmem:[#allocation7 + $0x178] sm:$0xff]
    %v4388 = vld [vmem:[#allocation11 + $0x30] sm:$0xff]
    %v4389 = vld [vmem:[#allocation11 + $0x38] sm:$0xff]
    %v4390 = vld [vmem:[#allocation11 + $0x40] sm:$0xff]
    %v4391 = vld [vmem:[#allocation11 + $0x48] sm:$0xff]
    %v4392 = vld [vmem:[#allocation11 + $0x50] sm:$0xff]
    %v4393 = vld [vmem:[#allocation11 + $0x58] sm:$0xff]
    %v4394 = vld [vmem:[#allocation11 + $0x60] sm:$0xff]
    %v4395 = vld [vmem:[#allocation11 + $0x68] sm:$0xff]
    %v4396 = vld [vmem:[#allocation11 + $0x70] sm:$0xff]
    %v4397 = vld [vmem:[#allocation11 + $0x78] sm:$0xff]
    %v4398 = vld [vmem:[#allocation11 + $0x80] sm:$0xff]
    %v4399 = vld [vmem:[#allocation11 + $0x88] sm:$0xff]
    %v4400 = vld [vmem:[#allocation11 + $0x90] sm:$0xff]
    %v4401 = vld [vmem:[#allocation11 + $0x98] sm:$0xff]
    %v4402 = vld [vmem:[#allocation11 + $0xa0] sm:$0xff]
    %v4403 = vld [vmem:[#allocation11 + $0xa8] sm:$0xff]
    %v4404 = vld [vmem:[#allocation11 + $0xb0] sm:$0xff]
    %v4405 = vld [vmem:[#allocation11 + $0xb8] sm:$0xff]
    %v4406 = vld [vmem:[#allocation11 + $0xc0] sm:$0xff]
    %v4407 = vld [vmem:[#allocation11 + $0xc8] sm:$0xff]
    %v4408 = vld [vmem:[#allocation11 + $0xd0] sm:$0xff]
    %v4409 = vld [vmem:[#allocation11 + $0xd8] sm:$0xff]
    %v4410 = vld [vmem:[#allocation11 + $0xe0] sm:$0xff]
    %v4411 = vld [vmem:[#allocation11 + $0xe8] sm:$0xff]
    %v4412 = vld [vmem:[#allocation11 + $0xf0] sm:$0xff]
    %v4413 = vld [vmem:[#allocation11 + $0xf8] sm:$0xff]
    %v4414 = vld [vmem:[#allocation11 + $0x100] sm:$0xff]
    %v4415 = vld [vmem:[#allocation11 + $0x108] sm:$0xff]
    %v4416 = vld [vmem:[#allocation11 + $0x110] sm:$0xff]
    %v4417 = vld [vmem:[#allocation11 + $0x118] sm:$0xff]
    %v4418 = vld [vmem:[#allocation11 + $0x120] sm:$0xff]
    %v4419 = vld [vmem:[#allocation11 + $0x128] sm:$0xff]
    %v4420 = vld [vmem:[#allocation11 + $0x130] sm:$0xff]
    %v4421 = vld [vmem:[#allocation11 + $0x138] sm:$0xff]
    %v4422 = vld [vmem:[#allocation11 + $0x140] sm:$0xff]
    %v4423 = vld [vmem:[#allocation11 + $0x148] sm:$0xff]
    %v4424 = vld [vmem:[#allocation11 + $0x150] sm:$0x1]
    %v4425 = vperm.slane %v4424, 0
    %v4427 = vsel %vm3058, %v4342, 0
    %v4430 = vsel %vm3058, %v4345, 0
    %v4433 = vsel %vm3058, %v4348, 0
    %v4436 = vsel %vm3058, %v4351, 0
    %v4439 = vsel %vm3058, %v4354, 0
    %v4442 = vsel %vm3058, %v4357, 0
    %v4445 = vsel %vm3058, %v4360, 0
    %v4448 = vsel %vm3058, %v4363, 0
    %v4451 = vsel %vm3058, %v4366, 0
    %v4454 = vsel %vm3058, %v4369, 0
    %v4457 = vsel %vm3058, %v4372, 0
    %v4460 = vsel %vm3058, %v4375, 0
    %v4463 = vsel %vm3058, %v4378, 0
    %v4466 = vsel %vm3058, %v4381, 0
    %v4469 = vsel %vm3058, %v4384, 0
    %v4472 = vsel %vm3058, %v4387, 0
    %4474 = vmatpush.msra.mxu0 %v4403
    %4475 = vmatpush.msra.mxu0 %v4402
    %4476 = vmatpush.msra.mxu0 %v4401
    %4477 = vmatpush.msra.mxu0 %v4400
    %4478 = vmatpush.msra.mxu0 %v4399
    %4479 = vmatpush.msra.mxu0 %v4398
    %4480 = vmatpush.msra.mxu0 %v4397
    %4481 = vmatpush.msra.mxu0 %v4396
    %4482 = vmatpush.msra.mxu0 %v4395
    %4483 = vmatpush.msra.mxu0 %v4394
    %4484 = vmatpush.msra.mxu0 %v4393
    %4485 = vmatpush.msra.mxu0 %v4392
    %4486 = vmatpush.msra.mxu0 %v4391
    %4487 = vmatpush.msra.mxu0 %v4390
    %4488 = vmatpush.msra.mxu0 %v4389
    %4489 = vmatpush.msra.mxu0 %v4388
    %4490 = vmatmul.f32.gmra.mxu0 %v4340
    %v4491 = vpop.f32.mrf.mxu0
    %v4492 = vadd.f32 %v4425, %v4491
    %4493 = vmatmul.f32.gmra.mxu0 %v4343
    %v4494 = vpop.f32.mrf.mxu0
    %v4495 = vadd.f32 %v4425, %v4494
    %4496 = vmatmul.f32.gmra.mxu0 %v4346
    %v4497 = vpop.f32.mrf.mxu0
    %v4498 = vadd.f32 %v4425, %v4497
    %4499 = vmatmul.f32.gmra.mxu0 %v4349
    %v4500 = vpop.f32.mrf.mxu0
    %v4501 = vadd.f32 %v4425, %v4500
    %4502 = vmatmul.f32.gmra.mxu0 %v4352
    %v4503 = vpop.f32.mrf.mxu0
    %v4504 = vadd.f32 %v4425, %v4503
    %4505 = vmatmul.f32.gmra.mxu0 %v4355
    %v4506 = vpop.f32.mrf.mxu0
    %v4507 = vadd.f32 %v4425, %v4506
    %4508 = vmatmul.f32.gmra.mxu0 %v4358
    %v4509 = vpop.f32.mrf.mxu0
    %v4510 = vadd.f32 %v4425, %v4509
    %4511 = vmatmul.f32.gmra.mxu0 %v4361
    %v4512 = vpop.f32.mrf.mxu0
    %v4513 = vadd.f32 %v4425, %v4512
    %4514 = vmatmul.f32.gmra.mxu0 %v4364
    %v4515 = vpop.f32.mrf.mxu0
    %v4516 = vadd.f32 %v4425, %v4515
    %4517 = vmatmul.f32.gmra.mxu0 %v4367
    %v4518 = vpop.f32.mrf.mxu0
    %v4519 = vadd.f32 %v4425, %v4518
    %4520 = vmatmul.f32.gmra.mxu0 %v4370
    %v4521 = vpop.f32.mrf.mxu0
    %v4522 = vadd.f32 %v4425, %v4521
    %4523 = vmatmul.f32.gmra.mxu0 %v4373
    %v4524 = vpop.f32.mrf.mxu0
    %v4525 = vadd.f32 %v4425, %v4524
    %4526 = vmatmul.f32.gmra.mxu0 %v4376
    %v4527 = vpop.f32.mrf.mxu0
    %v4528 = vadd.f32 %v4425, %v4527
    %4529 = vmatmul.f32.gmra.mxu0 %v4379
    %v4530 = vpop.f32.mrf.mxu0
    %v4531 = vadd.f32 %v4425, %v4530
    %4532 = vmatmul.f32.gmra.mxu0 %v4382
    %v4533 = vpop.f32.mrf.mxu0
    %v4534 = vadd.f32 %v4425, %v4533
    %4535 = vmatmul.f32.gmra.mxu0 %v4385
    %v4536 = vpop.f32.mrf.mxu0
    %v4537 = vadd.f32 %v4425, %v4536
    %4538 = vdwg.mxu0
    %4539 = vmatpush.msra.mxu0 %v4419
    %4540 = vmatpush.msra.mxu0 %v4418
    %4541 = vmatpush.msra.mxu0 %v4417
    %4542 = vmatpush.msra.mxu0 %v4416
    %4543 = vmatpush.msra.mxu0 %v4415
    %4544 = vmatpush.msra.mxu0 %v4414
    %4545 = vmatpush.msra.mxu0 %v4413
    %4546 = vmatpush.msra.mxu0 %v4412
    %4547 = vmatpush.msra.mxu0 %v4411
    %4548 = vmatpush.msra.mxu0 %v4410
    %4549 = vmatpush.msra.mxu0 %v4409
    %4550 = vmatpush.msra.mxu0 %v4408
    %4551 = vmatpush.msra.mxu0 %v4407
    %4552 = vmatpush.msra.mxu0 %v4406
    %4553 = vmatpush.msra.mxu0 %v4405
    %4554 = vmatpush.msra.mxu0 %v4404
    %4555 = vmatmul.f32.gmra.mxu0 %v4341
    %v4556 = vpop.f32.mrf.mxu0
    %v4557 = vadd.f32 %v4492, %v4556
    %4558 = vmatmul.f32.gmra.mxu0 %v4344
    %v4559 = vpop.f32.mrf.mxu0
    %v4560 = vadd.f32 %v4495, %v4559
    %4561 = vmatmul.f32.gmra.mxu0 %v4347
    %v4562 = vpop.f32.mrf.mxu0
    %v4563 = vadd.f32 %v4498, %v4562
    %4564 = vmatmul.f32.gmra.mxu0 %v4350
    %v4565 = vpop.f32.mrf.mxu0
    %v4566 = vadd.f32 %v4501, %v4565
    %4567 = vmatmul.f32.gmra.mxu0 %v4353
    %v4568 = vpop.f32.mrf.mxu0
    %v4569 = vadd.f32 %v4504, %v4568
    %4570 = vmatmul.f32.gmra.mxu0 %v4356
    %v4571 = vpop.f32.mrf.mxu0
    %v4572 = vadd.f32 %v4507, %v4571
    %4573 = vmatmul.f32.gmra.mxu0 %v4359
    %v4574 = vpop.f32.mrf.mxu0
    %v4575 = vadd.f32 %v4510, %v4574
    %4576 = vmatmul.f32.gmra.mxu0 %v4362
    %v4577 = vpop.f32.mrf.mxu0
    %v4578 = vadd.f32 %v4513, %v4577
    %4579 = vmatmul.f32.gmra.mxu0 %v4365
    %v4580 = vpop.f32.mrf.mxu0
    %v4581 = vadd.f32 %v4516, %v4580
    %4582 = vmatmul.f32.gmra.mxu0 %v4368
    %v4583 = vpop.f32.mrf.mxu0
    %v4584 = vadd.f32 %v4519, %v4583
    %4585 = vmatmul.f32.gmra.mxu0 %v4371
    %v4586 = vpop.f32.mrf.mxu0
    %v4587 = vadd.f32 %v4522, %v4586
    %4588 = vmatmul.f32.gmra.mxu0 %v4374
    %v4589 = vpop.f32.mrf.mxu0
    %v4590 = vadd.f32 %v4525, %v4589
    %4591 = vmatmul.f32.gmra.mxu0 %v4377
    %v4592 = vpop.f32.mrf.mxu0
    %v4593 = vadd.f32 %v4528, %v4592
    %4594 = vmatmul.f32.gmra.mxu0 %v4380
    %v4595 = vpop.f32.mrf.mxu0
    %v4596 = vadd.f32 %v4531, %v4595
    %4597 = vmatmul.f32.gmra.mxu0 %v4383
    %v4598 = vpop.f32.mrf.mxu0
    %v4599 = vadd.f32 %v4534, %v4598
    %4600 = vmatmul.f32.gmra.mxu0 %v4386
    %v4601 = vpop.f32.mrf.mxu0
    %v4602 = vadd.f32 %v4537, %v4601
    %4603 = vdwg.mxu0
    %4604 = vmatpush.msra.mxu0 0.0
    %4605 = vmatpush.msra.mxu0 0.0
    %4606 = vmatpush.msra.mxu0 0.0
    %4607 = vmatpush.msra.mxu0 0.0
    %4608 = vmatpush.msra.mxu0 0.0
    %4609 = vmatpush.msra.mxu0 0.0
    %4610 = vmatpush.msra.mxu0 0.0
    %4611 = vmatpush.msra.mxu0 0.0
    %4612 = vmatpush.msra.mxu0 0.0
    %4613 = vmatpush.msra.mxu0 0.0
    %4614 = vmatpush.msra.mxu0 0.0
    %4615 = vmatpush.msra.mxu0 0.0
    %4616 = vmatpush.msra.mxu0 %v4423
    %4617 = vmatpush.msra.mxu0 %v4422
    %4618 = vmatpush.msra.mxu0 %v4421
    %4619 = vmatpush.msra.mxu0 %v4420
    %4620 = vmatmul.f32.gmra.mxu0 %v4427
    %v4621 = vpop.f32.mrf.mxu0
    %v4622 = vadd.f32 %v4557, %v4621
    %4623 = vmatmul.f32.gmra.mxu0 %v4430
    %v4624 = vpop.f32.mrf.mxu0
    %v4625 = vadd.f32 %v4560, %v4624
    %4626 = vmatmul.f32.gmra.mxu0 %v4433
    %v4627 = vpop.f32.mrf.mxu0
    %v4628 = vadd.f32 %v4563, %v4627
    %4629 = vmatmul.f32.gmra.mxu0 %v4436
    %v4630 = vpop.f32.mrf.mxu0
    %v4631 = vadd.f32 %v4566, %v4630
    %4632 = vmatmul.f32.gmra.mxu0 %v4439
    %v4633 = vpop.f32.mrf.mxu0
    %v4634 = vadd.f32 %v4569, %v4633
    %4635 = vmatmul.f32.gmra.mxu0 %v4442
    %v4636 = vpop.f32.mrf.mxu0
    %v4637 = vadd.f32 %v4572, %v4636
    %4638 = vmatmul.f32.gmra.mxu0 %v4445
    %v4639 = vpop.f32.mrf.mxu0
    %v4640 = vadd.f32 %v4575, %v4639
    %4641 = vmatmul.f32.gmra.mxu0 %v4448
    %v4642 = vpop.f32.mrf.mxu0
    %v4643 = vadd.f32 %v4578, %v4642
    %4644 = vmatmul.f32.gmra.mxu0 %v4451
    %v4645 = vpop.f32.mrf.mxu0
    %v4646 = vadd.f32 %v4581, %v4645
    %4647 = vmatmul.f32.gmra.mxu0 %v4454
    %v4648 = vpop.f32.mrf.mxu0
    %v4649 = vadd.f32 %v4584, %v4648
    %4650 = vmatmul.f32.gmra.mxu0 %v4457
    %v4651 = vpop.f32.mrf.mxu0
    %v4652 = vadd.f32 %v4587, %v4651
    %4653 = vmatmul.f32.gmra.mxu0 %v4460
    %v4654 = vpop.f32.mrf.mxu0
    %v4655 = vadd.f32 %v4590, %v4654
    %4656 = vmatmul.f32.gmra.mxu0 %v4463
    %v4657 = vpop.f32.mrf.mxu0
    %v4658 = vadd.f32 %v4593, %v4657
    %4659 = vmatmul.f32.gmra.mxu0 %v4466
    %v4660 = vpop.f32.mrf.mxu0
    %v4661 = vadd.f32 %v4596, %v4660
    %4662 = vmatmul.f32.gmra.mxu0 %v4469
    %v4663 = vpop.f32.mrf.mxu0
    %v4664 = vadd.f32 %v4599, %v4663
    %4665 = vmatmul.f32.gmra.mxu0 %v4472
    %v4666 = vpop.f32.mrf.mxu0
    %v4667 = vadd.f32 %v4602, %v4666
    %4668 = vdwg.mxu0
    %v4669 = vmax.f32 %v4622, 0.0
    %v4670 = vmax.f32 %v4625, 0.0
    %v4671 = vmax.f32 %v4628, 0.0
    %v4672 = vmax.f32 %v4631, 0.0
    %v4673 = vmax.f32 %v4634, 0.0
    %v4674 = vmax.f32 %v4637, 0.0
    %v4675 = vmax.f32 %v4640, 0.0
    %v4676 = vmax.f32 %v4643, 0.0
    %v4677 = vmax.f32 %v4646, 0.0
    %v4678 = vmax.f32 %v4649, 0.0
    %v4679 = vmax.f32 %v4652, 0.0
    %v4680 = vmax.f32 %v4655, 0.0
    %v4681 = vmax.f32 %v4658, 0.0
    %v4682 = vmax.f32 %v4661, 0.0
    %v4683 = vmax.f32 %v4664, 0.0
    %v4684 = vmax.f32 %v4667, 0.0
    %vm4685 = vcmask 523264
    %4686 = vst.msk [vmem:[#allocation8] sm:$0xff] %vm4685, %v4669
    %4687 = vst.msk [vmem:[#allocation8 + $0x8] sm:$0xff] %vm4685, %v4670
    %4688 = vst.msk [vmem:[#allocation8 + $0x10] sm:$0xff] %vm4685, %v4671
    %4689 = vst.msk [vmem:[#allocation8 + $0x18] sm:$0xff] %vm4685, %v4672
    %4690 = vst.msk [vmem:[#allocation8 + $0x20] sm:$0xff] %vm4685, %v4673
    %4691 = vst.msk [vmem:[#allocation8 + $0x28] sm:$0xff] %vm4685, %v4674
    %4692 = vst.msk [vmem:[#allocation8 + $0x30] sm:$0xff] %vm4685, %v4675
    %4693 = vst.msk [vmem:[#allocation8 + $0x38] sm:$0xff] %vm4685, %v4676
    %4694 = vst.msk [vmem:[#allocation8 + $0x40] sm:$0xff] %vm4685, %v4677
    %4695 = vst.msk [vmem:[#allocation8 + $0x48] sm:$0xff] %vm4685, %v4678
    %4696 = vst.msk [vmem:[#allocation8 + $0x50] sm:$0xff] %vm4685, %v4679
    %4697 = vst.msk [vmem:[#allocation8 + $0x58] sm:$0xff] %vm4685, %v4680
    %4698 = vst.msk [vmem:[#allocation8 + $0x60] sm:$0xff] %vm4685, %v4681
    %4699 = vst.msk [vmem:[#allocation8 + $0x68] sm:$0xff] %vm4685, %v4682
    %4700 = vst.msk [vmem:[#allocation8 + $0x70] sm:$0xff] %vm4685, %v4683
    %4701 = vst.msk [vmem:[#allocation8 + $0x78] sm:$0xff] %vm4685, %v4684
    %v4702 = vld [vmem:[#allocation8] sm:$0xff]
    %v4703 = vld [vmem:[#allocation8 + $0x8] sm:$0xff]
    %v4704 = vld [vmem:[#allocation8 + $0x10] sm:$0xff]
    %v4705 = vld [vmem:[#allocation8 + $0x18] sm:$0xff]
    %v4706 = vld [vmem:[#allocation8 + $0x20] sm:$0xff]
    %v4707 = vld [vmem:[#allocation8 + $0x28] sm:$0xff]
    %v4708 = vld [vmem:[#allocation8 + $0x30] sm:$0xff]
    %v4709 = vld [vmem:[#allocation8 + $0x38] sm:$0xff]
    %v4710 = vld [vmem:[#allocation8 + $0x40] sm:$0xff]
    %v4711 = vld [vmem:[#allocation8 + $0x48] sm:$0xff]
    %v4712 = vld [vmem:[#allocation8 + $0x50] sm:$0xff]
    %v4713 = vld [vmem:[#allocation8 + $0x58] sm:$0xff]
    %v4714 = vld [vmem:[#allocation8 + $0x60] sm:$0xff]
    %v4715 = vld [vmem:[#allocation8 + $0x68] sm:$0xff]
    %v4716 = vld [vmem:[#allocation8 + $0x70] sm:$0xff]
    %v4717 = vld [vmem:[#allocation8 + $0x78] sm:$0xff]
    %v4718 = vld [vmem:[#allocation8 + $0x1] sm:$0xff]
    %v4719 = vld [vmem:[#allocation8 + $0x9] sm:$0xff]
    %v4720 = vld [vmem:[#allocation8 + $0x11] sm:$0xff]
    %v4721 = vld [vmem:[#allocation8 + $0x19] sm:$0xff]
    %v4722 = vld [vmem:[#allocation8 + $0x21] sm:$0xff]
    %v4723 = vld [vmem:[#allocation8 + $0x29] sm:$0xff]
    %v4724 = vld [vmem:[#allocation8 + $0x31] sm:$0xff]
    %v4725 = vld [vmem:[#allocation8 + $0x39] sm:$0xff]
    %v4726 = vld [vmem:[#allocation8 + $0x41] sm:$0xff]
    %v4727 = vld [vmem:[#allocation8 + $0x49] sm:$0xff]
    %v4728 = vld [vmem:[#allocation8 + $0x51] sm:$0xff]
    %v4729 = vld [vmem:[#allocation8 + $0x59] sm:$0xff]
    %v4730 = vld [vmem:[#allocation8 + $0x61] sm:$0xff]
    %v4731 = vld [vmem:[#allocation8 + $0x69] sm:$0xff]
    %v4732 = vld [vmem:[#allocation8 + $0x71] sm:$0xff]
    %v4733 = vld [vmem:[#allocation8 + $0x79] sm:$0xff]
    %v4734 = vmax.f32 %v4702, %v4718
    %v4735 = vmax.f32 %v4703, %v4719
    %v4736 = vmax.f32 %v4704, %v4720
    %v4737 = vmax.f32 %v4705, %v4721
    %v4738 = vmax.f32 %v4706, %v4722
    %v4739 = vmax.f32 %v4707, %v4723
    %v4740 = vmax.f32 %v4708, %v4724
    %v4741 = vmax.f32 %v4709, %v4725
    %v4742 = vmax.f32 %v4710, %v4726
    %v4743 = vmax.f32 %v4711, %v4727
    %v4744 = vmax.f32 %v4712, %v4728
    %v4745 = vmax.f32 %v4713, %v4729
    %v4746 = vmax.f32 %v4714, %v4730
    %v4747 = vmax.f32 %v4715, %v4731
    %v4748 = vmax.f32 %v4716, %v4732
    %v4749 = vmax.f32 %v4717, %v4733
    %v4750 = vld [vmem:[#allocation8 + $0x80] sm:$0xff]
    %v4751 = vld [vmem:[#allocation8 + $0x81] sm:$0xff]
    %v4752 = vmax.f32 %v4750, %v4751
    %v4753 = vmax.f32 %v4734, %v4735
    %v4754 = vmax.f32 %v4735, %v4736
    %v4755 = vmax.f32 %v4736, %v4737
    %v4756 = vmax.f32 %v4737, %v4738
    %v4757 = vmax.f32 %v4738, %v4739
    %v4758 = vmax.f32 %v4739, %v4740
    %v4759 = vmax.f32 %v4740, %v4741
    %v4760 = vmax.f32 %v4741, %v4742
    %v4761 = vmax.f32 %v4742, %v4743
    %v4762 = vmax.f32 %v4743, %v4744
    %v4763 = vmax.f32 %v4744, %v4745
    %v4764 = vmax.f32 %v4745, %v4746
    %v4765 = vmax.f32 %v4746, %v4747
    %v4766 = vmax.f32 %v4747, %v4748
    %v4767 = vmax.f32 %v4748, %v4749
    %v4768 = vmax.f32 %v4749, %v4752
    %4769 = vst.msk [vmem:[#allocation9] sm:$0xff] %vm4685, %v4753
    %4770 = vst.msk [vmem:[#allocation9 + $0x8] sm:$0xff] %vm4685, %v4754
    %4771 = vst.msk [vmem:[#allocation9 + $0x10] sm:$0xff] %vm4685, %v4755
    %4772 = vst.msk [vmem:[#allocation9 + $0x18] sm:$0xff] %vm4685, %v4756
    %4773 = vst.msk [vmem:[#allocation9 + $0x20] sm:$0xff] %vm4685, %v4757
    %4774 = vst.msk [vmem:[#allocation9 + $0x28] sm:$0xff] %vm4685, %v4758
    %4775 = vst.msk [vmem:[#allocation9 + $0x30] sm:$0xff] %vm4685, %v4759
    %4776 = vst.msk [vmem:[#allocation9 + $0x38] sm:$0xff] %vm4685, %v4760
    %4777 = vst.msk [vmem:[#allocation9 + $0x40] sm:$0xff] %vm4685, %v4761
    %4778 = vst.msk [vmem:[#allocation9 + $0x48] sm:$0xff] %vm4685, %v4762
    %4779 = vst.msk [vmem:[#allocation9 + $0x50] sm:$0xff] %vm4685, %v4763
    %4780 = vst.msk [vmem:[#allocation9 + $0x58] sm:$0xff] %vm4685, %v4764
    %4781 = vst.msk [vmem:[#allocation9 + $0x60] sm:$0xff] %vm4685, %v4765
    %4782 = vst.msk [vmem:[#allocation9 + $0x68] sm:$0xff] %vm4685, %v4766
    %4783 = vst.msk [vmem:[#allocation9 + $0x70] sm:$0xff] %vm4685, %v4767
    %4784 = vst.msk [vmem:[#allocation9 + $0x78] sm:$0xff] %vm4685, %v4768
    %4785 = vst [vmem:[#allocation10] sm:$0xff] 0.0
    %4786 = vst [vmem:[#allocation10 + $0x8] sm:$0xff] 0.0
    %4787 = vst [vmem:[#allocation10 + $0x10] sm:$0xff] 0.0
    %4788 = vst [vmem:[#allocation10 + $0x18] sm:$0xff] 0.0
    %4789 = vst.msk [vmem:[#allocation10 + $0x20] sm:$0xff] %vm4685, 0.0
    %v4790 = vld [vmem:[#allocation9 + $0x9] sm:$0x1]
    %vm4791 = vcmask 516096
    %4792 = vst.msk [vmem:[#allocation10] sm:$0x1] %vm4791, %v4790
    %v4793 = vld [vmem:[#allocation9 + $0xb] sm:$0x1]
    %4795 = vrot.lane.b32.xlu0 %v4793, 64
    %v4796 = vpop.permute.xlu0 %4795
    %vm4798 = vcmask 1040896
    %4799 = vst.msk [vmem:[#allocation10] sm:$0x1] %vm4798, %v4796
    %v4800 = vld [vmem:[#allocation9 + $0xd] sm:$0x1]
    %4801 = vst.msk [vmem:[#allocation10 + $0x8] sm:$0x1] %vm4791, %v4800
    %v4802 = vld [vmem:[#allocation9 + $0x19] sm:$0x1]
    %4804 = vrot.lane.b32.xlu0 %v4802, 64
    %v4805 = vpop.permute.xlu0 %4804
    %4807 = vst.msk [vmem:[#allocation10 + $0x8] sm:$0x1] %vm4798, %v4805
    %v4808 = vld [vmem:[#allocation9 + $0x1b] sm:$0x1]
    %4809 = vst.msk [vmem:[#allocation10 + $0x10] sm:$0x1] %vm4791, %v4808
    %v4810 = vld [vmem:[#allocation9 + $0x1d] sm:$0x1]
    %4812 = vrot.lane.b32.xlu0 %v4810, 64
    %v4813 = vpop.permute.xlu0 %4812
    %4815 = vst.msk [vmem:[#allocation10 + $0x10] sm:$0x1] %vm4798, %v4813
    %v4816 = vld [vmem:[#allocation9 + $0x29] sm:$0x1]
    %4817 = vst.msk [vmem:[#allocation10 + $0x18] sm:$0x1] %vm4791, %v4816
    %v4818 = vld [vmem:[#allocation9 + $0x2b] sm:$0x1]
    %4820 = vrot.lane.b32.xlu0 %v4818, 64
    %v4821 = vpop.permute.xlu0 %4820
    %4823 = vst.msk [vmem:[#allocation10 + $0x18] sm:$0x1] %vm4798, %v4821
    %v4824 = vld [vmem:[#allocation9 + $0x2d] sm:$0x1]
    %4825 = vst.msk [vmem:[#allocation10 + $0x20] sm:$0x1] %vm4791, %v4824
    %v4826 = vld [vmem:[#allocation9 + $0x49] sm:$0x1]
    %4827 = vst.msk [vmem:[#allocation10 + $0x1] sm:$0x1] %vm4791, %v4826
    %v4828 = vld [vmem:[#allocation9 + $0x4b] sm:$0x1]
    %4830 = vrot.lane.b32.xlu0 %v4828, 64
    %v4831 = vpop.permute.xlu0 %4830
    %4833 = vst.msk [vmem:[#allocation10 + $0x1] sm:$0x1] %vm4798, %v4831
    %v4834 = vld [vmem:[#allocation9 + $0x4d] sm:$0x1]
    %4835 = vst.msk [vmem:[#allocation10 + $0x9] sm:$0x1] %vm4791, %v4834
    %v4836 = vld [vmem:[#allocation9 + $0x59] sm:$0x1]
    %4838 = vrot.lane.b32.xlu0 %v4836, 64
    %v4839 = vpop.permute.xlu0 %4838
    %4841 = vst.msk [vmem:[#allocation10 + $0x9] sm:$0x1] %vm4798, %v4839
    %v4842 = vld [vmem:[#allocation9 + $0x5b] sm:$0x1]
    %4843 = vst.msk [vmem:[#allocation10 + $0x11] sm:$0x1] %vm4791, %v4842
    %v4844 = vld [vmem:[#allocation9 + $0x5d] sm:$0x1]
    %4846 = vrot.lane.b32.xlu0 %v4844, 64
    %v4847 = vpop.permute.xlu0 %4846
    %4849 = vst.msk [vmem:[#allocation10 + $0x11] sm:$0x1] %vm4798, %v4847
    %v4850 = vld [vmem:[#allocation9 + $0x69] sm:$0x1]
    %4851 = vst.msk [vmem:[#allocation10 + $0x19] sm:$0x1] %vm4791, %v4850
    %v4852 = vld [vmem:[#allocation9 + $0x6b] sm:$0x1]
    %4854 = vrot.lane.b32.xlu0 %v4852, 64
    %v4855 = vpop.permute.xlu0 %4854
    %4857 = vst.msk [vmem:[#allocation10 + $0x19] sm:$0x1] %vm4798, %v4855
    %v4858 = vld [vmem:[#allocation9 + $0x6d] sm:$0x1]
    %4859 = vst.msk [vmem:[#allocation10 + $0x21] sm:$0x1] %vm4791, %v4858
    %v4860 = vld [vmem:[#allocation10] sm:$0xff]
    %v4861 = vld [vmem:[#allocation10 + $0x8] sm:$0xff]
    %v4862 = vld [vmem:[#allocation10 + $0x10] sm:$0xff]
    %v4863 = vld [vmem:[#allocation10 + $0x18] sm:$0xff]
    %v4864 = vld [vmem:[#allocation10 + $0x20] sm:$0xff]
    %v4865 = vld [vmem:[#allocation11 + $0x158] sm:$0xff]
    %v4866 = vld [vmem:[#allocation11 + $0x160] sm:$0xff]
    %v4867 = vld [vmem:[#allocation11 + $0x168] sm:$0xff]
    %v4868 = vld [vmem:[#allocation11 + $0x170] sm:$0xff]
    %v4869 = vld [vmem:[#allocation11 + $0x178] sm:$0xff]
    %v4870 = vld [vmem:[#allocation11 + $0x180] sm:$0xff]
    %v4871 = vld [vmem:[#allocation11 + $0x188] sm:$0xff]
    %v4872 = vld [vmem:[#allocation11 + $0x190] sm:$0xff]
    %v4873 = vld [vmem:[#allocation11 + $0x198] sm:$0xff]
    %v4874 = vld [vmem:[#allocation11 + $0x1a0] sm:$0xff]
    %v4875 = vld [vmem:[#allocation11 + $0x1a8] sm:$0xff]
    %v4876 = vld [vmem:[#allocation11 + $0x1b0] sm:$0xff]
    %v4877 = vld [vmem:[#allocation11 + $0x1b8] sm:$0xff]
    %v4878 = vld [vmem:[#allocation11 + $0x1c0] sm:$0xff]
    %v4879 = vld [vmem:[#allocation11 + $0x1c8] sm:$0xff]
    %v4880 = vld [vmem:[#allocation11 + $0x1d0] sm:$0xff]
    %v4881 = vld [vmem:[#allocation11 + $0x1d8] sm:$0xff]
    %v4882 = vld [vmem:[#allocation11 + $0x1e0] sm:$0xff]
    %v4883 = vld [vmem:[#allocation11 + $0x1e8] sm:$0xff]
    %v4884 = vld [vmem:[#allocation11 + $0x1f0] sm:$0xff]
    %v4885 = vld [vmem:[#allocation11 + $0x1f8] sm:$0xff]
    %v4886 = vld [vmem:[#allocation11 + $0x200] sm:$0xff]
    %v4887 = vld [vmem:[#allocation11 + $0x208] sm:$0xff]
    %v4888 = vld [vmem:[#allocation11 + $0x210] sm:$0xff]
    %v4889 = vld [vmem:[#allocation11 + $0x218] sm:$0xff]
    %v4890 = vld [vmem:[#allocation11 + $0x220] sm:$0xff]
    %v4891 = vld [vmem:[#allocation11 + $0x228] sm:$0xff]
    %v4892 = vld [vmem:[#allocation11 + $0x230] sm:$0xff]
    %v4893 = vld [vmem:[#allocation11 + $0x238] sm:$0xff]
    %v4894 = vld [vmem:[#allocation11 + $0x240] sm:$0xff]
    %v4895 = vld [vmem:[#allocation11 + $0x248] sm:$0xff]
    %v4896 = vld [vmem:[#allocation11 + $0x250] sm:$0xff]
    %v4897 = vld [vmem:[#allocation11 + $0x258] sm:$0xff]
    %v4898 = vld [vmem:[#allocation11 + $0x260] sm:$0xff]
    %v4899 = vld [vmem:[#allocation11 + $0x268] sm:$0xff]
    %v4900 = vld [vmem:[#allocation11 + $0x270] sm:$0xff]
    %v4901 = vld [vmem:[#allocation11 + $0x278] sm:$0xff]
    %v4902 = vld [vmem:[#allocation11 + $0x280] sm:$0xff]
    %v4903 = vld [vmem:[#allocation11 + $0x288] sm:$0xff]
    %v4904 = vld [vmem:[#allocation11 + $0x290] sm:$0xff]
    %v4905 = vld [vmem:[#allocation11 + $0x298] sm:$0xff]
    %v4906 = vld [vmem:[#allocation11 + $0x2a0] sm:$0xff]
    %v4907 = vld [vmem:[#allocation11 + $0x2a8] sm:$0xff]
    %v4908 = vld [vmem:[#allocation11 + $0x2b0] sm:$0xff]
    %v4909 = vld [vmem:[#allocation11 + $0x2b8] sm:$0xff]
    %v4910 = vld [vmem:[#allocation11 + $0x2c0] sm:$0xff]
    %v4911 = vld [vmem:[#allocation11 + $0x2c8] sm:$0xff]
    %v4912 = vld [vmem:[#allocation11 + $0x2d0] sm:$0xff]
    %v4913 = vld [vmem:[#allocation11 + $0x2d8] sm:$0xff]
    %v4914 = vld [vmem:[#allocation11 + $0x2e0] sm:$0xff]
    %v4915 = vld [vmem:[#allocation11 + $0x2e8] sm:$0xff]
    %v4916 = vld [vmem:[#allocation11 + $0x2f0] sm:$0xff]
    %v4917 = vld [vmem:[#allocation11 + $0x2f8] sm:$0xff]
    %v4918 = vld [vmem:[#allocation11 + $0x300] sm:$0xff]
    %v4919 = vld [vmem:[#allocation11 + $0x308] sm:$0xff]
    %v4920 = vld [vmem:[#allocation11 + $0x310] sm:$0xff]
    %v4921 = vld [vmem:[#allocation11 + $0x318] sm:$0xff]
    %v4922 = vld [vmem:[#allocation11 + $0x320] sm:$0xff]
    %v4923 = vld [vmem:[#allocation11 + $0x328] sm:$0xff]
    %v4924 = vld [vmem:[#allocation11 + $0x330] sm:$0xff]
    %v4925 = vld [vmem:[#allocation11 + $0x338] sm:$0xff]
    %v4926 = vld [vmem:[#allocation11 + $0x340] sm:$0xff]
    %v4927 = vld [vmem:[#allocation11 + $0x348] sm:$0xff]
    %v4928 = vld [vmem:[#allocation11 + $0x350] sm:$0xff]
    %v4929 = vld [vmem:[#allocation11 + $0x358] sm:$0xff]
    %v4930 = vld [vmem:[#allocation11 + $0x360] sm:$0xff]
    %v4931 = vld [vmem:[#allocation11 + $0x368] sm:$0xff]
    %v4932 = vld [vmem:[#allocation11 + $0x370] sm:$0xff]
    %v4933 = vld [vmem:[#allocation11 + $0x378] sm:$0xff]
    %v4934 = vld [vmem:[#allocation11 + $0x380] sm:$0xff]
    %v4935 = vld [vmem:[#allocation11 + $0x388] sm:$0xff]
    %v4936 = vld [vmem:[#allocation11 + $0x390] sm:$0xff]
    %v4937 = vld [vmem:[#allocation11 + $0x398] sm:$0x1]
    %v4938 = vperm.slane %v4937, 0
    %v4940 = vsel %vm4685, %v4864, 0
    %4942 = vmatpush.msra.mxu0 %v4880
    %4943 = vmatpush.msra.mxu0 %v4879
    %4944 = vmatpush.msra.mxu0 %v4878
    %4945 = vmatpush.msra.mxu0 %v4877
    %4946 = vmatpush.msra.mxu0 %v4876
    %4947 = vmatpush.msra.mxu0 %v4875
    %4948 = vmatpush.msra.mxu0 %v4874
    %4949 = vmatpush.msra.mxu0 %v4873
    %4950 = vmatpush.msra.mxu0 %v4872
    %4951 = vmatpush.msra.mxu0 %v4871
    %4952 = vmatpush.msra.mxu0 %v4870
    %4953 = vmatpush.msra.mxu0 %v4869
    %4954 = vmatpush.msra.mxu0 %v4868
    %4955 = vmatpush.msra.mxu0 %v4867
    %4956 = vmatpush.msra.mxu0 %v4866
    %4957 = vmatpush.msra.mxu0 %v4865
    %4958 = vmatmul.f32.gmra.mxu0 %v4860
    %v4959 = vpop.f32.mrf.mxu0
    %v4960 = vadd.f32 %v4938, %v4959
    %4961 = vdwg.mxu0
    %4962 = vmatpush.msra.mxu0 %v4896
    %4963 = vmatpush.msra.mxu0 %v4895
    %4964 = vmatpush.msra.mxu0 %v4894
    %4965 = vmatpush.msra.mxu0 %v4893
    %4966 = vmatpush.msra.mxu0 %v4892
    %4967 = vmatpush.msra.mxu0 %v4891
    %4968 = vmatpush.msra.mxu0 %v4890
    %4969 = vmatpush.msra.mxu0 %v4889
    %4970 = vmatpush.msra.mxu0 %v4888
    %4971 = vmatpush.msra.mxu0 %v4887
    %4972 = vmatpush.msra.mxu0 %v4886
    %4973 = vmatpush.msra.mxu0 %v4885
    %4974 = vmatpush.msra.mxu0 %v4884
    %4975 = vmatpush.msra.mxu0 %v4883
    %4976 = vmatpush.msra.mxu0 %v4882
    %4977 = vmatpush.msra.mxu0 %v4881
    %4978 = vmatmul.f32.gmra.mxu0 %v4861
    %v4979 = vpop.f32.mrf.mxu0
    %v4980 = vadd.f32 %v4960, %v4979
    %4981 = vdwg.mxu0
    %4982 = vmatpush.msra.mxu0 %v4912
    %4983 = vmatpush.msra.mxu0 %v4911
    %4984 = vmatpush.msra.mxu0 %v4910
    %4985 = vmatpush.msra.mxu0 %v4909
    %4986 = vmatpush.msra.mxu0 %v4908
    %4987 = vmatpush.msra.mxu0 %v4907
    %4988 = vmatpush.msra.mxu0 %v4906
    %4989 = vmatpush.msra.mxu0 %v4905
    %4990 = vmatpush.msra.mxu0 %v4904
    %4991 = vmatpush.msra.mxu0 %v4903
    %4992 = vmatpush.msra.mxu0 %v4902
    %4993 = vmatpush.msra.mxu0 %v4901
    %4994 = vmatpush.msra.mxu0 %v4900
    %4995 = vmatpush.msra.mxu0 %v4899
    %4996 = vmatpush.msra.mxu0 %v4898
    %4997 = vmatpush.msra.mxu0 %v4897
    %4998 = vmatmul.f32.gmra.mxu0 %v4862
    %v4999 = vpop.f32.mrf.mxu0
    %v5000 = vadd.f32 %v4980, %v4999
    %5001 = vdwg.mxu0
    %5002 = vmatpush.msra.mxu0 %v4928
    %5003 = vmatpush.msra.mxu0 %v4927
    %5004 = vmatpush.msra.mxu0 %v4926
    %5005 = vmatpush.msra.mxu0 %v4925
    %5006 = vmatpush.msra.mxu0 %v4924
    %5007 = vmatpush.msra.mxu0 %v4923
    %5008 = vmatpush.msra.mxu0 %v4922
    %5009 = vmatpush.msra.mxu0 %v4921
    %5010 = vmatpush.msra.mxu0 %v4920
    %5011 = vmatpush.msra.mxu0 %v4919
    %5012 = vmatpush.msra.mxu0 %v4918
    %5013 = vmatpush.msra.mxu0 %v4917
    %5014 = vmatpush.msra.mxu0 %v4916
    %5015 = vmatpush.msra.mxu0 %v4915
    %5016 = vmatpush.msra.mxu0 %v4914
    %5017 = vmatpush.msra.mxu0 %v4913
    %5018 = vmatmul.f32.gmra.mxu0 %v4863
    %v5019 = vpop.f32.mrf.mxu0
    %v5020 = vadd.f32 %v5000, %v5019
    %5021 = vdwg.mxu0
    %5022 = vmatpush.msra.mxu0 0.0
    %5023 = vmatpush.msra.mxu0 0.0
    %5024 = vmatpush.msra.mxu0 0.0
    %5025 = vmatpush.msra.mxu0 0.0
    %5026 = vmatpush.msra.mxu0 0.0
    %5027 = vmatpush.msra.mxu0 0.0
    %5028 = vmatpush.msra.mxu0 0.0
    %5029 = vmatpush.msra.mxu0 0.0
    %5030 = vmatpush.msra.mxu0 %v4936
    %5031 = vmatpush.msra.mxu0 %v4935
    %5032 = vmatpush.msra.mxu0 %v4934
    %5033 = vmatpush.msra.mxu0 %v4933
    %5034 = vmatpush.msra.mxu0 %v4932
    %5035 = vmatpush.msra.mxu0 %v4931
    %5036 = vmatpush.msra.mxu0 %v4930
    %5037 = vmatpush.msra.mxu0 %v4929
    %5038 = vmatmul.f32.gmra.mxu0 %v4940
    %v5039 = vpop.f32.mrf.mxu0
    %v5040 = vadd.f32 %v5020, %v5039
    %5041 = vdwg.mxu0
    %v5042 = vmax.f32 %v5040, 0.0
    %v5043 = vld [vmem:[#allocation11 + $0x3a0] sm:$0xff]
    %v5044 = vld [vmem:[#allocation11 + $0x3a8] sm:$0xff]
    %v5045 = vld [vmem:[#allocation11 + $0x3b0] sm:$0xff]
    %v5046 = vld [vmem:[#allocation11 + $0x3b8] sm:$0xff]
    %v5047 = vld [vmem:[#allocation11 + $0x3c0] sm:$0xff]
    %v5048 = vld [vmem:[#allocation11 + $0x3c8] sm:$0xff]
    %v5049 = vld [vmem:[#allocation11 + $0x3d0] sm:$0xff]
    %v5050 = vld [vmem:[#allocation11 + $0x3d8] sm:$0xff]
    %v5051 = vld [vmem:[#allocation11 + $0x3e0] sm:$0xff]
    %v5052 = vld [vmem:[#allocation11 + $0x3e8] sm:$0xff]
    %v5053 = vld [vmem:[#allocation11 + $0x3f0] sm:$0xff]
    %v5054 = vld [vmem:[#allocation11 + $0x3f8] sm:$0xff]
    %v5055 = vld [vmem:[#allocation11 + $0x400] sm:$0xff]
    %v5056 = vld [vmem:[#allocation11 + $0x408] sm:$0xff]
    %v5057 = vld [vmem:[#allocation11 + $0x410] sm:$0xff]
    %v5058 = vld [vmem:[#allocation11 + $0x418] sm:$0xff]
    %v5059 = vld [vmem:[#allocation11 + $0x420] sm:$0x1]
    %v5060 = vperm.slane %v5059, 0
    %5061 = vmatpush.msra.mxu0 %v5058
    %5062 = vmatpush.msra.mxu0 %v5057
    %5063 = vmatpush.msra.mxu0 %v5056
    %5064 = vmatpush.msra.mxu0 %v5055
    %5065 = vmatpush.msra.mxu0 %v5054
    %5066 = vmatpush.msra.mxu0 %v5053
    %5067 = vmatpush.msra.mxu0 %v5052
    %5068 = vmatpush.msra.mxu0 %v5051
    %5069 = vmatpush.msra.mxu0 %v5050
    %5070 = vmatpush.msra.mxu0 %v5049
    %5071 = vmatpush.msra.mxu0 %v5048
    %5072 = vmatpush.msra.mxu0 %v5047
    %5073 = vmatpush.msra.mxu0 %v5046
    %5074 = vmatpush.msra.mxu0 %v5045
    %5075 = vmatpush.msra.mxu0 %v5044
    %5076 = vmatpush.msra.mxu0 %v5043
    %5077 = vmatmul.f32.gmra.mxu0 %v5042
    %v5078 = vpop.f32.mrf.mxu0
    %v5079 = vadd.f32 %v5060, %v5078
    %5080 = vdwg.mxu0
    %vm5081 = vcmask 33792
    %5082 = vst.msk [vmem:[#allocation14] sm:$0x3] %vm5081, %v5079
    // Predicated region
    $region14: #{_lambda_.1} parent=1 // pred_check
      _
    $region15: #{_lambda_.1} parent=1 // pred_check_branch
      %5084 = sbr.rel (0) target = $region17
    $region16: #{_lambda_.1} parent=1 // pred_region
      %5086 = vsyncadd [#allocation13], 0
      %s5088 = sshll.u32 [#allocation14], 4
      %s5089 = int_to_ptr.vmem [resolvable:$true] %s5088
      %s5090 = sshll.u32 %s2, 4
      %s5091 = int_to_ptr.hbm [resolvable:$true] %s5090
      %5093 = dma.vmem_to_hbm [thread:$0]  %s5089, 32, %s5091, [#allocation13]
    $region17: #{_lambda_.1} parent=1 // pred_fallthru
      _
    // Predicated region
    $region18: #{_lambda_.1} parent=1 // pred_check
      _
    $region19: #{_lambda_.1} parent=1 // pred_check_branch
      %5095 = sbr.rel (0) target = $region21
    $region20: #{_lambda_.1} parent=1 // pred_region
      %5097 = dma.done [#allocation13], 32
    $region21: #{_lambda_.1} parent=1 // pred_fallthru
      _
    %5098 = vsyncpa [#allocation12], 1
    %5099 = vsyncpa [#allocation13], 1

</llo_original>
